<compile_context>
chip_gen: v7x
topology: tpu7x:2x2x1
jax: 0.10.0
libtpu: 0.0.40
codegen_flags: <defaults>
</compile_context>

<pallas_src>
import functools

import jax
import jax.numpy as jnp
from jax import lax
from jax.experimental import pallas as pl
from jax.experimental.pallas import tpu as pltpu


def _round_up(x, m):
    return (x + m - 1) // m * m


def _sigmoid(x):
    # sigmoid(x) == 0.5 * tanh(0.5 * x) + 0.5 : one EUP push (tanh) + cheap
    # VALU mul/add, instead of exp + divide (2 EUP pushes).  Exact identity.
    return 0.5 * jnp.tanh(0.5 * x) + 0.5


def _vmem_capacity_bytes():
    try:
        return int(pltpu.get_tpu_info().vmem_capacity_bytes)
    except Exception:
        return 64 << 20          # conservative default (v7x per-TC VMEM)


def _lstm_recurrence_kernel(pre_ref, whh_ref, bias_ref, h0_ref, c0_ref,
                            out_ref, hn_ref, cn_ref,
                            h_scr, c_scr,
                            *, t_chunk, hp, last_chunk, last_inner,
                            matmul_dtype):
    """Grid = (batch_blocks, time_chunks).  Per grid step: t_chunk recurrent
    updates.  pre_ref: (Bb, t_chunk, 4*Hp) precomputed x @ W_ih^T (no bias)."""
    t_idx = pl.program_id(1)

    # New batch block: load the initial hidden state into the f32 VMEM carry.
    @pl.when(t_idx == 0)
    def _():
        h_scr[...] = h0_ref[...].astype(jnp.float32)
        c_scr[...] = c0_ref[...].astype(jnp.float32)

    bias = bias_ref[...].astype(jnp.float32)              # (1, 4*Hp), hoisted

    # Static unroll keeps every pre/out slice index static (dense, statically
    # addressed vector loads/stores); the recurrence through h_scr/c_scr
    # serializes iterations anyway.
    # TODO(synk): move to lax.fori_loop(unroll=True) once dynamic second-minor
    # indexing of the (Bb, t_chunk, *) blocks is verified on all generations.
    for i in range(t_chunk):
        h_prev = h_scr[...]                                # (Bb, Hp) f32
        c_prev = c_scr[...]                                # (Bb, Hp) f32

        # gates: (Bb, 4*Hp) — only the recurrent dot remains in the loop.
        gates = (pre_ref[:, i, :].astype(jnp.float32) + bias
                 + jnp.dot(h_prev.astype(matmul_dtype), whh_ref[...],
                           preferred_element_type=jnp.float32))

        # Lane-aligned gate blocks (each Hp is a multiple of 128).
        i_g = _sigmoid(gates[:, 0 * hp:1 * hp])
        f_g = _sigmoid(gates[:, 1 * hp:2 * hp])
        g_g = jnp.tanh(gates[:, 2 * hp:3 * hp])
        o_g = _sigmoid(gates[:, 3 * hp:4 * hp])

        c_new = f_g * c_prev + i_g * g_g
        h_new = o_g * jnp.tanh(c_new)

        h_scr[...] = h_new
        c_scr[...] = c_new
        out_ref[:, i, :] = h_new.astype(out_ref.dtype)     # lane-dense store

        # Write h_n / c_n exactly once, at the true final timestep.
        if i == last_inner:
            @pl.when(t_idx == last_chunk)
            def _():
                hn_ref[...] = h_new.astype(hn_ref.dtype)
                cn_ref[...] = c_new.astype(cn_ref.dtype)


def lstm_pallas(x_bsd, w_ih, w_hh, b_ih, b_hh, h0, c0,
                *, t_chunk=None, batch_block=None, matmul_dtype=None):
    """x_bsd: (B, S, D) batch-major input.  h0/c0: (B, H).
    Returns (out (B, S, H), h_n (B, H), c_n (B, H))."""
    B, S, D = x_bsd.shape
    H = w_ih.shape[0] // 4
    dtype = x_bsd.dtype
    if matmul_dtype is None:
        matmul_dtype = jnp.bfloat16      # MXU-native on v5e/v6e/v7x
    matmul_dtype = jnp.dtype(matmul_dtype)
    out_it = jnp.dtype(dtype).itemsize
    mm_it = matmul_dtype.itemsize

    if S == 0:  # degenerate: nothing to run; h_n/c_n pass through.
        return (jnp.zeros((B, 0, H), dtype),
                h0.astype(dtype), c0.astype(dtype))

    # `pre` is the dominant HBM stream of the recurrence — keep it in the
    # matmul dtype (bf16 by default); the kernel upcasts to f32 for gate math.
    pre_dtype = matmul_dtype
    pre_it = pre_dtype.itemsize

    Hp = _round_up(H, 128)               # lane-align each gate block
    sub_m = 16 if out_it < 4 else 8      # bf16 packs 2 rows per sublane
    Bp = _round_up(B, sub_m)
    t_sub = 16 if pre_it < 4 else 8      # sublane packing of the pre blocks

    # Batch blocking: split in two when the batch is big enough so the
    # "parallel" batch grid axis can feed v7x's second TensorCore; otherwise
    # keep batch_block (the matmul M dimension) as large as possible.
    divs = [d for d in range(sub_m, Bp + 1, sub_m) if Bp % d == 0]
    if batch_block is None:
        target = Bp if Bp < 2 * sub_m else -(-Bp // 2)
    else:
        target = max(batch_block, sub_m)
    batch_block = max(d for d in divs if d <= max(target, sub_m))

    if t_chunk is None:
        t_chunk = min(16, _round_up(S, t_sub))
    t_chunk = max(t_sub, _round_up(t_chunk, t_sub))

    # ---- Generation-aware VMEM sizing --------------------------------------
    vmem_cap = _vmem_capacity_bytes()                  # 64 MiB v7x, 128 MiB v5e/v6e
    budget = max(vmem_cap - (16 << 20), 16 << 20)      # compiler headroom

    def est_bytes(tb, bb):
        pre_blk = bb * tb * 4 * Hp * pre_it
        out_blk = bb * tb * Hp * out_it
        whh_b = 2 * Hp * 4 * Hp * mm_it                # double-buffered weight
        bias_b = 2 * 4 * Hp * 4
        small = (2 * 2 * bb * Hp * 4                   # h0/c0 (f32, x2 buf)
                 + 2 * 2 * bb * Hp * out_it            # h_n/c_n (x2 buf)
                 + 2 * bb * Hp * 4)                    # f32 h/c scratch carry
        return 2 * pre_blk + 2 * out_blk + whh_b + bias_b + small

    while est_bytes(t_chunk, batch_block) > budget:
        if t_chunk > t_sub:
            t_chunk = max(t_sub, _round_up(t_chunk // 2, t_sub))
        else:
            smaller = [d for d in divs if d < batch_block]
            if not smaller:
                break
            batch_block = smaller[-1]

    Sp = _round_up(S, t_chunk)
    n_b = Bp // batch_block
    n_t = Sp // t_chunk
    vmem_limit = int(min(budget,
                         max(est_bytes(t_chunk, batch_block) + (4 << 20),
                             16 << 20)))

    # ---- Pack weights so every gate block starts on a 128-lane boundary ----
    wih_pad = jnp.zeros((D, 4 * Hp), jnp.float32)
    whh_pad = jnp.zeros((Hp, 4 * Hp), jnp.float32)
    b_pad = jnp.zeros((1, 4 * Hp), jnp.float32)
    bias = (b_ih + b_hh).astype(jnp.float32)
    for k in range(4):                   # gate order (i, f, g, o)
        wih_pad = wih_pad.at[:, k * Hp:k * Hp + H].set(
            w_ih[k * H:(k + 1) * H, :].astype(jnp.float32).T)
        whh_pad = whh_pad.at[:H, k * Hp:k * Hp + H].set(
            w_hh[k * H:(k + 1) * H, :].astype(jnp.float32).T)
        b_pad = b_pad.at[0, k * Hp:k * Hp + H].set(bias[k * H:(k + 1) * H])

    # ---- Hoisted input projection: one big batch-major GEMM (XLA) ----------
    # Pad the *small* x (batch + time) before the GEMM so it writes the padded
    # layout directly (no jnp.pad pass over the large `pre`); bias is added
    # inside the kernel (VALU slot, which has slack under MXU/EUP).
    x_p = jnp.pad(x_bsd, ((0, Bp - B), (0, Sp - S), (0, 0)))
    pre = jnp.einsum('bsd,dg->bsg',
                     x_p.astype(matmul_dtype), wih_pad.astype(matmul_dtype),
                     preferred_element_type=jnp.float32).astype(pre_dtype)

    h0_p = jnp.pad(h0.astype(jnp.float32), ((0, Bp - B), (0, Hp - H)))
    c0_p = jnp.pad(c0.astype(jnp.float32), ((0, Bp - B), (0, Hp - H)))
    whh_k = whh_pad.astype(matmul_dtype)               # resident recurrent W
    # NOTE: single-buffering W_hh/bias (pipeline_mode=pl.Buffered(1)) would
    # save another W_hh-sized VMEM slab on v7x; left at default buffering here.

    last_chunk = (S - 1) // t_chunk
    last_inner = (S - 1) % t_chunk

    kernel = functools.partial(
        _lstm_recurrence_kernel,
        t_chunk=t_chunk, hp=Hp, last_chunk=last_chunk, last_inner=last_inner,
        matmul_dtype=matmul_dtype)

    grid_spec = pltpu.PrefetchScalarGridSpec(
        num_scalar_prefetch=0,
        grid=(n_b, n_t),
        in_specs=[
            pl.BlockSpec((batch_block, t_chunk, 4 * Hp),
                         lambda b, t: (b, t, 0)),               # pre-projected x
            pl.BlockSpec((Hp, 4 * Hp), lambda b, t: (0, 0)),    # W_hh^T resident
            pl.BlockSpec((1, 4 * Hp), lambda b, t: (0, 0)),     # bias resident
            pl.BlockSpec((batch_block, Hp), lambda b, t: (b, 0)),  # h0
            pl.BlockSpec((batch_block, Hp), lambda b, t: (b, 0)),  # c0
        ],
        out_specs=[
            pl.BlockSpec((batch_block, t_chunk, Hp),
                         lambda b, t: (b, t, 0)),               # outputs
            pl.BlockSpec((batch_block, Hp), lambda b, t: (b, 0)),  # h_n
            pl.BlockSpec((batch_block, Hp), lambda b, t: (b, 0)),  # c_n
        ],
        scratch_shapes=[
            pltpu.VMEM((batch_block, Hp), jnp.float32),         # h carry (f32)
            pltpu.VMEM((batch_block, Hp), jnp.float32),         # c carry (f32)
        ],
    )

    out_p, hn_p, cn_p = pl.pallas_call(
        kernel,
        grid_spec=grid_spec,
        out_shape=(
            jax.ShapeDtypeStruct((Bp, Sp, Hp), dtype),
            jax.ShapeDtypeStruct((Bp, Hp), dtype),
            jax.ShapeDtypeStruct((Bp, Hp), dtype),
        ),
        compiler_params=pltpu.CompilerParams(
            dimension_semantics=("parallel", "arbitrary"),
            vmem_limit_bytes=vmem_limit,
        ),
    )(pre, whh_k, b_pad, h0_p, c0_p)

    return out_p[:B, :S, :H], hn_p[:B, :H], cn_p[:B, :H]


def encoder_forward(embedded_inputs, hidden, params, *, matmul_dtype=None):
    """Mirrors Encoder.forward.  embedded_inputs: (B, S, D);
    hidden: ((1, B, H), (1, B, H)).  The module's permute(1,0,2) -> LSTM ->
    permute(1,0,2) cancels out with a batch-major kernel, so no transposes.
    Returns (output (B, S, H), (h_n (1,B,H), c_n (1,B,H)))."""
    w_ih, w_hh, b_ih, b_hh = params
    h0, c0 = hidden
    out_bsh, h_n, c_n = lstm_pallas(embedded_inputs, w_ih, w_hh, b_ih, b_hh,
                                    h0[0], c0[0], matmul_dtype=matmul_dtype)
    return out_bsh, (h_n[None, ...], c_n[None, ...])


def encoder_get_hidden_0(embedded_inputs, hidden_dim, dtype=jnp.float32):
    B = embedded_inputs.shape[0]
    h_0 = jnp.zeros((1, B, hidden_dim), dtype=dtype)
    c_0 = jnp.zeros((1, B, hidden_dim), dtype=dtype)
    return h_0, c_0


def _lstm_reference(x_sbd, w_ih, w_hh, b_ih, b_hh, h0, c0):
    """Pure-JAX reference (PyTorch LSTM semantics, gate order i,f,g,o)."""
    H = w_hh.shape[1]

    def step(carry, x_t):
        h, c = carry
        gates = x_t @ w_ih.T + h @ w_hh.T + b_ih + b_hh
        i = jax.nn.sigmoid(gates[:, 0 * H:1 * H])
        f = jax.nn.sigmoid(gates[:, 1 * H:2 * H])
        g = jnp.tanh(gates[:, 2 * H:3 * H])
        o = jax.nn.sigmoid(gates[:, 3 * H:4 * H])
        c_new = f * c + i * g
        h_new = o * jnp.tanh(c_new)
        return (h_new, c_new), h_new

    (h_n, c_n), outs = lax.scan(step, (h0, c0), x_sbd)
    return outs, h_n, c_n


if __name__ == "__main__":
    # Small shapes consistent with Encoder(input_dim, hidden_dim)
    B, S, D, H = 2, 8, 4, 32
    key = jax.random.PRNGKey(0)
    kx, kh, kc, k1, k2, k3, k4 = jax.random.split(key, 7)

    # PyTorch nn.LSTM init: U(-1/sqrt(H), 1/sqrt(H))
    bound = 1.0 / jnp.sqrt(jnp.float32(H))
    w_ih = jax.random.uniform(k1, (4 * H, D), jnp.float32, -bound, bound)
    w_hh = jax.random.uniform(k2, (4 * H, H), jnp.float32, -bound, bound)
    b_ih = jax.random.uniform(k3, (4 * H,), jnp.float32, -bound, bound)
    b_hh = jax.random.uniform(k4, (4 * H,), jnp.float32, -bound, bound)
    params = (w_ih, w_hh, b_ih, b_hh)

    embedded_inputs = jax.random.normal(kx, (B, S, D), jnp.float32)
    h0 = jax.random.normal(kh, (1, B, H), jnp.float32)
    c0 = jax.random.normal(kc, (1, B, H), jnp.float32)

    # Pure-JAX reference (time-major scan, f32).
    x_sbd = jnp.transpose(embedded_inputs, (1, 0, 2))
    ref_out, ref_h, ref_c = _lstm_reference(x_sbd, w_ih, w_hh, b_ih, b_hh,
                                            h0[0], c0[0])
    ref_out_b = jnp.transpose(ref_out, (1, 0, 2))

    # Default path: bf16 MXU matmuls, f32 gate math + f32 carries.
    output, (h_n, c_n) = encoder_forward(embedded_inputs, (h0, c0), params)
    output = jax.block_until_ready(output)
    h_n = jax.block_until_ready(h_n)
    c_n = jax.block_until_ready(c_n)
    assert output.shape == (B, S, H)
    assert h_n.shape == (1, B, H) and c_n.shape == (1, B, H)
    assert jnp.allclose(output, ref_out_b, atol=5e-2, rtol=5e-2)
    assert jnp.allclose(h_n[0], ref_h, atol=5e-2, rtol=5e-2)
    assert jnp.allclose(c_n[0], ref_c, atol=5e-2, rtol=5e-2)

    # f32 parity path (matches PyTorch f32 semantics closely).
    out32, (h32, c32) = encoder_forward(embedded_inputs, (h0, c0), params,
                                        matmul_dtype=jnp.float32)
    out32 = jax.block_until_ready(out32)
    assert jnp.allclose(out32, ref_out_b, atol=1e-5, rtol=1e-5)
    assert jnp.allclose(h32[0], ref_h, atol=1e-5, rtol=1e-5)
    assert jnp.allclose(c32[0], ref_c, atol=1e-5, rtol=1e-5)

    print("KERNEL_OK")
</pallas_src>

<mosaic_0001>
module attributes {stable_mosaic.version = 11 : i64} {
  func.func @_lstm_recurrence_kernel(%arg0: i32, %arg1: i32, %arg2: memref<8x16x512xbf16, #tpu.memory_space<vmem>>, %arg3: memref<128x512xbf16, #tpu.memory_space<vmem>>, %arg4: memref<1x512xf32, #tpu.memory_space<vmem>>, %arg5: memref<8x128xf32, #tpu.memory_space<vmem>>, %arg6: memref<8x128xf32, #tpu.memory_space<vmem>>, %arg7: memref<8x16x128xf32, #tpu.memory_space<vmem>>, %arg8: memref<8x128xf32, #tpu.memory_space<vmem>>, %arg9: memref<8x128xf32, #tpu.memory_space<vmem>>, %arg10: memref<8x128xf32, #tpu.memory_space<vmem>>, %arg11: memref<8x128xf32, #tpu.memory_space<vmem>>) attributes {dimension_semantics = [#tpu.dimension_semantics<parallel>, #tpu.dimension_semantics<arbitrary>], iteration_bounds = array<i64: 1, 1>, scalar_prefetch = 0 : i64, scratch_operands = 2 : i64, tpu.core_type = #tpu.core_type<tc>, window_params = [{transform_indices = @transform_0, window_bounds = array<i64: 8, 16, 512>}, {pipeline_mode = #tpu.pipeline_mode<synchronous>, transform_indices = @transform_1, window_bounds = array<i64: 128, 512>}, {pipeline_mode = #tpu.pipeline_mode<synchronous>, transform_indices = @transform_2, window_bounds = array<i64: 1, 512>}, {transform_indices = @transform_3, window_bounds = array<i64: 8, 128>}, {transform_indices = @transform_4, window_bounds = array<i64: 8, 128>}, {transform_indices = @transform_5, window_bounds = array<i64: 8, 16, 128>}, {transform_indices = @transform_6, window_bounds = array<i64: 8, 128>}, {transform_indices = @transform_7, window_bounds = array<i64: 8, 128>}]} {
    %c0_i32 = arith.constant 0 : i32
    %0 = arith.cmpi eq, %arg1, %c0_i32 : i32
    %1 = arith.extui %0 : i1 to i32
    %c0_i32_0 = arith.constant 0 : i32
    %2 = arith.cmpi ne, %1, %c0_i32_0 : i32
    scf.if %2 {
      %c0_404 = arith.constant 0 : index
      %c0_405 = arith.constant 0 : index
      %759 = vector.load %arg5[%c0_404, %c0_405] : memref<8x128xf32, #tpu.memory_space<vmem>>, vector<8x128xf32>
      %c0_406 = arith.constant 0 : index
      %c0_407 = arith.constant 0 : index
      %760 = vector.load %arg10[%c0_406, %c0_407] : memref<8x128xf32, #tpu.memory_space<vmem>>, vector<8x128xf32>
      tpu.vector_store %arg10[%c0_406, %c0_407], %759 {strides = array<i32>} : memref<8x128xf32, #tpu.memory_space<vmem>>, vector<8x128xf32>,
      %c0_408 = arith.constant 0 : index
      %c0_409 = arith.constant 0 : index
      %761 = vector.load %arg6[%c0_408, %c0_409] : memref<8x128xf32, #tpu.memory_space<vmem>>, vector<8x128xf32>
      %c0_410 = arith.constant 0 : index
      %c0_411 = arith.constant 0 : index
      %762 = vector.load %arg11[%c0_410, %c0_411] : memref<8x128xf32, #tpu.memory_space<vmem>>, vector<8x128xf32>
      tpu.vector_store %arg11[%c0_410, %c0_411], %761 {strides = array<i32>} : memref<8x128xf32, #tpu.memory_space<vmem>>, vector<8x128xf32>,
    } else {
    }
    %c0 = arith.constant 0 : index
    %c0_1 = arith.constant 0 : index
    %3 = vector.load %arg4[%c0, %c0_1] : memref<1x512xf32, #tpu.memory_space<vmem>>, vector<1x512xf32>
    %c0_2 = arith.constant 0 : index
    %c0_3 = arith.constant 0 : index
    %4 = vector.load %arg10[%c0_2, %c0_3] : memref<8x128xf32, #tpu.memory_space<vmem>>, vector<8x128xf32>
    %c0_4 = arith.constant 0 : index
    %c0_5 = arith.constant 0 : index
    %5 = vector.load %arg11[%c0_4, %c0_5] : memref<8x128xf32, #tpu.memory_space<vmem>>, vector<8x128xf32>
    %c0_6 = arith.constant 0 : index
    %c0_7 = arith.constant 0 : index
    %c0_8 = arith.constant 0 : index
    %6 = vector.load %arg2[%c0_6, %c0_7, %c0_8] : memref<8x16x512xbf16, #tpu.memory_space<vmem>>, vector<8x1x512xbf16>
    %7 = vector.shape_cast %6 : vector<8x1x512xbf16> to vector<8x512xbf16>
    %8 = arith.extf %7 : vector<8x512xbf16> to vector<8x512xf32>
    %9 = vector.broadcast %3 : vector<1x512xf32> to vector<8x512xf32>
    %10 = arith.addf %8, %9 : vector<8x512xf32>
    %11 = arith.truncf %4 : vector<8x128xf32> to vector<8x128xbf16>
    %c0_9 = arith.constant 0 : index
    %c0_10 = arith.constant 0 : index
    %12 = vector.load %arg3[%c0_9, %c0_10] : memref<128x512xbf16, #tpu.memory_space<vmem>>, vector<128x512xbf16>
    %cst = arith.constant dense<0.000000e+00> : vector<8x512xf32>
    %13 = tpu.matmul %11, %12, %cst {dimension_numbers = #tpu.dot_dimension_numbers<[1], [0], [0], [1], [0, 0, 1, 1], [], []>} : vector<8x128xbf16>, vector<128x512xbf16>, vector<8x512xf32> -> vector<8x512xf32>
    %14 = arith.addf %10, %13 : vector<8x512xf32>
    %15 = vector.extract_strided_slice %14 {offsets = [0, 0], sizes = [8, 128], strides = [1, 1]} : vector<8x512xf32> to vector<8x128xf32>
    %cst_11 = arith.constant 5.000000e-01 : f32
    %16 = vector.broadcast %cst_11 : f32 to vector<8x128xf32>
    %17 = arith.mulf %16, %15 : vector<8x128xf32>
    %18 = math.tanh %17 : vector<8x128xf32>
    %cst_12 = arith.constant 5.000000e-01 : f32
    %19 = vector.broadcast %cst_12 : f32 to vector<8x128xf32>
    %20 = arith.mulf %19, %18 : vector<8x128xf32>
    %cst_13 = arith.constant 5.000000e-01 : f32
    %21 = vector.broadcast %cst_13 : f32 to vector<8x128xf32>
    %22 = arith.addf %20, %21 : vector<8x128xf32>
    %23 = vector.extract_strided_slice %14 {offsets = [0, 128], sizes = [8, 128], strides = [1, 1]} : vector<8x512xf32> to vector<8x128xf32>
    %cst_14 = arith.constant 5.000000e-01 : f32
    %24 = vector.broadcast %cst_14 : f32 to vector<8x128xf32>
    %25 = arith.mulf %24, %23 : vector<8x128xf32>
    %26 = math.tanh %25 : vector<8x128xf32>
    %cst_15 = arith.constant 5.000000e-01 : f32
    %27 = vector.broadcast %cst_15 : f32 to vector<8x128xf32>
    %28 = arith.mulf %27, %26 : vector<8x128xf32>
    %cst_16 = arith.constant 5.000000e-01 : f32
    %29 = vector.broadcast %cst_16 : f32 to vector<8x128xf32>
    %30 = arith.addf %28, %29 : vector<8x128xf32>
    %31 = vector.extract_strided_slice %14 {offsets = [0, 256], sizes = [8, 128], strides = [1, 1]} : vector<8x512xf32> to vector<8x128xf32>
    %32 = math.tanh %31 : vector<8x128xf32>
    %33 = vector.extract_strided_slice %14 {offsets = [0, 384], sizes = [8, 128], strides = [1, 1]} : vector<8x512xf32> to vector<8x128xf32>
    %cst_17 = arith.constant 5.000000e-01 : f32
    %34 = vector.broadcast %cst_17 : f32 to vector<8x128xf32>
    %35 = arith.mulf %34, %33 : vector<8x128xf32>
    %36 = math.tanh %35 : vector<8x128xf32>
    %cst_18 = arith.constant 5.000000e-01 : f32
    %37 = vector.broadcast %cst_18 : f32 to vector<8x128xf32>
    %38 = arith.mulf %37, %36 : vector<8x128xf32>
    %cst_19 = arith.constant 5.000000e-01 : f32
    %39 = vector.broadcast %cst_19 : f32 to vector<8x128xf32>
    %40 = arith.addf %38, %39 : vector<8x128xf32>
    %41 = arith.mulf %30, %5 : vector<8x128xf32>
    %42 = arith.mulf %22, %32 : vector<8x128xf32>
    %43 = arith.addf %41, %42 : vector<8x128xf32>
    %44 = math.tanh %43 : vector<8x128xf32>
    %45 = arith.mulf %40, %44 : vector<8x128xf32>
    %c0_20 = arith.constant 0 : index
    %c0_21 = arith.constant 0 : index
    %46 = vector.load %arg10[%c0_20, %c0_21] : memref<8x128xf32, #tpu.memory_space<vmem>>, vector<8x128xf32>
    tpu.vector_store %arg10[%c0_20, %c0_21], %45 {strides = array<i32>} : memref<8x128xf32, #tpu.memory_space<vmem>>, vector<8x128xf32>,
    %c0_22 = arith.constant 0 : index
    %c0_23 = arith.constant 0 : index
    %47 = vector.load %arg11[%c0_22, %c0_23] : memref<8x128xf32, #tpu.memory_space<vmem>>, vector<8x128xf32>
    tpu.vector_store %arg11[%c0_22, %c0_23], %43 {strides = array<i32>} : memref<8x128xf32, #tpu.memory_space<vmem>>, vector<8x128xf32>,
    %c0_24 = arith.constant 0 : index
    %c0_25 = arith.constant 0 : index
    %c0_26 = arith.constant 0 : index
    %48 = vector.load %arg7[%c0_24, %c0_25, %c0_26] : memref<8x16x128xf32, #tpu.memory_space<vmem>>, vector<8x1x128xf32>
    %49 = vector.shape_cast %48 : vector<8x1x128xf32> to vector<8x128xf32>
    %50 = vector.shape_cast %45 : vector<8x128xf32> to vector<8x1x128xf32>
    tpu.vector_store %arg7[%c0_24, %c0_25, %c0_26], %50 {strides = array<i32>} : memref<8x16x128xf32, #tpu.memory_space<vmem>>, vector<8x1x128xf32>,
    %c0_27 = arith.constant 0 : index
    %c0_28 = arith.constant 0 : index
    %51 = vector.load %arg10[%c0_27, %c0_28] : memref<8x128xf32, #tpu.memory_space<vmem>>, vector<8x128xf32>
    %c0_29 = arith.constant 0 : index
    %c0_30 = arith.constant 0 : index
    %52 = vector.load %arg11[%c0_29, %c0_30] : memref<8x128xf32, #tpu.memory_space<vmem>>, vector<8x128xf32>
    %c0_31 = arith.constant 0 : index
    %c1 = arith.constant 1 : index
    %c0_32 = arith.constant 0 : index
    %53 = vector.load %arg2[%c0_31, %c1, %c0_32] : memref<8x16x512xbf16, #tpu.memory_space<vmem>>, vector<8x1x512xbf16>
    %54 = vector.shape_cast %53 : vector<8x1x512xbf16> to vector<8x512xbf16>
    %55 = arith.extf %54 : vector<8x512xbf16> to vector<8x512xf32>
    %56 = vector.broadcast %3 : vector<1x512xf32> to vector<8x512xf32>
    %57 = arith.addf %55, %56 : vector<8x512xf32>
    %58 = arith.truncf %51 : vector<8x128xf32> to vector<8x128xbf16>
    %c0_33 = arith.constant 0 : index
    %c0_34 = arith.constant 0 : index
    %59 = vector.load %arg3[%c0_33, %c0_34] : memref<128x512xbf16, #tpu.memory_space<vmem>>, vector<128x512xbf16>
    %cst_35 = arith.constant dense<0.000000e+00> : vector<8x512xf32>
    %60 = tpu.matmul %58, %59, %cst_35 {dimension_numbers = #tpu.dot_dimension_numbers<[1], [0], [0], [1], [0, 0, 1, 1], [], []>} : vector<8x128xbf16>, vector<128x512xbf16>, vector<8x512xf32> -> vector<8x512xf32>
    %61 = arith.addf %57, %60 : vector<8x512xf32>
    %62 = vector.extract_strided_slice %61 {offsets = [0, 0], sizes = [8, 128], strides = [1, 1]} : vector<8x512xf32> to vector<8x128xf32>
    %cst_36 = arith.constant 5.000000e-01 : f32
    %63 = vector.broadcast %cst_36 : f32 to vector<8x128xf32>
    %64 = arith.mulf %63, %62 : vector<8x128xf32>
    %65 = math.tanh %64 : vector<8x128xf32>
    %cst_37 = arith.constant 5.000000e-01 : f32
    %66 = vector.broadcast %cst_37 : f32 to vector<8x128xf32>
    %67 = arith.mulf %66, %65 : vector<8x128xf32>
    %cst_38 = arith.constant 5.000000e-01 : f32
    %68 = vector.broadcast %cst_38 : f32 to vector<8x128xf32>
    %69 = arith.addf %67, %68 : vector<8x128xf32>
    %70 = vector.extract_strided_slice %61 {offsets = [0, 128], sizes = [8, 128], strides = [1, 1]} : vector<8x512xf32> to vector<8x128xf32>
    %cst_39 = arith.constant 5.000000e-01 : f32
    %71 = vector.broadcast %cst_39 : f32 to vector<8x128xf32>
    %72 = arith.mulf %71, %70 : vector<8x128xf32>
    %73 = math.tanh %72 : vector<8x128xf32>
    %cst_40 = arith.constant 5.000000e-01 : f32
    %74 = vector.broadcast %cst_40 : f32 to vector<8x128xf32>
    %75 = arith.mulf %74, %73 : vector<8x128xf32>
    %cst_41 = arith.constant 5.000000e-01 : f32
    %76 = vector.broadcast %cst_41 : f32 to vector<8x128xf32>
    %77 = arith.addf %75, %76 : vector<8x128xf32>
    %78 = vector.extract_strided_slice %61 {offsets = [0, 256], sizes = [8, 128], strides = [1, 1]} : vector<8x512xf32> to vector<8x128xf32>
    %79 = math.tanh %78 : vector<8x128xf32>
    %80 = vector.extract_strided_slice %61 {offsets = [0, 384], sizes = [8, 128], strides = [1, 1]} : vector<8x512xf32> to vector<8x128xf32>
    %cst_42 = arith.constant 5.000000e-01 : f32
    %81 = vector.broadcast %cst_42 : f32 to vector<8x128xf32>
    %82 = arith.mulf %81, %80 : vector<8x128xf32>
    %83 = math.tanh %82 : vector<8x128xf32>
    %cst_43 = arith.constant 5.000000e-01 : f32
    %84 = vector.broadcast %cst_43 : f32 to vector<8x128xf32>
    %85 = arith.mulf %84, %83 : vector<8x128xf32>
    %cst_44 = arith.constant 5.000000e-01 : f32
    %86 = vector.broadcast %cst_44 : f32 to vector<8x128xf32>
    %87 = arith.addf %85, %86 : vector<8x128xf32>
    %88 = arith.mulf %77, %52 : vector<8x128xf32>
    %89 = arith.mulf %69, %79 : vector<8x128xf32>
    %90 = arith.addf %88, %89 : vector<8x128xf32>
    %91 = math.tanh %90 : vector<8x128xf32>
    %92 = arith.mulf %87, %91 : vector<8x128xf32>
    %c0_45 = arith.constant 0 : index
    %c0_46 = arith.constant 0 : index
    %93 = vector.load %arg10[%c0_45, %c0_46] : memref<8x128xf32, #tpu.memory_space<vmem>>, vector<8x128xf32>
    tpu.vector_store %arg10[%c0_45, %c0_46], %92 {strides = array<i32>} : memref<8x128xf32, #tpu.memory_space<vmem>>, vector<8x128xf32>,
    %c0_47 = arith.constant 0 : index
    %c0_48 = arith.constant 0 : index
    %94 = vector.load %arg11[%c0_47, %c0_48] : memref<8x128xf32, #tpu.memory_space<vmem>>, vector<8x128xf32>
    tpu.vector_store %arg11[%c0_47, %c0_48], %90 {strides = array<i32>} : memref<8x128xf32, #tpu.memory_space<vmem>>, vector<8x128xf32>,
    %c0_49 = arith.constant 0 : index
    %c1_50 = arith.constant 1 : index
    %c0_51 = arith.constant 0 : index
    %95 = vector.load %arg7[%c0_49, %c1_50, %c0_51] : memref<8x16x128xf32, #tpu.memory_space<vmem>>, vector<8x1x128xf32>
    %96 = vector.shape_cast %95 : vector<8x1x128xf32> to vector<8x128xf32>
    %97 = vector.shape_cast %92 : vector<8x128xf32> to vector<8x1x128xf32>
    tpu.vector_store %arg7[%c0_49, %c1_50, %c0_51], %97 {strides = array<i32>} : memref<8x16x128xf32, #tpu.memory_space<vmem>>, vector<8x1x128xf32>,
    %c0_52 = arith.constant 0 : index
    %c0_53 = arith.constant 0 : index
    %98 = vector.load %arg10[%c0_52, %c0_53] : memref<8x128xf32, #tpu.memory_space<vmem>>, vector<8x128xf32>
    %c0_54 = arith.constant 0 : index
    %c0_55 = arith.constant 0 : index
    %99 = vector.load %arg11[%c0_54, %c0_55] : memref<8x128xf32, #tpu.memory_space<vmem>>, vector<8x128xf32>
    %c0_56 = arith.constant 0 : index
    %c2 = arith.constant 2 : index
    %c0_57 = arith.constant 0 : index
    %100 = vector.load %arg2[%c0_56, %c2, %c0_57] : memref<8x16x512xbf16, #tpu.memory_space<vmem>>, vector<8x1x512xbf16>
    %101 = vector.shape_cast %100 : vector<8x1x512xbf16> to vector<8x512xbf16>
    %102 = arith.extf %101 : vector<8x512xbf16> to vector<8x512xf32>
    %103 = vector.broadcast %3 : vector<1x512xf32> to vector<8x512xf32>
    %104 = arith.addf %102, %103 : vector<8x512xf32>
    %105 = arith.truncf %98 : vector<8x128xf32> to vector<8x128xbf16>
    %c0_58 = arith.constant 0 : index
    %c0_59 = arith.constant 0 : index
    %106 = vector.load %arg3[%c0_58, %c0_59] : memref<128x512xbf16, #tpu.memory_space<vmem>>, vector<128x512xbf16>
    %cst_60 = arith.constant dense<0.000000e+00> : vector<8x512xf32>
    %107 = tpu.matmul %105, %106, %cst_60 {dimension_numbers = #tpu.dot_dimension_numbers<[1], [0], [0], [1], [0, 0, 1, 1], [], []>} : vector<8x128xbf16>, vector<128x512xbf16>, vector<8x512xf32> -> vector<8x512xf32>
    %108 = arith.addf %104, %107 : vector<8x512xf32>
    %109 = vector.extract_strided_slice %108 {offsets = [0, 0], sizes = [8, 128], strides = [1, 1]} : vector<8x512xf32> to vector<8x128xf32>
    %cst_61 = arith.constant 5.000000e-01 : f32
    %110 = vector.broadcast %cst_61 : f32 to vector<8x128xf32>
    %111 = arith.mulf %110, %109 : vector<8x128xf32>
    %112 = math.tanh %111 : vector<8x128xf32>
    %cst_62 = arith.constant 5.000000e-01 : f32
    %113 = vector.broadcast %cst_62 : f32 to vector<8x128xf32>
    %114 = arith.mulf %113, %112 : vector<8x128xf32>
    %cst_63 = arith.constant 5.000000e-01 : f32
    %115 = vector.broadcast %cst_63 : f32 to vector<8x128xf32>
    %116 = arith.addf %114, %115 : vector<8x128xf32>
    %117 = vector.extract_strided_slice %108 {offsets = [0, 128], sizes = [8, 128], strides = [1, 1]} : vector<8x512xf32> to vector<8x128xf32>
    %cst_64 = arith.constant 5.000000e-01 : f32
    %118 = vector.broadcast %cst_64 : f32 to vector<8x128xf32>
    %119 = arith.mulf %118, %117 : vector<8x128xf32>
    %120 = math.tanh %119 : vector<8x128xf32>
    %cst_65 = arith.constant 5.000000e-01 : f32
    %121 = vector.broadcast %cst_65 : f32 to vector<8x128xf32>
    %122 = arith.mulf %121, %120 : vector<8x128xf32>
    %cst_66 = arith.constant 5.000000e-01 : f32
    %123 = vector.broadcast %cst_66 : f32 to vector<8x128xf32>
    %124 = arith.addf %122, %123 : vector<8x128xf32>
    %125 = vector.extract_strided_slice %108 {offsets = [0, 256], sizes = [8, 128], strides = [1, 1]} : vector<8x512xf32> to vector<8x128xf32>
    %126 = math.tanh %125 : vector<8x128xf32>
    %127 = vector.extract_strided_slice %108 {offsets = [0, 384], sizes = [8, 128], strides = [1, 1]} : vector<8x512xf32> to vector<8x128xf32>
    %cst_67 = arith.constant 5.000000e-01 : f32
    %128 = vector.broadcast %cst_67 : f32 to vector<8x128xf32>
    %129 = arith.mulf %128, %127 : vector<8x128xf32>
    %130 = math.tanh %129 : vector<8x128xf32>
    %cst_68 = arith.constant 5.000000e-01 : f32
    %131 = vector.broadcast %cst_68 : f32 to vector<8x128xf32>
    %132 = arith.mulf %131, %130 : vector<8x128xf32>
    %cst_69 = arith.constant 5.000000e-01 : f32
    %133 = vector.broadcast %cst_69 : f32 to vector<8x128xf32>
    %134 = arith.addf %132, %133 : vector<8x128xf32>
    %135 = arith.mulf %124, %99 : vector<8x128xf32>
    %136 = arith.mulf %116, %126 : vector<8x128xf32>
    %137 = arith.addf %135, %136 : vector<8x128xf32>
    %138 = math.tanh %137 : vector<8x128xf32>
    %139 = arith.mulf %134, %138 : vector<8x128xf32>
    %c0_70 = arith.constant 0 : index
    %c0_71 = arith.constant 0 : index
    %140 = vector.load %arg10[%c0_70, %c0_71] : memref<8x128xf32, #tpu.memory_space<vmem>>, vector<8x128xf32>
    tpu.vector_store %arg10[%c0_70, %c0_71], %139 {strides = array<i32>} : memref<8x128xf32, #tpu.memory_space<vmem>>, vector<8x128xf32>,
    %c0_72 = arith.constant 0 : index
    %c0_73 = arith.constant 0 : index
    %141 = vector.load %arg11[%c0_72, %c0_73] : memref<8x128xf32, #tpu.memory_space<vmem>>, vector<8x128xf32>
    tpu.vector_store %arg11[%c0_72, %c0_73], %137 {strides = array<i32>} : memref<8x128xf32, #tpu.memory_space<vmem>>, vector<8x128xf32>,
    %c0_74 = arith.constant 0 : index
    %c2_75 = arith.constant 2 : index
    %c0_76 = arith.constant 0 : index
    %142 = vector.load %arg7[%c0_74, %c2_75, %c0_76] : memref<8x16x128xf32, #tpu.memory_space<vmem>>, vector<8x1x128xf32>
    %143 = vector.shape_cast %142 : vector<8x1x128xf32> to vector<8x128xf32>
    %144 = vector.shape_cast %139 : vector<8x128xf32> to vector<8x1x128xf32>
    tpu.vector_store %arg7[%c0_74, %c2_75, %c0_76], %144 {strides = array<i32>} : memref<8x16x128xf32, #tpu.memory_space<vmem>>, vector<8x1x128xf32>,
    %c0_77 = arith.constant 0 : index
    %c0_78 = arith.constant 0 : index
    %145 = vector.load %arg10[%c0_77, %c0_78] : memref<8x128xf32, #tpu.memory_space<vmem>>, vector<8x128xf32>
    %c0_79 = arith.constant 0 : index
    %c0_80 = arith.constant 0 : index
    %146 = vector.load %arg11[%c0_79, %c0_80] : memref<8x128xf32, #tpu.memory_space<vmem>>, vector<8x128xf32>
    %c0_81 = arith.constant 0 : index
    %c3 = arith.constant 3 : index
    %c0_82 = arith.constant 0 : index
    %147 = vector.load %arg2[%c0_81, %c3, %c0_82] : memref<8x16x512xbf16, #tpu.memory_space<vmem>>, vector<8x1x512xbf16>
    %148 = vector.shape_cast %147 : vector<8x1x512xbf16> to vector<8x512xbf16>
    %149 = arith.extf %148 : vector<8x512xbf16> to vector<8x512xf32>
    %150 = vector.broadcast %3 : vector<1x512xf32> to vector<8x512xf32>
    %151 = arith.addf %149, %150 : vector<8x512xf32>
    %152 = arith.truncf %145 : vector<8x128xf32> to vector<8x128xbf16>
    %c0_83 = arith.constant 0 : index
    %c0_84 = arith.constant 0 : index
    %153 = vector.load %arg3[%c0_83, %c0_84] : memref<128x512xbf16, #tpu.memory_space<vmem>>, vector<128x512xbf16>
    %cst_85 = arith.constant dense<0.000000e+00> : vector<8x512xf32>
    %154 = tpu.matmul %152, %153, %cst_85 {dimension_numbers = #tpu.dot_dimension_numbers<[1], [0], [0], [1], [0, 0, 1, 1], [], []>} : vector<8x128xbf16>, vector<128x512xbf16>, vector<8x512xf32> -> vector<8x512xf32>
    %155 = arith.addf %151, %154 : vector<8x512xf32>
    %156 = vector.extract_strided_slice %155 {offsets = [0, 0], sizes = [8, 128], strides = [1, 1]} : vector<8x512xf32> to vector<8x128xf32>
    %cst_86 = arith.constant 5.000000e-01 : f32
    %157 = vector.broadcast %cst_86 : f32 to vector<8x128xf32>
    %158 = arith.mulf %157, %156 : vector<8x128xf32>
    %159 = math.tanh %158 : vector<8x128xf32>
    %cst_87 = arith.constant 5.000000e-01 : f32
    %160 = vector.broadcast %cst_87 : f32 to vector<8x128xf32>
    %161 = arith.mulf %160, %159 : vector<8x128xf32>
    %cst_88 = arith.constant 5.000000e-01 : f32
    %162 = vector.broadcast %cst_88 : f32 to vector<8x128xf32>
    %163 = arith.addf %161, %162 : vector<8x128xf32>
    %164 = vector.extract_strided_slice %155 {offsets = [0, 128], sizes = [8, 128], strides = [1, 1]} : vector<8x512xf32> to vector<8x128xf32>
    %cst_89 = arith.constant 5.000000e-01 : f32
    %165 = vector.broadcast %cst_89 : f32 to vector<8x128xf32>
    %166 = arith.mulf %165, %164 : vector<8x128xf32>
    %167 = math.tanh %166 : vector<8x128xf32>
    %cst_90 = arith.constant 5.000000e-01 : f32
    %168 = vector.broadcast %cst_90 : f32 to vector<8x128xf32>
    %169 = arith.mulf %168, %167 : vector<8x128xf32>
    %cst_91 = arith.constant 5.000000e-01 : f32
    %170 = vector.broadcast %cst_91 : f32 to vector<8x128xf32>
    %171 = arith.addf %169, %170 : vector<8x128xf32>
    %172 = vector.extract_strided_slice %155 {offsets = [0, 256], sizes = [8, 128], strides = [1, 1]} : vector<8x512xf32> to vector<8x128xf32>
    %173 = math.tanh %172 : vector<8x128xf32>
    %174 = vector.extract_strided_slice %155 {offsets = [0, 384], sizes = [8, 128], strides = [1, 1]} : vector<8x512xf32> to vector<8x128xf32>
    %cst_92 = arith.constant 5.000000e-01 : f32
    %175 = vector.broadcast %cst_92 : f32 to vector<8x128xf32>
    %176 = arith.mulf %175, %174 : vector<8x128xf32>
    %177 = math.tanh %176 : vector<8x128xf32>
    %cst_93 = arith.constant 5.000000e-01 : f32
    %178 = vector.broadcast %cst_93 : f32 to vector<8x128xf32>
    %179 = arith.mulf %178, %177 : vector<8x128xf32>
    %cst_94 = arith.constant 5.000000e-01 : f32
    %180 = vector.broadcast %cst_94 : f32 to vector<8x128xf32>
    %181 = arith.addf %179, %180 : vector<8x128xf32>
    %182 = arith.mulf %171, %146 : vector<8x128xf32>
    %183 = arith.mulf %163, %173 : vector<8x128xf32>
    %184 = arith.addf %182, %183 : vector<8x128xf32>
    %185 = math.tanh %184 : vector<8x128xf32>
    %186 = arith.mulf %181, %185 : vector<8x128xf32>
    %c0_95 = arith.constant 0 : index
    %c0_96 = arith.constant 0 : index
    %187 = vector.load %arg10[%c0_95, %c0_96] : memref<8x128xf32, #tpu.memory_space<vmem>>, vector<8x128xf32>
    tpu.vector_store %arg10[%c0_95, %c0_96], %186 {strides = array<i32>} : memref<8x128xf32, #tpu.memory_space<vmem>>, vector<8x128xf32>,
    %c0_97 = arith.constant 0 : index
    %c0_98 = arith.constant 0 : index
    %188 = vector.load %arg11[%c0_97, %c0_98] : memref<8x128xf32, #tpu.memory_space<vmem>>, vector<8x128xf32>
    tpu.vector_store %arg11[%c0_97, %c0_98], %184 {strides = array<i32>} : memref<8x128xf32, #tpu.memory_space<vmem>>, vector<8x128xf32>,
    %c0_99 = arith.constant 0 : index
    %c3_100 = arith.constant 3 : index
    %c0_101 = arith.constant 0 : index
    %189 = vector.load %arg7[%c0_99, %c3_100, %c0_101] : memref<8x16x128xf32, #tpu.memory_space<vmem>>, vector<8x1x128xf32>
    %190 = vector.shape_cast %189 : vector<8x1x128xf32> to vector<8x128xf32>
    %191 = vector.shape_cast %186 : vector<8x128xf32> to vector<8x1x128xf32>
    tpu.vector_store %arg7[%c0_99, %c3_100, %c0_101], %191 {strides = array<i32>} : memref<8x16x128xf32, #tpu.memory_space<vmem>>, vector<8x1x128xf32>,
    %c0_102 = arith.constant 0 : index
    %c0_103 = arith.constant 0 : index
    %192 = vector.load %arg10[%c0_102, %c0_103] : memref<8x128xf32, #tpu.memory_space<vmem>>, vector<8x128xf32>
    %c0_104 = arith.constant 0 : index
    %c0_105 = arith.constant 0 : index
    %193 = vector.load %arg11[%c0_104, %c0_105] : memref<8x128xf32, #tpu.memory_space<vmem>>, vector<8x128xf32>
    %c0_106 = arith.constant 0 : index
    %c4 = arith.constant 4 : index
    %c0_107 = arith.constant 0 : index
    %194 = vector.load %arg2[%c0_106, %c4, %c0_107] : memref<8x16x512xbf16, #tpu.memory_space<vmem>>, vector<8x1x512xbf16>
    %195 = vector.shape_cast %194 : vector<8x1x512xbf16> to vector<8x512xbf16>
    %196 = arith.extf %195 : vector<8x512xbf16> to vector<8x512xf32>
    %197 = vector.broadcast %3 : vector<1x512xf32> to vector<8x512xf32>
    %198 = arith.addf %196, %197 : vector<8x512xf32>
    %199 = arith.truncf %192 : vector<8x128xf32> to vector<8x128xbf16>
    %c0_108 = arith.constant 0 : index
    %c0_109 = arith.constant 0 : index
    %200 = vector.load %arg3[%c0_108, %c0_109] : memref<128x512xbf16, #tpu.memory_space<vmem>>, vector<128x512xbf16>
    %cst_110 = arith.constant dense<0.000000e+00> : vector<8x512xf32>
    %201 = tpu.matmul %199, %200, %cst_110 {dimension_numbers = #tpu.dot_dimension_numbers<[1], [0], [0], [1], [0, 0, 1, 1], [], []>} : vector<8x128xbf16>, vector<128x512xbf16>, vector<8x512xf32> -> vector<8x512xf32>
    %202 = arith.addf %198, %201 : vector<8x512xf32>
    %203 = vector.extract_strided_slice %202 {offsets = [0, 0], sizes = [8, 128], strides = [1, 1]} : vector<8x512xf32> to vector<8x128xf32>
    %cst_111 = arith.constant 5.000000e-01 : f32
    %204 = vector.broadcast %cst_111 : f32 to vector<8x128xf32>
    %205 = arith.mulf %204, %203 : vector<8x128xf32>
    %206 = math.tanh %205 : vector<8x128xf32>
    %cst_112 = arith.constant 5.000000e-01 : f32
    %207 = vector.broadcast %cst_112 : f32 to vector<8x128xf32>
    %208 = arith.mulf %207, %206 : vector<8x128xf32>
    %cst_113 = arith.constant 5.000000e-01 : f32
    %209 = vector.broadcast %cst_113 : f32 to vector<8x128xf32>
    %210 = arith.addf %208, %209 : vector<8x128xf32>
    %211 = vector.extract_strided_slice %202 {offsets = [0, 128], sizes = [8, 128], strides = [1, 1]} : vector<8x512xf32> to vector<8x128xf32>
    %cst_114 = arith.constant 5.000000e-01 : f32
    %212 = vector.broadcast %cst_114 : f32 to vector<8x128xf32>
    %213 = arith.mulf %212, %211 : vector<8x128xf32>
    %214 = math.tanh %213 : vector<8x128xf32>
    %cst_115 = arith.constant 5.000000e-01 : f32
    %215 = vector.broadcast %cst_115 : f32 to vector<8x128xf32>
    %216 = arith.mulf %215, %214 : vector<8x128xf32>
    %cst_116 = arith.constant 5.000000e-01 : f32
    %217 = vector.broadcast %cst_116 : f32 to vector<8x128xf32>
    %218 = arith.addf %216, %217 : vector<8x128xf32>
    %219 = vector.extract_strided_slice %202 {offsets = [0, 256], sizes = [8, 128], strides = [1, 1]} : vector<8x512xf32> to vector<8x128xf32>
    %220 = math.tanh %219 : vector<8x128xf32>
    %221 = vector.extract_strided_slice %202 {offsets = [0, 384], sizes = [8, 128], strides = [1, 1]} : vector<8x512xf32> to vector<8x128xf32>
    %cst_117 = arith.constant 5.000000e-01 : f32
    %222 = vector.broadcast %cst_117 : f32 to vector<8x128xf32>
    %223 = arith.mulf %222, %221 : vector<8x128xf32>
    %224 = math.tanh %223 : vector<8x128xf32>
    %cst_118 = arith.constant 5.000000e-01 : f32
    %225 = vector.broadcast %cst_118 : f32 to vector<8x128xf32>
    %226 = arith.mulf %225, %224 : vector<8x128xf32>
    %cst_119 = arith.constant 5.000000e-01 : f32
    %227 = vector.broadcast %cst_119 : f32 to vector<8x128xf32>
    %228 = arith.addf %226, %227 : vector<8x128xf32>
    %229 = arith.mulf %218, %193 : vector<8x128xf32>
    %230 = arith.mulf %210, %220 : vector<8x128xf32>
    %231 = arith.addf %229, %230 : vector<8x128xf32>
    %232 = math.tanh %231 : vector<8x128xf32>
    %233 = arith.mulf %228, %232 : vector<8x128xf32>
    %c0_120 = arith.constant 0 : index
    %c0_121 = arith.constant 0 : index
    %234 = vector.load %arg10[%c0_120, %c0_121] : memref<8x128xf32, #tpu.memory_space<vmem>>, vector<8x128xf32>
    tpu.vector_store %arg10[%c0_120, %c0_121], %233 {strides = array<i32>} : memref<8x128xf32, #tpu.memory_space<vmem>>, vector<8x128xf32>,
    %c0_122 = arith.constant 0 : index
    %c0_123 = arith.constant 0 : index
    %235 = vector.load %arg11[%c0_122, %c0_123] : memref<8x128xf32, #tpu.memory_space<vmem>>, vector<8x128xf32>
    tpu.vector_store %arg11[%c0_122, %c0_123], %231 {strides = array<i32>} : memref<8x128xf32, #tpu.memory_space<vmem>>, vector<8x128xf32>,
    %c0_124 = arith.constant 0 : index
    %c4_125 = arith.constant 4 : index
    %c0_126 = arith.constant 0 : index
    %236 = vector.load %arg7[%c0_124, %c4_125, %c0_126] : memref<8x16x128xf32, #tpu.memory_space<vmem>>, vector<8x1x128xf32>
    %237 = vector.shape_cast %236 : vector<8x1x128xf32> to vector<8x128xf32>
    %238 = vector.shape_cast %233 : vector<8x128xf32> to vector<8x1x128xf32>
    tpu.vector_store %arg7[%c0_124, %c4_125, %c0_126], %238 {strides = array<i32>} : memref<8x16x128xf32, #tpu.memory_space<vmem>>, vector<8x1x128xf32>,
    %c0_127 = arith.constant 0 : index
    %c0_128 = arith.constant 0 : index
    %239 = vector.load %arg10[%c0_127, %c0_128] : memref<8x128xf32, #tpu.memory_space<vmem>>, vector<8x128xf32>
    %c0_129 = arith.constant 0 : index
    %c0_130 = arith.constant 0 : index
    %240 = vector.load %arg11[%c0_129, %c0_130] : memref<8x128xf32, #tpu.memory_space<vmem>>, vector<8x128xf32>
    %c0_131 = arith.constant 0 : index
    %c5 = arith.constant 5 : index
    %c0_132 = arith.constant 0 : index
    %241 = vector.load %arg2[%c0_131, %c5, %c0_132] : memref<8x16x512xbf16, #tpu.memory_space<vmem>>, vector<8x1x512xbf16>
    %242 = vector.shape_cast %241 : vector<8x1x512xbf16> to vector<8x512xbf16>
    %243 = arith.extf %242 : vector<8x512xbf16> to vector<8x512xf32>
    %244 = vector.broadcast %3 : vector<1x512xf32> to vector<8x512xf32>
    %245 = arith.addf %243, %244 : vector<8x512xf32>
    %246 = arith.truncf %239 : vector<8x128xf32> to vector<8x128xbf16>
    %c0_133 = arith.constant 0 : index
    %c0_134 = arith.constant 0 : index
    %247 = vector.load %arg3[%c0_133, %c0_134] : memref<128x512xbf16, #tpu.memory_space<vmem>>, vector<128x512xbf16>
    %cst_135 = arith.constant dense<0.000000e+00> : vector<8x512xf32>
    %248 = tpu.matmul %246, %247, %cst_135 {dimension_numbers = #tpu.dot_dimension_numbers<[1], [0], [0], [1], [0, 0, 1, 1], [], []>} : vector<8x128xbf16>, vector<128x512xbf16>, vector<8x512xf32> -> vector<8x512xf32>
    %249 = arith.addf %245, %248 : vector<8x512xf32>
    %250 = vector.extract_strided_slice %249 {offsets = [0, 0], sizes = [8, 128], strides = [1, 1]} : vector<8x512xf32> to vector<8x128xf32>
    %cst_136 = arith.constant 5.000000e-01 : f32
    %251 = vector.broadcast %cst_136 : f32 to vector<8x128xf32>
    %252 = arith.mulf %251, %250 : vector<8x128xf32>
    %253 = math.tanh %252 : vector<8x128xf32>
    %cst_137 = arith.constant 5.000000e-01 : f32
    %254 = vector.broadcast %cst_137 : f32 to vector<8x128xf32>
    %255 = arith.mulf %254, %253 : vector<8x128xf32>
    %cst_138 = arith.constant 5.000000e-01 : f32
    %256 = vector.broadcast %cst_138 : f32 to vector<8x128xf32>
    %257 = arith.addf %255, %256 : vector<8x128xf32>
    %258 = vector.extract_strided_slice %249 {offsets = [0, 128], sizes = [8, 128], strides = [1, 1]} : vector<8x512xf32> to vector<8x128xf32>
    %cst_139 = arith.constant 5.000000e-01 : f32
    %259 = vector.broadcast %cst_139 : f32 to vector<8x128xf32>
    %260 = arith.mulf %259, %258 : vector<8x128xf32>
    %261 = math.tanh %260 : vector<8x128xf32>
    %cst_140 = arith.constant 5.000000e-01 : f32
    %262 = vector.broadcast %cst_140 : f32 to vector<8x128xf32>
    %263 = arith.mulf %262, %261 : vector<8x128xf32>
    %cst_141 = arith.constant 5.000000e-01 : f32
    %264 = vector.broadcast %cst_141 : f32 to vector<8x128xf32>
    %265 = arith.addf %263, %264 : vector<8x128xf32>
    %266 = vector.extract_strided_slice %249 {offsets = [0, 256], sizes = [8, 128], strides = [1, 1]} : vector<8x512xf32> to vector<8x128xf32>
    %267 = math.tanh %266 : vector<8x128xf32>
    %268 = vector.extract_strided_slice %249 {offsets = [0, 384], sizes = [8, 128], strides = [1, 1]} : vector<8x512xf32> to vector<8x128xf32>
    %cst_142 = arith.constant 5.000000e-01 : f32
    %269 = vector.broadcast %cst_142 : f32 to vector<8x128xf32>
    %270 = arith.mulf %269, %268 : vector<8x128xf32>
    %271 = math.tanh %270 : vector<8x128xf32>
    %cst_143 = arith.constant 5.000000e-01 : f32
    %272 = vector.broadcast %cst_143 : f32 to vector<8x128xf32>
    %273 = arith.mulf %272, %271 : vector<8x128xf32>
    %cst_144 = arith.constant 5.000000e-01 : f32
    %274 = vector.broadcast %cst_144 : f32 to vector<8x128xf32>
    %275 = arith.addf %273, %274 : vector<8x128xf32>
    %276 = arith.mulf %265, %240 : vector<8x128xf32>
    %277 = arith.mulf %257, %267 : vector<8x128xf32>
    %278 = arith.addf %276, %277 : vector<8x128xf32>
    %279 = math.tanh %278 : vector<8x128xf32>
    %280 = arith.mulf %275, %279 : vector<8x128xf32>
    %c0_145 = arith.constant 0 : index
    %c0_146 = arith.constant 0 : index
    %281 = vector.load %arg10[%c0_145, %c0_146] : memref<8x128xf32, #tpu.memory_space<vmem>>, vector<8x128xf32>
    tpu.vector_store %arg10[%c0_145, %c0_146], %280 {strides = array<i32>} : memref<8x128xf32, #tpu.memory_space<vmem>>, vector<8x128xf32>,
    %c0_147 = arith.constant 0 : index
    %c0_148 = arith.constant 0 : index
    %282 = vector.load %arg11[%c0_147, %c0_148] : memref<8x128xf32, #tpu.memory_space<vmem>>, vector<8x128xf32>
    tpu.vector_store %arg11[%c0_147, %c0_148], %278 {strides = array<i32>} : memref<8x128xf32, #tpu.memory_space<vmem>>, vector<8x128xf32>,
    %c0_149 = arith.constant 0 : index
    %c5_150 = arith.constant 5 : index
    %c0_151 = arith.constant 0 : index
    %283 = vector.load %arg7[%c0_149, %c5_150, %c0_151] : memref<8x16x128xf32, #tpu.memory_space<vmem>>, vector<8x1x128xf32>
    %284 = vector.shape_cast %283 : vector<8x1x128xf32> to vector<8x128xf32>
    %285 = vector.shape_cast %280 : vector<8x128xf32> to vector<8x1x128xf32>
    tpu.vector_store %arg7[%c0_149, %c5_150, %c0_151], %285 {strides = array<i32>} : memref<8x16x128xf32, #tpu.memory_space<vmem>>, vector<8x1x128xf32>,
    %c0_152 = arith.constant 0 : index
    %c0_153 = arith.constant 0 : index
    %286 = vector.load %arg10[%c0_152, %c0_153] : memref<8x128xf32, #tpu.memory_space<vmem>>, vector<8x128xf32>
    %c0_154 = arith.constant 0 : index
    %c0_155 = arith.constant 0 : index
    %287 = vector.load %arg11[%c0_154, %c0_155] : memref<8x128xf32, #tpu.memory_space<vmem>>, vector<8x128xf32>
    %c0_156 = arith.constant 0 : index
    %c6 = arith.constant 6 : index
    %c0_157 = arith.constant 0 : index
    %288 = vector.load %arg2[%c0_156, %c6, %c0_157] : memref<8x16x512xbf16, #tpu.memory_space<vmem>>, vector<8x1x512xbf16>
    %289 = vector.shape_cast %288 : vector<8x1x512xbf16> to vector<8x512xbf16>
    %290 = arith.extf %289 : vector<8x512xbf16> to vector<8x512xf32>
    %291 = vector.broadcast %3 : vector<1x512xf32> to vector<8x512xf32>
    %292 = arith.addf %290, %291 : vector<8x512xf32>
    %293 = arith.truncf %286 : vector<8x128xf32> to vector<8x128xbf16>
    %c0_158 = arith.constant 0 : index
    %c0_159 = arith.constant 0 : index
    %294 = vector.load %arg3[%c0_158, %c0_159] : memref<128x512xbf16, #tpu.memory_space<vmem>>, vector<128x512xbf16>
    %cst_160 = arith.constant dense<0.000000e+00> : vector<8x512xf32>
    %295 = tpu.matmul %293, %294, %cst_160 {dimension_numbers = #tpu.dot_dimension_numbers<[1], [0], [0], [1], [0, 0, 1, 1], [], []>} : vector<8x128xbf16>, vector<128x512xbf16>, vector<8x512xf32> -> vector<8x512xf32>
    %296 = arith.addf %292, %295 : vector<8x512xf32>
    %297 = vector.extract_strided_slice %296 {offsets = [0, 0], sizes = [8, 128], strides = [1, 1]} : vector<8x512xf32> to vector<8x128xf32>
    %cst_161 = arith.constant 5.000000e-01 : f32
    %298 = vector.broadcast %cst_161 : f32 to vector<8x128xf32>
    %299 = arith.mulf %298, %297 : vector<8x128xf32>
    %300 = math.tanh %299 : vector<8x128xf32>
    %cst_162 = arith.constant 5.000000e-01 : f32
    %301 = vector.broadcast %cst_162 : f32 to vector<8x128xf32>
    %302 = arith.mulf %301, %300 : vector<8x128xf32>
    %cst_163 = arith.constant 5.000000e-01 : f32
    %303 = vector.broadcast %cst_163 : f32 to vector<8x128xf32>
    %304 = arith.addf %302, %303 : vector<8x128xf32>
    %305 = vector.extract_strided_slice %296 {offsets = [0, 128], sizes = [8, 128], strides = [1, 1]} : vector<8x512xf32> to vector<8x128xf32>
    %cst_164 = arith.constant 5.000000e-01 : f32
    %306 = vector.broadcast %cst_164 : f32 to vector<8x128xf32>
    %307 = arith.mulf %306, %305 : vector<8x128xf32>
    %308 = math.tanh %307 : vector<8x128xf32>
    %cst_165 = arith.constant 5.000000e-01 : f32
    %309 = vector.broadcast %cst_165 : f32 to vector<8x128xf32>
    %310 = arith.mulf %309, %308 : vector<8x128xf32>
    %cst_166 = arith.constant 5.000000e-01 : f32
    %311 = vector.broadcast %cst_166 : f32 to vector<8x128xf32>
    %312 = arith.addf %310, %311 : vector<8x128xf32>
    %313 = vector.extract_strided_slice %296 {offsets = [0, 256], sizes = [8, 128], strides = [1, 1]} : vector<8x512xf32> to vector<8x128xf32>
    %314 = math.tanh %313 : vector<8x128xf32>
    %315 = vector.extract_strided_slice %296 {offsets = [0, 384], sizes = [8, 128], strides = [1, 1]} : vector<8x512xf32> to vector<8x128xf32>
    %cst_167 = arith.constant 5.000000e-01 : f32
    %316 = vector.broadcast %cst_167 : f32 to vector<8x128xf32>
    %317 = arith.mulf %316, %315 : vector<8x128xf32>
    %318 = math.tanh %317 : vector<8x128xf32>
    %cst_168 = arith.constant 5.000000e-01 : f32
    %319 = vector.broadcast %cst_168 : f32 to vector<8x128xf32>
    %320 = arith.mulf %319, %318 : vector<8x128xf32>
    %cst_169 = arith.constant 5.000000e-01 : f32
    %321 = vector.broadcast %cst_169 : f32 to vector<8x128xf32>
    %322 = arith.addf %320, %321 : vector<8x128xf32>
    %323 = arith.mulf %312, %287 : vector<8x128xf32>
    %324 = arith.mulf %304, %314 : vector<8x128xf32>
    %325 = arith.addf %323, %324 : vector<8x128xf32>
    %326 = math.tanh %325 : vector<8x128xf32>
    %327 = arith.mulf %322, %326 : vector<8x128xf32>
    %c0_170 = arith.constant 0 : index
    %c0_171 = arith.constant 0 : index
    %328 = vector.load %arg10[%c0_170, %c0_171] : memref<8x128xf32, #tpu.memory_space<vmem>>, vector<8x128xf32>
    tpu.vector_store %arg10[%c0_170, %c0_171], %327 {strides = array<i32>} : memref<8x128xf32, #tpu.memory_space<vmem>>, vector<8x128xf32>,
    %c0_172 = arith.constant 0 : index
    %c0_173 = arith.constant 0 : index
    %329 = vector.load %arg11[%c0_172, %c0_173] : memref<8x128xf32, #tpu.memory_space<vmem>>, vector<8x128xf32>
    tpu.vector_store %arg11[%c0_172, %c0_173], %325 {strides = array<i32>} : memref<8x128xf32, #tpu.memory_space<vmem>>, vector<8x128xf32>,
    %c0_174 = arith.constant 0 : index
    %c6_175 = arith.constant 6 : index
    %c0_176 = arith.constant 0 : index
    %330 = vector.load %arg7[%c0_174, %c6_175, %c0_176] : memref<8x16x128xf32, #tpu.memory_space<vmem>>, vector<8x1x128xf32>
    %331 = vector.shape_cast %330 : vector<8x1x128xf32> to vector<8x128xf32>
    %332 = vector.shape_cast %327 : vector<8x128xf32> to vector<8x1x128xf32>
    tpu.vector_store %arg7[%c0_174, %c6_175, %c0_176], %332 {strides = array<i32>} : memref<8x16x128xf32, #tpu.memory_space<vmem>>, vector<8x1x128xf32>,
    %c0_177 = arith.constant 0 : index
    %c0_178 = arith.constant 0 : index
    %333 = vector.load %arg10[%c0_177, %c0_178] : memref<8x128xf32, #tpu.memory_space<vmem>>, vector<8x128xf32>
    %c0_179 = arith.constant 0 : index
    %c0_180 = arith.constant 0 : index
    %334 = vector.load %arg11[%c0_179, %c0_180] : memref<8x128xf32, #tpu.memory_space<vmem>>, vector<8x128xf32>
    %c0_181 = arith.constant 0 : index
    %c7 = arith.constant 7 : index
    %c0_182 = arith.constant 0 : index
    %335 = vector.load %arg2[%c0_181, %c7, %c0_182] : memref<8x16x512xbf16, #tpu.memory_space<vmem>>, vector<8x1x512xbf16>
    %336 = vector.shape_cast %335 : vector<8x1x512xbf16> to vector<8x512xbf16>
    %337 = arith.extf %336 : vector<8x512xbf16> to vector<8x512xf32>
    %338 = vector.broadcast %3 : vector<1x512xf32> to vector<8x512xf32>
    %339 = arith.addf %337, %338 : vector<8x512xf32>
    %340 = arith.truncf %333 : vector<8x128xf32> to vector<8x128xbf16>
    %c0_183 = arith.constant 0 : index
    %c0_184 = arith.constant 0 : index
    %341 = vector.load %arg3[%c0_183, %c0_184] : memref<128x512xbf16, #tpu.memory_space<vmem>>, vector<128x512xbf16>
    %cst_185 = arith.constant dense<0.000000e+00> : vector<8x512xf32>
    %342 = tpu.matmul %340, %341, %cst_185 {dimension_numbers = #tpu.dot_dimension_numbers<[1], [0], [0], [1], [0, 0, 1, 1], [], []>} : vector<8x128xbf16>, vector<128x512xbf16>, vector<8x512xf32> -> vector<8x512xf32>
    %343 = arith.addf %339, %342 : vector<8x512xf32>
    %344 = vector.extract_strided_slice %343 {offsets = [0, 0], sizes = [8, 128], strides = [1, 1]} : vector<8x512xf32> to vector<8x128xf32>
    %cst_186 = arith.constant 5.000000e-01 : f32
    %345 = vector.broadcast %cst_186 : f32 to vector<8x128xf32>
    %346 = arith.mulf %345, %344 : vector<8x128xf32>
    %347 = math.tanh %346 : vector<8x128xf32>
    %cst_187 = arith.constant 5.000000e-01 : f32
    %348 = vector.broadcast %cst_187 : f32 to vector<8x128xf32>
    %349 = arith.mulf %348, %347 : vector<8x128xf32>
    %cst_188 = arith.constant 5.000000e-01 : f32
    %350 = vector.broadcast %cst_188 : f32 to vector<8x128xf32>
    %351 = arith.addf %349, %350 : vector<8x128xf32>
    %352 = vector.extract_strided_slice %343 {offsets = [0, 128], sizes = [8, 128], strides = [1, 1]} : vector<8x512xf32> to vector<8x128xf32>
    %cst_189 = arith.constant 5.000000e-01 : f32
    %353 = vector.broadcast %cst_189 : f32 to vector<8x128xf32>
    %354 = arith.mulf %353, %352 : vector<8x128xf32>
    %355 = math.tanh %354 : vector<8x128xf32>
    %cst_190 = arith.constant 5.000000e-01 : f32
    %356 = vector.broadcast %cst_190 : f32 to vector<8x128xf32>
    %357 = arith.mulf %356, %355 : vector<8x128xf32>
    %cst_191 = arith.constant 5.000000e-01 : f32
    %358 = vector.broadcast %cst_191 : f32 to vector<8x128xf32>
    %359 = arith.addf %357, %358 : vector<8x128xf32>
    %360 = vector.extract_strided_slice %343 {offsets = [0, 256], sizes = [8, 128], strides = [1, 1]} : vector<8x512xf32> to vector<8x128xf32>
    %361 = math.tanh %360 : vector<8x128xf32>
    %362 = vector.extract_strided_slice %343 {offsets = [0, 384], sizes = [8, 128], strides = [1, 1]} : vector<8x512xf32> to vector<8x128xf32>
    %cst_192 = arith.constant 5.000000e-01 : f32
    %363 = vector.broadcast %cst_192 : f32 to vector<8x128xf32>
    %364 = arith.mulf %363, %362 : vector<8x128xf32>
    %365 = math.tanh %364 : vector<8x128xf32>
    %cst_193 = arith.constant 5.000000e-01 : f32
    %366 = vector.broadcast %cst_193 : f32 to vector<8x128xf32>
    %367 = arith.mulf %366, %365 : vector<8x128xf32>
    %cst_194 = arith.constant 5.000000e-01 : f32
    %368 = vector.broadcast %cst_194 : f32 to vector<8x128xf32>
    %369 = arith.addf %367, %368 : vector<8x128xf32>
    %370 = arith.mulf %359, %334 : vector<8x128xf32>
    %371 = arith.mulf %351, %361 : vector<8x128xf32>
    %372 = arith.addf %370, %371 : vector<8x128xf32>
    %373 = math.tanh %372 : vector<8x128xf32>
    %374 = arith.mulf %369, %373 : vector<8x128xf32>
    %c0_195 = arith.constant 0 : index
    %c0_196 = arith.constant 0 : index
    %375 = vector.load %arg10[%c0_195, %c0_196] : memref<8x128xf32, #tpu.memory_space<vmem>>, vector<8x128xf32>
    tpu.vector_store %arg10[%c0_195, %c0_196], %374 {strides = array<i32>} : memref<8x128xf32, #tpu.memory_space<vmem>>, vector<8x128xf32>,
    %c0_197 = arith.constant 0 : index
    %c0_198 = arith.constant 0 : index
    %376 = vector.load %arg11[%c0_197, %c0_198] : memref<8x128xf32, #tpu.memory_space<vmem>>, vector<8x128xf32>
    tpu.vector_store %arg11[%c0_197, %c0_198], %372 {strides = array<i32>} : memref<8x128xf32, #tpu.memory_space<vmem>>, vector<8x128xf32>,
    %c0_199 = arith.constant 0 : index
    %c7_200 = arith.constant 7 : index
    %c0_201 = arith.constant 0 : index
    %377 = vector.load %arg7[%c0_199, %c7_200, %c0_201] : memref<8x16x128xf32, #tpu.memory_space<vmem>>, vector<8x1x128xf32>
    %378 = vector.shape_cast %377 : vector<8x1x128xf32> to vector<8x128xf32>
    %379 = vector.shape_cast %374 : vector<8x128xf32> to vector<8x1x128xf32>
    tpu.vector_store %arg7[%c0_199, %c7_200, %c0_201], %379 {strides = array<i32>} : memref<8x16x128xf32, #tpu.memory_space<vmem>>, vector<8x1x128xf32>,
    %c0_i32_202 = arith.constant 0 : i32
    %380 = arith.cmpi eq, %arg1, %c0_i32_202 : i32
    %381 = arith.extui %380 : i1 to i32
    %c0_i32_203 = arith.constant 0 : i32
    %382 = arith.cmpi ne, %381, %c0_i32_203 : i32
    scf.if %382 {
      %c0_404 = arith.constant 0 : index
      %c0_405 = arith.constant 0 : index
      %759 = vector.load %arg8[%c0_404, %c0_405] : memref<8x128xf32, #tpu.memory_space<vmem>>, vector<8x128xf32>
      tpu.vector_store %arg8[%c0_404, %c0_405], %374 {strides = array<i32>} : memref<8x128xf32, #tpu.memory_space<vmem>>, vector<8x128xf32>,
      %c0_406 = arith.constant 0 : index
      %c0_407 = arith.constant 0 : index
      %760 = vector.load %arg9[%c0_406, %c0_407] : memref<8x128xf32, #tpu.memory_space<vmem>>, vector<8x128xf32>
      tpu.vector_store %arg9[%c0_406, %c0_407], %372 {strides = array<i32>} : memref<8x128xf32, #tpu.memory_space<vmem>>, vector<8x128xf32>,
    } else {
    }
    %c0_204 = arith.constant 0 : index
    %c0_205 = arith.constant 0 : index
    %383 = vector.load %arg10[%c0_204, %c0_205] : memref<8x128xf32, #tpu.memory_space<vmem>>, vector<8x128xf32>
    %c0_206 = arith.constant 0 : index
    %c0_207 = arith.constant 0 : index
    %384 = vector.load %arg11[%c0_206, %c0_207] : memref<8x128xf32, #tpu.memory_space<vmem>>, vector<8x128xf32>
    %c0_208 = arith.constant 0 : index
    %c8 = arith.constant 8 : index
    %c0_209 = arith.constant 0 : index
    %385 = vector.load %arg2[%c0_208, %c8, %c0_209] : memref<8x16x512xbf16, #tpu.memory_space<vmem>>, vector<8x1x512xbf16>
    %386 = vector.shape_cast %385 : vector<8x1x512xbf16> to vector<8x512xbf16>
    %387 = arith.extf %386 : vector<8x512xbf16> to vector<8x512xf32>
    %388 = vector.broadcast %3 : vector<1x512xf32> to vector<8x512xf32>
    %389 = arith.addf %387, %388 : vector<8x512xf32>
    %390 = arith.truncf %383 : vector<8x128xf32> to vector<8x128xbf16>
    %c0_210 = arith.constant 0 : index
    %c0_211 = arith.constant 0 : index
    %391 = vector.load %arg3[%c0_210, %c0_211] : memref<128x512xbf16, #tpu.memory_space<vmem>>, vector<128x512xbf16>
    %cst_212 = arith.constant dense<0.000000e+00> : vector<8x512xf32>
    %392 = tpu.matmul %390, %391, %cst_212 {dimension_numbers = #tpu.dot_dimension_numbers<[1], [0], [0], [1], [0, 0, 1, 1], [], []>} : vector<8x128xbf16>, vector<128x512xbf16>, vector<8x512xf32> -> vector<8x512xf32>
    %393 = arith.addf %389, %392 : vector<8x512xf32>
    %394 = vector.extract_strided_slice %393 {offsets = [0, 0], sizes = [8, 128], strides = [1, 1]} : vector<8x512xf32> to vector<8x128xf32>
    %cst_213 = arith.constant 5.000000e-01 : f32
    %395 = vector.broadcast %cst_213 : f32 to vector<8x128xf32>
    %396 = arith.mulf %395, %394 : vector<8x128xf32>
    %397 = math.tanh %396 : vector<8x128xf32>
    %cst_214 = arith.constant 5.000000e-01 : f32
    %398 = vector.broadcast %cst_214 : f32 to vector<8x128xf32>
    %399 = arith.mulf %398, %397 : vector<8x128xf32>
    %cst_215 = arith.constant 5.000000e-01 : f32
    %400 = vector.broadcast %cst_215 : f32 to vector<8x128xf32>
    %401 = arith.addf %399, %400 : vector<8x128xf32>
    %402 = vector.extract_strided_slice %393 {offsets = [0, 128], sizes = [8, 128], strides = [1, 1]} : vector<8x512xf32> to vector<8x128xf32>
    %cst_216 = arith.constant 5.000000e-01 : f32
    %403 = vector.broadcast %cst_216 : f32 to vector<8x128xf32>
    %404 = arith.mulf %403, %402 : vector<8x128xf32>
    %405 = math.tanh %404 : vector<8x128xf32>
    %cst_217 = arith.constant 5.000000e-01 : f32
    %406 = vector.broadcast %cst_217 : f32 to vector<8x128xf32>
    %407 = arith.mulf %406, %405 : vector<8x128xf32>
    %cst_218 = arith.constant 5.000000e-01 : f32
    %408 = vector.broadcast %cst_218 : f32 to vector<8x128xf32>
    %409 = arith.addf %407, %408 : vector<8x128xf32>
    %410 = vector.extract_strided_slice %393 {offsets = [0, 256], sizes = [8, 128], strides = [1, 1]} : vector<8x512xf32> to vector<8x128xf32>
    %411 = math.tanh %410 : vector<8x128xf32>
    %412 = vector.extract_strided_slice %393 {offsets = [0, 384], sizes = [8, 128], strides = [1, 1]} : vector<8x512xf32> to vector<8x128xf32>
    %cst_219 = arith.constant 5.000000e-01 : f32
    %413 = vector.broadcast %cst_219 : f32 to vector<8x128xf32>
    %414 = arith.mulf %413, %412 : vector<8x128xf32>
    %415 = math.tanh %414 : vector<8x128xf32>
    %cst_220 = arith.constant 5.000000e-01 : f32
    %416 = vector.broadcast %cst_220 : f32 to vector<8x128xf32>
    %417 = arith.mulf %416, %415 : vector<8x128xf32>
    %cst_221 = arith.constant 5.000000e-01 : f32
    %418 = vector.broadcast %cst_221 : f32 to vector<8x128xf32>
    %419 = arith.addf %417, %418 : vector<8x128xf32>
    %420 = arith.mulf %409, %384 : vector<8x128xf32>
    %421 = arith.mulf %401, %411 : vector<8x128xf32>
    %422 = arith.addf %420, %421 : vector<8x128xf32>
    %423 = math.tanh %422 : vector<8x128xf32>
    %424 = arith.mulf %419, %423 : vector<8x128xf32>
    %c0_222 = arith.constant 0 : index
    %c0_223 = arith.constant 0 : index
    %425 = vector.load %arg10[%c0_222, %c0_223] : memref<8x128xf32, #tpu.memory_space<vmem>>, vector<8x128xf32>
    tpu.vector_store %arg10[%c0_222, %c0_223], %424 {strides = array<i32>} : memref<8x128xf32, #tpu.memory_space<vmem>>, vector<8x128xf32>,
    %c0_224 = arith.constant 0 : index
    %c0_225 = arith.constant 0 : index
    %426 = vector.load %arg11[%c0_224, %c0_225] : memref<8x128xf32, #tpu.memory_space<vmem>>, vector<8x128xf32>
    tpu.vector_store %arg11[%c0_224, %c0_225], %422 {strides = array<i32>} : memref<8x128xf32, #tpu.memory_space<vmem>>, vector<8x128xf32>,
    %c0_226 = arith.constant 0 : index
    %c8_227 = arith.constant 8 : index
    %c0_228 = arith.constant 0 : index
    %427 = vector.load %arg7[%c0_226, %c8_227, %c0_228] : memref<8x16x128xf32, #tpu.memory_space<vmem>>, vector<8x1x128xf32>
    %428 = vector.shape_cast %427 : vector<8x1x128xf32> to vector<8x128xf32>
    %429 = vector.shape_cast %424 : vector<8x128xf32> to vector<8x1x128xf32>
    tpu.vector_store %arg7[%c0_226, %c8_227, %c0_228], %429 {strides = array<i32>} : memref<8x16x128xf32, #tpu.memory_space<vmem>>, vector<8x1x128xf32>,
    %c0_229 = arith.constant 0 : index
    %c0_230 = arith.constant 0 : index
    %430 = vector.load %arg10[%c0_229, %c0_230] : memref<8x128xf32, #tpu.memory_space<vmem>>, vector<8x128xf32>
    %c0_231 = arith.constant 0 : index
    %c0_232 = arith.constant 0 : index
    %431 = vector.load %arg11[%c0_231, %c0_232] : memref<8x128xf32, #tpu.memory_space<vmem>>, vector<8x128xf32>
    %c0_233 = arith.constant 0 : index
    %c9 = arith.constant 9 : index
    %c0_234 = arith.constant 0 : index
    %432 = vector.load %arg2[%c0_233, %c9, %c0_234] : memref<8x16x512xbf16, #tpu.memory_space<vmem>>, vector<8x1x512xbf16>
    %433 = vector.shape_cast %432 : vector<8x1x512xbf16> to vector<8x512xbf16>
    %434 = arith.extf %433 : vector<8x512xbf16> to vector<8x512xf32>
    %435 = vector.broadcast %3 : vector<1x512xf32> to vector<8x512xf32>
    %436 = arith.addf %434, %435 : vector<8x512xf32>
    %437 = arith.truncf %430 : vector<8x128xf32> to vector<8x128xbf16>
    %c0_235 = arith.constant 0 : index
    %c0_236 = arith.constant 0 : index
    %438 = vector.load %arg3[%c0_235, %c0_236] : memref<128x512xbf16, #tpu.memory_space<vmem>>, vector<128x512xbf16>
    %cst_237 = arith.constant dense<0.000000e+00> : vector<8x512xf32>
    %439 = tpu.matmul %437, %438, %cst_237 {dimension_numbers = #tpu.dot_dimension_numbers<[1], [0], [0], [1], [0, 0, 1, 1], [], []>} : vector<8x128xbf16>, vector<128x512xbf16>, vector<8x512xf32> -> vector<8x512xf32>
    %440 = arith.addf %436, %439 : vector<8x512xf32>
    %441 = vector.extract_strided_slice %440 {offsets = [0, 0], sizes = [8, 128], strides = [1, 1]} : vector<8x512xf32> to vector<8x128xf32>
    %cst_238 = arith.constant 5.000000e-01 : f32
    %442 = vector.broadcast %cst_238 : f32 to vector<8x128xf32>
    %443 = arith.mulf %442, %441 : vector<8x128xf32>
    %444 = math.tanh %443 : vector<8x128xf32>
    %cst_239 = arith.constant 5.000000e-01 : f32
    %445 = vector.broadcast %cst_239 : f32 to vector<8x128xf32>
    %446 = arith.mulf %445, %444 : vector<8x128xf32>
    %cst_240 = arith.constant 5.000000e-01 : f32
    %447 = vector.broadcast %cst_240 : f32 to vector<8x128xf32>
    %448 = arith.addf %446, %447 : vector<8x128xf32>
    %449 = vector.extract_strided_slice %440 {offsets = [0, 128], sizes = [8, 128], strides = [1, 1]} : vector<8x512xf32> to vector<8x128xf32>
    %cst_241 = arith.constant 5.000000e-01 : f32
    %450 = vector.broadcast %cst_241 : f32 to vector<8x128xf32>
    %451 = arith.mulf %450, %449 : vector<8x128xf32>
    %452 = math.tanh %451 : vector<8x128xf32>
    %cst_242 = arith.constant 5.000000e-01 : f32
    %453 = vector.broadcast %cst_242 : f32 to vector<8x128xf32>
    %454 = arith.mulf %453, %452 : vector<8x128xf32>
    %cst_243 = arith.constant 5.000000e-01 : f32
    %455 = vector.broadcast %cst_243 : f32 to vector<8x128xf32>
    %456 = arith.addf %454, %455 : vector<8x128xf32>
    %457 = vector.extract_strided_slice %440 {offsets = [0, 256], sizes = [8, 128], strides = [1, 1]} : vector<8x512xf32> to vector<8x128xf32>
    %458 = math.tanh %457 : vector<8x128xf32>
    %459 = vector.extract_strided_slice %440 {offsets = [0, 384], sizes = [8, 128], strides = [1, 1]} : vector<8x512xf32> to vector<8x128xf32>
    %cst_244 = arith.constant 5.000000e-01 : f32
    %460 = vector.broadcast %cst_244 : f32 to vector<8x128xf32>
    %461 = arith.mulf %460, %459 : vector<8x128xf32>
    %462 = math.tanh %461 : vector<8x128xf32>
    %cst_245 = arith.constant 5.000000e-01 : f32
    %463 = vector.broadcast %cst_245 : f32 to vector<8x128xf32>
    %464 = arith.mulf %463, %462 : vector<8x128xf32>
    %cst_246 = arith.constant 5.000000e-01 : f32
    %465 = vector.broadcast %cst_246 : f32 to vector<8x128xf32>
    %466 = arith.addf %464, %465 : vector<8x128xf32>
    %467 = arith.mulf %456, %431 : vector<8x128xf32>
    %468 = arith.mulf %448, %458 : vector<8x128xf32>
    %469 = arith.addf %467, %468 : vector<8x128xf32>
    %470 = math.tanh %469 : vector<8x128xf32>
    %471 = arith.mulf %466, %470 : vector<8x128xf32>
    %c0_247 = arith.constant 0 : index
    %c0_248 = arith.constant 0 : index
    %472 = vector.load %arg10[%c0_247, %c0_248] : memref<8x128xf32, #tpu.memory_space<vmem>>, vector<8x128xf32>
    tpu.vector_store %arg10[%c0_247, %c0_248], %471 {strides = array<i32>} : memref<8x128xf32, #tpu.memory_space<vmem>>, vector<8x128xf32>,
    %c0_249 = arith.constant 0 : index
    %c0_250 = arith.constant 0 : index
    %473 = vector.load %arg11[%c0_249, %c0_250] : memref<8x128xf32, #tpu.memory_space<vmem>>, vector<8x128xf32>
    tpu.vector_store %arg11[%c0_249, %c0_250], %469 {strides = array<i32>} : memref<8x128xf32, #tpu.memory_space<vmem>>, vector<8x128xf32>,
    %c0_251 = arith.constant 0 : index
    %c9_252 = arith.constant 9 : index
    %c0_253 = arith.constant 0 : index
    %474 = vector.load %arg7[%c0_251, %c9_252, %c0_253] : memref<8x16x128xf32, #tpu.memory_space<vmem>>, vector<8x1x128xf32>
    %475 = vector.shape_cast %474 : vector<8x1x128xf32> to vector<8x128xf32>
    %476 = vector.shape_cast %471 : vector<8x128xf32> to vector<8x1x128xf32>
    tpu.vector_store %arg7[%c0_251, %c9_252, %c0_253], %476 {strides = array<i32>} : memref<8x16x128xf32, #tpu.memory_space<vmem>>, vector<8x1x128xf32>,
    %c0_254 = arith.constant 0 : index
    %c0_255 = arith.constant 0 : index
    %477 = vector.load %arg10[%c0_254, %c0_255] : memref<8x128xf32, #tpu.memory_space<vmem>>, vector<8x128xf32>
    %c0_256 = arith.constant 0 : index
    %c0_257 = arith.constant 0 : index
    %478 = vector.load %arg11[%c0_256, %c0_257] : memref<8x128xf32, #tpu.memory_space<vmem>>, vector<8x128xf32>
    %c0_258 = arith.constant 0 : index
    %c10 = arith.constant 10 : index
    %c0_259 = arith.constant 0 : index
    %479 = vector.load %arg2[%c0_258, %c10, %c0_259] : memref<8x16x512xbf16, #tpu.memory_space<vmem>>, vector<8x1x512xbf16>
    %480 = vector.shape_cast %479 : vector<8x1x512xbf16> to vector<8x512xbf16>
    %481 = arith.extf %480 : vector<8x512xbf16> to vector<8x512xf32>
    %482 = vector.broadcast %3 : vector<1x512xf32> to vector<8x512xf32>
    %483 = arith.addf %481, %482 : vector<8x512xf32>
    %484 = arith.truncf %477 : vector<8x128xf32> to vector<8x128xbf16>
    %c0_260 = arith.constant 0 : index
    %c0_261 = arith.constant 0 : index
    %485 = vector.load %arg3[%c0_260, %c0_261] : memref<128x512xbf16, #tpu.memory_space<vmem>>, vector<128x512xbf16>
    %cst_262 = arith.constant dense<0.000000e+00> : vector<8x512xf32>
    %486 = tpu.matmul %484, %485, %cst_262 {dimension_numbers = #tpu.dot_dimension_numbers<[1], [0], [0], [1], [0, 0, 1, 1], [], []>} : vector<8x128xbf16>, vector<128x512xbf16>, vector<8x512xf32> -> vector<8x512xf32>
    %487 = arith.addf %483, %486 : vector<8x512xf32>
    %488 = vector.extract_strided_slice %487 {offsets = [0, 0], sizes = [8, 128], strides = [1, 1]} : vector<8x512xf32> to vector<8x128xf32>
    %cst_263 = arith.constant 5.000000e-01 : f32
    %489 = vector.broadcast %cst_263 : f32 to vector<8x128xf32>
    %490 = arith.mulf %489, %488 : vector<8x128xf32>
    %491 = math.tanh %490 : vector<8x128xf32>
    %cst_264 = arith.constant 5.000000e-01 : f32
    %492 = vector.broadcast %cst_264 : f32 to vector<8x128xf32>
    %493 = arith.mulf %492, %491 : vector<8x128xf32>
    %cst_265 = arith.constant 5.000000e-01 : f32
    %494 = vector.broadcast %cst_265 : f32 to vector<8x128xf32>
    %495 = arith.addf %493, %494 : vector<8x128xf32>
    %496 = vector.extract_strided_slice %487 {offsets = [0, 128], sizes = [8, 128], strides = [1, 1]} : vector<8x512xf32> to vector<8x128xf32>
    %cst_266 = arith.constant 5.000000e-01 : f32
    %497 = vector.broadcast %cst_266 : f32 to vector<8x128xf32>
    %498 = arith.mulf %497, %496 : vector<8x128xf32>
    %499 = math.tanh %498 : vector<8x128xf32>
    %cst_267 = arith.constant 5.000000e-01 : f32
    %500 = vector.broadcast %cst_267 : f32 to vector<8x128xf32>
    %501 = arith.mulf %500, %499 : vector<8x128xf32>
    %cst_268 = arith.constant 5.000000e-01 : f32
    %502 = vector.broadcast %cst_268 : f32 to vector<8x128xf32>
    %503 = arith.addf %501, %502 : vector<8x128xf32>
    %504 = vector.extract_strided_slice %487 {offsets = [0, 256], sizes = [8, 128], strides = [1, 1]} : vector<8x512xf32> to vector<8x128xf32>
    %505 = math.tanh %504 : vector<8x128xf32>
    %506 = vector.extract_strided_slice %487 {offsets = [0, 384], sizes = [8, 128], strides = [1, 1]} : vector<8x512xf32> to vector<8x128xf32>
    %cst_269 = arith.constant 5.000000e-01 : f32
    %507 = vector.broadcast %cst_269 : f32 to vector<8x128xf32>
    %508 = arith.mulf %507, %506 : vector<8x128xf32>
    %509 = math.tanh %508 : vector<8x128xf32>
    %cst_270 = arith.constant 5.000000e-01 : f32
    %510 = vector.broadcast %cst_270 : f32 to vector<8x128xf32>
    %511 = arith.mulf %510, %509 : vector<8x128xf32>
    %cst_271 = arith.constant 5.000000e-01 : f32
    %512 = vector.broadcast %cst_271 : f32 to vector<8x128xf32>
    %513 = arith.addf %511, %512 : vector<8x128xf32>
    %514 = arith.mulf %503, %478 : vector<8x128xf32>
    %515 = arith.mulf %495, %505 : vector<8x128xf32>
    %516 = arith.addf %514, %515 : vector<8x128xf32>
    %517 = math.tanh %516 : vector<8x128xf32>
    %518 = arith.mulf %513, %517 : vector<8x128xf32>
    %c0_272 = arith.constant 0 : index
    %c0_273 = arith.constant 0 : index
    %519 = vector.load %arg10[%c0_272, %c0_273] : memref<8x128xf32, #tpu.memory_space<vmem>>, vector<8x128xf32>
    tpu.vector_store %arg10[%c0_272, %c0_273], %518 {strides = array<i32>} : memref<8x128xf32, #tpu.memory_space<vmem>>, vector<8x128xf32>,
    %c0_274 = arith.constant 0 : index
    %c0_275 = arith.constant 0 : index
    %520 = vector.load %arg11[%c0_274, %c0_275] : memref<8x128xf32, #tpu.memory_space<vmem>>, vector<8x128xf32>
    tpu.vector_store %arg11[%c0_274, %c0_275], %516 {strides = array<i32>} : memref<8x128xf32, #tpu.memory_space<vmem>>, vector<8x128xf32>,
    %c0_276 = arith.constant 0 : index
    %c10_277 = arith.constant 10 : index
    %c0_278 = arith.constant 0 : index
    %521 = vector.load %arg7[%c0_276, %c10_277, %c0_278] : memref<8x16x128xf32, #tpu.memory_space<vmem>>, vector<8x1x128xf32>
    %522 = vector.shape_cast %521 : vector<8x1x128xf32> to vector<8x128xf32>
    %523 = vector.shape_cast %518 : vector<8x128xf32> to vector<8x1x128xf32>
    tpu.vector_store %arg7[%c0_276, %c10_277, %c0_278], %523 {strides = array<i32>} : memref<8x16x128xf32, #tpu.memory_space<vmem>>, vector<8x1x128xf32>,
    %c0_279 = arith.constant 0 : index
    %c0_280 = arith.constant 0 : index
    %524 = vector.load %arg10[%c0_279, %c0_280] : memref<8x128xf32, #tpu.memory_space<vmem>>, vector<8x128xf32>
    %c0_281 = arith.constant 0 : index
    %c0_282 = arith.constant 0 : index
    %525 = vector.load %arg11[%c0_281, %c0_282] : memref<8x128xf32, #tpu.memory_space<vmem>>, vector<8x128xf32>
    %c0_283 = arith.constant 0 : index
    %c11 = arith.constant 11 : index
    %c0_284 = arith.constant 0 : index
    %526 = vector.load %arg2[%c0_283, %c11, %c0_284] : memref<8x16x512xbf16, #tpu.memory_space<vmem>>, vector<8x1x512xbf16>
    %527 = vector.shape_cast %526 : vector<8x1x512xbf16> to vector<8x512xbf16>
    %528 = arith.extf %527 : vector<8x512xbf16> to vector<8x512xf32>
    %529 = vector.broadcast %3 : vector<1x512xf32> to vector<8x512xf32>
    %530 = arith.addf %528, %529 : vector<8x512xf32>
    %531 = arith.truncf %524 : vector<8x128xf32> to vector<8x128xbf16>
    %c0_285 = arith.constant 0 : index
    %c0_286 = arith.constant 0 : index
    %532 = vector.load %arg3[%c0_285, %c0_286] : memref<128x512xbf16, #tpu.memory_space<vmem>>, vector<128x512xbf16>
    %cst_287 = arith.constant dense<0.000000e+00> : vector<8x512xf32>
    %533 = tpu.matmul %531, %532, %cst_287 {dimension_numbers = #tpu.dot_dimension_numbers<[1], [0], [0], [1], [0, 0, 1, 1], [], []>} : vector<8x128xbf16>, vector<128x512xbf16>, vector<8x512xf32> -> vector<8x512xf32>
    %534 = arith.addf %530, %533 : vector<8x512xf32>
    %535 = vector.extract_strided_slice %534 {offsets = [0, 0], sizes = [8, 128], strides = [1, 1]} : vector<8x512xf32> to vector<8x128xf32>
    %cst_288 = arith.constant 5.000000e-01 : f32
    %536 = vector.broadcast %cst_288 : f32 to vector<8x128xf32>
    %537 = arith.mulf %536, %535 : vector<8x128xf32>
    %538 = math.tanh %537 : vector<8x128xf32>
    %cst_289 = arith.constant 5.000000e-01 : f32
    %539 = vector.broadcast %cst_289 : f32 to vector<8x128xf32>
    %540 = arith.mulf %539, %538 : vector<8x128xf32>
    %cst_290 = arith.constant 5.000000e-01 : f32
    %541 = vector.broadcast %cst_290 : f32 to vector<8x128xf32>
    %542 = arith.addf %540, %541 : vector<8x128xf32>
    %543 = vector.extract_strided_slice %534 {offsets = [0, 128], sizes = [8, 128], strides = [1, 1]} : vector<8x512xf32> to vector<8x128xf32>
    %cst_291 = arith.constant 5.000000e-01 : f32
    %544 = vector.broadcast %cst_291 : f32 to vector<8x128xf32>
    %545 = arith.mulf %544, %543 : vector<8x128xf32>
    %546 = math.tanh %545 : vector<8x128xf32>
    %cst_292 = arith.constant 5.000000e-01 : f32
    %547 = vector.broadcast %cst_292 : f32 to vector<8x128xf32>
    %548 = arith.mulf %547, %546 : vector<8x128xf32>
    %cst_293 = arith.constant 5.000000e-01 : f32
    %549 = vector.broadcast %cst_293 : f32 to vector<8x128xf32>
    %550 = arith.addf %548, %549 : vector<8x128xf32>
    %551 = vector.extract_strided_slice %534 {offsets = [0, 256], sizes = [8, 128], strides = [1, 1]} : vector<8x512xf32> to vector<8x128xf32>
    %552 = math.tanh %551 : vector<8x128xf32>
    %553 = vector.extract_strided_slice %534 {offsets = [0, 384], sizes = [8, 128], strides = [1, 1]} : vector<8x512xf32> to vector<8x128xf32>
    %cst_294 = arith.constant 5.000000e-01 : f32
    %554 = vector.broadcast %cst_294 : f32 to vector<8x128xf32>
    %555 = arith.mulf %554, %553 : vector<8x128xf32>
    %556 = math.tanh %555 : vector<8x128xf32>
    %cst_295 = arith.constant 5.000000e-01 : f32
    %557 = vector.broadcast %cst_295 : f32 to vector<8x128xf32>
    %558 = arith.mulf %557, %556 : vector<8x128xf32>
    %cst_296 = arith.constant 5.000000e-01 : f32
    %559 = vector.broadcast %cst_296 : f32 to vector<8x128xf32>
    %560 = arith.addf %558, %559 : vector<8x128xf32>
    %561 = arith.mulf %550, %525 : vector<8x128xf32>
    %562 = arith.mulf %542, %552 : vector<8x128xf32>
    %563 = arith.addf %561, %562 : vector<8x128xf32>
    %564 = math.tanh %563 : vector<8x128xf32>
    %565 = arith.mulf %560, %564 : vector<8x128xf32>
    %c0_297 = arith.constant 0 : index
    %c0_298 = arith.constant 0 : index
    %566 = vector.load %arg10[%c0_297, %c0_298] : memref<8x128xf32, #tpu.memory_space<vmem>>, vector<8x128xf32>
    tpu.vector_store %arg10[%c0_297, %c0_298], %565 {strides = array<i32>} : memref<8x128xf32, #tpu.memory_space<vmem>>, vector<8x128xf32>,
    %c0_299 = arith.constant 0 : index
    %c0_300 = arith.constant 0 : index
    %567 = vector.load %arg11[%c0_299, %c0_300] : memref<8x128xf32, #tpu.memory_space<vmem>>, vector<8x128xf32>
    tpu.vector_store %arg11[%c0_299, %c0_300], %563 {strides = array<i32>} : memref<8x128xf32, #tpu.memory_space<vmem>>, vector<8x128xf32>,
    %c0_301 = arith.constant 0 : index
    %c11_302 = arith.constant 11 : index
    %c0_303 = arith.constant 0 : index
    %568 = vector.load %arg7[%c0_301, %c11_302, %c0_303] : memref<8x16x128xf32, #tpu.memory_space<vmem>>, vector<8x1x128xf32>
    %569 = vector.shape_cast %568 : vector<8x1x128xf32> to vector<8x128xf32>
    %570 = vector.shape_cast %565 : vector<8x128xf32> to vector<8x1x128xf32>
    tpu.vector_store %arg7[%c0_301, %c11_302, %c0_303], %570 {strides = array<i32>} : memref<8x16x128xf32, #tpu.memory_space<vmem>>, vector<8x1x128xf32>,
    %c0_304 = arith.constant 0 : index
    %c0_305 = arith.constant 0 : index
    %571 = vector.load %arg10[%c0_304, %c0_305] : memref<8x128xf32, #tpu.memory_space<vmem>>, vector<8x128xf32>
    %c0_306 = arith.constant 0 : index
    %c0_307 = arith.constant 0 : index
    %572 = vector.load %arg11[%c0_306, %c0_307] : memref<8x128xf32, #tpu.memory_space<vmem>>, vector<8x128xf32>
    %c0_308 = arith.constant 0 : index
    %c12 = arith.constant 12 : index
    %c0_309 = arith.constant 0 : index
    %573 = vector.load %arg2[%c0_308, %c12, %c0_309] : memref<8x16x512xbf16, #tpu.memory_space<vmem>>, vector<8x1x512xbf16>
    %574 = vector.shape_cast %573 : vector<8x1x512xbf16> to vector<8x512xbf16>
    %575 = arith.extf %574 : vector<8x512xbf16> to vector<8x512xf32>
    %576 = vector.broadcast %3 : vector<1x512xf32> to vector<8x512xf32>
    %577 = arith.addf %575, %576 : vector<8x512xf32>
    %578 = arith.truncf %571 : vector<8x128xf32> to vector<8x128xbf16>
    %c0_310 = arith.constant 0 : index
    %c0_311 = arith.constant 0 : index
    %579 = vector.load %arg3[%c0_310, %c0_311] : memref<128x512xbf16, #tpu.memory_space<vmem>>, vector<128x512xbf16>
    %cst_312 = arith.constant dense<0.000000e+00> : vector<8x512xf32>
    %580 = tpu.matmul %578, %579, %cst_312 {dimension_numbers = #tpu.dot_dimension_numbers<[1], [0], [0], [1], [0, 0, 1, 1], [], []>} : vector<8x128xbf16>, vector<128x512xbf16>, vector<8x512xf32> -> vector<8x512xf32>
    %581 = arith.addf %577, %580 : vector<8x512xf32>
    %582 = vector.extract_strided_slice %581 {offsets = [0, 0], sizes = [8, 128], strides = [1, 1]} : vector<8x512xf32> to vector<8x128xf32>
    %cst_313 = arith.constant 5.000000e-01 : f32
    %583 = vector.broadcast %cst_313 : f32 to vector<8x128xf32>
    %584 = arith.mulf %583, %582 : vector<8x128xf32>
    %585 = math.tanh %584 : vector<8x128xf32>
    %cst_314 = arith.constant 5.000000e-01 : f32
    %586 = vector.broadcast %cst_314 : f32 to vector<8x128xf32>
    %587 = arith.mulf %586, %585 : vector<8x128xf32>
    %cst_315 = arith.constant 5.000000e-01 : f32
    %588 = vector.broadcast %cst_315 : f32 to vector<8x128xf32>
    %589 = arith.addf %587, %588 : vector<8x128xf32>
    %590 = vector.extract_strided_slice %581 {offsets = [0, 128], sizes = [8, 128], strides = [1, 1]} : vector<8x512xf32> to vector<8x128xf32>
    %cst_316 = arith.constant 5.000000e-01 : f32
    %591 = vector.broadcast %cst_316 : f32 to vector<8x128xf32>
    %592 = arith.mulf %591, %590 : vector<8x128xf32>
    %593 = math.tanh %592 : vector<8x128xf32>
    %cst_317 = arith.constant 5.000000e-01 : f32
    %594 = vector.broadcast %cst_317 : f32 to vector<8x128xf32>
    %595 = arith.mulf %594, %593 : vector<8x128xf32>
    %cst_318 = arith.constant 5.000000e-01 : f32
    %596 = vector.broadcast %cst_318 : f32 to vector<8x128xf32>
    %597 = arith.addf %595, %596 : vector<8x128xf32>
    %598 = vector.extract_strided_slice %581 {offsets = [0, 256], sizes = [8, 128], strides = [1, 1]} : vector<8x512xf32> to vector<8x128xf32>
    %599 = math.tanh %598 : vector<8x128xf32>
    %600 = vector.extract_strided_slice %581 {offsets = [0, 384], sizes = [8, 128], strides = [1, 1]} : vector<8x512xf32> to vector<8x128xf32>
    %cst_319 = arith.constant 5.000000e-01 : f32
    %601 = vector.broadcast %cst_319 : f32 to vector<8x128xf32>
    %602 = arith.mulf %601, %600 : vector<8x128xf32>
    %603 = math.tanh %602 : vector<8x128xf32>
    %cst_320 = arith.constant 5.000000e-01 : f32
    %604 = vector.broadcast %cst_320 : f32 to vector<8x128xf32>
    %605 = arith.mulf %604, %603 : vector<8x128xf32>
    %cst_321 = arith.constant 5.000000e-01 : f32
    %606 = vector.broadcast %cst_321 : f32 to vector<8x128xf32>
    %607 = arith.addf %605, %606 : vector<8x128xf32>
    %608 = arith.mulf %597, %572 : vector<8x128xf32>
    %609 = arith.mulf %589, %599 : vector<8x128xf32>
    %610 = arith.addf %608, %609 : vector<8x128xf32>
    %611 = math.tanh %610 : vector<8x128xf32>
    %612 = arith.mulf %607, %611 : vector<8x128xf32>
    %c0_322 = arith.constant 0 : index
    %c0_323 = arith.constant 0 : index
    %613 = vector.load %arg10[%c0_322, %c0_323] : memref<8x128xf32, #tpu.memory_space<vmem>>, vector<8x128xf32>
    tpu.vector_store %arg10[%c0_322, %c0_323], %612 {strides = array<i32>} : memref<8x128xf32, #tpu.memory_space<vmem>>, vector<8x128xf32>,
    %c0_324 = arith.constant 0 : index
    %c0_325 = arith.constant 0 : index
    %614 = vector.load %arg11[%c0_324, %c0_325] : memref<8x128xf32, #tpu.memory_space<vmem>>, vector<8x128xf32>
    tpu.vector_store %arg11[%c0_324, %c0_325], %610 {strides = array<i32>} : memref<8x128xf32, #tpu.memory_space<vmem>>, vector<8x128xf32>,
    %c0_326 = arith.constant 0 : index
    %c12_327 = arith.constant 12 : index
    %c0_328 = arith.constant 0 : index
    %615 = vector.load %arg7[%c0_326, %c12_327, %c0_328] : memref<8x16x128xf32, #tpu.memory_space<vmem>>, vector<8x1x128xf32>
    %616 = vector.shape_cast %615 : vector<8x1x128xf32> to vector<8x128xf32>
    %617 = vector.shape_cast %612 : vector<8x128xf32> to vector<8x1x128xf32>
    tpu.vector_store %arg7[%c0_326, %c12_327, %c0_328], %617 {strides = array<i32>} : memref<8x16x128xf32, #tpu.memory_space<vmem>>, vector<8x1x128xf32>,
    %c0_329 = arith.constant 0 : index
    %c0_330 = arith.constant 0 : index
    %618 = vector.load %arg10[%c0_329, %c0_330] : memref<8x128xf32, #tpu.memory_space<vmem>>, vector<8x128xf32>
    %c0_331 = arith.constant 0 : index
    %c0_332 = arith.constant 0 : index
    %619 = vector.load %arg11[%c0_331, %c0_332] : memref<8x128xf32, #tpu.memory_space<vmem>>, vector<8x128xf32>
    %c0_333 = arith.constant 0 : index
    %c13 = arith.constant 13 : index
    %c0_334 = arith.constant 0 : index
    %620 = vector.load %arg2[%c0_333, %c13, %c0_334] : memref<8x16x512xbf16, #tpu.memory_space<vmem>>, vector<8x1x512xbf16>
    %621 = vector.shape_cast %620 : vector<8x1x512xbf16> to vector<8x512xbf16>
    %622 = arith.extf %621 : vector<8x512xbf16> to vector<8x512xf32>
    %623 = vector.broadcast %3 : vector<1x512xf32> to vector<8x512xf32>
    %624 = arith.addf %622, %623 : vector<8x512xf32>
    %625 = arith.truncf %618 : vector<8x128xf32> to vector<8x128xbf16>
    %c0_335 = arith.constant 0 : index
    %c0_336 = arith.constant 0 : index
    %626 = vector.load %arg3[%c0_335, %c0_336] : memref<128x512xbf16, #tpu.memory_space<vmem>>, vector<128x512xbf16>
    %cst_337 = arith.constant dense<0.000000e+00> : vector<8x512xf32>
    %627 = tpu.matmul %625, %626, %cst_337 {dimension_numbers = #tpu.dot_dimension_numbers<[1], [0], [0], [1], [0, 0, 1, 1], [], []>} : vector<8x128xbf16>, vector<128x512xbf16>, vector<8x512xf32> -> vector<8x512xf32>
    %628 = arith.addf %624, %627 : vector<8x512xf32>
    %629 = vector.extract_strided_slice %628 {offsets = [0, 0], sizes = [8, 128], strides = [1, 1]} : vector<8x512xf32> to vector<8x128xf32>
    %cst_338 = arith.constant 5.000000e-01 : f32
    %630 = vector.broadcast %cst_338 : f32 to vector<8x128xf32>
    %631 = arith.mulf %630, %629 : vector<8x128xf32>
    %632 = math.tanh %631 : vector<8x128xf32>
    %cst_339 = arith.constant 5.000000e-01 : f32
    %633 = vector.broadcast %cst_339 : f32 to vector<8x128xf32>
    %634 = arith.mulf %633, %632 : vector<8x128xf32>
    %cst_340 = arith.constant 5.000000e-01 : f32
    %635 = vector.broadcast %cst_340 : f32 to vector<8x128xf32>
    %636 = arith.addf %634, %635 : vector<8x128xf32>
    %637 = vector.extract_strided_slice %628 {offsets = [0, 128], sizes = [8, 128], strides = [1, 1]} : vector<8x512xf32> to vector<8x128xf32>
    %cst_341 = arith.constant 5.000000e-01 : f32
    %638 = vector.broadcast %cst_341 : f32 to vector<8x128xf32>
    %639 = arith.mulf %638, %637 : vector<8x128xf32>
    %640 = math.tanh %639 : vector<8x128xf32>
    %cst_342 = arith.constant 5.000000e-01 : f32
    %641 = vector.broadcast %cst_342 : f32 to vector<8x128xf32>
    %642 = arith.mulf %641, %640 : vector<8x128xf32>
    %cst_343 = arith.constant 5.000000e-01 : f32
    %643 = vector.broadcast %cst_343 : f32 to vector<8x128xf32>
    %644 = arith.addf %642, %643 : vector<8x128xf32>
    %645 = vector.extract_strided_slice %628 {offsets = [0, 256], sizes = [8, 128], strides = [1, 1]} : vector<8x512xf32> to vector<8x128xf32>
    %646 = math.tanh %645 : vector<8x128xf32>
    %647 = vector.extract_strided_slice %628 {offsets = [0, 384], sizes = [8, 128], strides = [1, 1]} : vector<8x512xf32> to vector<8x128xf32>
    %cst_344 = arith.constant 5.000000e-01 : f32
    %648 = vector.broadcast %cst_344 : f32 to vector<8x128xf32>
    %649 = arith.mulf %648, %647 : vector<8x128xf32>
    %650 = math.tanh %649 : vector<8x128xf32>
    %cst_345 = arith.constant 5.000000e-01 : f32
    %651 = vector.broadcast %cst_345 : f32 to vector<8x128xf32>
    %652 = arith.mulf %651, %650 : vector<8x128xf32>
    %cst_346 = arith.constant 5.000000e-01 : f32
    %653 = vector.broadcast %cst_346 : f32 to vector<8x128xf32>
    %654 = arith.addf %652, %653 : vector<8x128xf32>
    %655 = arith.mulf %644, %619 : vector<8x128xf32>
    %656 = arith.mulf %636, %646 : vector<8x128xf32>
    %657 = arith.addf %655, %656 : vector<8x128xf32>
    %658 = math.tanh %657 : vector<8x128xf32>
    %659 = arith.mulf %654, %658 : vector<8x128xf32>
    %c0_347 = arith.constant 0 : index
    %c0_348 = arith.constant 0 : index
    %660 = vector.load %arg10[%c0_347, %c0_348] : memref<8x128xf32, #tpu.memory_space<vmem>>, vector<8x128xf32>
    tpu.vector_store %arg10[%c0_347, %c0_348], %659 {strides = array<i32>} : memref<8x128xf32, #tpu.memory_space<vmem>>, vector<8x128xf32>,
    %c0_349 = arith.constant 0 : index
    %c0_350 = arith.constant 0 : index
    %661 = vector.load %arg11[%c0_349, %c0_350] : memref<8x128xf32, #tpu.memory_space<vmem>>, vector<8x128xf32>
    tpu.vector_store %arg11[%c0_349, %c0_350], %657 {strides = array<i32>} : memref<8x128xf32, #tpu.memory_space<vmem>>, vector<8x128xf32>,
    %c0_351 = arith.constant 0 : index
    %c13_352 = arith.constant 13 : index
    %c0_353 = arith.constant 0 : index
    %662 = vector.load %arg7[%c0_351, %c13_352, %c0_353] : memref<8x16x128xf32, #tpu.memory_space<vmem>>, vector<8x1x128xf32>
    %663 = vector.shape_cast %662 : vector<8x1x128xf32> to vector<8x128xf32>
    %664 = vector.shape_cast %659 : vector<8x128xf32> to vector<8x1x128xf32>
    tpu.vector_store %arg7[%c0_351, %c13_352, %c0_353], %664 {strides = array<i32>} : memref<8x16x128xf32, #tpu.memory_space<vmem>>, vector<8x1x128xf32>,
    %c0_354 = arith.constant 0 : index
    %c0_355 = arith.constant 0 : index
    %665 = vector.load %arg10[%c0_354, %c0_355] : memref<8x128xf32, #tpu.memory_space<vmem>>, vector<8x128xf32>
    %c0_356 = arith.constant 0 : index
    %c0_357 = arith.constant 0 : index
    %666 = vector.load %arg11[%c0_356, %c0_357] : memref<8x128xf32, #tpu.memory_space<vmem>>, vector<8x128xf32>
    %c0_358 = arith.constant 0 : index
    %c14 = arith.constant 14 : index
    %c0_359 = arith.constant 0 : index
    %667 = vector.load %arg2[%c0_358, %c14, %c0_359] : memref<8x16x512xbf16, #tpu.memory_space<vmem>>, vector<8x1x512xbf16>
    %668 = vector.shape_cast %667 : vector<8x1x512xbf16> to vector<8x512xbf16>
    %669 = arith.extf %668 : vector<8x512xbf16> to vector<8x512xf32>
    %670 = vector.broadcast %3 : vector<1x512xf32> to vector<8x512xf32>
    %671 = arith.addf %669, %670 : vector<8x512xf32>
    %672 = arith.truncf %665 : vector<8x128xf32> to vector<8x128xbf16>
    %c0_360 = arith.constant 0 : index
    %c0_361 = arith.constant 0 : index
    %673 = vector.load %arg3[%c0_360, %c0_361] : memref<128x512xbf16, #tpu.memory_space<vmem>>, vector<128x512xbf16>
    %cst_362 = arith.constant dense<0.000000e+00> : vector<8x512xf32>
    %674 = tpu.matmul %672, %673, %cst_362 {dimension_numbers = #tpu.dot_dimension_numbers<[1], [0], [0], [1], [0, 0, 1, 1], [], []>} : vector<8x128xbf16>, vector<128x512xbf16>, vector<8x512xf32> -> vector<8x512xf32>
    %675 = arith.addf %671, %674 : vector<8x512xf32>
    %676 = vector.extract_strided_slice %675 {offsets = [0, 0], sizes = [8, 128], strides = [1, 1]} : vector<8x512xf32> to vector<8x128xf32>
    %cst_363 = arith.constant 5.000000e-01 : f32
    %677 = vector.broadcast %cst_363 : f32 to vector<8x128xf32>
    %678 = arith.mulf %677, %676 : vector<8x128xf32>
    %679 = math.tanh %678 : vector<8x128xf32>
    %cst_364 = arith.constant 5.000000e-01 : f32
    %680 = vector.broadcast %cst_364 : f32 to vector<8x128xf32>
    %681 = arith.mulf %680, %679 : vector<8x128xf32>
    %cst_365 = arith.constant 5.000000e-01 : f32
    %682 = vector.broadcast %cst_365 : f32 to vector<8x128xf32>
    %683 = arith.addf %681, %682 : vector<8x128xf32>
    %684 = vector.extract_strided_slice %675 {offsets = [0, 128], sizes = [8, 128], strides = [1, 1]} : vector<8x512xf32> to vector<8x128xf32>
    %cst_366 = arith.constant 5.000000e-01 : f32
    %685 = vector.broadcast %cst_366 : f32 to vector<8x128xf32>
    %686 = arith.mulf %685, %684 : vector<8x128xf32>
    %687 = math.tanh %686 : vector<8x128xf32>
    %cst_367 = arith.constant 5.000000e-01 : f32
    %688 = vector.broadcast %cst_367 : f32 to vector<8x128xf32>
    %689 = arith.mulf %688, %687 : vector<8x128xf32>
    %cst_368 = arith.constant 5.000000e-01 : f32
    %690 = vector.broadcast %cst_368 : f32 to vector<8x128xf32>
    %691 = arith.addf %689, %690 : vector<8x128xf32>
    %692 = vector.extract_strided_slice %675 {offsets = [0, 256], sizes = [8, 128], strides = [1, 1]} : vector<8x512xf32> to vector<8x128xf32>
    %693 = math.tanh %692 : vector<8x128xf32>
    %694 = vector.extract_strided_slice %675 {offsets = [0, 384], sizes = [8, 128], strides = [1, 1]} : vector<8x512xf32> to vector<8x128xf32>
    %cst_369 = arith.constant 5.000000e-01 : f32
    %695 = vector.broadcast %cst_369 : f32 to vector<8x128xf32>
    %696 = arith.mulf %695, %694 : vector<8x128xf32>
    %697 = math.tanh %696 : vector<8x128xf32>
    %cst_370 = arith.constant 5.000000e-01 : f32
    %698 = vector.broadcast %cst_370 : f32 to vector<8x128xf32>
    %699 = arith.mulf %698, %697 : vector<8x128xf32>
    %cst_371 = arith.constant 5.000000e-01 : f32
    %700 = vector.broadcast %cst_371 : f32 to vector<8x128xf32>
    %701 = arith.addf %699, %700 : vector<8x128xf32>
    %702 = arith.mulf %691, %666 : vector<8x128xf32>
    %703 = arith.mulf %683, %693 : vector<8x128xf32>
    %704 = arith.addf %702, %703 : vector<8x128xf32>
    %705 = math.tanh %704 : vector<8x128xf32>
    %706 = arith.mulf %701, %705 : vector<8x128xf32>
    %c0_372 = arith.constant 0 : index
    %c0_373 = arith.constant 0 : index
    %707 = vector.load %arg10[%c0_372, %c0_373] : memref<8x128xf32, #tpu.memory_space<vmem>>, vector<8x128xf32>
    tpu.vector_store %arg10[%c0_372, %c0_373], %706 {strides = array<i32>} : memref<8x128xf32, #tpu.memory_space<vmem>>, vector<8x128xf32>,
    %c0_374 = arith.constant 0 : index
    %c0_375 = arith.constant 0 : index
    %708 = vector.load %arg11[%c0_374, %c0_375] : memref<8x128xf32, #tpu.memory_space<vmem>>, vector<8x128xf32>
    tpu.vector_store %arg11[%c0_374, %c0_375], %704 {strides = array<i32>} : memref<8x128xf32, #tpu.memory_space<vmem>>, vector<8x128xf32>,
    %c0_376 = arith.constant 0 : index
    %c14_377 = arith.constant 14 : index
    %c0_378 = arith.constant 0 : index
    %709 = vector.load %arg7[%c0_376, %c14_377, %c0_378] : memref<8x16x128xf32, #tpu.memory_space<vmem>>, vector<8x1x128xf32>
    %710 = vector.shape_cast %709 : vector<8x1x128xf32> to vector<8x128xf32>
    %711 = vector.shape_cast %706 : vector<8x128xf32> to vector<8x1x128xf32>
    tpu.vector_store %arg7[%c0_376, %c14_377, %c0_378], %711 {strides = array<i32>} : memref<8x16x128xf32, #tpu.memory_space<vmem>>, vector<8x1x128xf32>,
    %c0_379 = arith.constant 0 : index
    %c0_380 = arith.constant 0 : index
    %712 = vector.load %arg10[%c0_379, %c0_380] : memref<8x128xf32, #tpu.memory_space<vmem>>, vector<8x128xf32>
    %c0_381 = arith.constant 0 : index
    %c0_382 = arith.constant 0 : index
    %713 = vector.load %arg11[%c0_381, %c0_382] : memref<8x128xf32, #tpu.memory_space<vmem>>, vector<8x128xf32>
    %c0_383 = arith.constant 0 : index
    %c15 = arith.constant 15 : index
    %c0_384 = arith.constant 0 : index
    %714 = vector.load %arg2[%c0_383, %c15, %c0_384] : memref<8x16x512xbf16, #tpu.memory_space<vmem>>, vector<8x1x512xbf16>
    %715 = vector.shape_cast %714 : vector<8x1x512xbf16> to vector<8x512xbf16>
    %716 = arith.extf %715 : vector<8x512xbf16> to vector<8x512xf32>
    %717 = vector.broadcast %3 : vector<1x512xf32> to vector<8x512xf32>
    %718 = arith.addf %716, %717 : vector<8x512xf32>
    %719 = arith.truncf %712 : vector<8x128xf32> to vector<8x128xbf16>
    %c0_385 = arith.constant 0 : index
    %c0_386 = arith.constant 0 : index
    %720 = vector.load %arg3[%c0_385, %c0_386] : memref<128x512xbf16, #tpu.memory_space<vmem>>, vector<128x512xbf16>
    %cst_387 = arith.constant dense<0.000000e+00> : vector<8x512xf32>
    %721 = tpu.matmul %719, %720, %cst_387 {dimension_numbers = #tpu.dot_dimension_numbers<[1], [0], [0], [1], [0, 0, 1, 1], [], []>} : vector<8x128xbf16>, vector<128x512xbf16>, vector<8x512xf32> -> vector<8x512xf32>
    %722 = arith.addf %718, %721 : vector<8x512xf32>
    %723 = vector.extract_strided_slice %722 {offsets = [0, 0], sizes = [8, 128], strides = [1, 1]} : vector<8x512xf32> to vector<8x128xf32>
    %cst_388 = arith.constant 5.000000e-01 : f32
    %724 = vector.broadcast %cst_388 : f32 to vector<8x128xf32>
    %725 = arith.mulf %724, %723 : vector<8x128xf32>
    %726 = math.tanh %725 : vector<8x128xf32>
    %cst_389 = arith.constant 5.000000e-01 : f32
    %727 = vector.broadcast %cst_389 : f32 to vector<8x128xf32>
    %728 = arith.mulf %727, %726 : vector<8x128xf32>
    %cst_390 = arith.constant 5.000000e-01 : f32
    %729 = vector.broadcast %cst_390 : f32 to vector<8x128xf32>
    %730 = arith.addf %728, %729 : vector<8x128xf32>
    %731 = vector.extract_strided_slice %722 {offsets = [0, 128], sizes = [8, 128], strides = [1, 1]} : vector<8x512xf32> to vector<8x128xf32>
    %cst_391 = arith.constant 5.000000e-01 : f32
    %732 = vector.broadcast %cst_391 : f32 to vector<8x128xf32>
    %733 = arith.mulf %732, %731 : vector<8x128xf32>
    %734 = math.tanh %733 : vector<8x128xf32>
    %cst_392 = arith.constant 5.000000e-01 : f32
    %735 = vector.broadcast %cst_392 : f32 to vector<8x128xf32>
    %736 = arith.mulf %735, %734 : vector<8x128xf32>
    %cst_393 = arith.constant 5.000000e-01 : f32
    %737 = vector.broadcast %cst_393 : f32 to vector<8x128xf32>
    %738 = arith.addf %736, %737 : vector<8x128xf32>
    %739 = vector.extract_strided_slice %722 {offsets = [0, 256], sizes = [8, 128], strides = [1, 1]} : vector<8x512xf32> to vector<8x128xf32>
    %740 = math.tanh %739 : vector<8x128xf32>
    %741 = vector.extract_strided_slice %722 {offsets = [0, 384], sizes = [8, 128], strides = [1, 1]} : vector<8x512xf32> to vector<8x128xf32>
    %cst_394 = arith.constant 5.000000e-01 : f32
    %742 = vector.broadcast %cst_394 : f32 to vector<8x128xf32>
    %743 = arith.mulf %742, %741 : vector<8x128xf32>
    %744 = math.tanh %743 : vector<8x128xf32>
    %cst_395 = arith.constant 5.000000e-01 : f32
    %745 = vector.broadcast %cst_395 : f32 to vector<8x128xf32>
    %746 = arith.mulf %745, %744 : vector<8x128xf32>
    %cst_396 = arith.constant 5.000000e-01 : f32
    %747 = vector.broadcast %cst_396 : f32 to vector<8x128xf32>
    %748 = arith.addf %746, %747 : vector<8x128xf32>
    %749 = arith.mulf %738, %713 : vector<8x128xf32>
    %750 = arith.mulf %730, %740 : vector<8x128xf32>
    %751 = arith.addf %749, %750 : vector<8x128xf32>
    %752 = math.tanh %751 : vector<8x128xf32>
    %753 = arith.mulf %748, %752 : vector<8x128xf32>
    %c0_397 = arith.constant 0 : index
    %c0_398 = arith.constant 0 : index
    %754 = vector.load %arg10[%c0_397, %c0_398] : memref<8x128xf32, #tpu.memory_space<vmem>>, vector<8x128xf32>
    tpu.vector_store %arg10[%c0_397, %c0_398], %753 {strides = array<i32>} : memref<8x128xf32, #tpu.memory_space<vmem>>, vector<8x128xf32>,
    %c0_399 = arith.constant 0 : index
    %c0_400 = arith.constant 0 : index
    %755 = vector.load %arg11[%c0_399, %c0_400] : memref<8x128xf32, #tpu.memory_space<vmem>>, vector<8x128xf32>
    tpu.vector_store %arg11[%c0_399, %c0_400], %751 {strides = array<i32>} : memref<8x128xf32, #tpu.memory_space<vmem>>, vector<8x128xf32>,
    %c0_401 = arith.constant 0 : index
    %c15_402 = arith.constant 15 : index
    %c0_403 = arith.constant 0 : index
    %756 = vector.load %arg7[%c0_401, %c15_402, %c0_403] : memref<8x16x128xf32, #tpu.memory_space<vmem>>, vector<8x1x128xf32>
    %757 = vector.shape_cast %756 : vector<8x1x128xf32> to vector<8x128xf32>
    %758 = vector.shape_cast %753 : vector<8x128xf32> to vector<8x1x128xf32>
    tpu.vector_store %arg7[%c0_401, %c15_402, %c0_403], %758 {strides = array<i32>} : memref<8x16x128xf32, #tpu.memory_space<vmem>>, vector<8x1x128xf32>,
    return
  }
  func.func @transform_0(%arg0: i32, %arg1: i32) -> (i32, i32, i32) {
    %c0_i32 = arith.constant 0 : i32
    %c0_i32_0 = arith.constant 0 : i32
    return %arg0, %arg1, %c0_i32 : i32, i32, i32
  }
  func.func @transform_1(%arg0: i32, %arg1: i32) -> (i32, i32) {
    %c0_i32 = arith.constant 0 : i32
    %c0_i32_0 = arith.constant 0 : i32
    %c0_i32_1 = arith.constant 0 : i32
    return %c0_i32, %c0_i32_0 : i32, i32
  }
  func.func @transform_2(%arg0: i32, %arg1: i32) -> (i32, i32) {
    %c0_i32 = arith.constant 0 : i32
    %c0_i32_0 = arith.constant 0 : i32
    %c0_i32_1 = arith.constant 0 : i32
    return %c0_i32, %c0_i32_0 : i32, i32
  }
  func.func @transform_3(%arg0: i32, %arg1: i32) -> (i32, i32) {
    %c0_i32 = arith.constant 0 : i32
    %c0_i32_0 = arith.constant 0 : i32
    return %arg0, %c0_i32 : i32, i32
  }
  func.func @transform_4(%arg0: i32, %arg1: i32) -> (i32, i32) {
    %c0_i32 = arith.constant 0 : i32
    %c0_i32_0 = arith.constant 0 : i32
    return %arg0, %c0_i32 : i32, i32
  }
  func.func @transform_5(%arg0: i32, %arg1: i32) -> (i32, i32, i32) {
    %c0_i32 = arith.constant 0 : i32
    %c0_i32_0 = arith.constant 0 : i32
    return %arg0, %arg1, %c0_i32 : i32, i32, i32
  }
  func.func @transform_6(%arg0: i32, %arg1: i32) -> (i32, i32) {
    %c0_i32 = arith.constant 0 : i32
    %c0_i32_0 = arith.constant 0 : i32
    return %arg0, %c0_i32 : i32, i32
  }
  func.func @transform_7(%arg0: i32, %arg1: i32) -> (i32, i32) {
    %c0_i32 = arith.constant 0 : i32
    %c0_i32_0 = arith.constant 0 : i32
    return %arg0, %c0_i32 : i32, i32
  }
}

</mosaic_0001>

<llo_original>
// kernel: tpu_custom_call.1
$region0: #{tpu_custom_call.1}
  #allocation0 [shape = 'u32[]', space=smem, size = 0x4, offset = 0x4, fixed_abs, tag = 'smem constant byte address 0x4 - core index']
  #allocation1 [shape = 'u32[144,128]{1,0:T(1,128)}', space=vmem, size = 0x12000, scoped, tag = 'internal scratch']
  #allocation2 [shape = 'f32[8,128]{1,0:T(8,128)}', space=vmem, size = 0x1000, scoped, tag = 'scratch operand']
  #allocation3 [shape = 'f32[8,128]{1,0:T(8,128)}', space=vmem, size = 0x1000, scoped, tag = 'scratch operand']
  %s0 = inlined_call_operand.hbm [shape: bf16[8,16,512], index: 0, kind: input, shape index: {}]
  %s1 = inlined_call_operand.hbm [shape: bf16[128,512], index: 1, kind: input, shape index: {}]
  %s2 = inlined_call_operand.hbm [shape: f32[1,512], index: 2, kind: input, shape index: {}]
  %s3 = inlined_call_operand.vmem [shape: f32[8,128], index: 3, kind: input, shape index: {}]
  %s4 = inlined_call_operand.hbm [shape: f32[8,128], index: 4, kind: input, shape index: {}]
  %s5 = inlined_call_operand.hbm [shape: f32[8,16,128], index: 5, kind: output, shape index: {0}]
  %s6 = inlined_call_operand.hbm [shape: f32[8,128], index: 6, kind: output, shape index: {1}]
  %s7 = inlined_call_operand.hbm [shape: f32[8,128], index: 7, kind: output, shape index: {2}]
  %8 = xla_tuple %s5, %s6, %s7
  %s9 = sld [smem:[#allocation0]]
  $region70: #{tpu_custom_call.1} parent=0
    _
  %s11 = ssub.s32 1, %s9
  %s12 = scalar_select 0, %s11, %s9
  $region1: #{tpu_custom_call.1} parent=0
    #allocation4 [shape = 'u8[131072]{0}', space=vmem, size = 0x20000, scoped, tag = 'input window, operand 0, single buffered']
    #allocation5 [shape = 's32[1]{0}', space=sflag, size = 0x4, scoped, tag = 'scoped memory for tpu_custom_call.1']
    #allocation6 [shape = 's32[1]{0}', space=sflag, size = 0x4, scoped, tag = 'scoped memory for tpu_custom_call.1']
    #allocation7 [shape = 'u8[131072]{0}', space=vmem, size = 0x20000, scoped, tag = 'input window, operand 1, single buffered']
    #allocation8 [shape = 's32[1]{0}', space=sflag, size = 0x4, scoped, tag = 'scoped memory for tpu_custom_call.1']
    #allocation9 [shape = 'u8[2048]{0}', space=vmem, size = 0x800, scoped, tag = 'input window, operand 2, single buffered']
    #allocation10 [shape = 'u8[4096]{0}', space=vmem, size = 0x1000, scoped, tag = 'input window, operand 4, single buffered']
    #allocation11 [shape = 's32[1]{0}', space=sflag, size = 0x4, scoped, tag = 'scoped memory for tpu_custom_call.1']
    #allocation12 [shape = 'u8[65536]{0}', space=vmem, size = 0x10000, scoped, tag = 'output window, operand 0, single buffered']
    #allocation13 [shape = 'u8[4096]{0}', space=vmem, size = 0x1000, scoped, tag = 'output window, operand 1, single buffered']
    #allocation14 [shape = 's32[1]{0}', space=sflag, size = 0x4, scoped, tag = 'scoped memory for tpu_custom_call.1']
    #allocation15 [shape = 'u8[4096]{0}', space=vmem, size = 0x1000, scoped, tag = 'output window, operand 2, single buffered']
    %13 = vsyncpa [#allocation5], 0
    %14 = vsyncpa [#allocation8], 0
    %15 = vsyncpa [#allocation11], 0
    %16 = vsyncpa [#allocation6], 0
    %17 = vsyncpa [#allocation14], 0
    // Predicated region
    $region2: #{tpu_custom_call.1} parent=1 // pred_check
      _
    $region3: #{tpu_custom_call.1} parent=1 // pred_check_branch
      %19 = sbr.rel (0) target = $region5
    $region4: #{tpu_custom_call.1} parent=1 // pred_region
      %s21 = ssub.s32 4096, 4096
      %22 = vsyncadd [#allocation5], %s21
      %s23 = sshll.u32 [#allocation4], 4
      %s24 = int_to_ptr.vmem [resolvable:$true] %s23
      %29 = dma.hbm_to_vmem [thread:$0]  %s0, 4096, %s24, [#allocation5], 256, 256, 16
    $region5: #{tpu_custom_call.1} parent=1 // pred_fallthru
      _
    // Predicated region
    $region6: #{tpu_custom_call.1} parent=1 // pred_check
      _
    $region7: #{tpu_custom_call.1} parent=1 // pred_check_branch
      %31 = sbr.rel (0) target = $region9
    $region8: #{tpu_custom_call.1} parent=1 // pred_region
      %s33 = ssub.s32 4096, 4096
      %34 = vsyncadd [#allocation8], %s33
      %s35 = sshll.u32 [#allocation7], 4
      %s36 = int_to_ptr.vmem [resolvable:$true] %s35
      %41 = dma.hbm_to_vmem [thread:$0]  %s1, 4096, %s36, [#allocation8], 256, 256, 16
    $region9: #{tpu_custom_call.1} parent=1 // pred_fallthru
      _
    // Predicated region
    $region10: #{tpu_custom_call.1} parent=1 // pred_check
      _
    $region11: #{tpu_custom_call.1} parent=1 // pred_check_branch
      %43 = sbr.rel (0) target = $region13
    $region12: #{tpu_custom_call.1} parent=1 // pred_region
      %s45 = ssub.s32 64, 64
      %46 = vsyncadd [#allocation8], %s45
      %s48 = sshll.u32 [#allocation9], 4
      %s49 = int_to_ptr.vmem [resolvable:$true] %s48
      %51 = dma.hbm_to_vmem [thread:$0]  %s2, 64, %s49, [#allocation8]
    $region13: #{tpu_custom_call.1} parent=1 // pred_fallthru
      _
    // Predicated region
    $region14: #{tpu_custom_call.1} parent=1 // pred_check
      _
    $region15: #{tpu_custom_call.1} parent=1 // pred_check_branch
      %53 = sbr.rel (0) target = $region17
    $region16: #{tpu_custom_call.1} parent=1 // pred_region
      _
    $region17: #{tpu_custom_call.1} parent=1 // pred_fallthru
      _
    // Predicated region
    $region18: #{tpu_custom_call.1} parent=1 // pred_check
      _
    $region19: #{tpu_custom_call.1} parent=1 // pred_check_branch
      %55 = sbr.rel (0) target = $region21
    $region20: #{tpu_custom_call.1} parent=1 // pred_region
      %s57 = ssub.s32 128, 128
      %58 = vsyncadd [#allocation11], %s57
      %s60 = sshll.u32 [#allocation10], 4
      %s61 = int_to_ptr.vmem [resolvable:$true] %s60
      %63 = dma.hbm_to_vmem [thread:$0]  %s4, 128, %s61, [#allocation11]
    $region21: #{tpu_custom_call.1} parent=1 // pred_fallthru
      _
    // Predicated region
    $region22: #{tpu_custom_call.1} parent=1 // pred_check
      _
    $region23: #{tpu_custom_call.1} parent=1 // pred_check_branch
      %65 = sbr.rel (0) target = $region25
    $region24: #{tpu_custom_call.1} parent=1 // pred_region
      %66 = dma.done [#allocation5], 4096
    $region25: #{tpu_custom_call.1} parent=1 // pred_fallthru
      _
    // Predicated region
    $region26: #{tpu_custom_call.1} parent=1 // pred_check
      _
    $region27: #{tpu_custom_call.1} parent=1 // pred_check_branch
      %68 = sbr.rel (0) target = $region29
    $region28: #{tpu_custom_call.1} parent=1 // pred_region
      %69 = dma.done [#allocation8], 4096
    $region29: #{tpu_custom_call.1} parent=1 // pred_fallthru
      _
    // Predicated region
    $region30: #{tpu_custom_call.1} parent=1 // pred_check
      _
    $region31: #{tpu_custom_call.1} parent=1 // pred_check_branch
      %71 = sbr.rel (0) target = $region33
    $region32: #{tpu_custom_call.1} parent=1 // pred_region
      %72 = dma.done [#allocation8], 64
    $region33: #{tpu_custom_call.1} parent=1 // pred_fallthru
      _
    // Predicated region
    $region34: #{tpu_custom_call.1} parent=1 // pred_check
      _
    $region35: #{tpu_custom_call.1} parent=1 // pred_check_branch
      %74 = sbr.rel (0) target = $region37
    $region36: #{tpu_custom_call.1} parent=1 // pred_region
      %75 = dma.done [#allocation11], 128
    $region37: #{tpu_custom_call.1} parent=1 // pred_fallthru
      _
    %p77 = scmp.eq.s32.totalorder 0, 0
    // Predicated region
    $region38: #{tpu_custom_call.1} parent=1 // pred_check
      %p78 = pneg %p77
    $region39: #{tpu_custom_call.1} parent=1 // pred_check_branch
      %80 = sbr.rel (%p78) target = $region41
    $region40: #{tpu_custom_call.1} parent=1 // pred_region
      %v81 = vld [vmem:[%s3] sm:$0xff]
      %82 = vst [vmem:[#allocation2] sm:$0xff] %v81
      %v83 = vld [vmem:[#allocation10] sm:$0xff]
      %84 = vst [vmem:[#allocation3] sm:$0xff] %v83
    $region41: #{tpu_custom_call.1} parent=1 // pred_fallthru
      _
    %v85 = vld [vmem:[#allocation9] sm:$0xf]
    %v86 = vld [vmem:[#allocation2] sm:$0xff]
    %v87 = vld [vmem:[#allocation3] sm:$0xff]
    %v88 = vld [vmem:[#allocation4] sm:$0x11]
    %v89 = vld [vmem:[#allocation4 + $0x8] sm:$0x11]
    %v90 = vld [vmem:[#allocation4 + $0x20] sm:$0x11]
    %v91 = vld [vmem:[#allocation4 + $0x28] sm:$0x11]
    %v92 = vld [vmem:[#allocation4 + $0x40] sm:$0x11]
    %v93 = vld [vmem:[#allocation4 + $0x48] sm:$0x11]
    %v94 = vld [vmem:[#allocation4 + $0x60] sm:$0x11]
    %v95 = vld [vmem:[#allocation4 + $0x68] sm:$0x11]
    %v96 = vld [vmem:[#allocation4 + $0x80] sm:$0x11]
    %v97 = vld [vmem:[#allocation4 + $0x88] sm:$0x11]
    %v98 = vld [vmem:[#allocation4 + $0xa0] sm:$0x11]
    %v99 = vld [vmem:[#allocation4 + $0xa8] sm:$0x11]
    %v100 = vld [vmem:[#allocation4 + $0xc0] sm:$0x11]
    %v101 = vld [vmem:[#allocation4 + $0xc8] sm:$0x11]
    %v102 = vld [vmem:[#allocation4 + $0xe0] sm:$0x11]
    %v103 = vld [vmem:[#allocation4 + $0xe8] sm:$0x11]
    %v104 = vunpack.c.l.bf16 %v88
    %v105 = vunpack.c.h.bf16 %v88
    %v106 = vunpack.c.l.bf16 %v89
    %v107 = vunpack.c.h.bf16 %v89
    %v108 = vunpack.c.l.bf16 %v90
    %v109 = vunpack.c.h.bf16 %v90
    %v110 = vunpack.c.l.bf16 %v91
    %v111 = vunpack.c.h.bf16 %v91
    %v112 = vunpack.c.l.bf16 %v92
    %v113 = vunpack.c.h.bf16 %v92
    %v114 = vunpack.c.l.bf16 %v93
    %v115 = vunpack.c.h.bf16 %v93
    %v116 = vunpack.c.l.bf16 %v94
    %v117 = vunpack.c.h.bf16 %v94
    %v118 = vunpack.c.l.bf16 %v95
    %v119 = vunpack.c.h.bf16 %v95
    %v120 = vunpack.c.l.bf16 %v96
    %v121 = vunpack.c.h.bf16 %v96
    %v122 = vunpack.c.l.bf16 %v97
    %v123 = vunpack.c.h.bf16 %v97
    %v124 = vunpack.c.l.bf16 %v98
    %v125 = vunpack.c.h.bf16 %v98
    %v126 = vunpack.c.l.bf16 %v99
    %v127 = vunpack.c.h.bf16 %v99
    %v128 = vunpack.c.l.bf16 %v100
    %v129 = vunpack.c.h.bf16 %v100
    %v130 = vunpack.c.l.bf16 %v101
    %v131 = vunpack.c.h.bf16 %v101
    %v132 = vunpack.c.l.bf16 %v102
    %v133 = vunpack.c.h.bf16 %v102
    %v134 = vunpack.c.l.bf16 %v103
    %v135 = vunpack.c.h.bf16 %v103
    %v137 = vlaneseq
    %v138 = vshrl.u32 %v137, 7
    %v139 = vsub.s32 0, %v138
    %v140 = vrot.slane %v85, %v139
    %v141 = vlaneseq
    %v142 = vshrl.u32 %v141, 7
    %v143 = vsub.s32 1, %v142
    %v144 = vrot.slane %v85, %v143
    %v145 = vlaneseq
    %v146 = vshrl.u32 %v145, 7
    %v147 = vsub.s32 2, %v146
    %v148 = vrot.slane %v85, %v147
    %v149 = vlaneseq
    %v150 = vshrl.u32 %v149, 7
    %v151 = vsub.s32 3, %v150
    %v152 = vrot.slane %v85, %v151
    %v157 = vadd.f32 %v104, %v140
    %v158 = vadd.f32 %v105, %v144
    %v159 = vadd.f32 %v106, %v148
    %v160 = vadd.f32 %v107, %v152
    %v161 = vadd.f32 %v108, %v140
    %v162 = vadd.f32 %v109, %v144
    %v163 = vadd.f32 %v110, %v148
    %v164 = vadd.f32 %v111, %v152
    %v165 = vadd.f32 %v112, %v140
    %v166 = vadd.f32 %v113, %v144
    %v167 = vadd.f32 %v114, %v148
    %v168 = vadd.f32 %v115, %v152
    %v169 = vadd.f32 %v116, %v140
    %v170 = vadd.f32 %v117, %v144
    %v171 = vadd.f32 %v118, %v148
    %v172 = vadd.f32 %v119, %v152
    %v173 = vadd.f32 %v120, %v140
    %v174 = vadd.f32 %v121, %v144
    %v175 = vadd.f32 %v122, %v148
    %v176 = vadd.f32 %v123, %v152
    %v177 = vadd.f32 %v124, %v140
    %v178 = vadd.f32 %v125, %v144
    %v179 = vadd.f32 %v126, %v148
    %v180 = vadd.f32 %v127, %v152
    %v181 = vadd.f32 %v128, %v140
    %v182 = vadd.f32 %v129, %v144
    %v183 = vadd.f32 %v130, %v148
    %v184 = vadd.f32 %v131, %v152
    %v185 = vadd.f32 %v132, %v140
    %v186 = vadd.f32 %v133, %v144
    %v187 = vadd.f32 %v134, %v148
    %v188 = vadd.f32 %v135, %v152
    %v189 = vpack.c.bf16 %v86, %v86
    %v190 = vld [vmem:[#allocation7] sm:$0xff]
    %v191 = vld [vmem:[#allocation7 + $0x8] sm:$0xff]
    %v192 = vld [vmem:[#allocation7 + $0x10] sm:$0xff]
    %v193 = vld [vmem:[#allocation7 + $0x18] sm:$0xff]
    %v194 = vld [vmem:[#allocation7 + $0x20] sm:$0xff]
    %v195 = vld [vmem:[#allocation7 + $0x28] sm:$0xff]
    %v196 = vld [vmem:[#allocation7 + $0x30] sm:$0xff]
    %v197 = vld [vmem:[#allocation7 + $0x38] sm:$0xff]
    %v198 = vld [vmem:[#allocation7 + $0x40] sm:$0xff]
    %v199 = vld [vmem:[#allocation7 + $0x48] sm:$0xff]
    %v200 = vld [vmem:[#allocation7 + $0x50] sm:$0xff]
    %v201 = vld [vmem:[#allocation7 + $0x58] sm:$0xff]
    %v202 = vld [vmem:[#allocation7 + $0x60] sm:$0xff]
    %v203 = vld [vmem:[#allocation7 + $0x68] sm:$0xff]
    %v204 = vld [vmem:[#allocation7 + $0x70] sm:$0xff]
    %v205 = vld [vmem:[#allocation7 + $0x78] sm:$0xff]
    %v206 = vld [vmem:[#allocation7 + $0x80] sm:$0xff]
    %v207 = vld [vmem:[#allocation7 + $0x88] sm:$0xff]
    %v208 = vld [vmem:[#allocation7 + $0x90] sm:$0xff]
    %v209 = vld [vmem:[#allocation7 + $0x98] sm:$0xff]
    %v210 = vld [vmem:[#allocation7 + $0xa0] sm:$0xff]
    %v211 = vld [vmem:[#allocation7 + $0xa8] sm:$0xff]
    %v212 = vld [vmem:[#allocation7 + $0xb0] sm:$0xff]
    %v213 = vld [vmem:[#allocation7 + $0xb8] sm:$0xff]
    %v214 = vld [vmem:[#allocation7 + $0xc0] sm:$0xff]
    %v215 = vld [vmem:[#allocation7 + $0xc8] sm:$0xff]
    %v216 = vld [vmem:[#allocation7 + $0xd0] sm:$0xff]
    %v217 = vld [vmem:[#allocation7 + $0xd8] sm:$0xff]
    %v218 = vld [vmem:[#allocation7 + $0xe0] sm:$0xff]
    %v219 = vld [vmem:[#allocation7 + $0xe8] sm:$0xff]
    %v220 = vld [vmem:[#allocation7 + $0xf0] sm:$0xff]
    %v221 = vld [vmem:[#allocation7 + $0xf8] sm:$0xff]
    %v254 = vunpack.c.l.b16 %v190
    %v255 = vunpack.c.h.b16 %v190
    %v256 = vunpack.c.l.b16 %v191
    %v257 = vunpack.c.h.b16 %v191
    %v258 = vunpack.c.l.b16 %v192
    %v259 = vunpack.c.h.b16 %v192
    %v260 = vunpack.c.l.b16 %v193
    %v261 = vunpack.c.h.b16 %v193
    %v262 = vunpack.c.l.b16 %v194
    %v263 = vunpack.c.h.b16 %v194
    %v264 = vunpack.c.l.b16 %v195
    %v265 = vunpack.c.h.b16 %v195
    %v266 = vunpack.c.l.b16 %v196
    %v267 = vunpack.c.h.b16 %v196
    %v268 = vunpack.c.l.b16 %v197
    %v269 = vunpack.c.h.b16 %v197
    %v270 = vunpack.c.l.b16 %v198
    %v271 = vunpack.c.h.b16 %v198
    %v272 = vunpack.c.l.b16 %v199
    %v273 = vunpack.c.h.b16 %v199
    %v274 = vunpack.c.l.b16 %v200
    %v275 = vunpack.c.h.b16 %v200
    %v276 = vunpack.c.l.b16 %v201
    %v277 = vunpack.c.h.b16 %v201
    %v278 = vunpack.c.l.b16 %v202
    %v279 = vunpack.c.h.b16 %v202
    %v280 = vunpack.c.l.b16 %v203
    %v281 = vunpack.c.h.b16 %v203
    %v282 = vunpack.c.l.b16 %v204
    %v283 = vunpack.c.h.b16 %v204
    %v284 = vunpack.c.l.b16 %v205
    %v285 = vunpack.c.h.b16 %v205
    %v286 = vunpack.c.l.b16 %v206
    %v287 = vunpack.c.h.b16 %v206
    %v288 = vunpack.c.l.b16 %v207
    %v289 = vunpack.c.h.b16 %v207
    %v290 = vunpack.c.l.b16 %v208
    %v291 = vunpack.c.h.b16 %v208
    %v292 = vunpack.c.l.b16 %v209
    %v293 = vunpack.c.h.b16 %v209
    %v294 = vunpack.c.l.b16 %v210
    %v295 = vunpack.c.h.b16 %v210
    %v296 = vunpack.c.l.b16 %v211
    %v297 = vunpack.c.h.b16 %v211
    %v298 = vunpack.c.l.b16 %v212
    %v299 = vunpack.c.h.b16 %v212
    %v300 = vunpack.c.l.b16 %v213
    %v301 = vunpack.c.h.b16 %v213
    %v302 = vunpack.c.l.b16 %v214
    %v303 = vunpack.c.h.b16 %v214
    %v304 = vunpack.c.l.b16 %v215
    %v305 = vunpack.c.h.b16 %v215
    %v306 = vunpack.c.l.b16 %v216
    %v307 = vunpack.c.h.b16 %v216
    %v308 = vunpack.c.l.b16 %v217
    %v309 = vunpack.c.h.b16 %v217
    %v310 = vunpack.c.l.b16 %v218
    %v311 = vunpack.c.h.b16 %v218
    %v312 = vunpack.c.l.b16 %v219
    %v313 = vunpack.c.h.b16 %v219
    %v314 = vunpack.c.l.b16 %v220
    %v315 = vunpack.c.h.b16 %v220
    %v316 = vunpack.c.l.b16 %v221
    %v317 = vunpack.c.h.b16 %v221
    %v318 = vpack.c.b16 %v258, %v254
    %v319 = vpack.c.b16 %v259, %v255
    %v320 = vpack.c.b16 %v260, %v256
    %v321 = vpack.c.b16 %v261, %v257
    %v322 = vpack.c.b16 %v266, %v262
    %v323 = vpack.c.b16 %v267, %v263
    %v324 = vpack.c.b16 %v268, %v264
    %v325 = vpack.c.b16 %v269, %v265
    %v326 = vpack.c.b16 %v274, %v270
    %v327 = vpack.c.b16 %v275, %v271
    %v328 = vpack.c.b16 %v276, %v272
    %v329 = vpack.c.b16 %v277, %v273
    %v330 = vpack.c.b16 %v282, %v278
    %v331 = vpack.c.b16 %v283, %v279
    %v332 = vpack.c.b16 %v284, %v280
    %v333 = vpack.c.b16 %v285, %v281
    %v334 = vpack.c.b16 %v290, %v286
    %v335 = vpack.c.b16 %v291, %v287
    %v336 = vpack.c.b16 %v292, %v288
    %v337 = vpack.c.b16 %v293, %v289
    %v338 = vpack.c.b16 %v298, %v294
    %v339 = vpack.c.b16 %v299, %v295
    %v340 = vpack.c.b16 %v300, %v296
    %v341 = vpack.c.b16 %v301, %v297
    %v342 = vpack.c.b16 %v306, %v302
    %v343 = vpack.c.b16 %v307, %v303
    %v344 = vpack.c.b16 %v308, %v304
    %v345 = vpack.c.b16 %v309, %v305
    %v346 = vpack.c.b16 %v314, %v310
    %v347 = vpack.c.b16 %v315, %v311
    %v348 = vpack.c.b16 %v316, %v312
    %v349 = vpack.c.b16 %v317, %v313
    %382 = vmatprep.subr.bf16.mxu0 %v319
    %383 = vmatpush1.bf16.msra.mxu0 %v318
    %384 = vmatprep.subr.bf16.mxu0 %v323
    %385 = vmatpush1.bf16.msra.mxu0 %v322
    %386 = vmatprep.subr.bf16.mxu0 %v327
    %387 = vmatpush1.bf16.msra.mxu0 %v326
    %388 = vmatprep.subr.bf16.mxu0 %v331
    %389 = vmatpush1.bf16.msra.mxu0 %v330
    %390 = vmatprep.subr.bf16.mxu0 %v335
    %391 = vmatpush1.bf16.msra.mxu0 %v334
    %392 = vmatprep.subr.bf16.mxu0 %v339
    %393 = vmatpush1.bf16.msra.mxu0 %v338
    %394 = vmatprep.subr.bf16.mxu0 %v343
    %395 = vmatpush1.bf16.msra.mxu0 %v342
    %396 = vmatprep.subr.bf16.mxu0 %v347
    %397 = vmatpush1.bf16.msra.mxu0 %v346
    %398 = vmatprep.subr.bf16.mxu0 0
    %399 = vmatpush1.bf16.msra.mxu0 0
    %400 = vmatprep.subr.bf16.mxu0 0
    %401 = vmatpush1.bf16.msra.mxu0 0
    %402 = vmatprep.subr.bf16.mxu0 0
    %403 = vmatpush1.bf16.msra.mxu0 0
    %404 = vmatprep.subr.bf16.mxu0 0
    %405 = vmatpush1.bf16.msra.mxu0 0
    %406 = vmatprep.subr.bf16.mxu0 0
    %407 = vmatpush1.bf16.msra.mxu0 0
    %408 = vmatprep.subr.bf16.mxu0 0
    %409 = vmatpush1.bf16.msra.mxu0 0
    %410 = vmatprep.subr.bf16.mxu0 0
    %411 = vmatpush1.bf16.msra.mxu0 0
    %412 = vmatprep.subr.bf16.mxu0 0
    %413 = vmatpush1.bf16.msra.mxu0 0
    %414 = vmatprep.mubr.bf16.mxu0 0
    %415 = vmatmul.mubr.bf16.gmra.mrb[0].mxu0 %v189
    %v416 = vpop.f32.mrb[0].mxu0
    %v417 = vadd.f32 0.0, %v416
    %v418 = vpop.f32.mrb[0].mxu0
    %v419 = vadd.f32 0.0, %v418
    %v420 = vpop.f32.mrb[0].mxu0
    %v421 = vpop.f32.mrb[0].mxu0
    %422 = vdwg.mxu0
    %423 = vmatprep.subr.bf16.mxu0 %v321
    %424 = vmatpush1.bf16.msra.mxu0 %v320
    %425 = vmatprep.subr.bf16.mxu0 %v325
    %426 = vmatpush1.bf16.msra.mxu0 %v324
    %427 = vmatprep.subr.bf16.mxu0 %v329
    %428 = vmatpush1.bf16.msra.mxu0 %v328
    %429 = vmatprep.subr.bf16.mxu0 %v333
    %430 = vmatpush1.bf16.msra.mxu0 %v332
    %431 = vmatprep.subr.bf16.mxu0 %v337
    %432 = vmatpush1.bf16.msra.mxu0 %v336
    %433 = vmatprep.subr.bf16.mxu0 %v341
    %434 = vmatpush1.bf16.msra.mxu0 %v340
    %435 = vmatprep.subr.bf16.mxu0 %v345
    %436 = vmatpush1.bf16.msra.mxu0 %v344
    %437 = vmatprep.subr.bf16.mxu0 %v349
    %438 = vmatpush1.bf16.msra.mxu0 %v348
    %439 = vmatprep.subr.bf16.mxu0 0
    %440 = vmatpush1.bf16.msra.mxu0 0
    %441 = vmatprep.subr.bf16.mxu0 0
    %442 = vmatpush1.bf16.msra.mxu0 0
    %443 = vmatprep.subr.bf16.mxu0 0
    %444 = vmatpush1.bf16.msra.mxu0 0
    %445 = vmatprep.subr.bf16.mxu0 0
    %446 = vmatpush1.bf16.msra.mxu0 0
    %447 = vmatprep.subr.bf16.mxu0 0
    %448 = vmatpush1.bf16.msra.mxu0 0
    %449 = vmatprep.subr.bf16.mxu0 0
    %450 = vmatpush1.bf16.msra.mxu0 0
    %451 = vmatprep.subr.bf16.mxu0 0
    %452 = vmatpush1.bf16.msra.mxu0 0
    %453 = vmatprep.subr.bf16.mxu0 0
    %454 = vmatpush1.bf16.msra.mxu0 0
    %455 = vmatprep.mubr.bf16.mxu0 0
    %456 = vmatmul.mubr.bf16.gmra.mrb[0].mxu0 %v189
    %v457 = vpop.f32.mrb[0].mxu0
    %v458 = vadd.f32 0.0, %v457
    %v459 = vpop.f32.mrb[0].mxu0
    %v460 = vadd.f32 0.0, %v459
    %v461 = vpop.f32.mrb[0].mxu0
    %v462 = vpop.f32.mrb[0].mxu0
    %463 = vdwg.mxu0
    %v468 = vrot.slane %v417, 1
    %v469 = vrot.slane %v419, 1
    %v470 = vrot.slane %v458, 1
    %v471 = vrot.slane %v460, 1
    %v472 = vrot.slane %v417, 2
    %v473 = vrot.slane %v419, 2
    %v474 = vrot.slane %v458, 2
    %v475 = vrot.slane %v460, 2
    %v476 = vrot.slane %v417, 3
    %v477 = vrot.slane %v419, 3
    %v478 = vrot.slane %v458, 3
    %v479 = vrot.slane %v460, 3
    %v480 = vrot.slane %v417, 4
    %v481 = vrot.slane %v419, 4
    %v482 = vrot.slane %v458, 4
    %v483 = vrot.slane %v460, 4
    %v484 = vrot.slane %v417, 5
    %v485 = vrot.slane %v419, 5
    %v486 = vrot.slane %v458, 5
    %v487 = vrot.slane %v460, 5
    %v488 = vrot.slane %v417, 6
    %v489 = vrot.slane %v419, 6
    %v490 = vrot.slane %v458, 6
    %v491 = vrot.slane %v460, 6
    %v492 = vrot.slane %v417, 7
    %v493 = vrot.slane %v419, 7
    %v494 = vrot.slane %v458, 7
    %v495 = vrot.slane %v460, 7
    %v528 = vadd.f32 %v157, %v417
    %v529 = vadd.f32 %v158, %v419
    %v530 = vadd.f32 %v159, %v458
    %v531 = vadd.f32 %v160, %v460
    %v532 = vadd.f32 %v161, %v468
    %v533 = vadd.f32 %v162, %v469
    %v534 = vadd.f32 %v163, %v470
    %v535 = vadd.f32 %v164, %v471
    %v536 = vadd.f32 %v165, %v472
    %v537 = vadd.f32 %v166, %v473
    %v538 = vadd.f32 %v167, %v474
    %v539 = vadd.f32 %v168, %v475
    %v540 = vadd.f32 %v169, %v476
    %v541 = vadd.f32 %v170, %v477
    %v542 = vadd.f32 %v171, %v478
    %v543 = vadd.f32 %v172, %v479
    %v544 = vadd.f32 %v173, %v480
    %v545 = vadd.f32 %v174, %v481
    %v546 = vadd.f32 %v175, %v482
    %v547 = vadd.f32 %v176, %v483
    %v548 = vadd.f32 %v177, %v484
    %v549 = vadd.f32 %v178, %v485
    %v550 = vadd.f32 %v179, %v486
    %v551 = vadd.f32 %v180, %v487
    %v552 = vadd.f32 %v181, %v488
    %v553 = vadd.f32 %v182, %v489
    %v554 = vadd.f32 %v183, %v490
    %v555 = vadd.f32 %v184, %v491
    %v556 = vadd.f32 %v185, %v492
    %v557 = vadd.f32 %v186, %v493
    %v558 = vadd.f32 %v187, %v494
    %v559 = vadd.f32 %v188, %v495
    %v560 = vmul.f32 %v528, 0.5
    %v561 = vmul.f32 %v532, 0.5
    %v562 = vmul.f32 %v536, 0.5
    %v563 = vmul.f32 %v540, 0.5
    %v564 = vmul.f32 %v544, 0.5
    %v565 = vmul.f32 %v548, 0.5
    %v566 = vmul.f32 %v552, 0.5
    %v567 = vmul.f32 %v556, 0.5
    %v568 = vtanh.pop %v560
    %v569 = vtanh.pop %v561
    %v570 = vtanh.pop %v562
    %v571 = vtanh.pop %v563
    %v572 = vtanh.pop %v564
    %v573 = vtanh.pop %v565
    %v574 = vtanh.pop %v566
    %v575 = vtanh.pop %v567
    %v576 = vmul.f32 %v568, 0.5
    %v577 = vmul.f32 %v569, 0.5
    %v578 = vmul.f32 %v570, 0.5
    %v579 = vmul.f32 %v571, 0.5
    %v580 = vmul.f32 %v572, 0.5
    %v581 = vmul.f32 %v573, 0.5
    %v582 = vmul.f32 %v574, 0.5
    %v583 = vmul.f32 %v575, 0.5
    %v584 = vadd.f32 %v576, 0.5
    %v585 = vadd.f32 %v577, 0.5
    %v586 = vadd.f32 %v578, 0.5
    %v587 = vadd.f32 %v579, 0.5
    %v588 = vadd.f32 %v580, 0.5
    %v589 = vadd.f32 %v581, 0.5
    %v590 = vadd.f32 %v582, 0.5
    %v591 = vadd.f32 %v583, 0.5
    %v592 = vmul.f32 %v529, 0.5
    %v593 = vmul.f32 %v533, 0.5
    %v594 = vmul.f32 %v537, 0.5
    %v595 = vmul.f32 %v541, 0.5
    %v596 = vmul.f32 %v545, 0.5
    %v597 = vmul.f32 %v549, 0.5
    %v598 = vmul.f32 %v553, 0.5
    %v599 = vmul.f32 %v557, 0.5
    %v600 = vtanh.pop %v592
    %v601 = vtanh.pop %v593
    %v602 = vtanh.pop %v594
    %v603 = vtanh.pop %v595
    %v604 = vtanh.pop %v596
    %v605 = vtanh.pop %v597
    %v606 = vtanh.pop %v598
    %v607 = vtanh.pop %v599
    %v608 = vmul.f32 %v600, 0.5
    %v609 = vmul.f32 %v601, 0.5
    %v610 = vmul.f32 %v602, 0.5
    %v611 = vmul.f32 %v603, 0.5
    %v612 = vmul.f32 %v604, 0.5
    %v613 = vmul.f32 %v605, 0.5
    %v614 = vmul.f32 %v606, 0.5
    %v615 = vmul.f32 %v607, 0.5
    %v616 = vadd.f32 %v608, 0.5
    %v617 = vadd.f32 %v609, 0.5
    %v618 = vadd.f32 %v610, 0.5
    %v619 = vadd.f32 %v611, 0.5
    %v620 = vadd.f32 %v612, 0.5
    %v621 = vadd.f32 %v613, 0.5
    %v622 = vadd.f32 %v614, 0.5
    %v623 = vadd.f32 %v615, 0.5
    %v624 = vtanh.pop %v530
    %v625 = vtanh.pop %v534
    %v626 = vtanh.pop %v538
    %v627 = vtanh.pop %v542
    %v628 = vtanh.pop %v546
    %v629 = vtanh.pop %v550
    %v630 = vtanh.pop %v554
    %v631 = vtanh.pop %v558
    %v632 = vmul.f32 %v531, 0.5
    %v633 = vmul.f32 %v535, 0.5
    %v634 = vmul.f32 %v539, 0.5
    %v635 = vmul.f32 %v543, 0.5
    %v636 = vmul.f32 %v547, 0.5
    %v637 = vmul.f32 %v551, 0.5
    %v638 = vmul.f32 %v555, 0.5
    %v639 = vmul.f32 %v559, 0.5
    %v640 = vtanh.pop %v632
    %v641 = vtanh.pop %v633
    %v642 = vtanh.pop %v634
    %v643 = vtanh.pop %v635
    %v644 = vtanh.pop %v636
    %v645 = vtanh.pop %v637
    %v646 = vtanh.pop %v638
    %v647 = vtanh.pop %v639
    %v648 = vmul.f32 %v640, 0.5
    %v649 = vmul.f32 %v641, 0.5
    %v650 = vmul.f32 %v642, 0.5
    %v651 = vmul.f32 %v643, 0.5
    %v652 = vmul.f32 %v644, 0.5
    %v653 = vmul.f32 %v645, 0.5
    %v654 = vmul.f32 %v646, 0.5
    %v655 = vmul.f32 %v647, 0.5
    %v656 = vadd.f32 %v648, 0.5
    %v657 = vadd.f32 %v649, 0.5
    %v658 = vadd.f32 %v650, 0.5
    %v659 = vadd.f32 %v651, 0.5
    %v660 = vadd.f32 %v652, 0.5
    %v661 = vadd.f32 %v653, 0.5
    %v662 = vadd.f32 %v654, 0.5
    %v663 = vadd.f32 %v655, 0.5
    %v665 = vrot.slane %v87, 1
    %v666 = vrot.slane %v87, 2
    %v667 = vrot.slane %v87, 3
    %v668 = vrot.slane %v87, 4
    %v669 = vrot.slane %v87, 5
    %v670 = vrot.slane %v87, 6
    %v671 = vrot.slane %v87, 7
    %v680 = vmul.f32 %v616, %v87
    %v681 = vmul.f32 %v617, %v665
    %v682 = vmul.f32 %v618, %v666
    %v683 = vmul.f32 %v619, %v667
    %v684 = vmul.f32 %v620, %v668
    %v685 = vmul.f32 %v621, %v669
    %v686 = vmul.f32 %v622, %v670
    %v687 = vmul.f32 %v623, %v671
    %v688 = vmul.f32 %v584, %v624
    %v689 = vmul.f32 %v585, %v625
    %v690 = vmul.f32 %v586, %v626
    %v691 = vmul.f32 %v587, %v627
    %v692 = vmul.f32 %v588, %v628
    %v693 = vmul.f32 %v589, %v629
    %v694 = vmul.f32 %v590, %v630
    %v695 = vmul.f32 %v591, %v631
    %v696 = vadd.f32 %v680, %v688
    %v697 = vadd.f32 %v681, %v689
    %v698 = vadd.f32 %v682, %v690
    %v699 = vadd.f32 %v683, %v691
    %v700 = vadd.f32 %v684, %v692
    %v701 = vadd.f32 %v685, %v693
    %v702 = vadd.f32 %v686, %v694
    %v703 = vadd.f32 %v687, %v695
    %v704 = vtanh.pop %v696
    %v705 = vtanh.pop %v697
    %v706 = vtanh.pop %v698
    %v707 = vtanh.pop %v699
    %v708 = vtanh.pop %v700
    %v709 = vtanh.pop %v701
    %v710 = vtanh.pop %v702
    %v711 = vtanh.pop %v703
    %v712 = vmul.f32 %v656, %v704
    %v713 = vmul.f32 %v657, %v705
    %v714 = vmul.f32 %v658, %v706
    %v715 = vmul.f32 %v659, %v707
    %v716 = vmul.f32 %v660, %v708
    %v717 = vmul.f32 %v661, %v709
    %v718 = vmul.f32 %v662, %v710
    %v719 = vmul.f32 %v663, %v711
    %v728 = vrot.slane %v713, 7
    %vm729 = vcmask 1041409
    %v730 = vsel %vm729, %v728, %v712
    %v731 = vrot.slane %v714, 6
    %vm732 = vcmask 1042434
    %v733 = vsel %vm732, %v731, %v730
    %v734 = vrot.slane %v715, 5
    %vm735 = vcmask 1043459
    %v736 = vsel %vm735, %v734, %v733
    %v737 = vrot.slane %v716, 4
    %vm738 = vcmask 1044484
    %v739 = vsel %vm738, %v737, %v736
    %v740 = vrot.slane %v717, 3
    %vm741 = vcmask 1045509
    %v742 = vsel %vm741, %v740, %v739
    %v743 = vrot.slane %v718, 2
    %vm744 = vcmask 1046534
    %v745 = vsel %vm744, %v743, %v742
    %v746 = vrot.slane %v719, 1
    %vm747 = vcmask 1047559
    %v748 = vsel %vm747, %v746, %v745
    %750 = vst [vmem:[#allocation2] sm:$0xff] %v748
    %v759 = vrot.slane %v697, 7
    %v760 = vsel %vm729, %v759, %v696
    %v761 = vrot.slane %v698, 6
    %v762 = vsel %vm732, %v761, %v760
    %v763 = vrot.slane %v699, 5
    %v764 = vsel %vm735, %v763, %v762
    %v765 = vrot.slane %v700, 4
    %v766 = vsel %vm738, %v765, %v764
    %v767 = vrot.slane %v701, 3
    %v768 = vsel %vm741, %v767, %v766
    %v769 = vrot.slane %v702, 2
    %v770 = vsel %vm744, %v769, %v768
    %v771 = vrot.slane %v703, 1
    %v772 = vsel %vm747, %v771, %v770
    %774 = vst [vmem:[#allocation3] sm:$0xff] %v772
    %775 = vst [vmem:[#allocation12] sm:$0x1] %v712
    %776 = vst [vmem:[#allocation12 + $0x10] sm:$0x1] %v713
    %777 = vst [vmem:[#allocation12 + $0x20] sm:$0x1] %v714
    %778 = vst [vmem:[#allocation12 + $0x30] sm:$0x1] %v715
    %779 = vst [vmem:[#allocation12 + $0x40] sm:$0x1] %v716
    %780 = vst [vmem:[#allocation12 + $0x50] sm:$0x1] %v717
    %781 = vst [vmem:[#allocation12 + $0x60] sm:$0x1] %v718
    %782 = vst [vmem:[#allocation12 + $0x70] sm:$0x1] %v719
    %v783 = vld [vmem:[#allocation2] sm:$0xff]
    %v784 = vld [vmem:[#allocation3] sm:$0xff]
    %v785 = vld [vmem:[#allocation4] sm:$0x11]
    %v786 = vld [vmem:[#allocation4 + $0x8] sm:$0x11]
    %v787 = vld [vmem:[#allocation4 + $0x20] sm:$0x11]
    %v788 = vld [vmem:[#allocation4 + $0x28] sm:$0x11]
    %v789 = vld [vmem:[#allocation4 + $0x40] sm:$0x11]
    %v790 = vld [vmem:[#allocation4 + $0x48] sm:$0x11]
    %v791 = vld [vmem:[#allocation4 + $0x60] sm:$0x11]
    %v792 = vld [vmem:[#allocation4 + $0x68] sm:$0x11]
    %v793 = vld [vmem:[#allocation4 + $0x80] sm:$0x11]
    %v794 = vld [vmem:[#allocation4 + $0x88] sm:$0x11]
    %v795 = vld [vmem:[#allocation4 + $0xa0] sm:$0x11]
    %v796 = vld [vmem:[#allocation4 + $0xa8] sm:$0x11]
    %v797 = vld [vmem:[#allocation4 + $0xc0] sm:$0x11]
    %v798 = vld [vmem:[#allocation4 + $0xc8] sm:$0x11]
    %v799 = vld [vmem:[#allocation4 + $0xe0] sm:$0x11]
    %v800 = vld [vmem:[#allocation4 + $0xe8] sm:$0x11]
    %v801 = vunpack.c.l.bf16 %v785
    %v802 = vunpack.c.h.bf16 %v785
    %v803 = vunpack.c.l.bf16 %v786
    %v804 = vunpack.c.h.bf16 %v786
    %v805 = vunpack.c.l.bf16 %v787
    %v806 = vunpack.c.h.bf16 %v787
    %v807 = vunpack.c.l.bf16 %v788
    %v808 = vunpack.c.h.bf16 %v788
    %v809 = vunpack.c.l.bf16 %v789
    %v810 = vunpack.c.h.bf16 %v789
    %v811 = vunpack.c.l.bf16 %v790
    %v812 = vunpack.c.h.bf16 %v790
    %v813 = vunpack.c.l.bf16 %v791
    %v814 = vunpack.c.h.bf16 %v791
    %v815 = vunpack.c.l.bf16 %v792
    %v816 = vunpack.c.h.bf16 %v792
    %v817 = vunpack.c.l.bf16 %v793
    %v818 = vunpack.c.h.bf16 %v793
    %v819 = vunpack.c.l.bf16 %v794
    %v820 = vunpack.c.h.bf16 %v794
    %v821 = vunpack.c.l.bf16 %v795
    %v822 = vunpack.c.h.bf16 %v795
    %v823 = vunpack.c.l.bf16 %v796
    %v824 = vunpack.c.h.bf16 %v796
    %v825 = vunpack.c.l.bf16 %v797
    %v826 = vunpack.c.h.bf16 %v797
    %v827 = vunpack.c.l.bf16 %v798
    %v828 = vunpack.c.h.bf16 %v798
    %v829 = vunpack.c.l.bf16 %v799
    %v830 = vunpack.c.h.bf16 %v799
    %v831 = vunpack.c.l.bf16 %v800
    %v832 = vunpack.c.h.bf16 %v800
    %v833 = vadd.f32 %v801, %v140
    %v834 = vadd.f32 %v802, %v144
    %v835 = vadd.f32 %v803, %v148
    %v836 = vadd.f32 %v804, %v152
    %v837 = vadd.f32 %v805, %v140
    %v838 = vadd.f32 %v806, %v144
    %v839 = vadd.f32 %v807, %v148
    %v840 = vadd.f32 %v808, %v152
    %v841 = vadd.f32 %v809, %v140
    %v842 = vadd.f32 %v810, %v144
    %v843 = vadd.f32 %v811, %v148
    %v844 = vadd.f32 %v812, %v152
    %v845 = vadd.f32 %v813, %v140
    %v846 = vadd.f32 %v814, %v144
    %v847 = vadd.f32 %v815, %v148
    %v848 = vadd.f32 %v816, %v152
    %v849 = vadd.f32 %v817, %v140
    %v850 = vadd.f32 %v818, %v144
    %v851 = vadd.f32 %v819, %v148
    %v852 = vadd.f32 %v820, %v152
    %v853 = vadd.f32 %v821, %v140
    %v854 = vadd.f32 %v822, %v144
    %v855 = vadd.f32 %v823, %v148
    %v856 = vadd.f32 %v824, %v152
    %v857 = vadd.f32 %v825, %v140
    %v858 = vadd.f32 %v826, %v144
    %v859 = vadd.f32 %v827, %v148
    %v860 = vadd.f32 %v828, %v152
    %v861 = vadd.f32 %v829, %v140
    %v862 = vadd.f32 %v830, %v144
    %v863 = vadd.f32 %v831, %v148
    %v864 = vadd.f32 %v832, %v152
    %v865 = vpack.c.bf16 %v783, %v783
    %v866 = vld [vmem:[#allocation7] sm:$0xff]
    %v867 = vld [vmem:[#allocation7 + $0x8] sm:$0xff]
    %v868 = vld [vmem:[#allocation7 + $0x10] sm:$0xff]
    %v869 = vld [vmem:[#allocation7 + $0x18] sm:$0xff]
    %v870 = vld [vmem:[#allocation7 + $0x20] sm:$0xff]
    %v871 = vld [vmem:[#allocation7 + $0x28] sm:$0xff]
    %v872 = vld [vmem:[#allocation7 + $0x30] sm:$0xff]
    %v873 = vld [vmem:[#allocation7 + $0x38] sm:$0xff]
    %v874 = vld [vmem:[#allocation7 + $0x40] sm:$0xff]
    %v875 = vld [vmem:[#allocation7 + $0x48] sm:$0xff]
    %v876 = vld [vmem:[#allocation7 + $0x50] sm:$0xff]
    %v877 = vld [vmem:[#allocation7 + $0x58] sm:$0xff]
    %v878 = vld [vmem:[#allocation7 + $0x60] sm:$0xff]
    %v879 = vld [vmem:[#allocation7 + $0x68] sm:$0xff]
    %v880 = vld [vmem:[#allocation7 + $0x70] sm:$0xff]
    %v881 = vld [vmem:[#allocation7 + $0x78] sm:$0xff]
    %v882 = vld [vmem:[#allocation7 + $0x80] sm:$0xff]
    %v883 = vld [vmem:[#allocation7 + $0x88] sm:$0xff]
    %v884 = vld [vmem:[#allocation7 + $0x90] sm:$0xff]
    %v885 = vld [vmem:[#allocation7 + $0x98] sm:$0xff]
    %v886 = vld [vmem:[#allocation7 + $0xa0] sm:$0xff]
    %v887 = vld [vmem:[#allocation7 + $0xa8] sm:$0xff]
    %v888 = vld [vmem:[#allocation7 + $0xb0] sm:$0xff]
    %v889 = vld [vmem:[#allocation7 + $0xb8] sm:$0xff]
    %v890 = vld [vmem:[#allocation7 + $0xc0] sm:$0xff]
    %v891 = vld [vmem:[#allocation7 + $0xc8] sm:$0xff]
    %v892 = vld [vmem:[#allocation7 + $0xd0] sm:$0xff]
    %v893 = vld [vmem:[#allocation7 + $0xd8] sm:$0xff]
    %v894 = vld [vmem:[#allocation7 + $0xe0] sm:$0xff]
    %v895 = vld [vmem:[#allocation7 + $0xe8] sm:$0xff]
    %v896 = vld [vmem:[#allocation7 + $0xf0] sm:$0xff]
    %v897 = vld [vmem:[#allocation7 + $0xf8] sm:$0xff]
    %v930 = vunpack.c.l.b16 %v866
    %v931 = vunpack.c.h.b16 %v866
    %v932 = vunpack.c.l.b16 %v867
    %v933 = vunpack.c.h.b16 %v867
    %v934 = vunpack.c.l.b16 %v868
    %v935 = vunpack.c.h.b16 %v868
    %v936 = vunpack.c.l.b16 %v869
    %v937 = vunpack.c.h.b16 %v869
    %v938 = vunpack.c.l.b16 %v870
    %v939 = vunpack.c.h.b16 %v870
    %v940 = vunpack.c.l.b16 %v871
    %v941 = vunpack.c.h.b16 %v871
    %v942 = vunpack.c.l.b16 %v872
    %v943 = vunpack.c.h.b16 %v872
    %v944 = vunpack.c.l.b16 %v873
    %v945 = vunpack.c.h.b16 %v873
    %v946 = vunpack.c.l.b16 %v874
    %v947 = vunpack.c.h.b16 %v874
    %v948 = vunpack.c.l.b16 %v875
    %v949 = vunpack.c.h.b16 %v875
    %v950 = vunpack.c.l.b16 %v876
    %v951 = vunpack.c.h.b16 %v876
    %v952 = vunpack.c.l.b16 %v877
    %v953 = vunpack.c.h.b16 %v877
    %v954 = vunpack.c.l.b16 %v878
    %v955 = vunpack.c.h.b16 %v878
    %v956 = vunpack.c.l.b16 %v879
    %v957 = vunpack.c.h.b16 %v879
    %v958 = vunpack.c.l.b16 %v880
    %v959 = vunpack.c.h.b16 %v880
    %v960 = vunpack.c.l.b16 %v881
    %v961 = vunpack.c.h.b16 %v881
    %v962 = vunpack.c.l.b16 %v882
    %v963 = vunpack.c.h.b16 %v882
    %v964 = vunpack.c.l.b16 %v883
    %v965 = vunpack.c.h.b16 %v883
    %v966 = vunpack.c.l.b16 %v884
    %v967 = vunpack.c.h.b16 %v884
    %v968 = vunpack.c.l.b16 %v885
    %v969 = vunpack.c.h.b16 %v885
    %v970 = vunpack.c.l.b16 %v886
    %v971 = vunpack.c.h.b16 %v886
    %v972 = vunpack.c.l.b16 %v887
    %v973 = vunpack.c.h.b16 %v887
    %v974 = vunpack.c.l.b16 %v888
    %v975 = vunpack.c.h.b16 %v888
    %v976 = vunpack.c.l.b16 %v889
    %v977 = vunpack.c.h.b16 %v889
    %v978 = vunpack.c.l.b16 %v890
    %v979 = vunpack.c.h.b16 %v890
    %v980 = vunpack.c.l.b16 %v891
    %v981 = vunpack.c.h.b16 %v891
    %v982 = vunpack.c.l.b16 %v892
    %v983 = vunpack.c.h.b16 %v892
    %v984 = vunpack.c.l.b16 %v893
    %v985 = vunpack.c.h.b16 %v893
    %v986 = vunpack.c.l.b16 %v894
    %v987 = vunpack.c.h.b16 %v894
    %v988 = vunpack.c.l.b16 %v895
    %v989 = vunpack.c.h.b16 %v895
    %v990 = vunpack.c.l.b16 %v896
    %v991 = vunpack.c.h.b16 %v896
    %v992 = vunpack.c.l.b16 %v897
    %v993 = vunpack.c.h.b16 %v897
    %v994 = vpack.c.b16 %v934, %v930
    %v995 = vpack.c.b16 %v935, %v931
    %v996 = vpack.c.b16 %v936, %v932
    %v997 = vpack.c.b16 %v937, %v933
    %v998 = vpack.c.b16 %v942, %v938
    %v999 = vpack.c.b16 %v943, %v939
    %v1000 = vpack.c.b16 %v944, %v940
    %v1001 = vpack.c.b16 %v945, %v941
    %v1002 = vpack.c.b16 %v950, %v946
    %v1003 = vpack.c.b16 %v951, %v947
    %v1004 = vpack.c.b16 %v952, %v948
    %v1005 = vpack.c.b16 %v953, %v949
    %v1006 = vpack.c.b16 %v958, %v954
    %v1007 = vpack.c.b16 %v959, %v955
    %v1008 = vpack.c.b16 %v960, %v956
    %v1009 = vpack.c.b16 %v961, %v957
    %v1010 = vpack.c.b16 %v966, %v962
    %v1011 = vpack.c.b16 %v967, %v963
    %v1012 = vpack.c.b16 %v968, %v964
    %v1013 = vpack.c.b16 %v969, %v965
    %v1014 = vpack.c.b16 %v974, %v970
    %v1015 = vpack.c.b16 %v975, %v971
    %v1016 = vpack.c.b16 %v976, %v972
    %v1017 = vpack.c.b16 %v977, %v973
    %v1018 = vpack.c.b16 %v982, %v978
    %v1019 = vpack.c.b16 %v983, %v979
    %v1020 = vpack.c.b16 %v984, %v980
    %v1021 = vpack.c.b16 %v985, %v981
    %v1022 = vpack.c.b16 %v990, %v986
    %v1023 = vpack.c.b16 %v991, %v987
    %v1024 = vpack.c.b16 %v992, %v988
    %v1025 = vpack.c.b16 %v993, %v989
    %1058 = vmatprep.subr.bf16.mxu0 %v995
    %1059 = vmatpush1.bf16.msra.mxu0 %v994
    %1060 = vmatprep.subr.bf16.mxu0 %v999
    %1061 = vmatpush1.bf16.msra.mxu0 %v998
    %1062 = vmatprep.subr.bf16.mxu0 %v1003
    %1063 = vmatpush1.bf16.msra.mxu0 %v1002
    %1064 = vmatprep.subr.bf16.mxu0 %v1007
    %1065 = vmatpush1.bf16.msra.mxu0 %v1006
    %1066 = vmatprep.subr.bf16.mxu0 %v1011
    %1067 = vmatpush1.bf16.msra.mxu0 %v1010
    %1068 = vmatprep.subr.bf16.mxu0 %v1015
    %1069 = vmatpush1.bf16.msra.mxu0 %v1014
    %1070 = vmatprep.subr.bf16.mxu0 %v1019
    %1071 = vmatpush1.bf16.msra.mxu0 %v1018
    %1072 = vmatprep.subr.bf16.mxu0 %v1023
    %1073 = vmatpush1.bf16.msra.mxu0 %v1022
    %1074 = vmatprep.subr.bf16.mxu0 0
    %1075 = vmatpush1.bf16.msra.mxu0 0
    %1076 = vmatprep.subr.bf16.mxu0 0
    %1077 = vmatpush1.bf16.msra.mxu0 0
    %1078 = vmatprep.subr.bf16.mxu0 0
    %1079 = vmatpush1.bf16.msra.mxu0 0
    %1080 = vmatprep.subr.bf16.mxu0 0
    %1081 = vmatpush1.bf16.msra.mxu0 0
    %1082 = vmatprep.subr.bf16.mxu0 0
    %1083 = vmatpush1.bf16.msra.mxu0 0
    %1084 = vmatprep.subr.bf16.mxu0 0
    %1085 = vmatpush1.bf16.msra.mxu0 0
    %1086 = vmatprep.subr.bf16.mxu0 0
    %1087 = vmatpush1.bf16.msra.mxu0 0
    %1088 = vmatprep.subr.bf16.mxu0 0
    %1089 = vmatpush1.bf16.msra.mxu0 0
    %1090 = vmatprep.mubr.bf16.mxu0 0
    %1091 = vmatmul.mubr.bf16.gmra.mrb[0].mxu0 %v865
    %v1092 = vpop.f32.mrb[0].mxu0
    %v1093 = vadd.f32 0.0, %v1092
    %v1094 = vpop.f32.mrb[0].mxu0
    %v1095 = vadd.f32 0.0, %v1094
    %v1096 = vpop.f32.mrb[0].mxu0
    %v1097 = vpop.f32.mrb[0].mxu0
    %1098 = vdwg.mxu0
    %1099 = vmatprep.subr.bf16.mxu0 %v997
    %1100 = vmatpush1.bf16.msra.mxu0 %v996
    %1101 = vmatprep.subr.bf16.mxu0 %v1001
    %1102 = vmatpush1.bf16.msra.mxu0 %v1000
    %1103 = vmatprep.subr.bf16.mxu0 %v1005
    %1104 = vmatpush1.bf16.msra.mxu0 %v1004
    %1105 = vmatprep.subr.bf16.mxu0 %v1009
    %1106 = vmatpush1.bf16.msra.mxu0 %v1008
    %1107 = vmatprep.subr.bf16.mxu0 %v1013
    %1108 = vmatpush1.bf16.msra.mxu0 %v1012
    %1109 = vmatprep.subr.bf16.mxu0 %v1017
    %1110 = vmatpush1.bf16.msra.mxu0 %v1016
    %1111 = vmatprep.subr.bf16.mxu0 %v1021
    %1112 = vmatpush1.bf16.msra.mxu0 %v1020
    %1113 = vmatprep.subr.bf16.mxu0 %v1025
    %1114 = vmatpush1.bf16.msra.mxu0 %v1024
    %1115 = vmatprep.subr.bf16.mxu0 0
    %1116 = vmatpush1.bf16.msra.mxu0 0
    %1117 = vmatprep.subr.bf16.mxu0 0
    %1118 = vmatpush1.bf16.msra.mxu0 0
    %1119 = vmatprep.subr.bf16.mxu0 0
    %1120 = vmatpush1.bf16.msra.mxu0 0
    %1121 = vmatprep.subr.bf16.mxu0 0
    %1122 = vmatpush1.bf16.msra.mxu0 0
    %1123 = vmatprep.subr.bf16.mxu0 0
    %1124 = vmatpush1.bf16.msra.mxu0 0
    %1125 = vmatprep.subr.bf16.mxu0 0
    %1126 = vmatpush1.bf16.msra.mxu0 0
    %1127 = vmatprep.subr.bf16.mxu0 0
    %1128 = vmatpush1.bf16.msra.mxu0 0
    %1129 = vmatprep.subr.bf16.mxu0 0
    %1130 = vmatpush1.bf16.msra.mxu0 0
    %1131 = vmatprep.mubr.bf16.mxu0 0
    %1132 = vmatmul.mubr.bf16.gmra.mrb[0].mxu0 %v865
    %v1133 = vpop.f32.mrb[0].mxu0
    %v1134 = vadd.f32 0.0, %v1133
    %v1135 = vpop.f32.mrb[0].mxu0
    %v1136 = vadd.f32 0.0, %v1135
    %v1137 = vpop.f32.mrb[0].mxu0
    %v1138 = vpop.f32.mrb[0].mxu0
    %1139 = vdwg.mxu0
    %v1144 = vrot.slane %v1093, 7
    %v1145 = vrot.slane %v1095, 7
    %v1146 = vrot.slane %v1134, 7
    %v1147 = vrot.slane %v1136, 7
    %v1148 = vrot.slane %v1093, 1
    %v1149 = vrot.slane %v1095, 1
    %v1150 = vrot.slane %v1134, 1
    %v1151 = vrot.slane %v1136, 1
    %v1152 = vrot.slane %v1093, 2
    %v1153 = vrot.slane %v1095, 2
    %v1154 = vrot.slane %v1134, 2
    %v1155 = vrot.slane %v1136, 2
    %v1156 = vrot.slane %v1093, 3
    %v1157 = vrot.slane %v1095, 3
    %v1158 = vrot.slane %v1134, 3
    %v1159 = vrot.slane %v1136, 3
    %v1160 = vrot.slane %v1093, 4
    %v1161 = vrot.slane %v1095, 4
    %v1162 = vrot.slane %v1134, 4
    %v1163 = vrot.slane %v1136, 4
    %v1164 = vrot.slane %v1093, 5
    %v1165 = vrot.slane %v1095, 5
    %v1166 = vrot.slane %v1134, 5
    %v1167 = vrot.slane %v1136, 5
    %v1168 = vrot.slane %v1093, 6
    %v1169 = vrot.slane %v1095, 6
    %v1170 = vrot.slane %v1134, 6
    %v1171 = vrot.slane %v1136, 6
    %v1204 = vadd.f32 %v833, %v1144
    %v1205 = vadd.f32 %v834, %v1145
    %v1206 = vadd.f32 %v835, %v1146
    %v1207 = vadd.f32 %v836, %v1147
    %v1208 = vadd.f32 %v837, %v1093
    %v1209 = vadd.f32 %v838, %v1095
    %v1210 = vadd.f32 %v839, %v1134
    %v1211 = vadd.f32 %v840, %v1136
    %v1212 = vadd.f32 %v841, %v1148
    %v1213 = vadd.f32 %v842, %v1149
    %v1214 = vadd.f32 %v843, %v1150
    %v1215 = vadd.f32 %v844, %v1151
    %v1216 = vadd.f32 %v845, %v1152
    %v1217 = vadd.f32 %v846, %v1153
    %v1218 = vadd.f32 %v847, %v1154
    %v1219 = vadd.f32 %v848, %v1155
    %v1220 = vadd.f32 %v849, %v1156
    %v1221 = vadd.f32 %v850, %v1157
    %v1222 = vadd.f32 %v851, %v1158
    %v1223 = vadd.f32 %v852, %v1159
    %v1224 = vadd.f32 %v853, %v1160
    %v1225 = vadd.f32 %v854, %v1161
    %v1226 = vadd.f32 %v855, %v1162
    %v1227 = vadd.f32 %v856, %v1163
    %v1228 = vadd.f32 %v857, %v1164
    %v1229 = vadd.f32 %v858, %v1165
    %v1230 = vadd.f32 %v859, %v1166
    %v1231 = vadd.f32 %v860, %v1167
    %v1232 = vadd.f32 %v861, %v1168
    %v1233 = vadd.f32 %v862, %v1169
    %v1234 = vadd.f32 %v863, %v1170
    %v1235 = vadd.f32 %v864, %v1171
    %v1236 = vmul.f32 %v1204, 0.5
    %v1237 = vmul.f32 %v1208, 0.5
    %v1238 = vmul.f32 %v1212, 0.5
    %v1239 = vmul.f32 %v1216, 0.5
    %v1240 = vmul.f32 %v1220, 0.5
    %v1241 = vmul.f32 %v1224, 0.5
    %v1242 = vmul.f32 %v1228, 0.5
    %v1243 = vmul.f32 %v1232, 0.5
    %v1244 = vtanh.pop %v1236
    %v1245 = vtanh.pop %v1237
    %v1246 = vtanh.pop %v1238
    %v1247 = vtanh.pop %v1239
    %v1248 = vtanh.pop %v1240
    %v1249 = vtanh.pop %v1241
    %v1250 = vtanh.pop %v1242
    %v1251 = vtanh.pop %v1243
    %v1252 = vmul.f32 %v1244, 0.5
    %v1253 = vmul.f32 %v1245, 0.5
    %v1254 = vmul.f32 %v1246, 0.5
    %v1255 = vmul.f32 %v1247, 0.5
    %v1256 = vmul.f32 %v1248, 0.5
    %v1257 = vmul.f32 %v1249, 0.5
    %v1258 = vmul.f32 %v1250, 0.5
    %v1259 = vmul.f32 %v1251, 0.5
    %v1260 = vadd.f32 %v1252, 0.5
    %v1261 = vadd.f32 %v1253, 0.5
    %v1262 = vadd.f32 %v1254, 0.5
    %v1263 = vadd.f32 %v1255, 0.5
    %v1264 = vadd.f32 %v1256, 0.5
    %v1265 = vadd.f32 %v1257, 0.5
    %v1266 = vadd.f32 %v1258, 0.5
    %v1267 = vadd.f32 %v1259, 0.5
    %v1268 = vmul.f32 %v1205, 0.5
    %v1269 = vmul.f32 %v1209, 0.5
    %v1270 = vmul.f32 %v1213, 0.5
    %v1271 = vmul.f32 %v1217, 0.5
    %v1272 = vmul.f32 %v1221, 0.5
    %v1273 = vmul.f32 %v1225, 0.5
    %v1274 = vmul.f32 %v1229, 0.5
    %v1275 = vmul.f32 %v1233, 0.5
    %v1276 = vtanh.pop %v1268
    %v1277 = vtanh.pop %v1269
    %v1278 = vtanh.pop %v1270
    %v1279 = vtanh.pop %v1271
    %v1280 = vtanh.pop %v1272
    %v1281 = vtanh.pop %v1273
    %v1282 = vtanh.pop %v1274
    %v1283 = vtanh.pop %v1275
    %v1284 = vmul.f32 %v1276, 0.5
    %v1285 = vmul.f32 %v1277, 0.5
    %v1286 = vmul.f32 %v1278, 0.5
    %v1287 = vmul.f32 %v1279, 0.5
    %v1288 = vmul.f32 %v1280, 0.5
    %v1289 = vmul.f32 %v1281, 0.5
    %v1290 = vmul.f32 %v1282, 0.5
    %v1291 = vmul.f32 %v1283, 0.5
    %v1292 = vadd.f32 %v1284, 0.5
    %v1293 = vadd.f32 %v1285, 0.5
    %v1294 = vadd.f32 %v1286, 0.5
    %v1295 = vadd.f32 %v1287, 0.5
    %v1296 = vadd.f32 %v1288, 0.5
    %v1297 = vadd.f32 %v1289, 0.5
    %v1298 = vadd.f32 %v1290, 0.5
    %v1299 = vadd.f32 %v1291, 0.5
    %v1300 = vtanh.pop %v1206
    %v1301 = vtanh.pop %v1210
    %v1302 = vtanh.pop %v1214
    %v1303 = vtanh.pop %v1218
    %v1304 = vtanh.pop %v1222
    %v1305 = vtanh.pop %v1226
    %v1306 = vtanh.pop %v1230
    %v1307 = vtanh.pop %v1234
    %v1308 = vmul.f32 %v1207, 0.5
    %v1309 = vmul.f32 %v1211, 0.5
    %v1310 = vmul.f32 %v1215, 0.5
    %v1311 = vmul.f32 %v1219, 0.5
    %v1312 = vmul.f32 %v1223, 0.5
    %v1313 = vmul.f32 %v1227, 0.5
    %v1314 = vmul.f32 %v1231, 0.5
    %v1315 = vmul.f32 %v1235, 0.5
    %v1316 = vtanh.pop %v1308
    %v1317 = vtanh.pop %v1309
    %v1318 = vtanh.pop %v1310
    %v1319 = vtanh.pop %v1311
    %v1320 = vtanh.pop %v1312
    %v1321 = vtanh.pop %v1313
    %v1322 = vtanh.pop %v1314
    %v1323 = vtanh.pop %v1315
    %v1324 = vmul.f32 %v1316, 0.5
    %v1325 = vmul.f32 %v1317, 0.5
    %v1326 = vmul.f32 %v1318, 0.5
    %v1327 = vmul.f32 %v1319, 0.5
    %v1328 = vmul.f32 %v1320, 0.5
    %v1329 = vmul.f32 %v1321, 0.5
    %v1330 = vmul.f32 %v1322, 0.5
    %v1331 = vmul.f32 %v1323, 0.5
    %v1332 = vadd.f32 %v1324, 0.5
    %v1333 = vadd.f32 %v1325, 0.5
    %v1334 = vadd.f32 %v1326, 0.5
    %v1335 = vadd.f32 %v1327, 0.5
    %v1336 = vadd.f32 %v1328, 0.5
    %v1337 = vadd.f32 %v1329, 0.5
    %v1338 = vadd.f32 %v1330, 0.5
    %v1339 = vadd.f32 %v1331, 0.5
    %v1341 = vrot.slane %v784, 7
    %v1342 = vrot.slane %v784, 1
    %v1343 = vrot.slane %v784, 2
    %v1344 = vrot.slane %v784, 3
    %v1345 = vrot.slane %v784, 4
    %v1346 = vrot.slane %v784, 5
    %v1347 = vrot.slane %v784, 6
    %v1356 = vmul.f32 %v1292, %v1341
    %v1357 = vmul.f32 %v1293, %v784
    %v1358 = vmul.f32 %v1294, %v1342
    %v1359 = vmul.f32 %v1295, %v1343
    %v1360 = vmul.f32 %v1296, %v1344
    %v1361 = vmul.f32 %v1297, %v1345
    %v1362 = vmul.f32 %v1298, %v1346
    %v1363 = vmul.f32 %v1299, %v1347
    %v1364 = vmul.f32 %v1260, %v1300
    %v1365 = vmul.f32 %v1261, %v1301
    %v1366 = vmul.f32 %v1262, %v1302
    %v1367 = vmul.f32 %v1263, %v1303
    %v1368 = vmul.f32 %v1264, %v1304
    %v1369 = vmul.f32 %v1265, %v1305
    %v1370 = vmul.f32 %v1266, %v1306
    %v1371 = vmul.f32 %v1267, %v1307
    %v1372 = vadd.f32 %v1356, %v1364
    %v1373 = vadd.f32 %v1357, %v1365
    %v1374 = vadd.f32 %v1358, %v1366
    %v1375 = vadd.f32 %v1359, %v1367
    %v1376 = vadd.f32 %v1360, %v1368
    %v1377 = vadd.f32 %v1361, %v1369
    %v1378 = vadd.f32 %v1362, %v1370
    %v1379 = vadd.f32 %v1363, %v1371
    %v1380 = vtanh.pop %v1372
    %v1381 = vtanh.pop %v1373
    %v1382 = vtanh.pop %v1374
    %v1383 = vtanh.pop %v1375
    %v1384 = vtanh.pop %v1376
    %v1385 = vtanh.pop %v1377
    %v1386 = vtanh.pop %v1378
    %v1387 = vtanh.pop %v1379
    %v1388 = vmul.f32 %v1332, %v1380
    %v1389 = vmul.f32 %v1333, %v1381
    %v1390 = vmul.f32 %v1334, %v1382
    %v1391 = vmul.f32 %v1335, %v1383
    %v1392 = vmul.f32 %v1336, %v1384
    %v1393 = vmul.f32 %v1337, %v1385
    %v1394 = vmul.f32 %v1338, %v1386
    %v1395 = vmul.f32 %v1339, %v1387
    %v1404 = vrot.slane %v1389, 7
    %v1405 = vsel %vm732, %v1404, %v1388
    %v1406 = vrot.slane %v1390, 6
    %v1407 = vsel %vm735, %v1406, %v1405
    %v1408 = vrot.slane %v1391, 5
    %v1409 = vsel %vm738, %v1408, %v1407
    %v1410 = vrot.slane %v1392, 4
    %v1411 = vsel %vm741, %v1410, %v1409
    %v1412 = vrot.slane %v1393, 3
    %v1413 = vsel %vm744, %v1412, %v1411
    %v1414 = vrot.slane %v1394, 2
    %v1415 = vsel %vm747, %v1414, %v1413
    %v1416 = vrot.slane %v1395, 1
    %1419 = vst [vmem:[#allocation2 - $0x1] sm:$0xfe] %v1415
    %1420 = vst [vmem:[#allocation2 + $0x7] sm:$0x1] %v1416
    %v1429 = vrot.slane %v1373, 7
    %v1430 = vsel %vm732, %v1429, %v1372
    %v1431 = vrot.slane %v1374, 6
    %v1432 = vsel %vm735, %v1431, %v1430
    %v1433 = vrot.slane %v1375, 5
    %v1434 = vsel %vm738, %v1433, %v1432
    %v1435 = vrot.slane %v1376, 4
    %v1436 = vsel %vm741, %v1435, %v1434
    %v1437 = vrot.slane %v1377, 3
    %v1438 = vsel %vm744, %v1437, %v1436
    %v1439 = vrot.slane %v1378, 2
    %v1440 = vsel %vm747, %v1439, %v1438
    %v1441 = vrot.slane %v1379, 1
    %1444 = vst [vmem:[#allocation3 - $0x1] sm:$0xfe] %v1440
    %1445 = vst [vmem:[#allocation3 + $0x7] sm:$0x1] %v1441
    %1446 = vst [vmem:[#allocation12] sm:$0x2] %v1388
    %1447 = vst [vmem:[#allocation12 + $0x10] sm:$0x2] %v1389
    %1448 = vst [vmem:[#allocation12 + $0x20] sm:$0x2] %v1390
    %1449 = vst [vmem:[#allocation12 + $0x30] sm:$0x2] %v1391
    %1450 = vst [vmem:[#allocation12 + $0x40] sm:$0x2] %v1392
    %1451 = vst [vmem:[#allocation12 + $0x50] sm:$0x2] %v1393
    %1452 = vst [vmem:[#allocation12 + $0x60] sm:$0x2] %v1394
    %1453 = vst [vmem:[#allocation12 + $0x70] sm:$0x2] %v1395
    %v1454 = vld [vmem:[#allocation2] sm:$0xff]
    %v1455 = vld [vmem:[#allocation3] sm:$0xff]
    %v1456 = vld [vmem:[#allocation4] sm:$0x22]
    %v1457 = vld [vmem:[#allocation4 + $0x8] sm:$0x22]
    %v1458 = vld [vmem:[#allocation4 + $0x20] sm:$0x22]
    %v1459 = vld [vmem:[#allocation4 + $0x28] sm:$0x22]
    %v1460 = vld [vmem:[#allocation4 + $0x40] sm:$0x22]
    %v1461 = vld [vmem:[#allocation4 + $0x48] sm:$0x22]
    %v1462 = vld [vmem:[#allocation4 + $0x60] sm:$0x22]
    %v1463 = vld [vmem:[#allocation4 + $0x68] sm:$0x22]
    %v1464 = vld [vmem:[#allocation4 + $0x80] sm:$0x22]
    %v1465 = vld [vmem:[#allocation4 + $0x88] sm:$0x22]
    %v1466 = vld [vmem:[#allocation4 + $0xa0] sm:$0x22]
    %v1467 = vld [vmem:[#allocation4 + $0xa8] sm:$0x22]
    %v1468 = vld [vmem:[#allocation4 + $0xc0] sm:$0x22]
    %v1469 = vld [vmem:[#allocation4 + $0xc8] sm:$0x22]
    %v1470 = vld [vmem:[#allocation4 + $0xe0] sm:$0x22]
    %v1471 = vld [vmem:[#allocation4 + $0xe8] sm:$0x22]
    %v1472 = vunpack.c.l.bf16 %v1456
    %v1473 = vunpack.c.h.bf16 %v1456
    %v1474 = vunpack.c.l.bf16 %v1457
    %v1475 = vunpack.c.h.bf16 %v1457
    %v1476 = vunpack.c.l.bf16 %v1458
    %v1477 = vunpack.c.h.bf16 %v1458
    %v1478 = vunpack.c.l.bf16 %v1459
    %v1479 = vunpack.c.h.bf16 %v1459
    %v1480 = vunpack.c.l.bf16 %v1460
    %v1481 = vunpack.c.h.bf16 %v1460
    %v1482 = vunpack.c.l.bf16 %v1461
    %v1483 = vunpack.c.h.bf16 %v1461
    %v1484 = vunpack.c.l.bf16 %v1462
    %v1485 = vunpack.c.h.bf16 %v1462
    %v1486 = vunpack.c.l.bf16 %v1463
    %v1487 = vunpack.c.h.bf16 %v1463
    %v1488 = vunpack.c.l.bf16 %v1464
    %v1489 = vunpack.c.h.bf16 %v1464
    %v1490 = vunpack.c.l.bf16 %v1465
    %v1491 = vunpack.c.h.bf16 %v1465
    %v1492 = vunpack.c.l.bf16 %v1466
    %v1493 = vunpack.c.h.bf16 %v1466
    %v1494 = vunpack.c.l.bf16 %v1467
    %v1495 = vunpack.c.h.bf16 %v1467
    %v1496 = vunpack.c.l.bf16 %v1468
    %v1497 = vunpack.c.h.bf16 %v1468
    %v1498 = vunpack.c.l.bf16 %v1469
    %v1499 = vunpack.c.h.bf16 %v1469
    %v1500 = vunpack.c.l.bf16 %v1470
    %v1501 = vunpack.c.h.bf16 %v1470
    %v1502 = vunpack.c.l.bf16 %v1471
    %v1503 = vunpack.c.h.bf16 %v1471
    %v1504 = vadd.f32 %v1472, %v140
    %v1505 = vadd.f32 %v1473, %v144
    %v1506 = vadd.f32 %v1474, %v148
    %v1507 = vadd.f32 %v1475, %v152
    %v1508 = vadd.f32 %v1476, %v140
    %v1509 = vadd.f32 %v1477, %v144
    %v1510 = vadd.f32 %v1478, %v148
    %v1511 = vadd.f32 %v1479, %v152
    %v1512 = vadd.f32 %v1480, %v140
    %v1513 = vadd.f32 %v1481, %v144
    %v1514 = vadd.f32 %v1482, %v148
    %v1515 = vadd.f32 %v1483, %v152
    %v1516 = vadd.f32 %v1484, %v140
    %v1517 = vadd.f32 %v1485, %v144
    %v1518 = vadd.f32 %v1486, %v148
    %v1519 = vadd.f32 %v1487, %v152
    %v1520 = vadd.f32 %v1488, %v140
    %v1521 = vadd.f32 %v1489, %v144
    %v1522 = vadd.f32 %v1490, %v148
    %v1523 = vadd.f32 %v1491, %v152
    %v1524 = vadd.f32 %v1492, %v140
    %v1525 = vadd.f32 %v1493, %v144
    %v1526 = vadd.f32 %v1494, %v148
    %v1527 = vadd.f32 %v1495, %v152
    %v1528 = vadd.f32 %v1496, %v140
    %v1529 = vadd.f32 %v1497, %v144
    %v1530 = vadd.f32 %v1498, %v148
    %v1531 = vadd.f32 %v1499, %v152
    %v1532 = vadd.f32 %v1500, %v140
    %v1533 = vadd.f32 %v1501, %v144
    %v1534 = vadd.f32 %v1502, %v148
    %v1535 = vadd.f32 %v1503, %v152
    %v1536 = vpack.c.bf16 %v1454, %v1454
    %v1537 = vld [vmem:[#allocation7] sm:$0xff]
    %v1538 = vld [vmem:[#allocation7 + $0x8] sm:$0xff]
    %v1539 = vld [vmem:[#allocation7 + $0x10] sm:$0xff]
    %v1540 = vld [vmem:[#allocation7 + $0x18] sm:$0xff]
    %v1541 = vld [vmem:[#allocation7 + $0x20] sm:$0xff]
    %v1542 = vld [vmem:[#allocation7 + $0x28] sm:$0xff]
    %v1543 = vld [vmem:[#allocation7 + $0x30] sm:$0xff]
    %v1544 = vld [vmem:[#allocation7 + $0x38] sm:$0xff]
    %v1545 = vld [vmem:[#allocation7 + $0x40] sm:$0xff]
    %v1546 = vld [vmem:[#allocation7 + $0x48] sm:$0xff]
    %v1547 = vld [vmem:[#allocation7 + $0x50] sm:$0xff]
    %v1548 = vld [vmem:[#allocation7 + $0x58] sm:$0xff]
    %v1549 = vld [vmem:[#allocation7 + $0x60] sm:$0xff]
    %v1550 = vld [vmem:[#allocation7 + $0x68] sm:$0xff]
    %v1551 = vld [vmem:[#allocation7 + $0x70] sm:$0xff]
    %v1552 = vld [vmem:[#allocation7 + $0x78] sm:$0xff]
    %v1553 = vld [vmem:[#allocation7 + $0x80] sm:$0xff]
    %v1554 = vld [vmem:[#allocation7 + $0x88] sm:$0xff]
    %v1555 = vld [vmem:[#allocation7 + $0x90] sm:$0xff]
    %v1556 = vld [vmem:[#allocation7 + $0x98] sm:$0xff]
    %v1557 = vld [vmem:[#allocation7 + $0xa0] sm:$0xff]
    %v1558 = vld [vmem:[#allocation7 + $0xa8] sm:$0xff]
    %v1559 = vld [vmem:[#allocation7 + $0xb0] sm:$0xff]
    %v1560 = vld [vmem:[#allocation7 + $0xb8] sm:$0xff]
    %v1561 = vld [vmem:[#allocation7 + $0xc0] sm:$0xff]
    %v1562 = vld [vmem:[#allocation7 + $0xc8] sm:$0xff]
    %v1563 = vld [vmem:[#allocation7 + $0xd0] sm:$0xff]
    %v1564 = vld [vmem:[#allocation7 + $0xd8] sm:$0xff]
    %v1565 = vld [vmem:[#allocation7 + $0xe0] sm:$0xff]
    %v1566 = vld [vmem:[#allocation7 + $0xe8] sm:$0xff]
    %v1567 = vld [vmem:[#allocation7 + $0xf0] sm:$0xff]
    %v1568 = vld [vmem:[#allocation7 + $0xf8] sm:$0xff]
    %v1601 = vunpack.c.l.b16 %v1537
    %v1602 = vunpack.c.h.b16 %v1537
    %v1603 = vunpack.c.l.b16 %v1538
    %v1604 = vunpack.c.h.b16 %v1538
    %v1605 = vunpack.c.l.b16 %v1539
    %v1606 = vunpack.c.h.b16 %v1539
    %v1607 = vunpack.c.l.b16 %v1540
    %v1608 = vunpack.c.h.b16 %v1540
    %v1609 = vunpack.c.l.b16 %v1541
    %v1610 = vunpack.c.h.b16 %v1541
    %v1611 = vunpack.c.l.b16 %v1542
    %v1612 = vunpack.c.h.b16 %v1542
    %v1613 = vunpack.c.l.b16 %v1543
    %v1614 = vunpack.c.h.b16 %v1543
    %v1615 = vunpack.c.l.b16 %v1544
    %v1616 = vunpack.c.h.b16 %v1544
    %v1617 = vunpack.c.l.b16 %v1545
    %v1618 = vunpack.c.h.b16 %v1545
    %v1619 = vunpack.c.l.b16 %v1546
    %v1620 = vunpack.c.h.b16 %v1546
    %v1621 = vunpack.c.l.b16 %v1547
    %v1622 = vunpack.c.h.b16 %v1547
    %v1623 = vunpack.c.l.b16 %v1548
    %v1624 = vunpack.c.h.b16 %v1548
    %v1625 = vunpack.c.l.b16 %v1549
    %v1626 = vunpack.c.h.b16 %v1549
    %v1627 = vunpack.c.l.b16 %v1550
    %v1628 = vunpack.c.h.b16 %v1550
    %v1629 = vunpack.c.l.b16 %v1551
    %v1630 = vunpack.c.h.b16 %v1551
    %v1631 = vunpack.c.l.b16 %v1552
    %v1632 = vunpack.c.h.b16 %v1552
    %v1633 = vunpack.c.l.b16 %v1553
    %v1634 = vunpack.c.h.b16 %v1553
    %v1635 = vunpack.c.l.b16 %v1554
    %v1636 = vunpack.c.h.b16 %v1554
    %v1637 = vunpack.c.l.b16 %v1555
    %v1638 = vunpack.c.h.b16 %v1555
    %v1639 = vunpack.c.l.b16 %v1556
    %v1640 = vunpack.c.h.b16 %v1556
    %v1641 = vunpack.c.l.b16 %v1557
    %v1642 = vunpack.c.h.b16 %v1557
    %v1643 = vunpack.c.l.b16 %v1558
    %v1644 = vunpack.c.h.b16 %v1558
    %v1645 = vunpack.c.l.b16 %v1559
    %v1646 = vunpack.c.h.b16 %v1559
    %v1647 = vunpack.c.l.b16 %v1560
    %v1648 = vunpack.c.h.b16 %v1560
    %v1649 = vunpack.c.l.b16 %v1561
    %v1650 = vunpack.c.h.b16 %v1561
    %v1651 = vunpack.c.l.b16 %v1562
    %v1652 = vunpack.c.h.b16 %v1562
    %v1653 = vunpack.c.l.b16 %v1563
    %v1654 = vunpack.c.h.b16 %v1563
    %v1655 = vunpack.c.l.b16 %v1564
    %v1656 = vunpack.c.h.b16 %v1564
    %v1657 = vunpack.c.l.b16 %v1565
    %v1658 = vunpack.c.h.b16 %v1565
    %v1659 = vunpack.c.l.b16 %v1566
    %v1660 = vunpack.c.h.b16 %v1566
    %v1661 = vunpack.c.l.b16 %v1567
    %v1662 = vunpack.c.h.b16 %v1567
    %v1663 = vunpack.c.l.b16 %v1568
    %v1664 = vunpack.c.h.b16 %v1568
    %v1665 = vpack.c.b16 %v1605, %v1601
    %v1666 = vpack.c.b16 %v1606, %v1602
    %v1667 = vpack.c.b16 %v1607, %v1603
    %v1668 = vpack.c.b16 %v1608, %v1604
    %v1669 = vpack.c.b16 %v1613, %v1609
    %v1670 = vpack.c.b16 %v1614, %v1610
    %v1671 = vpack.c.b16 %v1615, %v1611
    %v1672 = vpack.c.b16 %v1616, %v1612
    %v1673 = vpack.c.b16 %v1621, %v1617
    %v1674 = vpack.c.b16 %v1622, %v1618
    %v1675 = vpack.c.b16 %v1623, %v1619
    %v1676 = vpack.c.b16 %v1624, %v1620
    %v1677 = vpack.c.b16 %v1629, %v1625
    %v1678 = vpack.c.b16 %v1630, %v1626
    %v1679 = vpack.c.b16 %v1631, %v1627
    %v1680 = vpack.c.b16 %v1632, %v1628
    %v1681 = vpack.c.b16 %v1637, %v1633
    %v1682 = vpack.c.b16 %v1638, %v1634
    %v1683 = vpack.c.b16 %v1639, %v1635
    %v1684 = vpack.c.b16 %v1640, %v1636
    %v1685 = vpack.c.b16 %v1645, %v1641
    %v1686 = vpack.c.b16 %v1646, %v1642
    %v1687 = vpack.c.b16 %v1647, %v1643
    %v1688 = vpack.c.b16 %v1648, %v1644
    %v1689 = vpack.c.b16 %v1653, %v1649
    %v1690 = vpack.c.b16 %v1654, %v1650
    %v1691 = vpack.c.b16 %v1655, %v1651
    %v1692 = vpack.c.b16 %v1656, %v1652
    %v1693 = vpack.c.b16 %v1661, %v1657
    %v1694 = vpack.c.b16 %v1662, %v1658
    %v1695 = vpack.c.b16 %v1663, %v1659
    %v1696 = vpack.c.b16 %v1664, %v1660
    %1729 = vmatprep.subr.bf16.mxu0 %v1666
    %1730 = vmatpush1.bf16.msra.mxu0 %v1665
    %1731 = vmatprep.subr.bf16.mxu0 %v1670
    %1732 = vmatpush1.bf16.msra.mxu0 %v1669
    %1733 = vmatprep.subr.bf16.mxu0 %v1674
    %1734 = vmatpush1.bf16.msra.mxu0 %v1673
    %1735 = vmatprep.subr.bf16.mxu0 %v1678
    %1736 = vmatpush1.bf16.msra.mxu0 %v1677
    %1737 = vmatprep.subr.bf16.mxu0 %v1682
    %1738 = vmatpush1.bf16.msra.mxu0 %v1681
    %1739 = vmatprep.subr.bf16.mxu0 %v1686
    %1740 = vmatpush1.bf16.msra.mxu0 %v1685
    %1741 = vmatprep.subr.bf16.mxu0 %v1690
    %1742 = vmatpush1.bf16.msra.mxu0 %v1689
    %1743 = vmatprep.subr.bf16.mxu0 %v1694
    %1744 = vmatpush1.bf16.msra.mxu0 %v1693
    %1745 = vmatprep.subr.bf16.mxu0 0
    %1746 = vmatpush1.bf16.msra.mxu0 0
    %1747 = vmatprep.subr.bf16.mxu0 0
    %1748 = vmatpush1.bf16.msra.mxu0 0
    %1749 = vmatprep.subr.bf16.mxu0 0
    %1750 = vmatpush1.bf16.msra.mxu0 0
    %1751 = vmatprep.subr.bf16.mxu0 0
    %1752 = vmatpush1.bf16.msra.mxu0 0
    %1753 = vmatprep.subr.bf16.mxu0 0
    %1754 = vmatpush1.bf16.msra.mxu0 0
    %1755 = vmatprep.subr.bf16.mxu0 0
    %1756 = vmatpush1.bf16.msra.mxu0 0
    %1757 = vmatprep.subr.bf16.mxu0 0
    %1758 = vmatpush1.bf16.msra.mxu0 0
    %1759 = vmatprep.subr.bf16.mxu0 0
    %1760 = vmatpush1.bf16.msra.mxu0 0
    %1761 = vmatprep.mubr.bf16.mxu0 0
    %1762 = vmatmul.mubr.bf16.gmra.mrb[0].mxu0 %v1536
    %v1763 = vpop.f32.mrb[0].mxu0
    %v1764 = vadd.f32 0.0, %v1763
    %v1765 = vpop.f32.mrb[0].mxu0
    %v1766 = vadd.f32 0.0, %v1765
    %v1767 = vpop.f32.mrb[0].mxu0
    %v1768 = vpop.f32.mrb[0].mxu0
    %1769 = vdwg.mxu0
    %1770 = vmatprep.subr.bf16.mxu0 %v1668
    %1771 = vmatpush1.bf16.msra.mxu0 %v1667
    %1772 = vmatprep.subr.bf16.mxu0 %v1672
    %1773 = vmatpush1.bf16.msra.mxu0 %v1671
    %1774 = vmatprep.subr.bf16.mxu0 %v1676
    %1775 = vmatpush1.bf16.msra.mxu0 %v1675
    %1776 = vmatprep.subr.bf16.mxu0 %v1680
    %1777 = vmatpush1.bf16.msra.mxu0 %v1679
    %1778 = vmatprep.subr.bf16.mxu0 %v1684
    %1779 = vmatpush1.bf16.msra.mxu0 %v1683
    %1780 = vmatprep.subr.bf16.mxu0 %v1688
    %1781 = vmatpush1.bf16.msra.mxu0 %v1687
    %1782 = vmatprep.subr.bf16.mxu0 %v1692
    %1783 = vmatpush1.bf16.msra.mxu0 %v1691
    %1784 = vmatprep.subr.bf16.mxu0 %v1696
    %1785 = vmatpush1.bf16.msra.mxu0 %v1695
    %1786 = vmatprep.subr.bf16.mxu0 0
    %1787 = vmatpush1.bf16.msra.mxu0 0
    %1788 = vmatprep.subr.bf16.mxu0 0
    %1789 = vmatpush1.bf16.msra.mxu0 0
    %1790 = vmatprep.subr.bf16.mxu0 0
    %1791 = vmatpush1.bf16.msra.mxu0 0
    %1792 = vmatprep.subr.bf16.mxu0 0
    %1793 = vmatpush1.bf16.msra.mxu0 0
    %1794 = vmatprep.subr.bf16.mxu0 0
    %1795 = vmatpush1.bf16.msra.mxu0 0
    %1796 = vmatprep.subr.bf16.mxu0 0
    %1797 = vmatpush1.bf16.msra.mxu0 0
    %1798 = vmatprep.subr.bf16.mxu0 0
    %1799 = vmatpush1.bf16.msra.mxu0 0
    %1800 = vmatprep.subr.bf16.mxu0 0
    %1801 = vmatpush1.bf16.msra.mxu0 0
    %1802 = vmatprep.mubr.bf16.mxu0 0
    %1803 = vmatmul.mubr.bf16.gmra.mrb[0].mxu0 %v1536
    %v1804 = vpop.f32.mrb[0].mxu0
    %v1805 = vadd.f32 0.0, %v1804
    %v1806 = vpop.f32.mrb[0].mxu0
    %v1807 = vadd.f32 0.0, %v1806
    %v1808 = vpop.f32.mrb[0].mxu0
    %v1809 = vpop.f32.mrb[0].mxu0
    %1810 = vdwg.mxu0
    %v1815 = vrot.slane %v1764, 6
    %v1816 = vrot.slane %v1766, 6
    %v1817 = vrot.slane %v1805, 6
    %v1818 = vrot.slane %v1807, 6
    %v1819 = vrot.slane %v1764, 7
    %v1820 = vrot.slane %v1766, 7
    %v1821 = vrot.slane %v1805, 7
    %v1822 = vrot.slane %v1807, 7
    %v1823 = vrot.slane %v1764, 1
    %v1824 = vrot.slane %v1766, 1
    %v1825 = vrot.slane %v1805, 1
    %v1826 = vrot.slane %v1807, 1
    %v1827 = vrot.slane %v1764, 2
    %v1828 = vrot.slane %v1766, 2
    %v1829 = vrot.slane %v1805, 2
    %v1830 = vrot.slane %v1807, 2
    %v1831 = vrot.slane %v1764, 3
    %v1832 = vrot.slane %v1766, 3
    %v1833 = vrot.slane %v1805, 3
    %v1834 = vrot.slane %v1807, 3
    %v1835 = vrot.slane %v1764, 4
    %v1836 = vrot.slane %v1766, 4
    %v1837 = vrot.slane %v1805, 4
    %v1838 = vrot.slane %v1807, 4
    %v1839 = vrot.slane %v1764, 5
    %v1840 = vrot.slane %v1766, 5
    %v1841 = vrot.slane %v1805, 5
    %v1842 = vrot.slane %v1807, 5
    %v1875 = vadd.f32 %v1504, %v1815
    %v1876 = vadd.f32 %v1505, %v1816
    %v1877 = vadd.f32 %v1506, %v1817
    %v1878 = vadd.f32 %v1507, %v1818
    %v1879 = vadd.f32 %v1508, %v1819
    %v1880 = vadd.f32 %v1509, %v1820
    %v1881 = vadd.f32 %v1510, %v1821
    %v1882 = vadd.f32 %v1511, %v1822
    %v1883 = vadd.f32 %v1512, %v1764
    %v1884 = vadd.f32 %v1513, %v1766
    %v1885 = vadd.f32 %v1514, %v1805
    %v1886 = vadd.f32 %v1515, %v1807
    %v1887 = vadd.f32 %v1516, %v1823
    %v1888 = vadd.f32 %v1517, %v1824
    %v1889 = vadd.f32 %v1518, %v1825
    %v1890 = vadd.f32 %v1519, %v1826
    %v1891 = vadd.f32 %v1520, %v1827
    %v1892 = vadd.f32 %v1521, %v1828
    %v1893 = vadd.f32 %v1522, %v1829
    %v1894 = vadd.f32 %v1523, %v1830
    %v1895 = vadd.f32 %v1524, %v1831
    %v1896 = vadd.f32 %v1525, %v1832
    %v1897 = vadd.f32 %v1526, %v1833
    %v1898 = vadd.f32 %v1527, %v1834
    %v1899 = vadd.f32 %v1528, %v1835
    %v1900 = vadd.f32 %v1529, %v1836
    %v1901 = vadd.f32 %v1530, %v1837
    %v1902 = vadd.f32 %v1531, %v1838
    %v1903 = vadd.f32 %v1532, %v1839
    %v1904 = vadd.f32 %v1533, %v1840
    %v1905 = vadd.f32 %v1534, %v1841
    %v1906 = vadd.f32 %v1535, %v1842
    %v1907 = vmul.f32 %v1875, 0.5
    %v1908 = vmul.f32 %v1879, 0.5
    %v1909 = vmul.f32 %v1883, 0.5
    %v1910 = vmul.f32 %v1887, 0.5
    %v1911 = vmul.f32 %v1891, 0.5
    %v1912 = vmul.f32 %v1895, 0.5
    %v1913 = vmul.f32 %v1899, 0.5
    %v1914 = vmul.f32 %v1903, 0.5
    %v1915 = vtanh.pop %v1907
    %v1916 = vtanh.pop %v1908
    %v1917 = vtanh.pop %v1909
    %v1918 = vtanh.pop %v1910
    %v1919 = vtanh.pop %v1911
    %v1920 = vtanh.pop %v1912
    %v1921 = vtanh.pop %v1913
    %v1922 = vtanh.pop %v1914
    %v1923 = vmul.f32 %v1915, 0.5
    %v1924 = vmul.f32 %v1916, 0.5
    %v1925 = vmul.f32 %v1917, 0.5
    %v1926 = vmul.f32 %v1918, 0.5
    %v1927 = vmul.f32 %v1919, 0.5
    %v1928 = vmul.f32 %v1920, 0.5
    %v1929 = vmul.f32 %v1921, 0.5
    %v1930 = vmul.f32 %v1922, 0.5
    %v1931 = vadd.f32 %v1923, 0.5
    %v1932 = vadd.f32 %v1924, 0.5
    %v1933 = vadd.f32 %v1925, 0.5
    %v1934 = vadd.f32 %v1926, 0.5
    %v1935 = vadd.f32 %v1927, 0.5
    %v1936 = vadd.f32 %v1928, 0.5
    %v1937 = vadd.f32 %v1929, 0.5
    %v1938 = vadd.f32 %v1930, 0.5
    %v1939 = vmul.f32 %v1876, 0.5
    %v1940 = vmul.f32 %v1880, 0.5
    %v1941 = vmul.f32 %v1884, 0.5
    %v1942 = vmul.f32 %v1888, 0.5
    %v1943 = vmul.f32 %v1892, 0.5
    %v1944 = vmul.f32 %v1896, 0.5
    %v1945 = vmul.f32 %v1900, 0.5
    %v1946 = vmul.f32 %v1904, 0.5
    %v1947 = vtanh.pop %v1939
    %v1948 = vtanh.pop %v1940
    %v1949 = vtanh.pop %v1941
    %v1950 = vtanh.pop %v1942
    %v1951 = vtanh.pop %v1943
    %v1952 = vtanh.pop %v1944
    %v1953 = vtanh.pop %v1945
    %v1954 = vtanh.pop %v1946
    %v1955 = vmul.f32 %v1947, 0.5
    %v1956 = vmul.f32 %v1948, 0.5
    %v1957 = vmul.f32 %v1949, 0.5
    %v1958 = vmul.f32 %v1950, 0.5
    %v1959 = vmul.f32 %v1951, 0.5
    %v1960 = vmul.f32 %v1952, 0.5
    %v1961 = vmul.f32 %v1953, 0.5
    %v1962 = vmul.f32 %v1954, 0.5
    %v1963 = vadd.f32 %v1955, 0.5
    %v1964 = vadd.f32 %v1956, 0.5
    %v1965 = vadd.f32 %v1957, 0.5
    %v1966 = vadd.f32 %v1958, 0.5
    %v1967 = vadd.f32 %v1959, 0.5
    %v1968 = vadd.f32 %v1960, 0.5
    %v1969 = vadd.f32 %v1961, 0.5
    %v1970 = vadd.f32 %v1962, 0.5
    %v1971 = vtanh.pop %v1877
    %v1972 = vtanh.pop %v1881
    %v1973 = vtanh.pop %v1885
    %v1974 = vtanh.pop %v1889
    %v1975 = vtanh.pop %v1893
    %v1976 = vtanh.pop %v1897
    %v1977 = vtanh.pop %v1901
    %v1978 = vtanh.pop %v1905
    %v1979 = vmul.f32 %v1878, 0.5
    %v1980 = vmul.f32 %v1882, 0.5
    %v1981 = vmul.f32 %v1886, 0.5
    %v1982 = vmul.f32 %v1890, 0.5
    %v1983 = vmul.f32 %v1894, 0.5
    %v1984 = vmul.f32 %v1898, 0.5
    %v1985 = vmul.f32 %v1902, 0.5
    %v1986 = vmul.f32 %v1906, 0.5
    %v1987 = vtanh.pop %v1979
    %v1988 = vtanh.pop %v1980
    %v1989 = vtanh.pop %v1981
    %v1990 = vtanh.pop %v1982
    %v1991 = vtanh.pop %v1983
    %v1992 = vtanh.pop %v1984
    %v1993 = vtanh.pop %v1985
    %v1994 = vtanh.pop %v1986
    %v1995 = vmul.f32 %v1987, 0.5
    %v1996 = vmul.f32 %v1988, 0.5
    %v1997 = vmul.f32 %v1989, 0.5
    %v1998 = vmul.f32 %v1990, 0.5
    %v1999 = vmul.f32 %v1991, 0.5
    %v2000 = vmul.f32 %v1992, 0.5
    %v2001 = vmul.f32 %v1993, 0.5
    %v2002 = vmul.f32 %v1994, 0.5
    %v2003 = vadd.f32 %v1995, 0.5
    %v2004 = vadd.f32 %v1996, 0.5
    %v2005 = vadd.f32 %v1997, 0.5
    %v2006 = vadd.f32 %v1998, 0.5
    %v2007 = vadd.f32 %v1999, 0.5
    %v2008 = vadd.f32 %v2000, 0.5
    %v2009 = vadd.f32 %v2001, 0.5
    %v2010 = vadd.f32 %v2002, 0.5
    %v2012 = vrot.slane %v1455, 6
    %v2013 = vrot.slane %v1455, 7
    %v2014 = vrot.slane %v1455, 1
    %v2015 = vrot.slane %v1455, 2
    %v2016 = vrot.slane %v1455, 3
    %v2017 = vrot.slane %v1455, 4
    %v2018 = vrot.slane %v1455, 5
    %v2027 = vmul.f32 %v1963, %v2012
    %v2028 = vmul.f32 %v1964, %v2013
    %v2029 = vmul.f32 %v1965, %v1455
    %v2030 = vmul.f32 %v1966, %v2014
    %v2031 = vmul.f32 %v1967, %v2015
    %v2032 = vmul.f32 %v1968, %v2016
    %v2033 = vmul.f32 %v1969, %v2017
    %v2034 = vmul.f32 %v1970, %v2018
    %v2035 = vmul.f32 %v1931, %v1971
    %v2036 = vmul.f32 %v1932, %v1972
    %v2037 = vmul.f32 %v1933, %v1973
    %v2038 = vmul.f32 %v1934, %v1974
    %v2039 = vmul.f32 %v1935, %v1975
    %v2040 = vmul.f32 %v1936, %v1976
    %v2041 = vmul.f32 %v1937, %v1977
    %v2042 = vmul.f32 %v1938, %v1978
    %v2043 = vadd.f32 %v2027, %v2035
    %v2044 = vadd.f32 %v2028, %v2036
    %v2045 = vadd.f32 %v2029, %v2037
    %v2046 = vadd.f32 %v2030, %v2038
    %v2047 = vadd.f32 %v2031, %v2039
    %v2048 = vadd.f32 %v2032, %v2040
    %v2049 = vadd.f32 %v2033, %v2041
    %v2050 = vadd.f32 %v2034, %v2042
    %v2051 = vtanh.pop %v2043
    %v2052 = vtanh.pop %v2044
    %v2053 = vtanh.pop %v2045
    %v2054 = vtanh.pop %v2046
    %v2055 = vtanh.pop %v2047
    %v2056 = vtanh.pop %v2048
    %v2057 = vtanh.pop %v2049
    %v2058 = vtanh.pop %v2050
    %v2059 = vmul.f32 %v2003, %v2051
    %v2060 = vmul.f32 %v2004, %v2052
    %v2061 = vmul.f32 %v2005, %v2053
    %v2062 = vmul.f32 %v2006, %v2054
    %v2063 = vmul.f32 %v2007, %v2055
    %v2064 = vmul.f32 %v2008, %v2056
    %v2065 = vmul.f32 %v2009, %v2057
    %v2066 = vmul.f32 %v2010, %v2058
    %v2075 = vrot.slane %v2060, 7
    %v2076 = vsel %vm735, %v2075, %v2059
    %v2077 = vrot.slane %v2061, 6
    %v2078 = vsel %vm738, %v2077, %v2076
    %v2079 = vrot.slane %v2062, 5
    %v2080 = vsel %vm741, %v2079, %v2078
    %v2081 = vrot.slane %v2063, 4
    %v2082 = vsel %vm744, %v2081, %v2080
    %v2083 = vrot.slane %v2064, 3
    %v2084 = vsel %vm747, %v2083, %v2082
    %v2085 = vrot.slane %v2065, 2
    %v2086 = vrot.slane %v2066, 1
    %v2087 = vsel %vm729, %v2086, %v2085
    %2090 = vst [vmem:[#allocation2 - $0x2] sm:$0xfc] %v2084
    %2091 = vst [vmem:[#allocation2 + $0x6] sm:$0x3] %v2087
    %v2100 = vrot.slane %v2044, 7
    %v2101 = vsel %vm735, %v2100, %v2043
    %v2102 = vrot.slane %v2045, 6
    %v2103 = vsel %vm738, %v2102, %v2101
    %v2104 = vrot.slane %v2046, 5
    %v2105 = vsel %vm741, %v2104, %v2103
    %v2106 = vrot.slane %v2047, 4
    %v2107 = vsel %vm744, %v2106, %v2105
    %v2108 = vrot.slane %v2048, 3
    %v2109 = vsel %vm747, %v2108, %v2107
    %v2110 = vrot.slane %v2049, 2
    %v2111 = vrot.slane %v2050, 1
    %v2112 = vsel %vm729, %v2111, %v2110
    %2115 = vst [vmem:[#allocation3 - $0x2] sm:$0xfc] %v2109
    %2116 = vst [vmem:[#allocation3 + $0x6] sm:$0x3] %v2112
    %2117 = vst [vmem:[#allocation12] sm:$0x4] %v2059
    %2118 = vst [vmem:[#allocation12 + $0x10] sm:$0x4] %v2060
    %2119 = vst [vmem:[#allocation12 + $0x20] sm:$0x4] %v2061
    %2120 = vst [vmem:[#allocation12 + $0x30] sm:$0x4] %v2062
    %2121 = vst [vmem:[#allocation12 + $0x40] sm:$0x4] %v2063
    %2122 = vst [vmem:[#allocation12 + $0x50] sm:$0x4] %v2064
    %2123 = vst [vmem:[#allocation12 + $0x60] sm:$0x4] %v2065
    %2124 = vst [vmem:[#allocation12 + $0x70] sm:$0x4] %v2066
    %v2125 = vld [vmem:[#allocation2] sm:$0xff]
    %v2126 = vld [vmem:[#allocation3] sm:$0xff]
    %v2127 = vld [vmem:[#allocation4] sm:$0x22]
    %v2128 = vld [vmem:[#allocation4 + $0x8] sm:$0x22]
    %v2129 = vld [vmem:[#allocation4 + $0x20] sm:$0x22]
    %v2130 = vld [vmem:[#allocation4 + $0x28] sm:$0x22]
    %v2131 = vld [vmem:[#allocation4 + $0x40] sm:$0x22]
    %v2132 = vld [vmem:[#allocation4 + $0x48] sm:$0x22]
    %v2133 = vld [vmem:[#allocation4 + $0x60] sm:$0x22]
    %v2134 = vld [vmem:[#allocation4 + $0x68] sm:$0x22]
    %v2135 = vld [vmem:[#allocation4 + $0x80] sm:$0x22]
    %v2136 = vld [vmem:[#allocation4 + $0x88] sm:$0x22]
    %v2137 = vld [vmem:[#allocation4 + $0xa0] sm:$0x22]
    %v2138 = vld [vmem:[#allocation4 + $0xa8] sm:$0x22]
    %v2139 = vld [vmem:[#allocation4 + $0xc0] sm:$0x22]
    %v2140 = vld [vmem:[#allocation4 + $0xc8] sm:$0x22]
    %v2141 = vld [vmem:[#allocation4 + $0xe0] sm:$0x22]
    %v2142 = vld [vmem:[#allocation4 + $0xe8] sm:$0x22]
    %v2143 = vunpack.c.l.bf16 %v2127
    %v2144 = vunpack.c.h.bf16 %v2127
    %v2145 = vunpack.c.l.bf16 %v2128
    %v2146 = vunpack.c.h.bf16 %v2128
    %v2147 = vunpack.c.l.bf16 %v2129
    %v2148 = vunpack.c.h.bf16 %v2129
    %v2149 = vunpack.c.l.bf16 %v2130
    %v2150 = vunpack.c.h.bf16 %v2130
    %v2151 = vunpack.c.l.bf16 %v2131
    %v2152 = vunpack.c.h.bf16 %v2131
    %v2153 = vunpack.c.l.bf16 %v2132
    %v2154 = vunpack.c.h.bf16 %v2132
    %v2155 = vunpack.c.l.bf16 %v2133
    %v2156 = vunpack.c.h.bf16 %v2133
    %v2157 = vunpack.c.l.bf16 %v2134
    %v2158 = vunpack.c.h.bf16 %v2134
    %v2159 = vunpack.c.l.bf16 %v2135
    %v2160 = vunpack.c.h.bf16 %v2135
    %v2161 = vunpack.c.l.bf16 %v2136
    %v2162 = vunpack.c.h.bf16 %v2136
    %v2163 = vunpack.c.l.bf16 %v2137
    %v2164 = vunpack.c.h.bf16 %v2137
    %v2165 = vunpack.c.l.bf16 %v2138
    %v2166 = vunpack.c.h.bf16 %v2138
    %v2167 = vunpack.c.l.bf16 %v2139
    %v2168 = vunpack.c.h.bf16 %v2139
    %v2169 = vunpack.c.l.bf16 %v2140
    %v2170 = vunpack.c.h.bf16 %v2140
    %v2171 = vunpack.c.l.bf16 %v2141
    %v2172 = vunpack.c.h.bf16 %v2141
    %v2173 = vunpack.c.l.bf16 %v2142
    %v2174 = vunpack.c.h.bf16 %v2142
    %v2175 = vadd.f32 %v2143, %v140
    %v2176 = vadd.f32 %v2144, %v144
    %v2177 = vadd.f32 %v2145, %v148
    %v2178 = vadd.f32 %v2146, %v152
    %v2179 = vadd.f32 %v2147, %v140
    %v2180 = vadd.f32 %v2148, %v144
    %v2181 = vadd.f32 %v2149, %v148
    %v2182 = vadd.f32 %v2150, %v152
    %v2183 = vadd.f32 %v2151, %v140
    %v2184 = vadd.f32 %v2152, %v144
    %v2185 = vadd.f32 %v2153, %v148
    %v2186 = vadd.f32 %v2154, %v152
    %v2187 = vadd.f32 %v2155, %v140
    %v2188 = vadd.f32 %v2156, %v144
    %v2189 = vadd.f32 %v2157, %v148
    %v2190 = vadd.f32 %v2158, %v152
    %v2191 = vadd.f32 %v2159, %v140
    %v2192 = vadd.f32 %v2160, %v144
    %v2193 = vadd.f32 %v2161, %v148
    %v2194 = vadd.f32 %v2162, %v152
    %v2195 = vadd.f32 %v2163, %v140
    %v2196 = vadd.f32 %v2164, %v144
    %v2197 = vadd.f32 %v2165, %v148
    %v2198 = vadd.f32 %v2166, %v152
    %v2199 = vadd.f32 %v2167, %v140
    %v2200 = vadd.f32 %v2168, %v144
    %v2201 = vadd.f32 %v2169, %v148
    %v2202 = vadd.f32 %v2170, %v152
    %v2203 = vadd.f32 %v2171, %v140
    %v2204 = vadd.f32 %v2172, %v144
    %v2205 = vadd.f32 %v2173, %v148
    %v2206 = vadd.f32 %v2174, %v152
    %v2207 = vpack.c.bf16 %v2125, %v2125
    %v2208 = vld [vmem:[#allocation7] sm:$0xff]
    %v2209 = vld [vmem:[#allocation7 + $0x8] sm:$0xff]
    %v2210 = vld [vmem:[#allocation7 + $0x10] sm:$0xff]
    %v2211 = vld [vmem:[#allocation7 + $0x18] sm:$0xff]
    %v2212 = vld [vmem:[#allocation7 + $0x20] sm:$0xff]
    %v2213 = vld [vmem:[#allocation7 + $0x28] sm:$0xff]
    %v2214 = vld [vmem:[#allocation7 + $0x30] sm:$0xff]
    %v2215 = vld [vmem:[#allocation7 + $0x38] sm:$0xff]
    %v2216 = vld [vmem:[#allocation7 + $0x40] sm:$0xff]
    %v2217 = vld [vmem:[#allocation7 + $0x48] sm:$0xff]
    %v2218 = vld [vmem:[#allocation7 + $0x50] sm:$0xff]
    %v2219 = vld [vmem:[#allocation7 + $0x58] sm:$0xff]
    %v2220 = vld [vmem:[#allocation7 + $0x60] sm:$0xff]
    %v2221 = vld [vmem:[#allocation7 + $0x68] sm:$0xff]
    %v2222 = vld [vmem:[#allocation7 + $0x70] sm:$0xff]
    %v2223 = vld [vmem:[#allocation7 + $0x78] sm:$0xff]
    %v2224 = vld [vmem:[#allocation7 + $0x80] sm:$0xff]
    %v2225 = vld [vmem:[#allocation7 + $0x88] sm:$0xff]
    %v2226 = vld [vmem:[#allocation7 + $0x90] sm:$0xff]
    %v2227 = vld [vmem:[#allocation7 + $0x98] sm:$0xff]
    %v2228 = vld [vmem:[#allocation7 + $0xa0] sm:$0xff]
    %v2229 = vld [vmem:[#allocation7 + $0xa8] sm:$0xff]
    %v2230 = vld [vmem:[#allocation7 + $0xb0] sm:$0xff]
    %v2231 = vld [vmem:[#allocation7 + $0xb8] sm:$0xff]
    %v2232 = vld [vmem:[#allocation7 + $0xc0] sm:$0xff]
    %v2233 = vld [vmem:[#allocation7 + $0xc8] sm:$0xff]
    %v2234 = vld [vmem:[#allocation7 + $0xd0] sm:$0xff]
    %v2235 = vld [vmem:[#allocation7 + $0xd8] sm:$0xff]
    %v2236 = vld [vmem:[#allocation7 + $0xe0] sm:$0xff]
    %v2237 = vld [vmem:[#allocation7 + $0xe8] sm:$0xff]
    %v2238 = vld [vmem:[#allocation7 + $0xf0] sm:$0xff]
    %v2239 = vld [vmem:[#allocation7 + $0xf8] sm:$0xff]
    %v2272 = vunpack.c.l.b16 %v2208
    %v2273 = vunpack.c.h.b16 %v2208
    %v2274 = vunpack.c.l.b16 %v2209
    %v2275 = vunpack.c.h.b16 %v2209
    %v2276 = vunpack.c.l.b16 %v2210
    %v2277 = vunpack.c.h.b16 %v2210
    %v2278 = vunpack.c.l.b16 %v2211
    %v2279 = vunpack.c.h.b16 %v2211
    %v2280 = vunpack.c.l.b16 %v2212
    %v2281 = vunpack.c.h.b16 %v2212
    %v2282 = vunpack.c.l.b16 %v2213
    %v2283 = vunpack.c.h.b16 %v2213
    %v2284 = vunpack.c.l.b16 %v2214
    %v2285 = vunpack.c.h.b16 %v2214
    %v2286 = vunpack.c.l.b16 %v2215
    %v2287 = vunpack.c.h.b16 %v2215
    %v2288 = vunpack.c.l.b16 %v2216
    %v2289 = vunpack.c.h.b16 %v2216
    %v2290 = vunpack.c.l.b16 %v2217
    %v2291 = vunpack.c.h.b16 %v2217
    %v2292 = vunpack.c.l.b16 %v2218
    %v2293 = vunpack.c.h.b16 %v2218
    %v2294 = vunpack.c.l.b16 %v2219
    %v2295 = vunpack.c.h.b16 %v2219
    %v2296 = vunpack.c.l.b16 %v2220
    %v2297 = vunpack.c.h.b16 %v2220
    %v2298 = vunpack.c.l.b16 %v2221
    %v2299 = vunpack.c.h.b16 %v2221
    %v2300 = vunpack.c.l.b16 %v2222
    %v2301 = vunpack.c.h.b16 %v2222
    %v2302 = vunpack.c.l.b16 %v2223
    %v2303 = vunpack.c.h.b16 %v2223
    %v2304 = vunpack.c.l.b16 %v2224
    %v2305 = vunpack.c.h.b16 %v2224
    %v2306 = vunpack.c.l.b16 %v2225
    %v2307 = vunpack.c.h.b16 %v2225
    %v2308 = vunpack.c.l.b16 %v2226
    %v2309 = vunpack.c.h.b16 %v2226
    %v2310 = vunpack.c.l.b16 %v2227
    %v2311 = vunpack.c.h.b16 %v2227
    %v2312 = vunpack.c.l.b16 %v2228
    %v2313 = vunpack.c.h.b16 %v2228
    %v2314 = vunpack.c.l.b16 %v2229
    %v2315 = vunpack.c.h.b16 %v2229
    %v2316 = vunpack.c.l.b16 %v2230
    %v2317 = vunpack.c.h.b16 %v2230
    %v2318 = vunpack.c.l.b16 %v2231
    %v2319 = vunpack.c.h.b16 %v2231
    %v2320 = vunpack.c.l.b16 %v2232
    %v2321 = vunpack.c.h.b16 %v2232
    %v2322 = vunpack.c.l.b16 %v2233
    %v2323 = vunpack.c.h.b16 %v2233
    %v2324 = vunpack.c.l.b16 %v2234
    %v2325 = vunpack.c.h.b16 %v2234
    %v2326 = vunpack.c.l.b16 %v2235
    %v2327 = vunpack.c.h.b16 %v2235
    %v2328 = vunpack.c.l.b16 %v2236
    %v2329 = vunpack.c.h.b16 %v2236
    %v2330 = vunpack.c.l.b16 %v2237
    %v2331 = vunpack.c.h.b16 %v2237
    %v2332 = vunpack.c.l.b16 %v2238
    %v2333 = vunpack.c.h.b16 %v2238
    %v2334 = vunpack.c.l.b16 %v2239
    %v2335 = vunpack.c.h.b16 %v2239
    %v2336 = vpack.c.b16 %v2276, %v2272
    %v2337 = vpack.c.b16 %v2277, %v2273
    %v2338 = vpack.c.b16 %v2278, %v2274
    %v2339 = vpack.c.b16 %v2279, %v2275
    %v2340 = vpack.c.b16 %v2284, %v2280
    %v2341 = vpack.c.b16 %v2285, %v2281
    %v2342 = vpack.c.b16 %v2286, %v2282
    %v2343 = vpack.c.b16 %v2287, %v2283
    %v2344 = vpack.c.b16 %v2292, %v2288
    %v2345 = vpack.c.b16 %v2293, %v2289
    %v2346 = vpack.c.b16 %v2294, %v2290
    %v2347 = vpack.c.b16 %v2295, %v2291
    %v2348 = vpack.c.b16 %v2300, %v2296
    %v2349 = vpack.c.b16 %v2301, %v2297
    %v2350 = vpack.c.b16 %v2302, %v2298
    %v2351 = vpack.c.b16 %v2303, %v2299
    %v2352 = vpack.c.b16 %v2308, %v2304
    %v2353 = vpack.c.b16 %v2309, %v2305
    %v2354 = vpack.c.b16 %v2310, %v2306
    %v2355 = vpack.c.b16 %v2311, %v2307
    %v2356 = vpack.c.b16 %v2316, %v2312
    %v2357 = vpack.c.b16 %v2317, %v2313
    %v2358 = vpack.c.b16 %v2318, %v2314
    %v2359 = vpack.c.b16 %v2319, %v2315
    %v2360 = vpack.c.b16 %v2324, %v2320
    %v2361 = vpack.c.b16 %v2325, %v2321
    %v2362 = vpack.c.b16 %v2326, %v2322
    %v2363 = vpack.c.b16 %v2327, %v2323
    %v2364 = vpack.c.b16 %v2332, %v2328
    %v2365 = vpack.c.b16 %v2333, %v2329
    %v2366 = vpack.c.b16 %v2334, %v2330
    %v2367 = vpack.c.b16 %v2335, %v2331
    %2400 = vmatprep.subr.bf16.mxu0 %v2337
    %2401 = vmatpush1.bf16.msra.mxu0 %v2336
    %2402 = vmatprep.subr.bf16.mxu0 %v2341
    %2403 = vmatpush1.bf16.msra.mxu0 %v2340
    %2404 = vmatprep.subr.bf16.mxu0 %v2345
    %2405 = vmatpush1.bf16.msra.mxu0 %v2344
    %2406 = vmatprep.subr.bf16.mxu0 %v2349
    %2407 = vmatpush1.bf16.msra.mxu0 %v2348
    %2408 = vmatprep.subr.bf16.mxu0 %v2353
    %2409 = vmatpush1.bf16.msra.mxu0 %v2352
    %2410 = vmatprep.subr.bf16.mxu0 %v2357
    %2411 = vmatpush1.bf16.msra.mxu0 %v2356
    %2412 = vmatprep.subr.bf16.mxu0 %v2361
    %2413 = vmatpush1.bf16.msra.mxu0 %v2360
    %2414 = vmatprep.subr.bf16.mxu0 %v2365
    %2415 = vmatpush1.bf16.msra.mxu0 %v2364
    %2416 = vmatprep.subr.bf16.mxu0 0
    %2417 = vmatpush1.bf16.msra.mxu0 0
    %2418 = vmatprep.subr.bf16.mxu0 0
    %2419 = vmatpush1.bf16.msra.mxu0 0
    %2420 = vmatprep.subr.bf16.mxu0 0
    %2421 = vmatpush1.bf16.msra.mxu0 0
    %2422 = vmatprep.subr.bf16.mxu0 0
    %2423 = vmatpush1.bf16.msra.mxu0 0
    %2424 = vmatprep.subr.bf16.mxu0 0
    %2425 = vmatpush1.bf16.msra.mxu0 0
    %2426 = vmatprep.subr.bf16.mxu0 0
    %2427 = vmatpush1.bf16.msra.mxu0 0
    %2428 = vmatprep.subr.bf16.mxu0 0
    %2429 = vmatpush1.bf16.msra.mxu0 0
    %2430 = vmatprep.subr.bf16.mxu0 0
    %2431 = vmatpush1.bf16.msra.mxu0 0
    %2432 = vmatprep.mubr.bf16.mxu0 0
    %2433 = vmatmul.mubr.bf16.gmra.mrb[0].mxu0 %v2207
    %v2434 = vpop.f32.mrb[0].mxu0
    %v2435 = vadd.f32 0.0, %v2434
    %v2436 = vpop.f32.mrb[0].mxu0
    %v2437 = vadd.f32 0.0, %v2436
    %v2438 = vpop.f32.mrb[0].mxu0
    %v2439 = vpop.f32.mrb[0].mxu0
    %2440 = vdwg.mxu0
    %2441 = vmatprep.subr.bf16.mxu0 %v2339
    %2442 = vmatpush1.bf16.msra.mxu0 %v2338
    %2443 = vmatprep.subr.bf16.mxu0 %v2343
    %2444 = vmatpush1.bf16.msra.mxu0 %v2342
    %2445 = vmatprep.subr.bf16.mxu0 %v2347
    %2446 = vmatpush1.bf16.msra.mxu0 %v2346
    %2447 = vmatprep.subr.bf16.mxu0 %v2351
    %2448 = vmatpush1.bf16.msra.mxu0 %v2350
    %2449 = vmatprep.subr.bf16.mxu0 %v2355
    %2450 = vmatpush1.bf16.msra.mxu0 %v2354
    %2451 = vmatprep.subr.bf16.mxu0 %v2359
    %2452 = vmatpush1.bf16.msra.mxu0 %v2358
    %2453 = vmatprep.subr.bf16.mxu0 %v2363
    %2454 = vmatpush1.bf16.msra.mxu0 %v2362
    %2455 = vmatprep.subr.bf16.mxu0 %v2367
    %2456 = vmatpush1.bf16.msra.mxu0 %v2366
    %2457 = vmatprep.subr.bf16.mxu0 0
    %2458 = vmatpush1.bf16.msra.mxu0 0
    %2459 = vmatprep.subr.bf16.mxu0 0
    %2460 = vmatpush1.bf16.msra.mxu0 0
    %2461 = vmatprep.subr.bf16.mxu0 0
    %2462 = vmatpush1.bf16.msra.mxu0 0
    %2463 = vmatprep.subr.bf16.mxu0 0
    %2464 = vmatpush1.bf16.msra.mxu0 0
    %2465 = vmatprep.subr.bf16.mxu0 0
    %2466 = vmatpush1.bf16.msra.mxu0 0
    %2467 = vmatprep.subr.bf16.mxu0 0
    %2468 = vmatpush1.bf16.msra.mxu0 0
    %2469 = vmatprep.subr.bf16.mxu0 0
    %2470 = vmatpush1.bf16.msra.mxu0 0
    %2471 = vmatprep.subr.bf16.mxu0 0
    %2472 = vmatpush1.bf16.msra.mxu0 0
    %2473 = vmatprep.mubr.bf16.mxu0 0
    %2474 = vmatmul.mubr.bf16.gmra.mrb[0].mxu0 %v2207
    %v2475 = vpop.f32.mrb[0].mxu0
    %v2476 = vadd.f32 0.0, %v2475
    %v2477 = vpop.f32.mrb[0].mxu0
    %v2478 = vadd.f32 0.0, %v2477
    %v2479 = vpop.f32.mrb[0].mxu0
    %v2480 = vpop.f32.mrb[0].mxu0
    %2481 = vdwg.mxu0
    %v2486 = vrot.slane %v2435, 5
    %v2487 = vrot.slane %v2437, 5
    %v2488 = vrot.slane %v2476, 5
    %v2489 = vrot.slane %v2478, 5
    %v2490 = vrot.slane %v2435, 6
    %v2491 = vrot.slane %v2437, 6
    %v2492 = vrot.slane %v2476, 6
    %v2493 = vrot.slane %v2478, 6
    %v2494 = vrot.slane %v2435, 7
    %v2495 = vrot.slane %v2437, 7
    %v2496 = vrot.slane %v2476, 7
    %v2497 = vrot.slane %v2478, 7
    %v2498 = vrot.slane %v2435, 1
    %v2499 = vrot.slane %v2437, 1
    %v2500 = vrot.slane %v2476, 1
    %v2501 = vrot.slane %v2478, 1
    %v2502 = vrot.slane %v2435, 2
    %v2503 = vrot.slane %v2437, 2
    %v2504 = vrot.slane %v2476, 2
    %v2505 = vrot.slane %v2478, 2
    %v2506 = vrot.slane %v2435, 3
    %v2507 = vrot.slane %v2437, 3
    %v2508 = vrot.slane %v2476, 3
    %v2509 = vrot.slane %v2478, 3
    %v2510 = vrot.slane %v2435, 4
    %v2511 = vrot.slane %v2437, 4
    %v2512 = vrot.slane %v2476, 4
    %v2513 = vrot.slane %v2478, 4
    %v2546 = vadd.f32 %v2175, %v2486
    %v2547 = vadd.f32 %v2176, %v2487
    %v2548 = vadd.f32 %v2177, %v2488
    %v2549 = vadd.f32 %v2178, %v2489
    %v2550 = vadd.f32 %v2179, %v2490
    %v2551 = vadd.f32 %v2180, %v2491
    %v2552 = vadd.f32 %v2181, %v2492
    %v2553 = vadd.f32 %v2182, %v2493
    %v2554 = vadd.f32 %v2183, %v2494
    %v2555 = vadd.f32 %v2184, %v2495
    %v2556 = vadd.f32 %v2185, %v2496
    %v2557 = vadd.f32 %v2186, %v2497
    %v2558 = vadd.f32 %v2187, %v2435
    %v2559 = vadd.f32 %v2188, %v2437
    %v2560 = vadd.f32 %v2189, %v2476
    %v2561 = vadd.f32 %v2190, %v2478
    %v2562 = vadd.f32 %v2191, %v2498
    %v2563 = vadd.f32 %v2192, %v2499
    %v2564 = vadd.f32 %v2193, %v2500
    %v2565 = vadd.f32 %v2194, %v2501
    %v2566 = vadd.f32 %v2195, %v2502
    %v2567 = vadd.f32 %v2196, %v2503
    %v2568 = vadd.f32 %v2197, %v2504
    %v2569 = vadd.f32 %v2198, %v2505
    %v2570 = vadd.f32 %v2199, %v2506
    %v2571 = vadd.f32 %v2200, %v2507
    %v2572 = vadd.f32 %v2201, %v2508
    %v2573 = vadd.f32 %v2202, %v2509
    %v2574 = vadd.f32 %v2203, %v2510
    %v2575 = vadd.f32 %v2204, %v2511
    %v2576 = vadd.f32 %v2205, %v2512
    %v2577 = vadd.f32 %v2206, %v2513
    %v2578 = vmul.f32 %v2546, 0.5
    %v2579 = vmul.f32 %v2550, 0.5
    %v2580 = vmul.f32 %v2554, 0.5
    %v2581 = vmul.f32 %v2558, 0.5
    %v2582 = vmul.f32 %v2562, 0.5
    %v2583 = vmul.f32 %v2566, 0.5
    %v2584 = vmul.f32 %v2570, 0.5
    %v2585 = vmul.f32 %v2574, 0.5
    %v2586 = vtanh.pop %v2578
    %v2587 = vtanh.pop %v2579
    %v2588 = vtanh.pop %v2580
    %v2589 = vtanh.pop %v2581
    %v2590 = vtanh.pop %v2582
    %v2591 = vtanh.pop %v2583
    %v2592 = vtanh.pop %v2584
    %v2593 = vtanh.pop %v2585
    %v2594 = vmul.f32 %v2586, 0.5
    %v2595 = vmul.f32 %v2587, 0.5
    %v2596 = vmul.f32 %v2588, 0.5
    %v2597 = vmul.f32 %v2589, 0.5
    %v2598 = vmul.f32 %v2590, 0.5
    %v2599 = vmul.f32 %v2591, 0.5
    %v2600 = vmul.f32 %v2592, 0.5
    %v2601 = vmul.f32 %v2593, 0.5
    %v2602 = vadd.f32 %v2594, 0.5
    %v2603 = vadd.f32 %v2595, 0.5
    %v2604 = vadd.f32 %v2596, 0.5
    %v2605 = vadd.f32 %v2597, 0.5
    %v2606 = vadd.f32 %v2598, 0.5
    %v2607 = vadd.f32 %v2599, 0.5
    %v2608 = vadd.f32 %v2600, 0.5
    %v2609 = vadd.f32 %v2601, 0.5
    %v2610 = vmul.f32 %v2547, 0.5
    %v2611 = vmul.f32 %v2551, 0.5
    %v2612 = vmul.f32 %v2555, 0.5
    %v2613 = vmul.f32 %v2559, 0.5
    %v2614 = vmul.f32 %v2563, 0.5
    %v2615 = vmul.f32 %v2567, 0.5
    %v2616 = vmul.f32 %v2571, 0.5
    %v2617 = vmul.f32 %v2575, 0.5
    %v2618 = vtanh.pop %v2610
    %v2619 = vtanh.pop %v2611
    %v2620 = vtanh.pop %v2612
    %v2621 = vtanh.pop %v2613
    %v2622 = vtanh.pop %v2614
    %v2623 = vtanh.pop %v2615
    %v2624 = vtanh.pop %v2616
    %v2625 = vtanh.pop %v2617
    %v2626 = vmul.f32 %v2618, 0.5
    %v2627 = vmul.f32 %v2619, 0.5
    %v2628 = vmul.f32 %v2620, 0.5
    %v2629 = vmul.f32 %v2621, 0.5
    %v2630 = vmul.f32 %v2622, 0.5
    %v2631 = vmul.f32 %v2623, 0.5
    %v2632 = vmul.f32 %v2624, 0.5
    %v2633 = vmul.f32 %v2625, 0.5
    %v2634 = vadd.f32 %v2626, 0.5
    %v2635 = vadd.f32 %v2627, 0.5
    %v2636 = vadd.f32 %v2628, 0.5
    %v2637 = vadd.f32 %v2629, 0.5
    %v2638 = vadd.f32 %v2630, 0.5
    %v2639 = vadd.f32 %v2631, 0.5
    %v2640 = vadd.f32 %v2632, 0.5
    %v2641 = vadd.f32 %v2633, 0.5
    %v2642 = vtanh.pop %v2548
    %v2643 = vtanh.pop %v2552
    %v2644 = vtanh.pop %v2556
    %v2645 = vtanh.pop %v2560
    %v2646 = vtanh.pop %v2564
    %v2647 = vtanh.pop %v2568
    %v2648 = vtanh.pop %v2572
    %v2649 = vtanh.pop %v2576
    %v2650 = vmul.f32 %v2549, 0.5
    %v2651 = vmul.f32 %v2553, 0.5
    %v2652 = vmul.f32 %v2557, 0.5
    %v2653 = vmul.f32 %v2561, 0.5
    %v2654 = vmul.f32 %v2565, 0.5
    %v2655 = vmul.f32 %v2569, 0.5
    %v2656 = vmul.f32 %v2573, 0.5
    %v2657 = vmul.f32 %v2577, 0.5
    %v2658 = vtanh.pop %v2650
    %v2659 = vtanh.pop %v2651
    %v2660 = vtanh.pop %v2652
    %v2661 = vtanh.pop %v2653
    %v2662 = vtanh.pop %v2654
    %v2663 = vtanh.pop %v2655
    %v2664 = vtanh.pop %v2656
    %v2665 = vtanh.pop %v2657
    %v2666 = vmul.f32 %v2658, 0.5
    %v2667 = vmul.f32 %v2659, 0.5
    %v2668 = vmul.f32 %v2660, 0.5
    %v2669 = vmul.f32 %v2661, 0.5
    %v2670 = vmul.f32 %v2662, 0.5
    %v2671 = vmul.f32 %v2663, 0.5
    %v2672 = vmul.f32 %v2664, 0.5
    %v2673 = vmul.f32 %v2665, 0.5
    %v2674 = vadd.f32 %v2666, 0.5
    %v2675 = vadd.f32 %v2667, 0.5
    %v2676 = vadd.f32 %v2668, 0.5
    %v2677 = vadd.f32 %v2669, 0.5
    %v2678 = vadd.f32 %v2670, 0.5
    %v2679 = vadd.f32 %v2671, 0.5
    %v2680 = vadd.f32 %v2672, 0.5
    %v2681 = vadd.f32 %v2673, 0.5
    %v2683 = vrot.slane %v2126, 5
    %v2684 = vrot.slane %v2126, 6
    %v2685 = vrot.slane %v2126, 7
    %v2686 = vrot.slane %v2126, 1
    %v2687 = vrot.slane %v2126, 2
    %v2688 = vrot.slane %v2126, 3
    %v2689 = vrot.slane %v2126, 4
    %v2698 = vmul.f32 %v2634, %v2683
    %v2699 = vmul.f32 %v2635, %v2684
    %v2700 = vmul.f32 %v2636, %v2685
    %v2701 = vmul.f32 %v2637, %v2126
    %v2702 = vmul.f32 %v2638, %v2686
    %v2703 = vmul.f32 %v2639, %v2687
    %v2704 = vmul.f32 %v2640, %v2688
    %v2705 = vmul.f32 %v2641, %v2689
    %v2706 = vmul.f32 %v2602, %v2642
    %v2707 = vmul.f32 %v2603, %v2643
    %v2708 = vmul.f32 %v2604, %v2644
    %v2709 = vmul.f32 %v2605, %v2645
    %v2710 = vmul.f32 %v2606, %v2646
    %v2711 = vmul.f32 %v2607, %v2647
    %v2712 = vmul.f32 %v2608, %v2648
    %v2713 = vmul.f32 %v2609, %v2649
    %v2714 = vadd.f32 %v2698, %v2706
    %v2715 = vadd.f32 %v2699, %v2707
    %v2716 = vadd.f32 %v2700, %v2708
    %v2717 = vadd.f32 %v2701, %v2709
    %v2718 = vadd.f32 %v2702, %v2710
    %v2719 = vadd.f32 %v2703, %v2711
    %v2720 = vadd.f32 %v2704, %v2712
    %v2721 = vadd.f32 %v2705, %v2713
    %v2722 = vtanh.pop %v2714
    %v2723 = vtanh.pop %v2715
    %v2724 = vtanh.pop %v2716
    %v2725 = vtanh.pop %v2717
    %v2726 = vtanh.pop %v2718
    %v2727 = vtanh.pop %v2719
    %v2728 = vtanh.pop %v2720
    %v2729 = vtanh.pop %v2721
    %v2730 = vmul.f32 %v2674, %v2722
    %v2731 = vmul.f32 %v2675, %v2723
    %v2732 = vmul.f32 %v2676, %v2724
    %v2733 = vmul.f32 %v2677, %v2725
    %v2734 = vmul.f32 %v2678, %v2726
    %v2735 = vmul.f32 %v2679, %v2727
    %v2736 = vmul.f32 %v2680, %v2728
    %v2737 = vmul.f32 %v2681, %v2729
    %v2746 = vrot.slane %v2731, 7
    %v2747 = vsel %vm738, %v2746, %v2730
    %v2748 = vrot.slane %v2732, 6
    %v2749 = vsel %vm741, %v2748, %v2747
    %v2750 = vrot.slane %v2733, 5
    %v2751 = vsel %vm744, %v2750, %v2749
    %v2752 = vrot.slane %v2734, 4
    %v2753 = vsel %vm747, %v2752, %v2751
    %v2754 = vrot.slane %v2735, 3
    %v2755 = vrot.slane %v2736, 2
    %v2756 = vsel %vm729, %v2755, %v2754
    %v2757 = vrot.slane %v2737, 1
    %v2758 = vsel %vm732, %v2757, %v2756
    %2761 = vst [vmem:[#allocation2 - $0x3] sm:$0xf8] %v2753
    %2762 = vst [vmem:[#allocation2 + $0x5] sm:$0x7] %v2758
    %v2771 = vrot.slane %v2715, 7
    %v2772 = vsel %vm738, %v2771, %v2714
    %v2773 = vrot.slane %v2716, 6
    %v2774 = vsel %vm741, %v2773, %v2772
    %v2775 = vrot.slane %v2717, 5
    %v2776 = vsel %vm744, %v2775, %v2774
    %v2777 = vrot.slane %v2718, 4
    %v2778 = vsel %vm747, %v2777, %v2776
    %v2779 = vrot.slane %v2719, 3
    %v2780 = vrot.slane %v2720, 2
    %v2781 = vsel %vm729, %v2780, %v2779
    %v2782 = vrot.slane %v2721, 1
    %v2783 = vsel %vm732, %v2782, %v2781
    %2786 = vst [vmem:[#allocation3 - $0x3] sm:$0xf8] %v2778
    %2787 = vst [vmem:[#allocation3 + $0x5] sm:$0x7] %v2783
    %2788 = vst [vmem:[#allocation12] sm:$0x8] %v2730
    %2789 = vst [vmem:[#allocation12 + $0x10] sm:$0x8] %v2731
    %2790 = vst [vmem:[#allocation12 + $0x20] sm:$0x8] %v2732
    %2791 = vst [vmem:[#allocation12 + $0x30] sm:$0x8] %v2733
    %2792 = vst [vmem:[#allocation12 + $0x40] sm:$0x8] %v2734
    %2793 = vst [vmem:[#allocation12 + $0x50] sm:$0x8] %v2735
    %2794 = vst [vmem:[#allocation12 + $0x60] sm:$0x8] %v2736
    %2795 = vst [vmem:[#allocation12 + $0x70] sm:$0x8] %v2737
    %v2796 = vld [vmem:[#allocation2] sm:$0xff]
    %v2797 = vld [vmem:[#allocation3] sm:$0xff]
    %v2798 = vld [vmem:[#allocation4] sm:$0x44]
    %v2799 = vld [vmem:[#allocation4 + $0x8] sm:$0x44]
    %v2800 = vld [vmem:[#allocation4 + $0x20] sm:$0x44]
    %v2801 = vld [vmem:[#allocation4 + $0x28] sm:$0x44]
    %v2802 = vld [vmem:[#allocation4 + $0x40] sm:$0x44]
    %v2803 = vld [vmem:[#allocation4 + $0x48] sm:$0x44]
    %v2804 = vld [vmem:[#allocation4 + $0x60] sm:$0x44]
    %v2805 = vld [vmem:[#allocation4 + $0x68] sm:$0x44]
    %v2806 = vld [vmem:[#allocation4 + $0x80] sm:$0x44]
    %v2807 = vld [vmem:[#allocation4 + $0x88] sm:$0x44]
    %v2808 = vld [vmem:[#allocation4 + $0xa0] sm:$0x44]
    %v2809 = vld [vmem:[#allocation4 + $0xa8] sm:$0x44]
    %v2810 = vld [vmem:[#allocation4 + $0xc0] sm:$0x44]
    %v2811 = vld [vmem:[#allocation4 + $0xc8] sm:$0x44]
    %v2812 = vld [vmem:[#allocation4 + $0xe0] sm:$0x44]
    %v2813 = vld [vmem:[#allocation4 + $0xe8] sm:$0x44]
    %v2814 = vunpack.c.l.bf16 %v2798
    %v2815 = vunpack.c.h.bf16 %v2798
    %v2816 = vunpack.c.l.bf16 %v2799
    %v2817 = vunpack.c.h.bf16 %v2799
    %v2818 = vunpack.c.l.bf16 %v2800
    %v2819 = vunpack.c.h.bf16 %v2800
    %v2820 = vunpack.c.l.bf16 %v2801
    %v2821 = vunpack.c.h.bf16 %v2801
    %v2822 = vunpack.c.l.bf16 %v2802
    %v2823 = vunpack.c.h.bf16 %v2802
    %v2824 = vunpack.c.l.bf16 %v2803
    %v2825 = vunpack.c.h.bf16 %v2803
    %v2826 = vunpack.c.l.bf16 %v2804
    %v2827 = vunpack.c.h.bf16 %v2804
    %v2828 = vunpack.c.l.bf16 %v2805
    %v2829 = vunpack.c.h.bf16 %v2805
    %v2830 = vunpack.c.l.bf16 %v2806
    %v2831 = vunpack.c.h.bf16 %v2806
    %v2832 = vunpack.c.l.bf16 %v2807
    %v2833 = vunpack.c.h.bf16 %v2807
    %v2834 = vunpack.c.l.bf16 %v2808
    %v2835 = vunpack.c.h.bf16 %v2808
    %v2836 = vunpack.c.l.bf16 %v2809
    %v2837 = vunpack.c.h.bf16 %v2809
    %v2838 = vunpack.c.l.bf16 %v2810
    %v2839 = vunpack.c.h.bf16 %v2810
    %v2840 = vunpack.c.l.bf16 %v2811
    %v2841 = vunpack.c.h.bf16 %v2811
    %v2842 = vunpack.c.l.bf16 %v2812
    %v2843 = vunpack.c.h.bf16 %v2812
    %v2844 = vunpack.c.l.bf16 %v2813
    %v2845 = vunpack.c.h.bf16 %v2813
    %v2846 = vadd.f32 %v2814, %v140
    %v2847 = vadd.f32 %v2815, %v144
    %v2848 = vadd.f32 %v2816, %v148
    %v2849 = vadd.f32 %v2817, %v152
    %v2850 = vadd.f32 %v2818, %v140
    %v2851 = vadd.f32 %v2819, %v144
    %v2852 = vadd.f32 %v2820, %v148
    %v2853 = vadd.f32 %v2821, %v152
    %v2854 = vadd.f32 %v2822, %v140
    %v2855 = vadd.f32 %v2823, %v144
    %v2856 = vadd.f32 %v2824, %v148
    %v2857 = vadd.f32 %v2825, %v152
    %v2858 = vadd.f32 %v2826, %v140
    %v2859 = vadd.f32 %v2827, %v144
    %v2860 = vadd.f32 %v2828, %v148
    %v2861 = vadd.f32 %v2829, %v152
    %v2862 = vadd.f32 %v2830, %v140
    %v2863 = vadd.f32 %v2831, %v144
    %v2864 = vadd.f32 %v2832, %v148
    %v2865 = vadd.f32 %v2833, %v152
    %v2866 = vadd.f32 %v2834, %v140
    %v2867 = vadd.f32 %v2835, %v144
    %v2868 = vadd.f32 %v2836, %v148
    %v2869 = vadd.f32 %v2837, %v152
    %v2870 = vadd.f32 %v2838, %v140
    %v2871 = vadd.f32 %v2839, %v144
    %v2872 = vadd.f32 %v2840, %v148
    %v2873 = vadd.f32 %v2841, %v152
    %v2874 = vadd.f32 %v2842, %v140
    %v2875 = vadd.f32 %v2843, %v144
    %v2876 = vadd.f32 %v2844, %v148
    %v2877 = vadd.f32 %v2845, %v152
    %v2878 = vpack.c.bf16 %v2796, %v2796
    %v2879 = vld [vmem:[#allocation7] sm:$0xff]
    %v2880 = vld [vmem:[#allocation7 + $0x8] sm:$0xff]
    %v2881 = vld [vmem:[#allocation7 + $0x10] sm:$0xff]
    %v2882 = vld [vmem:[#allocation7 + $0x18] sm:$0xff]
    %v2883 = vld [vmem:[#allocation7 + $0x20] sm:$0xff]
    %v2884 = vld [vmem:[#allocation7 + $0x28] sm:$0xff]
    %v2885 = vld [vmem:[#allocation7 + $0x30] sm:$0xff]
    %v2886 = vld [vmem:[#allocation7 + $0x38] sm:$0xff]
    %v2887 = vld [vmem:[#allocation7 + $0x40] sm:$0xff]
    %v2888 = vld [vmem:[#allocation7 + $0x48] sm:$0xff]
    %v2889 = vld [vmem:[#allocation7 + $0x50] sm:$0xff]
    %v2890 = vld [vmem:[#allocation7 + $0x58] sm:$0xff]
    %v2891 = vld [vmem:[#allocation7 + $0x60] sm:$0xff]
    %v2892 = vld [vmem:[#allocation7 + $0x68] sm:$0xff]
    %v2893 = vld [vmem:[#allocation7 + $0x70] sm:$0xff]
    %v2894 = vld [vmem:[#allocation7 + $0x78] sm:$0xff]
    %v2895 = vld [vmem:[#allocation7 + $0x80] sm:$0xff]
    %v2896 = vld [vmem:[#allocation7 + $0x88] sm:$0xff]
    %v2897 = vld [vmem:[#allocation7 + $0x90] sm:$0xff]
    %v2898 = vld [vmem:[#allocation7 + $0x98] sm:$0xff]
    %v2899 = vld [vmem:[#allocation7 + $0xa0] sm:$0xff]
    %v2900 = vld [vmem:[#allocation7 + $0xa8] sm:$0xff]
    %v2901 = vld [vmem:[#allocation7 + $0xb0] sm:$0xff]
    %v2902 = vld [vmem:[#allocation7 + $0xb8] sm:$0xff]
    %v2903 = vld [vmem:[#allocation7 + $0xc0] sm:$0xff]
    %v2904 = vld [vmem:[#allocation7 + $0xc8] sm:$0xff]
    %v2905 = vld [vmem:[#allocation7 + $0xd0] sm:$0xff]
    %v2906 = vld [vmem:[#allocation7 + $0xd8] sm:$0xff]
    %v2907 = vld [vmem:[#allocation7 + $0xe0] sm:$0xff]
    %v2908 = vld [vmem:[#allocation7 + $0xe8] sm:$0xff]
    %v2909 = vld [vmem:[#allocation7 + $0xf0] sm:$0xff]
    %v2910 = vld [vmem:[#allocation7 + $0xf8] sm:$0xff]
    %v2943 = vunpack.c.l.b16 %v2879
    %v2944 = vunpack.c.h.b16 %v2879
    %v2945 = vunpack.c.l.b16 %v2880
    %v2946 = vunpack.c.h.b16 %v2880
    %v2947 = vunpack.c.l.b16 %v2881
    %v2948 = vunpack.c.h.b16 %v2881
    %v2949 = vunpack.c.l.b16 %v2882
    %v2950 = vunpack.c.h.b16 %v2882
    %v2951 = vunpack.c.l.b16 %v2883
    %v2952 = vunpack.c.h.b16 %v2883
    %v2953 = vunpack.c.l.b16 %v2884
    %v2954 = vunpack.c.h.b16 %v2884
    %v2955 = vunpack.c.l.b16 %v2885
    %v2956 = vunpack.c.h.b16 %v2885
    %v2957 = vunpack.c.l.b16 %v2886
    %v2958 = vunpack.c.h.b16 %v2886
    %v2959 = vunpack.c.l.b16 %v2887
    %v2960 = vunpack.c.h.b16 %v2887
    %v2961 = vunpack.c.l.b16 %v2888
    %v2962 = vunpack.c.h.b16 %v2888
    %v2963 = vunpack.c.l.b16 %v2889
    %v2964 = vunpack.c.h.b16 %v2889
    %v2965 = vunpack.c.l.b16 %v2890
    %v2966 = vunpack.c.h.b16 %v2890
    %v2967 = vunpack.c.l.b16 %v2891
    %v2968 = vunpack.c.h.b16 %v2891
    %v2969 = vunpack.c.l.b16 %v2892
    %v2970 = vunpack.c.h.b16 %v2892
    %v2971 = vunpack.c.l.b16 %v2893
    %v2972 = vunpack.c.h.b16 %v2893
    %v2973 = vunpack.c.l.b16 %v2894
    %v2974 = vunpack.c.h.b16 %v2894
    %v2975 = vunpack.c.l.b16 %v2895
    %v2976 = vunpack.c.h.b16 %v2895
    %v2977 = vunpack.c.l.b16 %v2896
    %v2978 = vunpack.c.h.b16 %v2896
    %v2979 = vunpack.c.l.b16 %v2897
    %v2980 = vunpack.c.h.b16 %v2897
    %v2981 = vunpack.c.l.b16 %v2898
    %v2982 = vunpack.c.h.b16 %v2898
    %v2983 = vunpack.c.l.b16 %v2899
    %v2984 = vunpack.c.h.b16 %v2899
    %v2985 = vunpack.c.l.b16 %v2900
    %v2986 = vunpack.c.h.b16 %v2900
    %v2987 = vunpack.c.l.b16 %v2901
    %v2988 = vunpack.c.h.b16 %v2901
    %v2989 = vunpack.c.l.b16 %v2902
    %v2990 = vunpack.c.h.b16 %v2902
    %v2991 = vunpack.c.l.b16 %v2903
    %v2992 = vunpack.c.h.b16 %v2903
    %v2993 = vunpack.c.l.b16 %v2904
    %v2994 = vunpack.c.h.b16 %v2904
    %v2995 = vunpack.c.l.b16 %v2905
    %v2996 = vunpack.c.h.b16 %v2905
    %v2997 = vunpack.c.l.b16 %v2906
    %v2998 = vunpack.c.h.b16 %v2906
    %v2999 = vunpack.c.l.b16 %v2907
    %v3000 = vunpack.c.h.b16 %v2907
    %v3001 = vunpack.c.l.b16 %v2908
    %v3002 = vunpack.c.h.b16 %v2908
    %v3003 = vunpack.c.l.b16 %v2909
    %v3004 = vunpack.c.h.b16 %v2909
    %v3005 = vunpack.c.l.b16 %v2910
    %v3006 = vunpack.c.h.b16 %v2910
    %v3007 = vpack.c.b16 %v2947, %v2943
    %v3008 = vpack.c.b16 %v2948, %v2944
    %v3009 = vpack.c.b16 %v2949, %v2945
    %v3010 = vpack.c.b16 %v2950, %v2946
    %v3011 = vpack.c.b16 %v2955, %v2951
    %v3012 = vpack.c.b16 %v2956, %v2952
    %v3013 = vpack.c.b16 %v2957, %v2953
    %v3014 = vpack.c.b16 %v2958, %v2954
    %v3015 = vpack.c.b16 %v2963, %v2959
    %v3016 = vpack.c.b16 %v2964, %v2960
    %v3017 = vpack.c.b16 %v2965, %v2961
    %v3018 = vpack.c.b16 %v2966, %v2962
    %v3019 = vpack.c.b16 %v2971, %v2967
    %v3020 = vpack.c.b16 %v2972, %v2968
    %v3021 = vpack.c.b16 %v2973, %v2969
    %v3022 = vpack.c.b16 %v2974, %v2970
    %v3023 = vpack.c.b16 %v2979, %v2975
    %v3024 = vpack.c.b16 %v2980, %v2976
    %v3025 = vpack.c.b16 %v2981, %v2977
    %v3026 = vpack.c.b16 %v2982, %v2978
    %v3027 = vpack.c.b16 %v2987, %v2983
    %v3028 = vpack.c.b16 %v2988, %v2984
    %v3029 = vpack.c.b16 %v2989, %v2985
    %v3030 = vpack.c.b16 %v2990, %v2986
    %v3031 = vpack.c.b16 %v2995, %v2991
    %v3032 = vpack.c.b16 %v2996, %v2992
    %v3033 = vpack.c.b16 %v2997, %v2993
    %v3034 = vpack.c.b16 %v2998, %v2994
    %v3035 = vpack.c.b16 %v3003, %v2999
    %v3036 = vpack.c.b16 %v3004, %v3000
    %v3037 = vpack.c.b16 %v3005, %v3001
    %v3038 = vpack.c.b16 %v3006, %v3002
    %3071 = vmatprep.subr.bf16.mxu0 %v3008
    %3072 = vmatpush1.bf16.msra.mxu0 %v3007
    %3073 = vmatprep.subr.bf16.mxu0 %v3012
    %3074 = vmatpush1.bf16.msra.mxu0 %v3011
    %3075 = vmatprep.subr.bf16.mxu0 %v3016
    %3076 = vmatpush1.bf16.msra.mxu0 %v3015
    %3077 = vmatprep.subr.bf16.mxu0 %v3020
    %3078 = vmatpush1.bf16.msra.mxu0 %v3019
    %3079 = vmatprep.subr.bf16.mxu0 %v3024
    %3080 = vmatpush1.bf16.msra.mxu0 %v3023
    %3081 = vmatprep.subr.bf16.mxu0 %v3028
    %3082 = vmatpush1.bf16.msra.mxu0 %v3027
    %3083 = vmatprep.subr.bf16.mxu0 %v3032
    %3084 = vmatpush1.bf16.msra.mxu0 %v3031
    %3085 = vmatprep.subr.bf16.mxu0 %v3036
    %3086 = vmatpush1.bf16.msra.mxu0 %v3035
    %3087 = vmatprep.subr.bf16.mxu0 0
    %3088 = vmatpush1.bf16.msra.mxu0 0
    %3089 = vmatprep.subr.bf16.mxu0 0
    %3090 = vmatpush1.bf16.msra.mxu0 0
    %3091 = vmatprep.subr.bf16.mxu0 0
    %3092 = vmatpush1.bf16.msra.mxu0 0
    %3093 = vmatprep.subr.bf16.mxu0 0
    %3094 = vmatpush1.bf16.msra.mxu0 0
    %3095 = vmatprep.subr.bf16.mxu0 0
    %3096 = vmatpush1.bf16.msra.mxu0 0
    %3097 = vmatprep.subr.bf16.mxu0 0
    %3098 = vmatpush1.bf16.msra.mxu0 0
    %3099 = vmatprep.subr.bf16.mxu0 0
    %3100 = vmatpush1.bf16.msra.mxu0 0
    %3101 = vmatprep.subr.bf16.mxu0 0
    %3102 = vmatpush1.bf16.msra.mxu0 0
    %3103 = vmatprep.mubr.bf16.mxu0 0
    %3104 = vmatmul.mubr.bf16.gmra.mrb[0].mxu0 %v2878
    %v3105 = vpop.f32.mrb[0].mxu0
    %v3106 = vadd.f32 0.0, %v3105
    %v3107 = vpop.f32.mrb[0].mxu0
    %v3108 = vadd.f32 0.0, %v3107
    %v3109 = vpop.f32.mrb[0].mxu0
    %v3110 = vpop.f32.mrb[0].mxu0
    %3111 = vdwg.mxu0
    %3112 = vmatprep.subr.bf16.mxu0 %v3010
    %3113 = vmatpush1.bf16.msra.mxu0 %v3009
    %3114 = vmatprep.subr.bf16.mxu0 %v3014
    %3115 = vmatpush1.bf16.msra.mxu0 %v3013
    %3116 = vmatprep.subr.bf16.mxu0 %v3018
    %3117 = vmatpush1.bf16.msra.mxu0 %v3017
    %3118 = vmatprep.subr.bf16.mxu0 %v3022
    %3119 = vmatpush1.bf16.msra.mxu0 %v3021
    %3120 = vmatprep.subr.bf16.mxu0 %v3026
    %3121 = vmatpush1.bf16.msra.mxu0 %v3025
    %3122 = vmatprep.subr.bf16.mxu0 %v3030
    %3123 = vmatpush1.bf16.msra.mxu0 %v3029
    %3124 = vmatprep.subr.bf16.mxu0 %v3034
    %3125 = vmatpush1.bf16.msra.mxu0 %v3033
    %3126 = vmatprep.subr.bf16.mxu0 %v3038
    %3127 = vmatpush1.bf16.msra.mxu0 %v3037
    %3128 = vmatprep.subr.bf16.mxu0 0
    %3129 = vmatpush1.bf16.msra.mxu0 0
    %3130 = vmatprep.subr.bf16.mxu0 0
    %3131 = vmatpush1.bf16.msra.mxu0 0
    %3132 = vmatprep.subr.bf16.mxu0 0
    %3133 = vmatpush1.bf16.msra.mxu0 0
    %3134 = vmatprep.subr.bf16.mxu0 0
    %3135 = vmatpush1.bf16.msra.mxu0 0
    %3136 = vmatprep.subr.bf16.mxu0 0
    %3137 = vmatpush1.bf16.msra.mxu0 0
    %3138 = vmatprep.subr.bf16.mxu0 0
    %3139 = vmatpush1.bf16.msra.mxu0 0
    %3140 = vmatprep.subr.bf16.mxu0 0
    %3141 = vmatpush1.bf16.msra.mxu0 0
    %3142 = vmatprep.subr.bf16.mxu0 0
    %3143 = vmatpush1.bf16.msra.mxu0 0
    %3144 = vmatprep.mubr.bf16.mxu0 0
    %3145 = vmatmul.mubr.bf16.gmra.mrb[0].mxu0 %v2878
    %v3146 = vpop.f32.mrb[0].mxu0
    %v3147 = vadd.f32 0.0, %v3146
    %v3148 = vpop.f32.mrb[0].mxu0
    %v3149 = vadd.f32 0.0, %v3148
    %v3150 = vpop.f32.mrb[0].mxu0
    %v3151 = vpop.f32.mrb[0].mxu0
    %3152 = vdwg.mxu0
    %v3157 = vrot.slane %v3106, 4
    %v3158 = vrot.slane %v3108, 4
    %v3159 = vrot.slane %v3147, 4
    %v3160 = vrot.slane %v3149, 4
    %v3161 = vrot.slane %v3106, 5
    %v3162 = vrot.slane %v3108, 5
    %v3163 = vrot.slane %v3147, 5
    %v3164 = vrot.slane %v3149, 5
    %v3165 = vrot.slane %v3106, 6
    %v3166 = vrot.slane %v3108, 6
    %v3167 = vrot.slane %v3147, 6
    %v3168 = vrot.slane %v3149, 6
    %v3169 = vrot.slane %v3106, 7
    %v3170 = vrot.slane %v3108, 7
    %v3171 = vrot.slane %v3147, 7
    %v3172 = vrot.slane %v3149, 7
    %v3173 = vrot.slane %v3106, 1
    %v3174 = vrot.slane %v3108, 1
    %v3175 = vrot.slane %v3147, 1
    %v3176 = vrot.slane %v3149, 1
    %v3177 = vrot.slane %v3106, 2
    %v3178 = vrot.slane %v3108, 2
    %v3179 = vrot.slane %v3147, 2
    %v3180 = vrot.slane %v3149, 2
    %v3181 = vrot.slane %v3106, 3
    %v3182 = vrot.slane %v3108, 3
    %v3183 = vrot.slane %v3147, 3
    %v3184 = vrot.slane %v3149, 3
    %v3217 = vadd.f32 %v2846, %v3157
    %v3218 = vadd.f32 %v2847, %v3158
    %v3219 = vadd.f32 %v2848, %v3159
    %v3220 = vadd.f32 %v2849, %v3160
    %v3221 = vadd.f32 %v2850, %v3161
    %v3222 = vadd.f32 %v2851, %v3162
    %v3223 = vadd.f32 %v2852, %v3163
    %v3224 = vadd.f32 %v2853, %v3164
    %v3225 = vadd.f32 %v2854, %v3165
    %v3226 = vadd.f32 %v2855, %v3166
    %v3227 = vadd.f32 %v2856, %v3167
    %v3228 = vadd.f32 %v2857, %v3168
    %v3229 = vadd.f32 %v2858, %v3169
    %v3230 = vadd.f32 %v2859, %v3170
    %v3231 = vadd.f32 %v2860, %v3171
    %v3232 = vadd.f32 %v2861, %v3172
    %v3233 = vadd.f32 %v2862, %v3106
    %v3234 = vadd.f32 %v2863, %v3108
    %v3235 = vadd.f32 %v2864, %v3147
    %v3236 = vadd.f32 %v2865, %v3149
    %v3237 = vadd.f32 %v2866, %v3173
    %v3238 = vadd.f32 %v2867, %v3174
    %v3239 = vadd.f32 %v2868, %v3175
    %v3240 = vadd.f32 %v2869, %v3176
    %v3241 = vadd.f32 %v2870, %v3177
    %v3242 = vadd.f32 %v2871, %v3178
    %v3243 = vadd.f32 %v2872, %v3179
    %v3244 = vadd.f32 %v2873, %v3180
    %v3245 = vadd.f32 %v2874, %v3181
    %v3246 = vadd.f32 %v2875, %v3182
    %v3247 = vadd.f32 %v2876, %v3183
    %v3248 = vadd.f32 %v2877, %v3184
    %v3249 = vmul.f32 %v3217, 0.5
    %v3250 = vmul.f32 %v3221, 0.5
    %v3251 = vmul.f32 %v3225, 0.5
    %v3252 = vmul.f32 %v3229, 0.5
    %v3253 = vmul.f32 %v3233, 0.5
    %v3254 = vmul.f32 %v3237, 0.5
    %v3255 = vmul.f32 %v3241, 0.5
    %v3256 = vmul.f32 %v3245, 0.5
    %v3257 = vtanh.pop %v3249
    %v3258 = vtanh.pop %v3250
    %v3259 = vtanh.pop %v3251
    %v3260 = vtanh.pop %v3252
    %v3261 = vtanh.pop %v3253
    %v3262 = vtanh.pop %v3254
    %v3263 = vtanh.pop %v3255
    %v3264 = vtanh.pop %v3256
    %v3265 = vmul.f32 %v3257, 0.5
    %v3266 = vmul.f32 %v3258, 0.5
    %v3267 = vmul.f32 %v3259, 0.5
    %v3268 = vmul.f32 %v3260, 0.5
    %v3269 = vmul.f32 %v3261, 0.5
    %v3270 = vmul.f32 %v3262, 0.5
    %v3271 = vmul.f32 %v3263, 0.5
    %v3272 = vmul.f32 %v3264, 0.5
    %v3273 = vadd.f32 %v3265, 0.5
    %v3274 = vadd.f32 %v3266, 0.5
    %v3275 = vadd.f32 %v3267, 0.5
    %v3276 = vadd.f32 %v3268, 0.5
    %v3277 = vadd.f32 %v3269, 0.5
    %v3278 = vadd.f32 %v3270, 0.5
    %v3279 = vadd.f32 %v3271, 0.5
    %v3280 = vadd.f32 %v3272, 0.5
    %v3281 = vmul.f32 %v3218, 0.5
    %v3282 = vmul.f32 %v3222, 0.5
    %v3283 = vmul.f32 %v3226, 0.5
    %v3284 = vmul.f32 %v3230, 0.5
    %v3285 = vmul.f32 %v3234, 0.5
    %v3286 = vmul.f32 %v3238, 0.5
    %v3287 = vmul.f32 %v3242, 0.5
    %v3288 = vmul.f32 %v3246, 0.5
    %v3289 = vtanh.pop %v3281
    %v3290 = vtanh.pop %v3282
    %v3291 = vtanh.pop %v3283
    %v3292 = vtanh.pop %v3284
    %v3293 = vtanh.pop %v3285
    %v3294 = vtanh.pop %v3286
    %v3295 = vtanh.pop %v3287
    %v3296 = vtanh.pop %v3288
    %v3297 = vmul.f32 %v3289, 0.5
    %v3298 = vmul.f32 %v3290, 0.5
    %v3299 = vmul.f32 %v3291, 0.5
    %v3300 = vmul.f32 %v3292, 0.5
    %v3301 = vmul.f32 %v3293, 0.5
    %v3302 = vmul.f32 %v3294, 0.5
    %v3303 = vmul.f32 %v3295, 0.5
    %v3304 = vmul.f32 %v3296, 0.5
    %v3305 = vadd.f32 %v3297, 0.5
    %v3306 = vadd.f32 %v3298, 0.5
    %v3307 = vadd.f32 %v3299, 0.5
    %v3308 = vadd.f32 %v3300, 0.5
    %v3309 = vadd.f32 %v3301, 0.5
    %v3310 = vadd.f32 %v3302, 0.5
    %v3311 = vadd.f32 %v3303, 0.5
    %v3312 = vadd.f32 %v3304, 0.5
    %v3313 = vtanh.pop %v3219
    %v3314 = vtanh.pop %v3223
    %v3315 = vtanh.pop %v3227
    %v3316 = vtanh.pop %v3231
    %v3317 = vtanh.pop %v3235
    %v3318 = vtanh.pop %v3239
    %v3319 = vtanh.pop %v3243
    %v3320 = vtanh.pop %v3247
    %v3321 = vmul.f32 %v3220, 0.5
    %v3322 = vmul.f32 %v3224, 0.5
    %v3323 = vmul.f32 %v3228, 0.5
    %v3324 = vmul.f32 %v3232, 0.5
    %v3325 = vmul.f32 %v3236, 0.5
    %v3326 = vmul.f32 %v3240, 0.5
    %v3327 = vmul.f32 %v3244, 0.5
    %v3328 = vmul.f32 %v3248, 0.5
    %v3329 = vtanh.pop %v3321
    %v3330 = vtanh.pop %v3322
    %v3331 = vtanh.pop %v3323
    %v3332 = vtanh.pop %v3324
    %v3333 = vtanh.pop %v3325
    %v3334 = vtanh.pop %v3326
    %v3335 = vtanh.pop %v3327
    %v3336 = vtanh.pop %v3328
    %v3337 = vmul.f32 %v3329, 0.5
    %v3338 = vmul.f32 %v3330, 0.5
    %v3339 = vmul.f32 %v3331, 0.5
    %v3340 = vmul.f32 %v3332, 0.5
    %v3341 = vmul.f32 %v3333, 0.5
    %v3342 = vmul.f32 %v3334, 0.5
    %v3343 = vmul.f32 %v3335, 0.5
    %v3344 = vmul.f32 %v3336, 0.5
    %v3345 = vadd.f32 %v3337, 0.5
    %v3346 = vadd.f32 %v3338, 0.5
    %v3347 = vadd.f32 %v3339, 0.5
    %v3348 = vadd.f32 %v3340, 0.5
    %v3349 = vadd.f32 %v3341, 0.5
    %v3350 = vadd.f32 %v3342, 0.5
    %v3351 = vadd.f32 %v3343, 0.5
    %v3352 = vadd.f32 %v3344, 0.5
    %v3354 = vrot.slane %v2797, 4
    %v3355 = vrot.slane %v2797, 5
    %v3356 = vrot.slane %v2797, 6
    %v3357 = vrot.slane %v2797, 7
    %v3358 = vrot.slane %v2797, 1
    %v3359 = vrot.slane %v2797, 2
    %v3360 = vrot.slane %v2797, 3
    %v3369 = vmul.f32 %v3305, %v3354
    %v3370 = vmul.f32 %v3306, %v3355
    %v3371 = vmul.f32 %v3307, %v3356
    %v3372 = vmul.f32 %v3308, %v3357
    %v3373 = vmul.f32 %v3309, %v2797
    %v3374 = vmul.f32 %v3310, %v3358
    %v3375 = vmul.f32 %v3311, %v3359
    %v3376 = vmul.f32 %v3312, %v3360
    %v3377 = vmul.f32 %v3273, %v3313
    %v3378 = vmul.f32 %v3274, %v3314
    %v3379 = vmul.f32 %v3275, %v3315
    %v3380 = vmul.f32 %v3276, %v3316
    %v3381 = vmul.f32 %v3277, %v3317
    %v3382 = vmul.f32 %v3278, %v3318
    %v3383 = vmul.f32 %v3279, %v3319
    %v3384 = vmul.f32 %v3280, %v3320
    %v3385 = vadd.f32 %v3369, %v3377
    %v3386 = vadd.f32 %v3370, %v3378
    %v3387 = vadd.f32 %v3371, %v3379
    %v3388 = vadd.f32 %v3372, %v3380
    %v3389 = vadd.f32 %v3373, %v3381
    %v3390 = vadd.f32 %v3374, %v3382
    %v3391 = vadd.f32 %v3375, %v3383
    %v3392 = vadd.f32 %v3376, %v3384
    %v3393 = vtanh.pop %v3385
    %v3394 = vtanh.pop %v3386
    %v3395 = vtanh.pop %v3387
    %v3396 = vtanh.pop %v3388
    %v3397 = vtanh.pop %v3389
    %v3398 = vtanh.pop %v3390
    %v3399 = vtanh.pop %v3391
    %v3400 = vtanh.pop %v3392
    %v3401 = vmul.f32 %v3345, %v3393
    %v3402 = vmul.f32 %v3346, %v3394
    %v3403 = vmul.f32 %v3347, %v3395
    %v3404 = vmul.f32 %v3348, %v3396
    %v3405 = vmul.f32 %v3349, %v3397
    %v3406 = vmul.f32 %v3350, %v3398
    %v3407 = vmul.f32 %v3351, %v3399
    %v3408 = vmul.f32 %v3352, %v3400
    %v3417 = vrot.slane %v3402, 7
    %v3418 = vsel %vm741, %v3417, %v3401
    %v3419 = vrot.slane %v3403, 6
    %v3420 = vsel %vm744, %v3419, %v3418
    %v3421 = vrot.slane %v3404, 5
    %v3422 = vsel %vm747, %v3421, %v3420
    %v3423 = vrot.slane %v3405, 4
    %v3424 = vrot.slane %v3406, 3
    %v3425 = vsel %vm729, %v3424, %v3423
    %v3426 = vrot.slane %v3407, 2
    %v3427 = vsel %vm732, %v3426, %v3425
    %v3428 = vrot.slane %v3408, 1
    %v3429 = vsel %vm735, %v3428, %v3427
    %3432 = vst [vmem:[#allocation2 - $0x4] sm:$0xf0] %v3422
    %3433 = vst [vmem:[#allocation2 + $0x4] sm:$0xf] %v3429
    %v3442 = vrot.slane %v3386, 7
    %v3443 = vsel %vm741, %v3442, %v3385
    %v3444 = vrot.slane %v3387, 6
    %v3445 = vsel %vm744, %v3444, %v3443
    %v3446 = vrot.slane %v3388, 5
    %v3447 = vsel %vm747, %v3446, %v3445
    %v3448 = vrot.slane %v3389, 4
    %v3449 = vrot.slane %v3390, 3
    %v3450 = vsel %vm729, %v3449, %v3448
    %v3451 = vrot.slane %v3391, 2
    %v3452 = vsel %vm732, %v3451, %v3450
    %v3453 = vrot.slane %v3392, 1
    %v3454 = vsel %vm735, %v3453, %v3452
    %3457 = vst [vmem:[#allocation3 - $0x4] sm:$0xf0] %v3447
    %3458 = vst [vmem:[#allocation3 + $0x4] sm:$0xf] %v3454
    %3459 = vst [vmem:[#allocation12] sm:$0x10] %v3401
    %3460 = vst [vmem:[#allocation12 + $0x10] sm:$0x10] %v3402
    %3461 = vst [vmem:[#allocation12 + $0x20] sm:$0x10] %v3403
    %3462 = vst [vmem:[#allocation12 + $0x30] sm:$0x10] %v3404
    %3463 = vst [vmem:[#allocation12 + $0x40] sm:$0x10] %v3405
    %3464 = vst [vmem:[#allocation12 + $0x50] sm:$0x10] %v3406
    %3465 = vst [vmem:[#allocation12 + $0x60] sm:$0x10] %v3407
    %3466 = vst [vmem:[#allocation12 + $0x70] sm:$0x10] %v3408
    %v3467 = vld [vmem:[#allocation2] sm:$0xff]
    %v3468 = vld [vmem:[#allocation3] sm:$0xff]
    %v3469 = vld [vmem:[#allocation4] sm:$0x44]
    %v3470 = vld [vmem:[#allocation4 + $0x8] sm:$0x44]
    %v3471 = vld [vmem:[#allocation4 + $0x20] sm:$0x44]
    %v3472 = vld [vmem:[#allocation4 + $0x28] sm:$0x44]
    %v3473 = vld [vmem:[#allocation4 + $0x40] sm:$0x44]
    %v3474 = vld [vmem:[#allocation4 + $0x48] sm:$0x44]
    %v3475 = vld [vmem:[#allocation4 + $0x60] sm:$0x44]
    %v3476 = vld [vmem:[#allocation4 + $0x68] sm:$0x44]
    %v3477 = vld [vmem:[#allocation4 + $0x80] sm:$0x44]
    %v3478 = vld [vmem:[#allocation4 + $0x88] sm:$0x44]
    %v3479 = vld [vmem:[#allocation4 + $0xa0] sm:$0x44]
    %v3480 = vld [vmem:[#allocation4 + $0xa8] sm:$0x44]
    %v3481 = vld [vmem:[#allocation4 + $0xc0] sm:$0x44]
    %v3482 = vld [vmem:[#allocation4 + $0xc8] sm:$0x44]
    %v3483 = vld [vmem:[#allocation4 + $0xe0] sm:$0x44]
    %v3484 = vld [vmem:[#allocation4 + $0xe8] sm:$0x44]
    %v3485 = vunpack.c.l.bf16 %v3469
    %v3486 = vunpack.c.h.bf16 %v3469
    %v3487 = vunpack.c.l.bf16 %v3470
    %v3488 = vunpack.c.h.bf16 %v3470
    %v3489 = vunpack.c.l.bf16 %v3471
    %v3490 = vunpack.c.h.bf16 %v3471
    %v3491 = vunpack.c.l.bf16 %v3472
    %v3492 = vunpack.c.h.bf16 %v3472
    %v3493 = vunpack.c.l.bf16 %v3473
    %v3494 = vunpack.c.h.bf16 %v3473
    %v3495 = vunpack.c.l.bf16 %v3474
    %v3496 = vunpack.c.h.bf16 %v3474
    %v3497 = vunpack.c.l.bf16 %v3475
    %v3498 = vunpack.c.h.bf16 %v3475
    %v3499 = vunpack.c.l.bf16 %v3476
    %v3500 = vunpack.c.h.bf16 %v3476
    %v3501 = vunpack.c.l.bf16 %v3477
    %v3502 = vunpack.c.h.bf16 %v3477
    %v3503 = vunpack.c.l.bf16 %v3478
    %v3504 = vunpack.c.h.bf16 %v3478
    %v3505 = vunpack.c.l.bf16 %v3479
    %v3506 = vunpack.c.h.bf16 %v3479
    %v3507 = vunpack.c.l.bf16 %v3480
    %v3508 = vunpack.c.h.bf16 %v3480
    %v3509 = vunpack.c.l.bf16 %v3481
    %v3510 = vunpack.c.h.bf16 %v3481
    %v3511 = vunpack.c.l.bf16 %v3482
    %v3512 = vunpack.c.h.bf16 %v3482
    %v3513 = vunpack.c.l.bf16 %v3483
    %v3514 = vunpack.c.h.bf16 %v3483
    %v3515 = vunpack.c.l.bf16 %v3484
    %v3516 = vunpack.c.h.bf16 %v3484
    %v3517 = vadd.f32 %v3485, %v140
    %v3518 = vadd.f32 %v3486, %v144
    %v3519 = vadd.f32 %v3487, %v148
    %v3520 = vadd.f32 %v3488, %v152
    %v3521 = vadd.f32 %v3489, %v140
    %v3522 = vadd.f32 %v3490, %v144
    %v3523 = vadd.f32 %v3491, %v148
    %v3524 = vadd.f32 %v3492, %v152
    %v3525 = vadd.f32 %v3493, %v140
    %v3526 = vadd.f32 %v3494, %v144
    %v3527 = vadd.f32 %v3495, %v148
    %v3528 = vadd.f32 %v3496, %v152
    %v3529 = vadd.f32 %v3497, %v140
    %v3530 = vadd.f32 %v3498, %v144
    %v3531 = vadd.f32 %v3499, %v148
    %v3532 = vadd.f32 %v3500, %v152
    %v3533 = vadd.f32 %v3501, %v140
    %v3534 = vadd.f32 %v3502, %v144
    %v3535 = vadd.f32 %v3503, %v148
    %v3536 = vadd.f32 %v3504, %v152
    %v3537 = vadd.f32 %v3505, %v140
    %v3538 = vadd.f32 %v3506, %v144
    %v3539 = vadd.f32 %v3507, %v148
    %v3540 = vadd.f32 %v3508, %v152
    %v3541 = vadd.f32 %v3509, %v140
    %v3542 = vadd.f32 %v3510, %v144
    %v3543 = vadd.f32 %v3511, %v148
    %v3544 = vadd.f32 %v3512, %v152
    %v3545 = vadd.f32 %v3513, %v140
    %v3546 = vadd.f32 %v3514, %v144
    %v3547 = vadd.f32 %v3515, %v148
    %v3548 = vadd.f32 %v3516, %v152
    %v3549 = vpack.c.bf16 %v3467, %v3467
    %v3550 = vld [vmem:[#allocation7] sm:$0xff]
    %v3551 = vld [vmem:[#allocation7 + $0x8] sm:$0xff]
    %v3552 = vld [vmem:[#allocation7 + $0x10] sm:$0xff]
    %v3553 = vld [vmem:[#allocation7 + $0x18] sm:$0xff]
    %v3554 = vld [vmem:[#allocation7 + $0x20] sm:$0xff]
    %v3555 = vld [vmem:[#allocation7 + $0x28] sm:$0xff]
    %v3556 = vld [vmem:[#allocation7 + $0x30] sm:$0xff]
    %v3557 = vld [vmem:[#allocation7 + $0x38] sm:$0xff]
    %v3558 = vld [vmem:[#allocation7 + $0x40] sm:$0xff]
    %v3559 = vld [vmem:[#allocation7 + $0x48] sm:$0xff]
    %v3560 = vld [vmem:[#allocation7 + $0x50] sm:$0xff]
    %v3561 = vld [vmem:[#allocation7 + $0x58] sm:$0xff]
    %v3562 = vld [vmem:[#allocation7 + $0x60] sm:$0xff]
    %v3563 = vld [vmem:[#allocation7 + $0x68] sm:$0xff]
    %v3564 = vld [vmem:[#allocation7 + $0x70] sm:$0xff]
    %v3565 = vld [vmem:[#allocation7 + $0x78] sm:$0xff]
    %v3566 = vld [vmem:[#allocation7 + $0x80] sm:$0xff]
    %v3567 = vld [vmem:[#allocation7 + $0x88] sm:$0xff]
    %v3568 = vld [vmem:[#allocation7 + $0x90] sm:$0xff]
    %v3569 = vld [vmem:[#allocation7 + $0x98] sm:$0xff]
    %v3570 = vld [vmem:[#allocation7 + $0xa0] sm:$0xff]
    %v3571 = vld [vmem:[#allocation7 + $0xa8] sm:$0xff]
    %v3572 = vld [vmem:[#allocation7 + $0xb0] sm:$0xff]
    %v3573 = vld [vmem:[#allocation7 + $0xb8] sm:$0xff]
    %v3574 = vld [vmem:[#allocation7 + $0xc0] sm:$0xff]
    %v3575 = vld [vmem:[#allocation7 + $0xc8] sm:$0xff]
    %v3576 = vld [vmem:[#allocation7 + $0xd0] sm:$0xff]
    %v3577 = vld [vmem:[#allocation7 + $0xd8] sm:$0xff]
    %v3578 = vld [vmem:[#allocation7 + $0xe0] sm:$0xff]
    %v3579 = vld [vmem:[#allocation7 + $0xe8] sm:$0xff]
    %v3580 = vld [vmem:[#allocation7 + $0xf0] sm:$0xff]
    %v3581 = vld [vmem:[#allocation7 + $0xf8] sm:$0xff]
    %v3614 = vunpack.c.l.b16 %v3550
    %v3615 = vunpack.c.h.b16 %v3550
    %v3616 = vunpack.c.l.b16 %v3551
    %v3617 = vunpack.c.h.b16 %v3551
    %v3618 = vunpack.c.l.b16 %v3552
    %v3619 = vunpack.c.h.b16 %v3552
    %v3620 = vunpack.c.l.b16 %v3553
    %v3621 = vunpack.c.h.b16 %v3553
    %v3622 = vunpack.c.l.b16 %v3554
    %v3623 = vunpack.c.h.b16 %v3554
    %v3624 = vunpack.c.l.b16 %v3555
    %v3625 = vunpack.c.h.b16 %v3555
    %v3626 = vunpack.c.l.b16 %v3556
    %v3627 = vunpack.c.h.b16 %v3556
    %v3628 = vunpack.c.l.b16 %v3557
    %v3629 = vunpack.c.h.b16 %v3557
    %v3630 = vunpack.c.l.b16 %v3558
    %v3631 = vunpack.c.h.b16 %v3558
    %v3632 = vunpack.c.l.b16 %v3559
    %v3633 = vunpack.c.h.b16 %v3559
    %v3634 = vunpack.c.l.b16 %v3560
    %v3635 = vunpack.c.h.b16 %v3560
    %v3636 = vunpack.c.l.b16 %v3561
    %v3637 = vunpack.c.h.b16 %v3561
    %v3638 = vunpack.c.l.b16 %v3562
    %v3639 = vunpack.c.h.b16 %v3562
    %v3640 = vunpack.c.l.b16 %v3563
    %v3641 = vunpack.c.h.b16 %v3563
    %v3642 = vunpack.c.l.b16 %v3564
    %v3643 = vunpack.c.h.b16 %v3564
    %v3644 = vunpack.c.l.b16 %v3565
    %v3645 = vunpack.c.h.b16 %v3565
    %v3646 = vunpack.c.l.b16 %v3566
    %v3647 = vunpack.c.h.b16 %v3566
    %v3648 = vunpack.c.l.b16 %v3567
    %v3649 = vunpack.c.h.b16 %v3567
    %v3650 = vunpack.c.l.b16 %v3568
    %v3651 = vunpack.c.h.b16 %v3568
    %v3652 = vunpack.c.l.b16 %v3569
    %v3653 = vunpack.c.h.b16 %v3569
    %v3654 = vunpack.c.l.b16 %v3570
    %v3655 = vunpack.c.h.b16 %v3570
    %v3656 = vunpack.c.l.b16 %v3571
    %v3657 = vunpack.c.h.b16 %v3571
    %v3658 = vunpack.c.l.b16 %v3572
    %v3659 = vunpack.c.h.b16 %v3572
    %v3660 = vunpack.c.l.b16 %v3573
    %v3661 = vunpack.c.h.b16 %v3573
    %v3662 = vunpack.c.l.b16 %v3574
    %v3663 = vunpack.c.h.b16 %v3574
    %v3664 = vunpack.c.l.b16 %v3575
    %v3665 = vunpack.c.h.b16 %v3575
    %v3666 = vunpack.c.l.b16 %v3576
    %v3667 = vunpack.c.h.b16 %v3576
    %v3668 = vunpack.c.l.b16 %v3577
    %v3669 = vunpack.c.h.b16 %v3577
    %v3670 = vunpack.c.l.b16 %v3578
    %v3671 = vunpack.c.h.b16 %v3578
    %v3672 = vunpack.c.l.b16 %v3579
    %v3673 = vunpack.c.h.b16 %v3579
    %v3674 = vunpack.c.l.b16 %v3580
    %v3675 = vunpack.c.h.b16 %v3580
    %v3676 = vunpack.c.l.b16 %v3581
    %v3677 = vunpack.c.h.b16 %v3581
    %v3678 = vpack.c.b16 %v3618, %v3614
    %v3679 = vpack.c.b16 %v3619, %v3615
    %v3680 = vpack.c.b16 %v3620, %v3616
    %v3681 = vpack.c.b16 %v3621, %v3617
    %v3682 = vpack.c.b16 %v3626, %v3622
    %v3683 = vpack.c.b16 %v3627, %v3623
    %v3684 = vpack.c.b16 %v3628, %v3624
    %v3685 = vpack.c.b16 %v3629, %v3625
    %v3686 = vpack.c.b16 %v3634, %v3630
    %v3687 = vpack.c.b16 %v3635, %v3631
    %v3688 = vpack.c.b16 %v3636, %v3632
    %v3689 = vpack.c.b16 %v3637, %v3633
    %v3690 = vpack.c.b16 %v3642, %v3638
    %v3691 = vpack.c.b16 %v3643, %v3639
    %v3692 = vpack.c.b16 %v3644, %v3640
    %v3693 = vpack.c.b16 %v3645, %v3641
    %v3694 = vpack.c.b16 %v3650, %v3646
    %v3695 = vpack.c.b16 %v3651, %v3647
    %v3696 = vpack.c.b16 %v3652, %v3648
    %v3697 = vpack.c.b16 %v3653, %v3649
    %v3698 = vpack.c.b16 %v3658, %v3654
    %v3699 = vpack.c.b16 %v3659, %v3655
    %v3700 = vpack.c.b16 %v3660, %v3656
    %v3701 = vpack.c.b16 %v3661, %v3657
    %v3702 = vpack.c.b16 %v3666, %v3662
    %v3703 = vpack.c.b16 %v3667, %v3663
    %v3704 = vpack.c.b16 %v3668, %v3664
    %v3705 = vpack.c.b16 %v3669, %v3665
    %v3706 = vpack.c.b16 %v3674, %v3670
    %v3707 = vpack.c.b16 %v3675, %v3671
    %v3708 = vpack.c.b16 %v3676, %v3672
    %v3709 = vpack.c.b16 %v3677, %v3673
    %3742 = vmatprep.subr.bf16.mxu0 %v3679
    %3743 = vmatpush1.bf16.msra.mxu0 %v3678
    %3744 = vmatprep.subr.bf16.mxu0 %v3683
    %3745 = vmatpush1.bf16.msra.mxu0 %v3682
    %3746 = vmatprep.subr.bf16.mxu0 %v3687
    %3747 = vmatpush1.bf16.msra.mxu0 %v3686
    %3748 = vmatprep.subr.bf16.mxu0 %v3691
    %3749 = vmatpush1.bf16.msra.mxu0 %v3690
    %3750 = vmatprep.subr.bf16.mxu0 %v3695
    %3751 = vmatpush1.bf16.msra.mxu0 %v3694
    %3752 = vmatprep.subr.bf16.mxu0 %v3699
    %3753 = vmatpush1.bf16.msra.mxu0 %v3698
    %3754 = vmatprep.subr.bf16.mxu0 %v3703
    %3755 = vmatpush1.bf16.msra.mxu0 %v3702
    %3756 = vmatprep.subr.bf16.mxu0 %v3707
    %3757 = vmatpush1.bf16.msra.mxu0 %v3706
    %3758 = vmatprep.subr.bf16.mxu0 0
    %3759 = vmatpush1.bf16.msra.mxu0 0
    %3760 = vmatprep.subr.bf16.mxu0 0
    %3761 = vmatpush1.bf16.msra.mxu0 0
    %3762 = vmatprep.subr.bf16.mxu0 0
    %3763 = vmatpush1.bf16.msra.mxu0 0
    %3764 = vmatprep.subr.bf16.mxu0 0
    %3765 = vmatpush1.bf16.msra.mxu0 0
    %3766 = vmatprep.subr.bf16.mxu0 0
    %3767 = vmatpush1.bf16.msra.mxu0 0
    %3768 = vmatprep.subr.bf16.mxu0 0
    %3769 = vmatpush1.bf16.msra.mxu0 0
    %3770 = vmatprep.subr.bf16.mxu0 0
    %3771 = vmatpush1.bf16.msra.mxu0 0
    %3772 = vmatprep.subr.bf16.mxu0 0
    %3773 = vmatpush1.bf16.msra.mxu0 0
    %3774 = vmatprep.mubr.bf16.mxu0 0
    %3775 = vmatmul.mubr.bf16.gmra.mrb[0].mxu0 %v3549
    %v3776 = vpop.f32.mrb[0].mxu0
    %v3777 = vadd.f32 0.0, %v3776
    %v3778 = vpop.f32.mrb[0].mxu0
    %v3779 = vadd.f32 0.0, %v3778
    %v3780 = vpop.f32.mrb[0].mxu0
    %v3781 = vpop.f32.mrb[0].mxu0
    %3782 = vdwg.mxu0
    %3783 = vmatprep.subr.bf16.mxu0 %v3681
    %3784 = vmatpush1.bf16.msra.mxu0 %v3680
    %3785 = vmatprep.subr.bf16.mxu0 %v3685
    %3786 = vmatpush1.bf16.msra.mxu0 %v3684
    %3787 = vmatprep.subr.bf16.mxu0 %v3689
    %3788 = vmatpush1.bf16.msra.mxu0 %v3688
    %3789 = vmatprep.subr.bf16.mxu0 %v3693
    %3790 = vmatpush1.bf16.msra.mxu0 %v3692
    %3791 = vmatprep.subr.bf16.mxu0 %v3697
    %3792 = vmatpush1.bf16.msra.mxu0 %v3696
    %3793 = vmatprep.subr.bf16.mxu0 %v3701
    %3794 = vmatpush1.bf16.msra.mxu0 %v3700
    %3795 = vmatprep.subr.bf16.mxu0 %v3705
    %3796 = vmatpush1.bf16.msra.mxu0 %v3704
    %3797 = vmatprep.subr.bf16.mxu0 %v3709
    %3798 = vmatpush1.bf16.msra.mxu0 %v3708
    %3799 = vmatprep.subr.bf16.mxu0 0
    %3800 = vmatpush1.bf16.msra.mxu0 0
    %3801 = vmatprep.subr.bf16.mxu0 0
    %3802 = vmatpush1.bf16.msra.mxu0 0
    %3803 = vmatprep.subr.bf16.mxu0 0
    %3804 = vmatpush1.bf16.msra.mxu0 0
    %3805 = vmatprep.subr.bf16.mxu0 0
    %3806 = vmatpush1.bf16.msra.mxu0 0
    %3807 = vmatprep.subr.bf16.mxu0 0
    %3808 = vmatpush1.bf16.msra.mxu0 0
    %3809 = vmatprep.subr.bf16.mxu0 0
    %3810 = vmatpush1.bf16.msra.mxu0 0
    %3811 = vmatprep.subr.bf16.mxu0 0
    %3812 = vmatpush1.bf16.msra.mxu0 0
    %3813 = vmatprep.subr.bf16.mxu0 0
    %3814 = vmatpush1.bf16.msra.mxu0 0
    %3815 = vmatprep.mubr.bf16.mxu0 0
    %3816 = vmatmul.mubr.bf16.gmra.mrb[0].mxu0 %v3549
    %v3817 = vpop.f32.mrb[0].mxu0
    %v3818 = vadd.f32 0.0, %v3817
    %v3819 = vpop.f32.mrb[0].mxu0
    %v3820 = vadd.f32 0.0, %v3819
    %v3821 = vpop.f32.mrb[0].mxu0
    %v3822 = vpop.f32.mrb[0].mxu0
    %3823 = vdwg.mxu0
    %v3828 = vrot.slane %v3777, 3
    %v3829 = vrot.slane %v3779, 3
    %v3830 = vrot.slane %v3818, 3
    %v3831 = vrot.slane %v3820, 3
    %v3832 = vrot.slane %v3777, 4
    %v3833 = vrot.slane %v3779, 4
    %v3834 = vrot.slane %v3818, 4
    %v3835 = vrot.slane %v3820, 4
    %v3836 = vrot.slane %v3777, 5
    %v3837 = vrot.slane %v3779, 5
    %v3838 = vrot.slane %v3818, 5
    %v3839 = vrot.slane %v3820, 5
    %v3840 = vrot.slane %v3777, 6
    %v3841 = vrot.slane %v3779, 6
    %v3842 = vrot.slane %v3818, 6
    %v3843 = vrot.slane %v3820, 6
    %v3844 = vrot.slane %v3777, 7
    %v3845 = vrot.slane %v3779, 7
    %v3846 = vrot.slane %v3818, 7
    %v3847 = vrot.slane %v3820, 7
    %v3848 = vrot.slane %v3777, 1
    %v3849 = vrot.slane %v3779, 1
    %v3850 = vrot.slane %v3818, 1
    %v3851 = vrot.slane %v3820, 1
    %v3852 = vrot.slane %v3777, 2
    %v3853 = vrot.slane %v3779, 2
    %v3854 = vrot.slane %v3818, 2
    %v3855 = vrot.slane %v3820, 2
    %v3888 = vadd.f32 %v3517, %v3828
    %v3889 = vadd.f32 %v3518, %v3829
    %v3890 = vadd.f32 %v3519, %v3830
    %v3891 = vadd.f32 %v3520, %v3831
    %v3892 = vadd.f32 %v3521, %v3832
    %v3893 = vadd.f32 %v3522, %v3833
    %v3894 = vadd.f32 %v3523, %v3834
    %v3895 = vadd.f32 %v3524, %v3835
    %v3896 = vadd.f32 %v3525, %v3836
    %v3897 = vadd.f32 %v3526, %v3837
    %v3898 = vadd.f32 %v3527, %v3838
    %v3899 = vadd.f32 %v3528, %v3839
    %v3900 = vadd.f32 %v3529, %v3840
    %v3901 = vadd.f32 %v3530, %v3841
    %v3902 = vadd.f32 %v3531, %v3842
    %v3903 = vadd.f32 %v3532, %v3843
    %v3904 = vadd.f32 %v3533, %v3844
    %v3905 = vadd.f32 %v3534, %v3845
    %v3906 = vadd.f32 %v3535, %v3846
    %v3907 = vadd.f32 %v3536, %v3847
    %v3908 = vadd.f32 %v3537, %v3777
    %v3909 = vadd.f32 %v3538, %v3779
    %v3910 = vadd.f32 %v3539, %v3818
    %v3911 = vadd.f32 %v3540, %v3820
    %v3912 = vadd.f32 %v3541, %v3848
    %v3913 = vadd.f32 %v3542, %v3849
    %v3914 = vadd.f32 %v3543, %v3850
    %v3915 = vadd.f32 %v3544, %v3851
    %v3916 = vadd.f32 %v3545, %v3852
    %v3917 = vadd.f32 %v3546, %v3853
    %v3918 = vadd.f32 %v3547, %v3854
    %v3919 = vadd.f32 %v3548, %v3855
    %v3920 = vmul.f32 %v3888, 0.5
    %v3921 = vmul.f32 %v3892, 0.5
    %v3922 = vmul.f32 %v3896, 0.5
    %v3923 = vmul.f32 %v3900, 0.5
    %v3924 = vmul.f32 %v3904, 0.5
    %v3925 = vmul.f32 %v3908, 0.5
    %v3926 = vmul.f32 %v3912, 0.5
    %v3927 = vmul.f32 %v3916, 0.5
    %v3928 = vtanh.pop %v3920
    %v3929 = vtanh.pop %v3921
    %v3930 = vtanh.pop %v3922
    %v3931 = vtanh.pop %v3923
    %v3932 = vtanh.pop %v3924
    %v3933 = vtanh.pop %v3925
    %v3934 = vtanh.pop %v3926
    %v3935 = vtanh.pop %v3927
    %v3936 = vmul.f32 %v3928, 0.5
    %v3937 = vmul.f32 %v3929, 0.5
    %v3938 = vmul.f32 %v3930, 0.5
    %v3939 = vmul.f32 %v3931, 0.5
    %v3940 = vmul.f32 %v3932, 0.5
    %v3941 = vmul.f32 %v3933, 0.5
    %v3942 = vmul.f32 %v3934, 0.5
    %v3943 = vmul.f32 %v3935, 0.5
    %v3944 = vadd.f32 %v3936, 0.5
    %v3945 = vadd.f32 %v3937, 0.5
    %v3946 = vadd.f32 %v3938, 0.5
    %v3947 = vadd.f32 %v3939, 0.5
    %v3948 = vadd.f32 %v3940, 0.5
    %v3949 = vadd.f32 %v3941, 0.5
    %v3950 = vadd.f32 %v3942, 0.5
    %v3951 = vadd.f32 %v3943, 0.5
    %v3952 = vmul.f32 %v3889, 0.5
    %v3953 = vmul.f32 %v3893, 0.5
    %v3954 = vmul.f32 %v3897, 0.5
    %v3955 = vmul.f32 %v3901, 0.5
    %v3956 = vmul.f32 %v3905, 0.5
    %v3957 = vmul.f32 %v3909, 0.5
    %v3958 = vmul.f32 %v3913, 0.5
    %v3959 = vmul.f32 %v3917, 0.5
    %v3960 = vtanh.pop %v3952
    %v3961 = vtanh.pop %v3953
    %v3962 = vtanh.pop %v3954
    %v3963 = vtanh.pop %v3955
    %v3964 = vtanh.pop %v3956
    %v3965 = vtanh.pop %v3957
    %v3966 = vtanh.pop %v3958
    %v3967 = vtanh.pop %v3959
    %v3968 = vmul.f32 %v3960, 0.5
    %v3969 = vmul.f32 %v3961, 0.5
    %v3970 = vmul.f32 %v3962, 0.5
    %v3971 = vmul.f32 %v3963, 0.5
    %v3972 = vmul.f32 %v3964, 0.5
    %v3973 = vmul.f32 %v3965, 0.5
    %v3974 = vmul.f32 %v3966, 0.5
    %v3975 = vmul.f32 %v3967, 0.5
    %v3976 = vadd.f32 %v3968, 0.5
    %v3977 = vadd.f32 %v3969, 0.5
    %v3978 = vadd.f32 %v3970, 0.5
    %v3979 = vadd.f32 %v3971, 0.5
    %v3980 = vadd.f32 %v3972, 0.5
    %v3981 = vadd.f32 %v3973, 0.5
    %v3982 = vadd.f32 %v3974, 0.5
    %v3983 = vadd.f32 %v3975, 0.5
    %v3984 = vtanh.pop %v3890
    %v3985 = vtanh.pop %v3894
    %v3986 = vtanh.pop %v3898
    %v3987 = vtanh.pop %v3902
    %v3988 = vtanh.pop %v3906
    %v3989 = vtanh.pop %v3910
    %v3990 = vtanh.pop %v3914
    %v3991 = vtanh.pop %v3918
    %v3992 = vmul.f32 %v3891, 0.5
    %v3993 = vmul.f32 %v3895, 0.5
    %v3994 = vmul.f32 %v3899, 0.5
    %v3995 = vmul.f32 %v3903, 0.5
    %v3996 = vmul.f32 %v3907, 0.5
    %v3997 = vmul.f32 %v3911, 0.5
    %v3998 = vmul.f32 %v3915, 0.5
    %v3999 = vmul.f32 %v3919, 0.5
    %v4000 = vtanh.pop %v3992
    %v4001 = vtanh.pop %v3993
    %v4002 = vtanh.pop %v3994
    %v4003 = vtanh.pop %v3995
    %v4004 = vtanh.pop %v3996
    %v4005 = vtanh.pop %v3997
    %v4006 = vtanh.pop %v3998
    %v4007 = vtanh.pop %v3999
    %v4008 = vmul.f32 %v4000, 0.5
    %v4009 = vmul.f32 %v4001, 0.5
    %v4010 = vmul.f32 %v4002, 0.5
    %v4011 = vmul.f32 %v4003, 0.5
    %v4012 = vmul.f32 %v4004, 0.5
    %v4013 = vmul.f32 %v4005, 0.5
    %v4014 = vmul.f32 %v4006, 0.5
    %v4015 = vmul.f32 %v4007, 0.5
    %v4016 = vadd.f32 %v4008, 0.5
    %v4017 = vadd.f32 %v4009, 0.5
    %v4018 = vadd.f32 %v4010, 0.5
    %v4019 = vadd.f32 %v4011, 0.5
    %v4020 = vadd.f32 %v4012, 0.5
    %v4021 = vadd.f32 %v4013, 0.5
    %v4022 = vadd.f32 %v4014, 0.5
    %v4023 = vadd.f32 %v4015, 0.5
    %v4025 = vrot.slane %v3468, 3
    %v4026 = vrot.slane %v3468, 4
    %v4027 = vrot.slane %v3468, 5
    %v4028 = vrot.slane %v3468, 6
    %v4029 = vrot.slane %v3468, 7
    %v4030 = vrot.slane %v3468, 1
    %v4031 = vrot.slane %v3468, 2
    %v4040 = vmul.f32 %v3976, %v4025
    %v4041 = vmul.f32 %v3977, %v4026
    %v4042 = vmul.f32 %v3978, %v4027
    %v4043 = vmul.f32 %v3979, %v4028
    %v4044 = vmul.f32 %v3980, %v4029
    %v4045 = vmul.f32 %v3981, %v3468
    %v4046 = vmul.f32 %v3982, %v4030
    %v4047 = vmul.f32 %v3983, %v4031
    %v4048 = vmul.f32 %v3944, %v3984
    %v4049 = vmul.f32 %v3945, %v3985
    %v4050 = vmul.f32 %v3946, %v3986
    %v4051 = vmul.f32 %v3947, %v3987
    %v4052 = vmul.f32 %v3948, %v3988
    %v4053 = vmul.f32 %v3949, %v3989
    %v4054 = vmul.f32 %v3950, %v3990
    %v4055 = vmul.f32 %v3951, %v3991
    %v4056 = vadd.f32 %v4040, %v4048
    %v4057 = vadd.f32 %v4041, %v4049
    %v4058 = vadd.f32 %v4042, %v4050
    %v4059 = vadd.f32 %v4043, %v4051
    %v4060 = vadd.f32 %v4044, %v4052
    %v4061 = vadd.f32 %v4045, %v4053
    %v4062 = vadd.f32 %v4046, %v4054
    %v4063 = vadd.f32 %v4047, %v4055
    %v4064 = vtanh.pop %v4056
    %v4065 = vtanh.pop %v4057
    %v4066 = vtanh.pop %v4058
    %v4067 = vtanh.pop %v4059
    %v4068 = vtanh.pop %v4060
    %v4069 = vtanh.pop %v4061
    %v4070 = vtanh.pop %v4062
    %v4071 = vtanh.pop %v4063
    %v4072 = vmul.f32 %v4016, %v4064
    %v4073 = vmul.f32 %v4017, %v4065
    %v4074 = vmul.f32 %v4018, %v4066
    %v4075 = vmul.f32 %v4019, %v4067
    %v4076 = vmul.f32 %v4020, %v4068
    %v4077 = vmul.f32 %v4021, %v4069
    %v4078 = vmul.f32 %v4022, %v4070
    %v4079 = vmul.f32 %v4023, %v4071
    %v4088 = vrot.slane %v4073, 7
    %v4089 = vsel %vm744, %v4088, %v4072
    %v4090 = vrot.slane %v4074, 6
    %v4091 = vsel %vm747, %v4090, %v4089
    %v4092 = vrot.slane %v4075, 5
    %v4093 = vrot.slane %v4076, 4
    %v4094 = vsel %vm729, %v4093, %v4092
    %v4095 = vrot.slane %v4077, 3
    %v4096 = vsel %vm732, %v4095, %v4094
    %v4097 = vrot.slane %v4078, 2
    %v4098 = vsel %vm735, %v4097, %v4096
    %v4099 = vrot.slane %v4079, 1
    %v4100 = vsel %vm738, %v4099, %v4098
    %4103 = vst [vmem:[#allocation2 - $0x5] sm:$0xe0] %v4091
    %4104 = vst [vmem:[#allocation2 + $0x3] sm:$0x1f] %v4100
    %v4113 = vrot.slane %v4057, 7
    %v4114 = vsel %vm744, %v4113, %v4056
    %v4115 = vrot.slane %v4058, 6
    %v4116 = vsel %vm747, %v4115, %v4114
    %v4117 = vrot.slane %v4059, 5
    %v4118 = vrot.slane %v4060, 4
    %v4119 = vsel %vm729, %v4118, %v4117
    %v4120 = vrot.slane %v4061, 3
    %v4121 = vsel %vm732, %v4120, %v4119
    %v4122 = vrot.slane %v4062, 2
    %v4123 = vsel %vm735, %v4122, %v4121
    %v4124 = vrot.slane %v4063, 1
    %v4125 = vsel %vm738, %v4124, %v4123
    %4128 = vst [vmem:[#allocation3 - $0x5] sm:$0xe0] %v4116
    %4129 = vst [vmem:[#allocation3 + $0x3] sm:$0x1f] %v4125
    %4130 = vst [vmem:[#allocation12] sm:$0x20] %v4072
    %4131 = vst [vmem:[#allocation12 + $0x10] sm:$0x20] %v4073
    %4132 = vst [vmem:[#allocation12 + $0x20] sm:$0x20] %v4074
    %4133 = vst [vmem:[#allocation12 + $0x30] sm:$0x20] %v4075
    %4134 = vst [vmem:[#allocation12 + $0x40] sm:$0x20] %v4076
    %4135 = vst [vmem:[#allocation12 + $0x50] sm:$0x20] %v4077
    %4136 = vst [vmem:[#allocation12 + $0x60] sm:$0x20] %v4078
    %4137 = vst [vmem:[#allocation12 + $0x70] sm:$0x20] %v4079
    %v4138 = vld [vmem:[#allocation2] sm:$0xff]
    %v4139 = vld [vmem:[#allocation3] sm:$0xff]
    %v4140 = vld [vmem:[#allocation4] sm:$0x88]
    %v4141 = vld [vmem:[#allocation4 + $0x8] sm:$0x88]
    %v4142 = vld [vmem:[#allocation4 + $0x20] sm:$0x88]
    %v4143 = vld [vmem:[#allocation4 + $0x28] sm:$0x88]
    %v4144 = vld [vmem:[#allocation4 + $0x40] sm:$0x88]
    %v4145 = vld [vmem:[#allocation4 + $0x48] sm:$0x88]
    %v4146 = vld [vmem:[#allocation4 + $0x60] sm:$0x88]
    %v4147 = vld [vmem:[#allocation4 + $0x68] sm:$0x88]
    %v4148 = vld [vmem:[#allocation4 + $0x80] sm:$0x88]
    %v4149 = vld [vmem:[#allocation4 + $0x88] sm:$0x88]
    %v4150 = vld [vmem:[#allocation4 + $0xa0] sm:$0x88]
    %v4151 = vld [vmem:[#allocation4 + $0xa8] sm:$0x88]
    %v4152 = vld [vmem:[#allocation4 + $0xc0] sm:$0x88]
    %v4153 = vld [vmem:[#allocation4 + $0xc8] sm:$0x88]
    %v4154 = vld [vmem:[#allocation4 + $0xe0] sm:$0x88]
    %v4155 = vld [vmem:[#allocation4 + $0xe8] sm:$0x88]
    %v4156 = vunpack.c.l.bf16 %v4140
    %v4157 = vunpack.c.h.bf16 %v4140
    %v4158 = vunpack.c.l.bf16 %v4141
    %v4159 = vunpack.c.h.bf16 %v4141
    %v4160 = vunpack.c.l.bf16 %v4142
    %v4161 = vunpack.c.h.bf16 %v4142
    %v4162 = vunpack.c.l.bf16 %v4143
    %v4163 = vunpack.c.h.bf16 %v4143
    %v4164 = vunpack.c.l.bf16 %v4144
    %v4165 = vunpack.c.h.bf16 %v4144
    %v4166 = vunpack.c.l.bf16 %v4145
    %v4167 = vunpack.c.h.bf16 %v4145
    %v4168 = vunpack.c.l.bf16 %v4146
    %v4169 = vunpack.c.h.bf16 %v4146
    %v4170 = vunpack.c.l.bf16 %v4147
    %v4171 = vunpack.c.h.bf16 %v4147
    %v4172 = vunpack.c.l.bf16 %v4148
    %v4173 = vunpack.c.h.bf16 %v4148
    %v4174 = vunpack.c.l.bf16 %v4149
    %v4175 = vunpack.c.h.bf16 %v4149
    %v4176 = vunpack.c.l.bf16 %v4150
    %v4177 = vunpack.c.h.bf16 %v4150
    %v4178 = vunpack.c.l.bf16 %v4151
    %v4179 = vunpack.c.h.bf16 %v4151
    %v4180 = vunpack.c.l.bf16 %v4152
    %v4181 = vunpack.c.h.bf16 %v4152
    %v4182 = vunpack.c.l.bf16 %v4153
    %v4183 = vunpack.c.h.bf16 %v4153
    %v4184 = vunpack.c.l.bf16 %v4154
    %v4185 = vunpack.c.h.bf16 %v4154
    %v4186 = vunpack.c.l.bf16 %v4155
    %v4187 = vunpack.c.h.bf16 %v4155
    %v4188 = vadd.f32 %v4156, %v140
    %v4189 = vadd.f32 %v4157, %v144
    %v4190 = vadd.f32 %v4158, %v148
    %v4191 = vadd.f32 %v4159, %v152
    %v4192 = vadd.f32 %v4160, %v140
    %v4193 = vadd.f32 %v4161, %v144
    %v4194 = vadd.f32 %v4162, %v148
    %v4195 = vadd.f32 %v4163, %v152
    %v4196 = vadd.f32 %v4164, %v140
    %v4197 = vadd.f32 %v4165, %v144
    %v4198 = vadd.f32 %v4166, %v148
    %v4199 = vadd.f32 %v4167, %v152
    %v4200 = vadd.f32 %v4168, %v140
    %v4201 = vadd.f32 %v4169, %v144
    %v4202 = vadd.f32 %v4170, %v148
    %v4203 = vadd.f32 %v4171, %v152
    %v4204 = vadd.f32 %v4172, %v140
    %v4205 = vadd.f32 %v4173, %v144
    %v4206 = vadd.f32 %v4174, %v148
    %v4207 = vadd.f32 %v4175, %v152
    %v4208 = vadd.f32 %v4176, %v140
    %v4209 = vadd.f32 %v4177, %v144
    %v4210 = vadd.f32 %v4178, %v148
    %v4211 = vadd.f32 %v4179, %v152
    %v4212 = vadd.f32 %v4180, %v140
    %v4213 = vadd.f32 %v4181, %v144
    %v4214 = vadd.f32 %v4182, %v148
    %v4215 = vadd.f32 %v4183, %v152
    %v4216 = vadd.f32 %v4184, %v140
    %v4217 = vadd.f32 %v4185, %v144
    %v4218 = vadd.f32 %v4186, %v148
    %v4219 = vadd.f32 %v4187, %v152
    %v4220 = vpack.c.bf16 %v4138, %v4138
    %v4221 = vld [vmem:[#allocation7] sm:$0xff]
    %v4222 = vld [vmem:[#allocation7 + $0x8] sm:$0xff]
    %v4223 = vld [vmem:[#allocation7 + $0x10] sm:$0xff]
    %v4224 = vld [vmem:[#allocation7 + $0x18] sm:$0xff]
    %v4225 = vld [vmem:[#allocation7 + $0x20] sm:$0xff]
    %v4226 = vld [vmem:[#allocation7 + $0x28] sm:$0xff]
    %v4227 = vld [vmem:[#allocation7 + $0x30] sm:$0xff]
    %v4228 = vld [vmem:[#allocation7 + $0x38] sm:$0xff]
    %v4229 = vld [vmem:[#allocation7 + $0x40] sm:$0xff]
    %v4230 = vld [vmem:[#allocation7 + $0x48] sm:$0xff]
    %v4231 = vld [vmem:[#allocation7 + $0x50] sm:$0xff]
    %v4232 = vld [vmem:[#allocation7 + $0x58] sm:$0xff]
    %v4233 = vld [vmem:[#allocation7 + $0x60] sm:$0xff]
    %v4234 = vld [vmem:[#allocation7 + $0x68] sm:$0xff]
    %v4235 = vld [vmem:[#allocation7 + $0x70] sm:$0xff]
    %v4236 = vld [vmem:[#allocation7 + $0x78] sm:$0xff]
    %v4237 = vld [vmem:[#allocation7 + $0x80] sm:$0xff]
    %v4238 = vld [vmem:[#allocation7 + $0x88] sm:$0xff]
    %v4239 = vld [vmem:[#allocation7 + $0x90] sm:$0xff]
    %v4240 = vld [vmem:[#allocation7 + $0x98] sm:$0xff]
    %v4241 = vld [vmem:[#allocation7 + $0xa0] sm:$0xff]
    %v4242 = vld [vmem:[#allocation7 + $0xa8] sm:$0xff]
    %v4243 = vld [vmem:[#allocation7 + $0xb0] sm:$0xff]
    %v4244 = vld [vmem:[#allocation7 + $0xb8] sm:$0xff]
    %v4245 = vld [vmem:[#allocation7 + $0xc0] sm:$0xff]
    %v4246 = vld [vmem:[#allocation7 + $0xc8] sm:$0xff]
    %v4247 = vld [vmem:[#allocation7 + $0xd0] sm:$0xff]
    %v4248 = vld [vmem:[#allocation7 + $0xd8] sm:$0xff]
    %v4249 = vld [vmem:[#allocation7 + $0xe0] sm:$0xff]
    %v4250 = vld [vmem:[#allocation7 + $0xe8] sm:$0xff]
    %v4251 = vld [vmem:[#allocation7 + $0xf0] sm:$0xff]
    %v4252 = vld [vmem:[#allocation7 + $0xf8] sm:$0xff]
    %v4285 = vunpack.c.l.b16 %v4221
    %v4286 = vunpack.c.h.b16 %v4221
    %v4287 = vunpack.c.l.b16 %v4222
    %v4288 = vunpack.c.h.b16 %v4222
    %v4289 = vunpack.c.l.b16 %v4223
    %v4290 = vunpack.c.h.b16 %v4223
    %v4291 = vunpack.c.l.b16 %v4224
    %v4292 = vunpack.c.h.b16 %v4224
    %v4293 = vunpack.c.l.b16 %v4225
    %v4294 = vunpack.c.h.b16 %v4225
    %v4295 = vunpack.c.l.b16 %v4226
    %v4296 = vunpack.c.h.b16 %v4226
    %v4297 = vunpack.c.l.b16 %v4227
    %v4298 = vunpack.c.h.b16 %v4227
    %v4299 = vunpack.c.l.b16 %v4228
    %v4300 = vunpack.c.h.b16 %v4228
    %v4301 = vunpack.c.l.b16 %v4229
    %v4302 = vunpack.c.h.b16 %v4229
    %v4303 = vunpack.c.l.b16 %v4230
    %v4304 = vunpack.c.h.b16 %v4230
    %v4305 = vunpack.c.l.b16 %v4231
    %v4306 = vunpack.c.h.b16 %v4231
    %v4307 = vunpack.c.l.b16 %v4232
    %v4308 = vunpack.c.h.b16 %v4232
    %v4309 = vunpack.c.l.b16 %v4233
    %v4310 = vunpack.c.h.b16 %v4233
    %v4311 = vunpack.c.l.b16 %v4234
    %v4312 = vunpack.c.h.b16 %v4234
    %v4313 = vunpack.c.l.b16 %v4235
    %v4314 = vunpack.c.h.b16 %v4235
    %v4315 = vunpack.c.l.b16 %v4236
    %v4316 = vunpack.c.h.b16 %v4236
    %v4317 = vunpack.c.l.b16 %v4237
    %v4318 = vunpack.c.h.b16 %v4237
    %v4319 = vunpack.c.l.b16 %v4238
    %v4320 = vunpack.c.h.b16 %v4238
    %v4321 = vunpack.c.l.b16 %v4239
    %v4322 = vunpack.c.h.b16 %v4239
    %v4323 = vunpack.c.l.b16 %v4240
    %v4324 = vunpack.c.h.b16 %v4240
    %v4325 = vunpack.c.l.b16 %v4241
    %v4326 = vunpack.c.h.b16 %v4241
    %v4327 = vunpack.c.l.b16 %v4242
    %v4328 = vunpack.c.h.b16 %v4242
    %v4329 = vunpack.c.l.b16 %v4243
    %v4330 = vunpack.c.h.b16 %v4243
    %v4331 = vunpack.c.l.b16 %v4244
    %v4332 = vunpack.c.h.b16 %v4244
    %v4333 = vunpack.c.l.b16 %v4245
    %v4334 = vunpack.c.h.b16 %v4245
    %v4335 = vunpack.c.l.b16 %v4246
    %v4336 = vunpack.c.h.b16 %v4246
    %v4337 = vunpack.c.l.b16 %v4247
    %v4338 = vunpack.c.h.b16 %v4247
    %v4339 = vunpack.c.l.b16 %v4248
    %v4340 = vunpack.c.h.b16 %v4248
    %v4341 = vunpack.c.l.b16 %v4249
    %v4342 = vunpack.c.h.b16 %v4249
    %v4343 = vunpack.c.l.b16 %v4250
    %v4344 = vunpack.c.h.b16 %v4250
    %v4345 = vunpack.c.l.b16 %v4251
    %v4346 = vunpack.c.h.b16 %v4251
    %v4347 = vunpack.c.l.b16 %v4252
    %v4348 = vunpack.c.h.b16 %v4252
    %v4349 = vpack.c.b16 %v4289, %v4285
    %v4350 = vpack.c.b16 %v4290, %v4286
    %v4351 = vpack.c.b16 %v4291, %v4287
    %v4352 = vpack.c.b16 %v4292, %v4288
    %v4353 = vpack.c.b16 %v4297, %v4293
    %v4354 = vpack.c.b16 %v4298, %v4294
    %v4355 = vpack.c.b16 %v4299, %v4295
    %v4356 = vpack.c.b16 %v4300, %v4296
    %v4357 = vpack.c.b16 %v4305, %v4301
    %v4358 = vpack.c.b16 %v4306, %v4302
    %v4359 = vpack.c.b16 %v4307, %v4303
    %v4360 = vpack.c.b16 %v4308, %v4304
    %v4361 = vpack.c.b16 %v4313, %v4309
    %v4362 = vpack.c.b16 %v4314, %v4310
    %v4363 = vpack.c.b16 %v4315, %v4311
    %v4364 = vpack.c.b16 %v4316, %v4312
    %v4365 = vpack.c.b16 %v4321, %v4317
    %v4366 = vpack.c.b16 %v4322, %v4318
    %v4367 = vpack.c.b16 %v4323, %v4319
    %v4368 = vpack.c.b16 %v4324, %v4320
    %v4369 = vpack.c.b16 %v4329, %v4325
    %v4370 = vpack.c.b16 %v4330, %v4326
    %v4371 = vpack.c.b16 %v4331, %v4327
    %v4372 = vpack.c.b16 %v4332, %v4328
    %v4373 = vpack.c.b16 %v4337, %v4333
    %v4374 = vpack.c.b16 %v4338, %v4334
    %v4375 = vpack.c.b16 %v4339, %v4335
    %v4376 = vpack.c.b16 %v4340, %v4336
    %v4377 = vpack.c.b16 %v4345, %v4341
    %v4378 = vpack.c.b16 %v4346, %v4342
    %v4379 = vpack.c.b16 %v4347, %v4343
    %v4380 = vpack.c.b16 %v4348, %v4344
    %4413 = vmatprep.subr.bf16.mxu0 %v4350
    %4414 = vmatpush1.bf16.msra.mxu0 %v4349
    %4415 = vmatprep.subr.bf16.mxu0 %v4354
    %4416 = vmatpush1.bf16.msra.mxu0 %v4353
    %4417 = vmatprep.subr.bf16.mxu0 %v4358
    %4418 = vmatpush1.bf16.msra.mxu0 %v4357
    %4419 = vmatprep.subr.bf16.mxu0 %v4362
    %4420 = vmatpush1.bf16.msra.mxu0 %v4361
    %4421 = vmatprep.subr.bf16.mxu0 %v4366
    %4422 = vmatpush1.bf16.msra.mxu0 %v4365
    %4423 = vmatprep.subr.bf16.mxu0 %v4370
    %4424 = vmatpush1.bf16.msra.mxu0 %v4369
    %4425 = vmatprep.subr.bf16.mxu0 %v4374
    %4426 = vmatpush1.bf16.msra.mxu0 %v4373
    %4427 = vmatprep.subr.bf16.mxu0 %v4378
    %4428 = vmatpush1.bf16.msra.mxu0 %v4377
    %4429 = vmatprep.subr.bf16.mxu0 0
    %4430 = vmatpush1.bf16.msra.mxu0 0
    %4431 = vmatprep.subr.bf16.mxu0 0
    %4432 = vmatpush1.bf16.msra.mxu0 0
    %4433 = vmatprep.subr.bf16.mxu0 0
    %4434 = vmatpush1.bf16.msra.mxu0 0
    %4435 = vmatprep.subr.bf16.mxu0 0
    %4436 = vmatpush1.bf16.msra.mxu0 0
    %4437 = vmatprep.subr.bf16.mxu0 0
    %4438 = vmatpush1.bf16.msra.mxu0 0
    %4439 = vmatprep.subr.bf16.mxu0 0
    %4440 = vmatpush1.bf16.msra.mxu0 0
    %4441 = vmatprep.subr.bf16.mxu0 0
    %4442 = vmatpush1.bf16.msra.mxu0 0
    %4443 = vmatprep.subr.bf16.mxu0 0
    %4444 = vmatpush1.bf16.msra.mxu0 0
    %4445 = vmatprep.mubr.bf16.mxu0 0
    %4446 = vmatmul.mubr.bf16.gmra.mrb[0].mxu0 %v4220
    %v4447 = vpop.f32.mrb[0].mxu0
    %v4448 = vadd.f32 0.0, %v4447
    %v4449 = vpop.f32.mrb[0].mxu0
    %v4450 = vadd.f32 0.0, %v4449
    %v4451 = vpop.f32.mrb[0].mxu0
    %v4452 = vpop.f32.mrb[0].mxu0
    %4453 = vdwg.mxu0
    %4454 = vmatprep.subr.bf16.mxu0 %v4352
    %4455 = vmatpush1.bf16.msra.mxu0 %v4351
    %4456 = vmatprep.subr.bf16.mxu0 %v4356
    %4457 = vmatpush1.bf16.msra.mxu0 %v4355
    %4458 = vmatprep.subr.bf16.mxu0 %v4360
    %4459 = vmatpush1.bf16.msra.mxu0 %v4359
    %4460 = vmatprep.subr.bf16.mxu0 %v4364
    %4461 = vmatpush1.bf16.msra.mxu0 %v4363
    %4462 = vmatprep.subr.bf16.mxu0 %v4368
    %4463 = vmatpush1.bf16.msra.mxu0 %v4367
    %4464 = vmatprep.subr.bf16.mxu0 %v4372
    %4465 = vmatpush1.bf16.msra.mxu0 %v4371
    %4466 = vmatprep.subr.bf16.mxu0 %v4376
    %4467 = vmatpush1.bf16.msra.mxu0 %v4375
    %4468 = vmatprep.subr.bf16.mxu0 %v4380
    %4469 = vmatpush1.bf16.msra.mxu0 %v4379
    %4470 = vmatprep.subr.bf16.mxu0 0
    %4471 = vmatpush1.bf16.msra.mxu0 0
    %4472 = vmatprep.subr.bf16.mxu0 0
    %4473 = vmatpush1.bf16.msra.mxu0 0
    %4474 = vmatprep.subr.bf16.mxu0 0
    %4475 = vmatpush1.bf16.msra.mxu0 0
    %4476 = vmatprep.subr.bf16.mxu0 0
    %4477 = vmatpush1.bf16.msra.mxu0 0
    %4478 = vmatprep.subr.bf16.mxu0 0
    %4479 = vmatpush1.bf16.msra.mxu0 0
    %4480 = vmatprep.subr.bf16.mxu0 0
    %4481 = vmatpush1.bf16.msra.mxu0 0
    %4482 = vmatprep.subr.bf16.mxu0 0
    %4483 = vmatpush1.bf16.msra.mxu0 0
    %4484 = vmatprep.subr.bf16.mxu0 0
    %4485 = vmatpush1.bf16.msra.mxu0 0
    %4486 = vmatprep.mubr.bf16.mxu0 0
    %4487 = vmatmul.mubr.bf16.gmra.mrb[0].mxu0 %v4220
    %v4488 = vpop.f32.mrb[0].mxu0
    %v4489 = vadd.f32 0.0, %v4488
    %v4490 = vpop.f32.mrb[0].mxu0
    %v4491 = vadd.f32 0.0, %v4490
    %v4492 = vpop.f32.mrb[0].mxu0
    %v4493 = vpop.f32.mrb[0].mxu0
    %4494 = vdwg.mxu0
    %v4499 = vrot.slane %v4448, 2
    %v4500 = vrot.slane %v4450, 2
    %v4501 = vrot.slane %v4489, 2
    %v4502 = vrot.slane %v4491, 2
    %v4503 = vrot.slane %v4448, 3
    %v4504 = vrot.slane %v4450, 3
    %v4505 = vrot.slane %v4489, 3
    %v4506 = vrot.slane %v4491, 3
    %v4507 = vrot.slane %v4448, 4
    %v4508 = vrot.slane %v4450, 4
    %v4509 = vrot.slane %v4489, 4
    %v4510 = vrot.slane %v4491, 4
    %v4511 = vrot.slane %v4448, 5
    %v4512 = vrot.slane %v4450, 5
    %v4513 = vrot.slane %v4489, 5
    %v4514 = vrot.slane %v4491, 5
    %v4515 = vrot.slane %v4448, 6
    %v4516 = vrot.slane %v4450, 6
    %v4517 = vrot.slane %v4489, 6
    %v4518 = vrot.slane %v4491, 6
    %v4519 = vrot.slane %v4448, 7
    %v4520 = vrot.slane %v4450, 7
    %v4521 = vrot.slane %v4489, 7
    %v4522 = vrot.slane %v4491, 7
    %v4523 = vrot.slane %v4448, 1
    %v4524 = vrot.slane %v4450, 1
    %v4525 = vrot.slane %v4489, 1
    %v4526 = vrot.slane %v4491, 1
    %v4559 = vadd.f32 %v4188, %v4499
    %v4560 = vadd.f32 %v4189, %v4500
    %v4561 = vadd.f32 %v4190, %v4501
    %v4562 = vadd.f32 %v4191, %v4502
    %v4563 = vadd.f32 %v4192, %v4503
    %v4564 = vadd.f32 %v4193, %v4504
    %v4565 = vadd.f32 %v4194, %v4505
    %v4566 = vadd.f32 %v4195, %v4506
    %v4567 = vadd.f32 %v4196, %v4507
    %v4568 = vadd.f32 %v4197, %v4508
    %v4569 = vadd.f32 %v4198, %v4509
    %v4570 = vadd.f32 %v4199, %v4510
    %v4571 = vadd.f32 %v4200, %v4511
    %v4572 = vadd.f32 %v4201, %v4512
    %v4573 = vadd.f32 %v4202, %v4513
    %v4574 = vadd.f32 %v4203, %v4514
    %v4575 = vadd.f32 %v4204, %v4515
    %v4576 = vadd.f32 %v4205, %v4516
    %v4577 = vadd.f32 %v4206, %v4517
    %v4578 = vadd.f32 %v4207, %v4518
    %v4579 = vadd.f32 %v4208, %v4519
    %v4580 = vadd.f32 %v4209, %v4520
    %v4581 = vadd.f32 %v4210, %v4521
    %v4582 = vadd.f32 %v4211, %v4522
    %v4583 = vadd.f32 %v4212, %v4448
    %v4584 = vadd.f32 %v4213, %v4450
    %v4585 = vadd.f32 %v4214, %v4489
    %v4586 = vadd.f32 %v4215, %v4491
    %v4587 = vadd.f32 %v4216, %v4523
    %v4588 = vadd.f32 %v4217, %v4524
    %v4589 = vadd.f32 %v4218, %v4525
    %v4590 = vadd.f32 %v4219, %v4526
    %v4591 = vmul.f32 %v4559, 0.5
    %v4592 = vmul.f32 %v4563, 0.5
    %v4593 = vmul.f32 %v4567, 0.5
    %v4594 = vmul.f32 %v4571, 0.5
    %v4595 = vmul.f32 %v4575, 0.5
    %v4596 = vmul.f32 %v4579, 0.5
    %v4597 = vmul.f32 %v4583, 0.5
    %v4598 = vmul.f32 %v4587, 0.5
    %v4599 = vtanh.pop %v4591
    %v4600 = vtanh.pop %v4592
    %v4601 = vtanh.pop %v4593
    %v4602 = vtanh.pop %v4594
    %v4603 = vtanh.pop %v4595
    %v4604 = vtanh.pop %v4596
    %v4605 = vtanh.pop %v4597
    %v4606 = vtanh.pop %v4598
    %v4607 = vmul.f32 %v4599, 0.5
    %v4608 = vmul.f32 %v4600, 0.5
    %v4609 = vmul.f32 %v4601, 0.5
    %v4610 = vmul.f32 %v4602, 0.5
    %v4611 = vmul.f32 %v4603, 0.5
    %v4612 = vmul.f32 %v4604, 0.5
    %v4613 = vmul.f32 %v4605, 0.5
    %v4614 = vmul.f32 %v4606, 0.5
    %v4615 = vadd.f32 %v4607, 0.5
    %v4616 = vadd.f32 %v4608, 0.5
    %v4617 = vadd.f32 %v4609, 0.5
    %v4618 = vadd.f32 %v4610, 0.5
    %v4619 = vadd.f32 %v4611, 0.5
    %v4620 = vadd.f32 %v4612, 0.5
    %v4621 = vadd.f32 %v4613, 0.5
    %v4622 = vadd.f32 %v4614, 0.5
    %v4623 = vmul.f32 %v4560, 0.5
    %v4624 = vmul.f32 %v4564, 0.5
    %v4625 = vmul.f32 %v4568, 0.5
    %v4626 = vmul.f32 %v4572, 0.5
    %v4627 = vmul.f32 %v4576, 0.5
    %v4628 = vmul.f32 %v4580, 0.5
    %v4629 = vmul.f32 %v4584, 0.5
    %v4630 = vmul.f32 %v4588, 0.5
    %v4631 = vtanh.pop %v4623
    %v4632 = vtanh.pop %v4624
    %v4633 = vtanh.pop %v4625
    %v4634 = vtanh.pop %v4626
    %v4635 = vtanh.pop %v4627
    %v4636 = vtanh.pop %v4628
    %v4637 = vtanh.pop %v4629
    %v4638 = vtanh.pop %v4630
    %v4639 = vmul.f32 %v4631, 0.5
    %v4640 = vmul.f32 %v4632, 0.5
    %v4641 = vmul.f32 %v4633, 0.5
    %v4642 = vmul.f32 %v4634, 0.5
    %v4643 = vmul.f32 %v4635, 0.5
    %v4644 = vmul.f32 %v4636, 0.5
    %v4645 = vmul.f32 %v4637, 0.5
    %v4646 = vmul.f32 %v4638, 0.5
    %v4647 = vadd.f32 %v4639, 0.5
    %v4648 = vadd.f32 %v4640, 0.5
    %v4649 = vadd.f32 %v4641, 0.5
    %v4650 = vadd.f32 %v4642, 0.5
    %v4651 = vadd.f32 %v4643, 0.5
    %v4652 = vadd.f32 %v4644, 0.5
    %v4653 = vadd.f32 %v4645, 0.5
    %v4654 = vadd.f32 %v4646, 0.5
    %v4655 = vtanh.pop %v4561
    %v4656 = vtanh.pop %v4565
    %v4657 = vtanh.pop %v4569
    %v4658 = vtanh.pop %v4573
    %v4659 = vtanh.pop %v4577
    %v4660 = vtanh.pop %v4581
    %v4661 = vtanh.pop %v4585
    %v4662 = vtanh.pop %v4589
    %v4663 = vmul.f32 %v4562, 0.5
    %v4664 = vmul.f32 %v4566, 0.5
    %v4665 = vmul.f32 %v4570, 0.5
    %v4666 = vmul.f32 %v4574, 0.5
    %v4667 = vmul.f32 %v4578, 0.5
    %v4668 = vmul.f32 %v4582, 0.5
    %v4669 = vmul.f32 %v4586, 0.5
    %v4670 = vmul.f32 %v4590, 0.5
    %v4671 = vtanh.pop %v4663
    %v4672 = vtanh.pop %v4664
    %v4673 = vtanh.pop %v4665
    %v4674 = vtanh.pop %v4666
    %v4675 = vtanh.pop %v4667
    %v4676 = vtanh.pop %v4668
    %v4677 = vtanh.pop %v4669
    %v4678 = vtanh.pop %v4670
    %v4679 = vmul.f32 %v4671, 0.5
    %v4680 = vmul.f32 %v4672, 0.5
    %v4681 = vmul.f32 %v4673, 0.5
    %v4682 = vmul.f32 %v4674, 0.5
    %v4683 = vmul.f32 %v4675, 0.5
    %v4684 = vmul.f32 %v4676, 0.5
    %v4685 = vmul.f32 %v4677, 0.5
    %v4686 = vmul.f32 %v4678, 0.5
    %v4687 = vadd.f32 %v4679, 0.5
    %v4688 = vadd.f32 %v4680, 0.5
    %v4689 = vadd.f32 %v4681, 0.5
    %v4690 = vadd.f32 %v4682, 0.5
    %v4691 = vadd.f32 %v4683, 0.5
    %v4692 = vadd.f32 %v4684, 0.5
    %v4693 = vadd.f32 %v4685, 0.5
    %v4694 = vadd.f32 %v4686, 0.5
    %v4696 = vrot.slane %v4139, 2
    %v4697 = vrot.slane %v4139, 3
    %v4698 = vrot.slane %v4139, 4
    %v4699 = vrot.slane %v4139, 5
    %v4700 = vrot.slane %v4139, 6
    %v4701 = vrot.slane %v4139, 7
    %v4702 = vrot.slane %v4139, 1
    %v4711 = vmul.f32 %v4647, %v4696
    %v4712 = vmul.f32 %v4648, %v4697
    %v4713 = vmul.f32 %v4649, %v4698
    %v4714 = vmul.f32 %v4650, %v4699
    %v4715 = vmul.f32 %v4651, %v4700
    %v4716 = vmul.f32 %v4652, %v4701
    %v4717 = vmul.f32 %v4653, %v4139
    %v4718 = vmul.f32 %v4654, %v4702
    %v4719 = vmul.f32 %v4615, %v4655
    %v4720 = vmul.f32 %v4616, %v4656
    %v4721 = vmul.f32 %v4617, %v4657
    %v4722 = vmul.f32 %v4618, %v4658
    %v4723 = vmul.f32 %v4619, %v4659
    %v4724 = vmul.f32 %v4620, %v4660
    %v4725 = vmul.f32 %v4621, %v4661
    %v4726 = vmul.f32 %v4622, %v4662
    %v4727 = vadd.f32 %v4711, %v4719
    %v4728 = vadd.f32 %v4712, %v4720
    %v4729 = vadd.f32 %v4713, %v4721
    %v4730 = vadd.f32 %v4714, %v4722
    %v4731 = vadd.f32 %v4715, %v4723
    %v4732 = vadd.f32 %v4716, %v4724
    %v4733 = vadd.f32 %v4717, %v4725
    %v4734 = vadd.f32 %v4718, %v4726
    %v4735 = vtanh.pop %v4727
    %v4736 = vtanh.pop %v4728
    %v4737 = vtanh.pop %v4729
    %v4738 = vtanh.pop %v4730
    %v4739 = vtanh.pop %v4731
    %v4740 = vtanh.pop %v4732
    %v4741 = vtanh.pop %v4733
    %v4742 = vtanh.pop %v4734
    %v4743 = vmul.f32 %v4687, %v4735
    %v4744 = vmul.f32 %v4688, %v4736
    %v4745 = vmul.f32 %v4689, %v4737
    %v4746 = vmul.f32 %v4690, %v4738
    %v4747 = vmul.f32 %v4691, %v4739
    %v4748 = vmul.f32 %v4692, %v4740
    %v4749 = vmul.f32 %v4693, %v4741
    %v4750 = vmul.f32 %v4694, %v4742
    %v4759 = vrot.slane %v4744, 7
    %v4760 = vsel %vm747, %v4759, %v4743
    %v4761 = vrot.slane %v4745, 6
    %v4762 = vrot.slane %v4746, 5
    %v4763 = vsel %vm729, %v4762, %v4761
    %v4764 = vrot.slane %v4747, 4
    %v4765 = vsel %vm732, %v4764, %v4763
    %v4766 = vrot.slane %v4748, 3
    %v4767 = vsel %vm735, %v4766, %v4765
    %v4768 = vrot.slane %v4749, 2
    %v4769 = vsel %vm738, %v4768, %v4767
    %v4770 = vrot.slane %v4750, 1
    %v4771 = vsel %vm741, %v4770, %v4769
    %4774 = vst [vmem:[#allocation2 - $0x6] sm:$0xc0] %v4760
    %4775 = vst [vmem:[#allocation2 + $0x2] sm:$0x3f] %v4771
    %v4784 = vrot.slane %v4728, 7
    %v4785 = vsel %vm747, %v4784, %v4727
    %v4786 = vrot.slane %v4729, 6
    %v4787 = vrot.slane %v4730, 5
    %v4788 = vsel %vm729, %v4787, %v4786
    %v4789 = vrot.slane %v4731, 4
    %v4790 = vsel %vm732, %v4789, %v4788
    %v4791 = vrot.slane %v4732, 3
    %v4792 = vsel %vm735, %v4791, %v4790
    %v4793 = vrot.slane %v4733, 2
    %v4794 = vsel %vm738, %v4793, %v4792
    %v4795 = vrot.slane %v4734, 1
    %v4796 = vsel %vm741, %v4795, %v4794
    %4799 = vst [vmem:[#allocation3 - $0x6] sm:$0xc0] %v4785
    %4800 = vst [vmem:[#allocation3 + $0x2] sm:$0x3f] %v4796
    %4801 = vst [vmem:[#allocation12] sm:$0x40] %v4743
    %4802 = vst [vmem:[#allocation12 + $0x10] sm:$0x40] %v4744
    %4803 = vst [vmem:[#allocation12 + $0x20] sm:$0x40] %v4745
    %4804 = vst [vmem:[#allocation12 + $0x30] sm:$0x40] %v4746
    %4805 = vst [vmem:[#allocation12 + $0x40] sm:$0x40] %v4747
    %4806 = vst [vmem:[#allocation12 + $0x50] sm:$0x40] %v4748
    %4807 = vst [vmem:[#allocation12 + $0x60] sm:$0x40] %v4749
    %4808 = vst [vmem:[#allocation12 + $0x70] sm:$0x40] %v4750
    %v4809 = vld [vmem:[#allocation2] sm:$0xff]
    %v4810 = vld [vmem:[#allocation3] sm:$0xff]
    %v4811 = vld [vmem:[#allocation4] sm:$0x88]
    %v4812 = vld [vmem:[#allocation4 + $0x8] sm:$0x88]
    %v4813 = vld [vmem:[#allocation4 + $0x20] sm:$0x88]
    %v4814 = vld [vmem:[#allocation4 + $0x28] sm:$0x88]
    %v4815 = vld [vmem:[#allocation4 + $0x40] sm:$0x88]
    %v4816 = vld [vmem:[#allocation4 + $0x48] sm:$0x88]
    %v4817 = vld [vmem:[#allocation4 + $0x60] sm:$0x88]
    %v4818 = vld [vmem:[#allocation4 + $0x68] sm:$0x88]
    %v4819 = vld [vmem:[#allocation4 + $0x80] sm:$0x88]
    %v4820 = vld [vmem:[#allocation4 + $0x88] sm:$0x88]
    %v4821 = vld [vmem:[#allocation4 + $0xa0] sm:$0x88]
    %v4822 = vld [vmem:[#allocation4 + $0xa8] sm:$0x88]
    %v4823 = vld [vmem:[#allocation4 + $0xc0] sm:$0x88]
    %v4824 = vld [vmem:[#allocation4 + $0xc8] sm:$0x88]
    %v4825 = vld [vmem:[#allocation4 + $0xe0] sm:$0x88]
    %v4826 = vld [vmem:[#allocation4 + $0xe8] sm:$0x88]
    %v4827 = vunpack.c.l.bf16 %v4811
    %v4828 = vunpack.c.h.bf16 %v4811
    %v4829 = vunpack.c.l.bf16 %v4812
    %v4830 = vunpack.c.h.bf16 %v4812
    %v4831 = vunpack.c.l.bf16 %v4813
    %v4832 = vunpack.c.h.bf16 %v4813
    %v4833 = vunpack.c.l.bf16 %v4814
    %v4834 = vunpack.c.h.bf16 %v4814
    %v4835 = vunpack.c.l.bf16 %v4815
    %v4836 = vunpack.c.h.bf16 %v4815
    %v4837 = vunpack.c.l.bf16 %v4816
    %v4838 = vunpack.c.h.bf16 %v4816
    %v4839 = vunpack.c.l.bf16 %v4817
    %v4840 = vunpack.c.h.bf16 %v4817
    %v4841 = vunpack.c.l.bf16 %v4818
    %v4842 = vunpack.c.h.bf16 %v4818
    %v4843 = vunpack.c.l.bf16 %v4819
    %v4844 = vunpack.c.h.bf16 %v4819
    %v4845 = vunpack.c.l.bf16 %v4820
    %v4846 = vunpack.c.h.bf16 %v4820
    %v4847 = vunpack.c.l.bf16 %v4821
    %v4848 = vunpack.c.h.bf16 %v4821
    %v4849 = vunpack.c.l.bf16 %v4822
    %v4850 = vunpack.c.h.bf16 %v4822
    %v4851 = vunpack.c.l.bf16 %v4823
    %v4852 = vunpack.c.h.bf16 %v4823
    %v4853 = vunpack.c.l.bf16 %v4824
    %v4854 = vunpack.c.h.bf16 %v4824
    %v4855 = vunpack.c.l.bf16 %v4825
    %v4856 = vunpack.c.h.bf16 %v4825
    %v4857 = vunpack.c.l.bf16 %v4826
    %v4858 = vunpack.c.h.bf16 %v4826
    %v4859 = vadd.f32 %v4827, %v140
    %v4860 = vadd.f32 %v4828, %v144
    %v4861 = vadd.f32 %v4829, %v148
    %v4862 = vadd.f32 %v4830, %v152
    %v4863 = vadd.f32 %v4831, %v140
    %v4864 = vadd.f32 %v4832, %v144
    %v4865 = vadd.f32 %v4833, %v148
    %v4866 = vadd.f32 %v4834, %v152
    %v4867 = vadd.f32 %v4835, %v140
    %v4868 = vadd.f32 %v4836, %v144
    %v4869 = vadd.f32 %v4837, %v148
    %v4870 = vadd.f32 %v4838, %v152
    %v4871 = vadd.f32 %v4839, %v140
    %v4872 = vadd.f32 %v4840, %v144
    %v4873 = vadd.f32 %v4841, %v148
    %v4874 = vadd.f32 %v4842, %v152
    %v4875 = vadd.f32 %v4843, %v140
    %v4876 = vadd.f32 %v4844, %v144
    %v4877 = vadd.f32 %v4845, %v148
    %v4878 = vadd.f32 %v4846, %v152
    %v4879 = vadd.f32 %v4847, %v140
    %v4880 = vadd.f32 %v4848, %v144
    %v4881 = vadd.f32 %v4849, %v148
    %v4882 = vadd.f32 %v4850, %v152
    %v4883 = vadd.f32 %v4851, %v140
    %v4884 = vadd.f32 %v4852, %v144
    %v4885 = vadd.f32 %v4853, %v148
    %v4886 = vadd.f32 %v4854, %v152
    %v4887 = vadd.f32 %v4855, %v140
    %v4888 = vadd.f32 %v4856, %v144
    %v4889 = vadd.f32 %v4857, %v148
    %v4890 = vadd.f32 %v4858, %v152
    %v4891 = vpack.c.bf16 %v4809, %v4809
    %v4892 = vld [vmem:[#allocation7] sm:$0xff]
    %v4893 = vld [vmem:[#allocation7 + $0x8] sm:$0xff]
    %v4894 = vld [vmem:[#allocation7 + $0x10] sm:$0xff]
    %v4895 = vld [vmem:[#allocation7 + $0x18] sm:$0xff]
    %v4896 = vld [vmem:[#allocation7 + $0x20] sm:$0xff]
    %v4897 = vld [vmem:[#allocation7 + $0x28] sm:$0xff]
    %v4898 = vld [vmem:[#allocation7 + $0x30] sm:$0xff]
    %v4899 = vld [vmem:[#allocation7 + $0x38] sm:$0xff]
    %v4900 = vld [vmem:[#allocation7 + $0x40] sm:$0xff]
    %v4901 = vld [vmem:[#allocation7 + $0x48] sm:$0xff]
    %v4902 = vld [vmem:[#allocation7 + $0x50] sm:$0xff]
    %v4903 = vld [vmem:[#allocation7 + $0x58] sm:$0xff]
    %v4904 = vld [vmem:[#allocation7 + $0x60] sm:$0xff]
    %v4905 = vld [vmem:[#allocation7 + $0x68] sm:$0xff]
    %v4906 = vld [vmem:[#allocation7 + $0x70] sm:$0xff]
    %v4907 = vld [vmem:[#allocation7 + $0x78] sm:$0xff]
    %v4908 = vld [vmem:[#allocation7 + $0x80] sm:$0xff]
    %v4909 = vld [vmem:[#allocation7 + $0x88] sm:$0xff]
    %v4910 = vld [vmem:[#allocation7 + $0x90] sm:$0xff]
    %v4911 = vld [vmem:[#allocation7 + $0x98] sm:$0xff]
    %v4912 = vld [vmem:[#allocation7 + $0xa0] sm:$0xff]
    %v4913 = vld [vmem:[#allocation7 + $0xa8] sm:$0xff]
    %v4914 = vld [vmem:[#allocation7 + $0xb0] sm:$0xff]
    %v4915 = vld [vmem:[#allocation7 + $0xb8] sm:$0xff]
    %v4916 = vld [vmem:[#allocation7 + $0xc0] sm:$0xff]
    %v4917 = vld [vmem:[#allocation7 + $0xc8] sm:$0xff]
    %v4918 = vld [vmem:[#allocation7 + $0xd0] sm:$0xff]
    %v4919 = vld [vmem:[#allocation7 + $0xd8] sm:$0xff]
    %v4920 = vld [vmem:[#allocation7 + $0xe0] sm:$0xff]
    %v4921 = vld [vmem:[#allocation7 + $0xe8] sm:$0xff]
    %v4922 = vld [vmem:[#allocation7 + $0xf0] sm:$0xff]
    %v4923 = vld [vmem:[#allocation7 + $0xf8] sm:$0xff]
    %v4956 = vunpack.c.l.b16 %v4892
    %v4957 = vunpack.c.h.b16 %v4892
    %v4958 = vunpack.c.l.b16 %v4893
    %v4959 = vunpack.c.h.b16 %v4893
    %v4960 = vunpack.c.l.b16 %v4894
    %v4961 = vunpack.c.h.b16 %v4894
    %v4962 = vunpack.c.l.b16 %v4895
    %v4963 = vunpack.c.h.b16 %v4895
    %v4964 = vunpack.c.l.b16 %v4896
    %v4965 = vunpack.c.h.b16 %v4896
    %v4966 = vunpack.c.l.b16 %v4897
    %v4967 = vunpack.c.h.b16 %v4897
    %v4968 = vunpack.c.l.b16 %v4898
    %v4969 = vunpack.c.h.b16 %v4898
    %v4970 = vunpack.c.l.b16 %v4899
    %v4971 = vunpack.c.h.b16 %v4899
    %v4972 = vunpack.c.l.b16 %v4900
    %v4973 = vunpack.c.h.b16 %v4900
    %v4974 = vunpack.c.l.b16 %v4901
    %v4975 = vunpack.c.h.b16 %v4901
    %v4976 = vunpack.c.l.b16 %v4902
    %v4977 = vunpack.c.h.b16 %v4902
    %v4978 = vunpack.c.l.b16 %v4903
    %v4979 = vunpack.c.h.b16 %v4903
    %v4980 = vunpack.c.l.b16 %v4904
    %v4981 = vunpack.c.h.b16 %v4904
    %v4982 = vunpack.c.l.b16 %v4905
    %v4983 = vunpack.c.h.b16 %v4905
    %v4984 = vunpack.c.l.b16 %v4906
    %v4985 = vunpack.c.h.b16 %v4906
    %v4986 = vunpack.c.l.b16 %v4907
    %v4987 = vunpack.c.h.b16 %v4907
    %v4988 = vunpack.c.l.b16 %v4908
    %v4989 = vunpack.c.h.b16 %v4908
    %v4990 = vunpack.c.l.b16 %v4909
    %v4991 = vunpack.c.h.b16 %v4909
    %v4992 = vunpack.c.l.b16 %v4910
    %v4993 = vunpack.c.h.b16 %v4910
    %v4994 = vunpack.c.l.b16 %v4911
    %v4995 = vunpack.c.h.b16 %v4911
    %v4996 = vunpack.c.l.b16 %v4912
    %v4997 = vunpack.c.h.b16 %v4912
    %v4998 = vunpack.c.l.b16 %v4913
    %v4999 = vunpack.c.h.b16 %v4913
    %v5000 = vunpack.c.l.b16 %v4914
    %v5001 = vunpack.c.h.b16 %v4914
    %v5002 = vunpack.c.l.b16 %v4915
    %v5003 = vunpack.c.h.b16 %v4915
    %v5004 = vunpack.c.l.b16 %v4916
    %v5005 = vunpack.c.h.b16 %v4916
    %v5006 = vunpack.c.l.b16 %v4917
    %v5007 = vunpack.c.h.b16 %v4917
    %v5008 = vunpack.c.l.b16 %v4918
    %v5009 = vunpack.c.h.b16 %v4918
    %v5010 = vunpack.c.l.b16 %v4919
    %v5011 = vunpack.c.h.b16 %v4919
    %v5012 = vunpack.c.l.b16 %v4920
    %v5013 = vunpack.c.h.b16 %v4920
    %v5014 = vunpack.c.l.b16 %v4921
    %v5015 = vunpack.c.h.b16 %v4921
    %v5016 = vunpack.c.l.b16 %v4922
    %v5017 = vunpack.c.h.b16 %v4922
    %v5018 = vunpack.c.l.b16 %v4923
    %v5019 = vunpack.c.h.b16 %v4923
    %v5020 = vpack.c.b16 %v4960, %v4956
    %v5021 = vpack.c.b16 %v4961, %v4957
    %v5022 = vpack.c.b16 %v4962, %v4958
    %v5023 = vpack.c.b16 %v4963, %v4959
    %v5024 = vpack.c.b16 %v4968, %v4964
    %v5025 = vpack.c.b16 %v4969, %v4965
    %v5026 = vpack.c.b16 %v4970, %v4966
    %v5027 = vpack.c.b16 %v4971, %v4967
    %v5028 = vpack.c.b16 %v4976, %v4972
    %v5029 = vpack.c.b16 %v4977, %v4973
    %v5030 = vpack.c.b16 %v4978, %v4974
    %v5031 = vpack.c.b16 %v4979, %v4975
    %v5032 = vpack.c.b16 %v4984, %v4980
    %v5033 = vpack.c.b16 %v4985, %v4981
    %v5034 = vpack.c.b16 %v4986, %v4982
    %v5035 = vpack.c.b16 %v4987, %v4983
    %v5036 = vpack.c.b16 %v4992, %v4988
    %v5037 = vpack.c.b16 %v4993, %v4989
    %v5038 = vpack.c.b16 %v4994, %v4990
    %v5039 = vpack.c.b16 %v4995, %v4991
    %v5040 = vpack.c.b16 %v5000, %v4996
    %v5041 = vpack.c.b16 %v5001, %v4997
    %v5042 = vpack.c.b16 %v5002, %v4998
    %v5043 = vpack.c.b16 %v5003, %v4999
    %v5044 = vpack.c.b16 %v5008, %v5004
    %v5045 = vpack.c.b16 %v5009, %v5005
    %v5046 = vpack.c.b16 %v5010, %v5006
    %v5047 = vpack.c.b16 %v5011, %v5007
    %v5048 = vpack.c.b16 %v5016, %v5012
    %v5049 = vpack.c.b16 %v5017, %v5013
    %v5050 = vpack.c.b16 %v5018, %v5014
    %v5051 = vpack.c.b16 %v5019, %v5015
    %5084 = vmatprep.subr.bf16.mxu0 %v5021
    %5085 = vmatpush1.bf16.msra.mxu0 %v5020
    %5086 = vmatprep.subr.bf16.mxu0 %v5025
    %5087 = vmatpush1.bf16.msra.mxu0 %v5024
    %5088 = vmatprep.subr.bf16.mxu0 %v5029
    %5089 = vmatpush1.bf16.msra.mxu0 %v5028
    %5090 = vmatprep.subr.bf16.mxu0 %v5033
    %5091 = vmatpush1.bf16.msra.mxu0 %v5032
    %5092 = vmatprep.subr.bf16.mxu0 %v5037
    %5093 = vmatpush1.bf16.msra.mxu0 %v5036
    %5094 = vmatprep.subr.bf16.mxu0 %v5041
    %5095 = vmatpush1.bf16.msra.mxu0 %v5040
    %5096 = vmatprep.subr.bf16.mxu0 %v5045
    %5097 = vmatpush1.bf16.msra.mxu0 %v5044
    %5098 = vmatprep.subr.bf16.mxu0 %v5049
    %5099 = vmatpush1.bf16.msra.mxu0 %v5048
    %5100 = vmatprep.subr.bf16.mxu0 0
    %5101 = vmatpush1.bf16.msra.mxu0 0
    %5102 = vmatprep.subr.bf16.mxu0 0
    %5103 = vmatpush1.bf16.msra.mxu0 0
    %5104 = vmatprep.subr.bf16.mxu0 0
    %5105 = vmatpush1.bf16.msra.mxu0 0
    %5106 = vmatprep.subr.bf16.mxu0 0
    %5107 = vmatpush1.bf16.msra.mxu0 0
    %5108 = vmatprep.subr.bf16.mxu0 0
    %5109 = vmatpush1.bf16.msra.mxu0 0
    %5110 = vmatprep.subr.bf16.mxu0 0
    %5111 = vmatpush1.bf16.msra.mxu0 0
    %5112 = vmatprep.subr.bf16.mxu0 0
    %5113 = vmatpush1.bf16.msra.mxu0 0
    %5114 = vmatprep.subr.bf16.mxu0 0
    %5115 = vmatpush1.bf16.msra.mxu0 0
    %5116 = vmatprep.mubr.bf16.mxu0 0
    %5117 = vmatmul.mubr.bf16.gmra.mrb[0].mxu0 %v4891
    %v5118 = vpop.f32.mrb[0].mxu0
    %v5119 = vadd.f32 0.0, %v5118
    %v5120 = vpop.f32.mrb[0].mxu0
    %v5121 = vadd.f32 0.0, %v5120
    %v5122 = vpop.f32.mrb[0].mxu0
    %v5123 = vpop.f32.mrb[0].mxu0
    %5124 = vdwg.mxu0
    %5125 = vmatprep.subr.bf16.mxu0 %v5023
    %5126 = vmatpush1.bf16.msra.mxu0 %v5022
    %5127 = vmatprep.subr.bf16.mxu0 %v5027
    %5128 = vmatpush1.bf16.msra.mxu0 %v5026
    %5129 = vmatprep.subr.bf16.mxu0 %v5031
    %5130 = vmatpush1.bf16.msra.mxu0 %v5030
    %5131 = vmatprep.subr.bf16.mxu0 %v5035
    %5132 = vmatpush1.bf16.msra.mxu0 %v5034
    %5133 = vmatprep.subr.bf16.mxu0 %v5039
    %5134 = vmatpush1.bf16.msra.mxu0 %v5038
    %5135 = vmatprep.subr.bf16.mxu0 %v5043
    %5136 = vmatpush1.bf16.msra.mxu0 %v5042
    %5137 = vmatprep.subr.bf16.mxu0 %v5047
    %5138 = vmatpush1.bf16.msra.mxu0 %v5046
    %5139 = vmatprep.subr.bf16.mxu0 %v5051
    %5140 = vmatpush1.bf16.msra.mxu0 %v5050
    %5141 = vmatprep.subr.bf16.mxu0 0
    %5142 = vmatpush1.bf16.msra.mxu0 0
    %5143 = vmatprep.subr.bf16.mxu0 0
    %5144 = vmatpush1.bf16.msra.mxu0 0
    %5145 = vmatprep.subr.bf16.mxu0 0
    %5146 = vmatpush1.bf16.msra.mxu0 0
    %5147 = vmatprep.subr.bf16.mxu0 0
    %5148 = vmatpush1.bf16.msra.mxu0 0
    %5149 = vmatprep.subr.bf16.mxu0 0
    %5150 = vmatpush1.bf16.msra.mxu0 0
    %5151 = vmatprep.subr.bf16.mxu0 0
    %5152 = vmatpush1.bf16.msra.mxu0 0
    %5153 = vmatprep.subr.bf16.mxu0 0
    %5154 = vmatpush1.bf16.msra.mxu0 0
    %5155 = vmatprep.subr.bf16.mxu0 0
    %5156 = vmatpush1.bf16.msra.mxu0 0
    %5157 = vmatprep.mubr.bf16.mxu0 0
    %5158 = vmatmul.mubr.bf16.gmra.mrb[0].mxu0 %v4891
    %v5159 = vpop.f32.mrb[0].mxu0
    %v5160 = vadd.f32 0.0, %v5159
    %v5161 = vpop.f32.mrb[0].mxu0
    %v5162 = vadd.f32 0.0, %v5161
    %v5163 = vpop.f32.mrb[0].mxu0
    %v5164 = vpop.f32.mrb[0].mxu0
    %5165 = vdwg.mxu0
    %v5170 = vrot.slane %v5119, 1
    %v5171 = vrot.slane %v5121, 1
    %v5172 = vrot.slane %v5160, 1
    %v5173 = vrot.slane %v5162, 1
    %v5174 = vrot.slane %v5119, 2
    %v5175 = vrot.slane %v5121, 2
    %v5176 = vrot.slane %v5160, 2
    %v5177 = vrot.slane %v5162, 2
    %v5178 = vrot.slane %v5119, 3
    %v5179 = vrot.slane %v5121, 3
    %v5180 = vrot.slane %v5160, 3
    %v5181 = vrot.slane %v5162, 3
    %v5182 = vrot.slane %v5119, 4
    %v5183 = vrot.slane %v5121, 4
    %v5184 = vrot.slane %v5160, 4
    %v5185 = vrot.slane %v5162, 4
    %v5186 = vrot.slane %v5119, 5
    %v5187 = vrot.slane %v5121, 5
    %v5188 = vrot.slane %v5160, 5
    %v5189 = vrot.slane %v5162, 5
    %v5190 = vrot.slane %v5119, 6
    %v5191 = vrot.slane %v5121, 6
    %v5192 = vrot.slane %v5160, 6
    %v5193 = vrot.slane %v5162, 6
    %v5194 = vrot.slane %v5119, 7
    %v5195 = vrot.slane %v5121, 7
    %v5196 = vrot.slane %v5160, 7
    %v5197 = vrot.slane %v5162, 7
    %v5230 = vadd.f32 %v4859, %v5170
    %v5231 = vadd.f32 %v4860, %v5171
    %v5232 = vadd.f32 %v4861, %v5172
    %v5233 = vadd.f32 %v4862, %v5173
    %v5234 = vadd.f32 %v4863, %v5174
    %v5235 = vadd.f32 %v4864, %v5175
    %v5236 = vadd.f32 %v4865, %v5176
    %v5237 = vadd.f32 %v4866, %v5177
    %v5238 = vadd.f32 %v4867, %v5178
    %v5239 = vadd.f32 %v4868, %v5179
    %v5240 = vadd.f32 %v4869, %v5180
    %v5241 = vadd.f32 %v4870, %v5181
    %v5242 = vadd.f32 %v4871, %v5182
    %v5243 = vadd.f32 %v4872, %v5183
    %v5244 = vadd.f32 %v4873, %v5184
    %v5245 = vadd.f32 %v4874, %v5185
    %v5246 = vadd.f32 %v4875, %v5186
    %v5247 = vadd.f32 %v4876, %v5187
    %v5248 = vadd.f32 %v4877, %v5188
    %v5249 = vadd.f32 %v4878, %v5189
    %v5250 = vadd.f32 %v4879, %v5190
    %v5251 = vadd.f32 %v4880, %v5191
    %v5252 = vadd.f32 %v4881, %v5192
    %v5253 = vadd.f32 %v4882, %v5193
    %v5254 = vadd.f32 %v4883, %v5194
    %v5255 = vadd.f32 %v4884, %v5195
    %v5256 = vadd.f32 %v4885, %v5196
    %v5257 = vadd.f32 %v4886, %v5197
    %v5258 = vadd.f32 %v4887, %v5119
    %v5259 = vadd.f32 %v4888, %v5121
    %v5260 = vadd.f32 %v4889, %v5160
    %v5261 = vadd.f32 %v4890, %v5162
    %v5262 = vmul.f32 %v5230, 0.5
    %v5263 = vmul.f32 %v5234, 0.5
    %v5264 = vmul.f32 %v5238, 0.5
    %v5265 = vmul.f32 %v5242, 0.5
    %v5266 = vmul.f32 %v5246, 0.5
    %v5267 = vmul.f32 %v5250, 0.5
    %v5268 = vmul.f32 %v5254, 0.5
    %v5269 = vmul.f32 %v5258, 0.5
    %v5270 = vtanh.pop %v5262
    %v5271 = vtanh.pop %v5263
    %v5272 = vtanh.pop %v5264
    %v5273 = vtanh.pop %v5265
    %v5274 = vtanh.pop %v5266
    %v5275 = vtanh.pop %v5267
    %v5276 = vtanh.pop %v5268
    %v5277 = vtanh.pop %v5269
    %v5278 = vmul.f32 %v5270, 0.5
    %v5279 = vmul.f32 %v5271, 0.5
    %v5280 = vmul.f32 %v5272, 0.5
    %v5281 = vmul.f32 %v5273, 0.5
    %v5282 = vmul.f32 %v5274, 0.5
    %v5283 = vmul.f32 %v5275, 0.5
    %v5284 = vmul.f32 %v5276, 0.5
    %v5285 = vmul.f32 %v5277, 0.5
    %v5286 = vadd.f32 %v5278, 0.5
    %v5287 = vadd.f32 %v5279, 0.5
    %v5288 = vadd.f32 %v5280, 0.5
    %v5289 = vadd.f32 %v5281, 0.5
    %v5290 = vadd.f32 %v5282, 0.5
    %v5291 = vadd.f32 %v5283, 0.5
    %v5292 = vadd.f32 %v5284, 0.5
    %v5293 = vadd.f32 %v5285, 0.5
    %v5294 = vmul.f32 %v5231, 0.5
    %v5295 = vmul.f32 %v5235, 0.5
    %v5296 = vmul.f32 %v5239, 0.5
    %v5297 = vmul.f32 %v5243, 0.5
    %v5298 = vmul.f32 %v5247, 0.5
    %v5299 = vmul.f32 %v5251, 0.5
    %v5300 = vmul.f32 %v5255, 0.5
    %v5301 = vmul.f32 %v5259, 0.5
    %v5302 = vtanh.pop %v5294
    %v5303 = vtanh.pop %v5295
    %v5304 = vtanh.pop %v5296
    %v5305 = vtanh.pop %v5297
    %v5306 = vtanh.pop %v5298
    %v5307 = vtanh.pop %v5299
    %v5308 = vtanh.pop %v5300
    %v5309 = vtanh.pop %v5301
    %v5310 = vmul.f32 %v5302, 0.5
    %v5311 = vmul.f32 %v5303, 0.5
    %v5312 = vmul.f32 %v5304, 0.5
    %v5313 = vmul.f32 %v5305, 0.5
    %v5314 = vmul.f32 %v5306, 0.5
    %v5315 = vmul.f32 %v5307, 0.5
    %v5316 = vmul.f32 %v5308, 0.5
    %v5317 = vmul.f32 %v5309, 0.5
    %v5318 = vadd.f32 %v5310, 0.5
    %v5319 = vadd.f32 %v5311, 0.5
    %v5320 = vadd.f32 %v5312, 0.5
    %v5321 = vadd.f32 %v5313, 0.5
    %v5322 = vadd.f32 %v5314, 0.5
    %v5323 = vadd.f32 %v5315, 0.5
    %v5324 = vadd.f32 %v5316, 0.5
    %v5325 = vadd.f32 %v5317, 0.5
    %v5326 = vtanh.pop %v5232
    %v5327 = vtanh.pop %v5236
    %v5328 = vtanh.pop %v5240
    %v5329 = vtanh.pop %v5244
    %v5330 = vtanh.pop %v5248
    %v5331 = vtanh.pop %v5252
    %v5332 = vtanh.pop %v5256
    %v5333 = vtanh.pop %v5260
    %v5334 = vmul.f32 %v5233, 0.5
    %v5335 = vmul.f32 %v5237, 0.5
    %v5336 = vmul.f32 %v5241, 0.5
    %v5337 = vmul.f32 %v5245, 0.5
    %v5338 = vmul.f32 %v5249, 0.5
    %v5339 = vmul.f32 %v5253, 0.5
    %v5340 = vmul.f32 %v5257, 0.5
    %v5341 = vmul.f32 %v5261, 0.5
    %v5342 = vtanh.pop %v5334
    %v5343 = vtanh.pop %v5335
    %v5344 = vtanh.pop %v5336
    %v5345 = vtanh.pop %v5337
    %v5346 = vtanh.pop %v5338
    %v5347 = vtanh.pop %v5339
    %v5348 = vtanh.pop %v5340
    %v5349 = vtanh.pop %v5341
    %v5350 = vmul.f32 %v5342, 0.5
    %v5351 = vmul.f32 %v5343, 0.5
    %v5352 = vmul.f32 %v5344, 0.5
    %v5353 = vmul.f32 %v5345, 0.5
    %v5354 = vmul.f32 %v5346, 0.5
    %v5355 = vmul.f32 %v5347, 0.5
    %v5356 = vmul.f32 %v5348, 0.5
    %v5357 = vmul.f32 %v5349, 0.5
    %v5358 = vadd.f32 %v5350, 0.5
    %v5359 = vadd.f32 %v5351, 0.5
    %v5360 = vadd.f32 %v5352, 0.5
    %v5361 = vadd.f32 %v5353, 0.5
    %v5362 = vadd.f32 %v5354, 0.5
    %v5363 = vadd.f32 %v5355, 0.5
    %v5364 = vadd.f32 %v5356, 0.5
    %v5365 = vadd.f32 %v5357, 0.5
    %v5367 = vrot.slane %v4810, 1
    %v5368 = vrot.slane %v4810, 2
    %v5369 = vrot.slane %v4810, 3
    %v5370 = vrot.slane %v4810, 4
    %v5371 = vrot.slane %v4810, 5
    %v5372 = vrot.slane %v4810, 6
    %v5373 = vrot.slane %v4810, 7
    %v5382 = vmul.f32 %v5318, %v5367
    %v5383 = vmul.f32 %v5319, %v5368
    %v5384 = vmul.f32 %v5320, %v5369
    %v5385 = vmul.f32 %v5321, %v5370
    %v5386 = vmul.f32 %v5322, %v5371
    %v5387 = vmul.f32 %v5323, %v5372
    %v5388 = vmul.f32 %v5324, %v5373
    %v5389 = vmul.f32 %v5325, %v4810
    %v5390 = vmul.f32 %v5286, %v5326
    %v5391 = vmul.f32 %v5287, %v5327
    %v5392 = vmul.f32 %v5288, %v5328
    %v5393 = vmul.f32 %v5289, %v5329
    %v5394 = vmul.f32 %v5290, %v5330
    %v5395 = vmul.f32 %v5291, %v5331
    %v5396 = vmul.f32 %v5292, %v5332
    %v5397 = vmul.f32 %v5293, %v5333
    %v5398 = vadd.f32 %v5382, %v5390
    %v5399 = vadd.f32 %v5383, %v5391
    %v5400 = vadd.f32 %v5384, %v5392
    %v5401 = vadd.f32 %v5385, %v5393
    %v5402 = vadd.f32 %v5386, %v5394
    %v5403 = vadd.f32 %v5387, %v5395
    %v5404 = vadd.f32 %v5388, %v5396
    %v5405 = vadd.f32 %v5389, %v5397
    %v5406 = vtanh.pop %v5398
    %v5407 = vtanh.pop %v5399
    %v5408 = vtanh.pop %v5400
    %v5409 = vtanh.pop %v5401
    %v5410 = vtanh.pop %v5402
    %v5411 = vtanh.pop %v5403
    %v5412 = vtanh.pop %v5404
    %v5413 = vtanh.pop %v5405
    %v5414 = vmul.f32 %v5358, %v5406
    %v5415 = vmul.f32 %v5359, %v5407
    %v5416 = vmul.f32 %v5360, %v5408
    %v5417 = vmul.f32 %v5361, %v5409
    %v5418 = vmul.f32 %v5362, %v5410
    %v5419 = vmul.f32 %v5363, %v5411
    %v5420 = vmul.f32 %v5364, %v5412
    %v5421 = vmul.f32 %v5365, %v5413
    %v5430 = vrot.slane %v5415, 7
    %v5431 = vrot.slane %v5416, 6
    %v5432 = vsel %vm729, %v5431, %v5430
    %v5433 = vrot.slane %v5417, 5
    %v5434 = vsel %vm732, %v5433, %v5432
    %v5435 = vrot.slane %v5418, 4
    %v5436 = vsel %vm735, %v5435, %v5434
    %v5437 = vrot.slane %v5419, 3
    %v5438 = vsel %vm738, %v5437, %v5436
    %v5439 = vrot.slane %v5420, 2
    %v5440 = vsel %vm741, %v5439, %v5438
    %v5441 = vrot.slane %v5421, 1
    %v5442 = vsel %vm744, %v5441, %v5440
    %5445 = vst [vmem:[#allocation2 - $0x7] sm:$0x80] %v5414
    %5446 = vst [vmem:[#allocation2 + $0x1] sm:$0x7f] %v5442
    %v5455 = vrot.slane %v5399, 7
    %v5456 = vrot.slane %v5400, 6
    %v5457 = vsel %vm729, %v5456, %v5455
    %v5458 = vrot.slane %v5401, 5
    %v5459 = vsel %vm732, %v5458, %v5457
    %v5460 = vrot.slane %v5402, 4
    %v5461 = vsel %vm735, %v5460, %v5459
    %v5462 = vrot.slane %v5403, 3
    %v5463 = vsel %vm738, %v5462, %v5461
    %v5464 = vrot.slane %v5404, 2
    %v5465 = vsel %vm741, %v5464, %v5463
    %v5466 = vrot.slane %v5405, 1
    %v5467 = vsel %vm744, %v5466, %v5465
    %5470 = vst [vmem:[#allocation3 - $0x7] sm:$0x80] %v5398
    %5471 = vst [vmem:[#allocation3 + $0x1] sm:$0x7f] %v5467
    %5472 = vst [vmem:[#allocation12] sm:$0x80] %v5414
    %5473 = vst [vmem:[#allocation12 + $0x10] sm:$0x80] %v5415
    %5474 = vst [vmem:[#allocation12 + $0x20] sm:$0x80] %v5416
    %5475 = vst [vmem:[#allocation12 + $0x30] sm:$0x80] %v5417
    %5476 = vst [vmem:[#allocation12 + $0x40] sm:$0x80] %v5418
    %5477 = vst [vmem:[#allocation12 + $0x50] sm:$0x80] %v5419
    %5478 = vst [vmem:[#allocation12 + $0x60] sm:$0x80] %v5420
    %5479 = vst [vmem:[#allocation12 + $0x70] sm:$0x80] %v5421
    // Predicated region
    $region42: #{tpu_custom_call.1} parent=1 // pred_check
      %p5480 = pneg %p77
    $region43: #{tpu_custom_call.1} parent=1 // pred_check_branch
      %5482 = sbr.rel (%p5480) target = $region45
    $region44: #{tpu_custom_call.1} parent=1 // pred_region
      %5483 = vst [vmem:[#allocation13 - $0x7] sm:$0x80] %v5414
      %5484 = vst [vmem:[#allocation13 + $0x1] sm:$0x7f] %v5442
      %5485 = vst [vmem:[#allocation15 - $0x7] sm:$0x80] %v5398
      %5486 = vst [vmem:[#allocation15 + $0x1] sm:$0x7f] %v5467
    $region45: #{tpu_custom_call.1} parent=1 // pred_fallthru
      _
    %v5487 = vld [vmem:[#allocation2] sm:$0xff]
    %v5488 = vld [vmem:[#allocation3] sm:$0xff]
    %v5489 = vld [vmem:[#allocation4 + $0x10] sm:$0x11]
    %v5490 = vld [vmem:[#allocation4 + $0x18] sm:$0x11]
    %v5491 = vld [vmem:[#allocation4 + $0x30] sm:$0x11]
    %v5492 = vld [vmem:[#allocation4 + $0x38] sm:$0x11]
    %v5493 = vld [vmem:[#allocation4 + $0x50] sm:$0x11]
    %v5494 = vld [vmem:[#allocation4 + $0x58] sm:$0x11]
    %v5495 = vld [vmem:[#allocation4 + $0x70] sm:$0x11]
    %v5496 = vld [vmem:[#allocation4 + $0x78] sm:$0x11]
    %v5497 = vld [vmem:[#allocation4 + $0x90] sm:$0x11]
    %v5498 = vld [vmem:[#allocation4 + $0x98] sm:$0x11]
    %v5499 = vld [vmem:[#allocation4 + $0xb0] sm:$0x11]
    %v5500 = vld [vmem:[#allocation4 + $0xb8] sm:$0x11]
    %v5501 = vld [vmem:[#allocation4 + $0xd0] sm:$0x11]
    %v5502 = vld [vmem:[#allocation4 + $0xd8] sm:$0x11]
    %v5503 = vld [vmem:[#allocation4 + $0xf0] sm:$0x11]
    %v5504 = vld [vmem:[#allocation4 + $0xf8] sm:$0x11]
    %v5505 = vunpack.c.l.bf16 %v5489
    %v5506 = vunpack.c.h.bf16 %v5489
    %v5507 = vunpack.c.l.bf16 %v5490
    %v5508 = vunpack.c.h.bf16 %v5490
    %v5509 = vunpack.c.l.bf16 %v5491
    %v5510 = vunpack.c.h.bf16 %v5491
    %v5511 = vunpack.c.l.bf16 %v5492
    %v5512 = vunpack.c.h.bf16 %v5492
    %v5513 = vunpack.c.l.bf16 %v5493
    %v5514 = vunpack.c.h.bf16 %v5493
    %v5515 = vunpack.c.l.bf16 %v5494
    %v5516 = vunpack.c.h.bf16 %v5494
    %v5517 = vunpack.c.l.bf16 %v5495
    %v5518 = vunpack.c.h.bf16 %v5495
    %v5519 = vunpack.c.l.bf16 %v5496
    %v5520 = vunpack.c.h.bf16 %v5496
    %v5521 = vunpack.c.l.bf16 %v5497
    %v5522 = vunpack.c.h.bf16 %v5497
    %v5523 = vunpack.c.l.bf16 %v5498
    %v5524 = vunpack.c.h.bf16 %v5498
    %v5525 = vunpack.c.l.bf16 %v5499
    %v5526 = vunpack.c.h.bf16 %v5499
    %v5527 = vunpack.c.l.bf16 %v5500
    %v5528 = vunpack.c.h.bf16 %v5500
    %v5529 = vunpack.c.l.bf16 %v5501
    %v5530 = vunpack.c.h.bf16 %v5501
    %v5531 = vunpack.c.l.bf16 %v5502
    %v5532 = vunpack.c.h.bf16 %v5502
    %v5533 = vunpack.c.l.bf16 %v5503
    %v5534 = vunpack.c.h.bf16 %v5503
    %v5535 = vunpack.c.l.bf16 %v5504
    %v5536 = vunpack.c.h.bf16 %v5504
    %v5537 = vadd.f32 %v5505, %v140
    %v5538 = vadd.f32 %v5506, %v144
    %v5539 = vadd.f32 %v5507, %v148
    %v5540 = vadd.f32 %v5508, %v152
    %v5541 = vadd.f32 %v5509, %v140
    %v5542 = vadd.f32 %v5510, %v144
    %v5543 = vadd.f32 %v5511, %v148
    %v5544 = vadd.f32 %v5512, %v152
    %v5545 = vadd.f32 %v5513, %v140
    %v5546 = vadd.f32 %v5514, %v144
    %v5547 = vadd.f32 %v5515, %v148
    %v5548 = vadd.f32 %v5516, %v152
    %v5549 = vadd.f32 %v5517, %v140
    %v5550 = vadd.f32 %v5518, %v144
    %v5551 = vadd.f32 %v5519, %v148
    %v5552 = vadd.f32 %v5520, %v152
    %v5553 = vadd.f32 %v5521, %v140
    %v5554 = vadd.f32 %v5522, %v144
    %v5555 = vadd.f32 %v5523, %v148
    %v5556 = vadd.f32 %v5524, %v152
    %v5557 = vadd.f32 %v5525, %v140
    %v5558 = vadd.f32 %v5526, %v144
    %v5559 = vadd.f32 %v5527, %v148
    %v5560 = vadd.f32 %v5528, %v152
    %v5561 = vadd.f32 %v5529, %v140
    %v5562 = vadd.f32 %v5530, %v144
    %v5563 = vadd.f32 %v5531, %v148
    %v5564 = vadd.f32 %v5532, %v152
    %v5565 = vadd.f32 %v5533, %v140
    %v5566 = vadd.f32 %v5534, %v144
    %v5567 = vadd.f32 %v5535, %v148
    %v5568 = vadd.f32 %v5536, %v152
    %v5569 = vpack.c.bf16 %v5487, %v5487
    %v5570 = vld [vmem:[#allocation7] sm:$0xff]
    %v5571 = vld [vmem:[#allocation7 + $0x8] sm:$0xff]
    %v5572 = vld [vmem:[#allocation7 + $0x10] sm:$0xff]
    %v5573 = vld [vmem:[#allocation7 + $0x18] sm:$0xff]
    %v5574 = vld [vmem:[#allocation7 + $0x20] sm:$0xff]
    %v5575 = vld [vmem:[#allocation7 + $0x28] sm:$0xff]
    %v5576 = vld [vmem:[#allocation7 + $0x30] sm:$0xff]
    %v5577 = vld [vmem:[#allocation7 + $0x38] sm:$0xff]
    %v5578 = vld [vmem:[#allocation7 + $0x40] sm:$0xff]
    %v5579 = vld [vmem:[#allocation7 + $0x48] sm:$0xff]
    %v5580 = vld [vmem:[#allocation7 + $0x50] sm:$0xff]
    %v5581 = vld [vmem:[#allocation7 + $0x58] sm:$0xff]
    %v5582 = vld [vmem:[#allocation7 + $0x60] sm:$0xff]
    %v5583 = vld [vmem:[#allocation7 + $0x68] sm:$0xff]
    %v5584 = vld [vmem:[#allocation7 + $0x70] sm:$0xff]
    %v5585 = vld [vmem:[#allocation7 + $0x78] sm:$0xff]
    %v5586 = vld [vmem:[#allocation7 + $0x80] sm:$0xff]
    %v5587 = vld [vmem:[#allocation7 + $0x88] sm:$0xff]
    %v5588 = vld [vmem:[#allocation7 + $0x90] sm:$0xff]
    %v5589 = vld [vmem:[#allocation7 + $0x98] sm:$0xff]
    %v5590 = vld [vmem:[#allocation7 + $0xa0] sm:$0xff]
    %v5591 = vld [vmem:[#allocation7 + $0xa8] sm:$0xff]
    %v5592 = vld [vmem:[#allocation7 + $0xb0] sm:$0xff]
    %v5593 = vld [vmem:[#allocation7 + $0xb8] sm:$0xff]
    %v5594 = vld [vmem:[#allocation7 + $0xc0] sm:$0xff]
    %v5595 = vld [vmem:[#allocation7 + $0xc8] sm:$0xff]
    %v5596 = vld [vmem:[#allocation7 + $0xd0] sm:$0xff]
    %v5597 = vld [vmem:[#allocation7 + $0xd8] sm:$0xff]
    %v5598 = vld [vmem:[#allocation7 + $0xe0] sm:$0xff]
    %v5599 = vld [vmem:[#allocation7 + $0xe8] sm:$0xff]
    %v5600 = vld [vmem:[#allocation7 + $0xf0] sm:$0xff]
    %v5601 = vld [vmem:[#allocation7 + $0xf8] sm:$0xff]
    %v5634 = vunpack.c.l.b16 %v5570
    %v5635 = vunpack.c.h.b16 %v5570
    %v5636 = vunpack.c.l.b16 %v5571
    %v5637 = vunpack.c.h.b16 %v5571
    %v5638 = vunpack.c.l.b16 %v5572
    %v5639 = vunpack.c.h.b16 %v5572
    %v5640 = vunpack.c.l.b16 %v5573
    %v5641 = vunpack.c.h.b16 %v5573
    %v5642 = vunpack.c.l.b16 %v5574
    %v5643 = vunpack.c.h.b16 %v5574
    %v5644 = vunpack.c.l.b16 %v5575
    %v5645 = vunpack.c.h.b16 %v5575
    %v5646 = vunpack.c.l.b16 %v5576
    %v5647 = vunpack.c.h.b16 %v5576
    %v5648 = vunpack.c.l.b16 %v5577
    %v5649 = vunpack.c.h.b16 %v5577
    %v5650 = vunpack.c.l.b16 %v5578
    %v5651 = vunpack.c.h.b16 %v5578
    %v5652 = vunpack.c.l.b16 %v5579
    %v5653 = vunpack.c.h.b16 %v5579
    %v5654 = vunpack.c.l.b16 %v5580
    %v5655 = vunpack.c.h.b16 %v5580
    %v5656 = vunpack.c.l.b16 %v5581
    %v5657 = vunpack.c.h.b16 %v5581
    %v5658 = vunpack.c.l.b16 %v5582
    %v5659 = vunpack.c.h.b16 %v5582
    %v5660 = vunpack.c.l.b16 %v5583
    %v5661 = vunpack.c.h.b16 %v5583
    %v5662 = vunpack.c.l.b16 %v5584
    %v5663 = vunpack.c.h.b16 %v5584
    %v5664 = vunpack.c.l.b16 %v5585
    %v5665 = vunpack.c.h.b16 %v5585
    %v5666 = vunpack.c.l.b16 %v5586
    %v5667 = vunpack.c.h.b16 %v5586
    %v5668 = vunpack.c.l.b16 %v5587
    %v5669 = vunpack.c.h.b16 %v5587
    %v5670 = vunpack.c.l.b16 %v5588
    %v5671 = vunpack.c.h.b16 %v5588
    %v5672 = vunpack.c.l.b16 %v5589
    %v5673 = vunpack.c.h.b16 %v5589
    %v5674 = vunpack.c.l.b16 %v5590
    %v5675 = vunpack.c.h.b16 %v5590
    %v5676 = vunpack.c.l.b16 %v5591
    %v5677 = vunpack.c.h.b16 %v5591
    %v5678 = vunpack.c.l.b16 %v5592
    %v5679 = vunpack.c.h.b16 %v5592
    %v5680 = vunpack.c.l.b16 %v5593
    %v5681 = vunpack.c.h.b16 %v5593
    %v5682 = vunpack.c.l.b16 %v5594
    %v5683 = vunpack.c.h.b16 %v5594
    %v5684 = vunpack.c.l.b16 %v5595
    %v5685 = vunpack.c.h.b16 %v5595
    %v5686 = vunpack.c.l.b16 %v5596
    %v5687 = vunpack.c.h.b16 %v5596
    %v5688 = vunpack.c.l.b16 %v5597
    %v5689 = vunpack.c.h.b16 %v5597
    %v5690 = vunpack.c.l.b16 %v5598
    %v5691 = vunpack.c.h.b16 %v5598
    %v5692 = vunpack.c.l.b16 %v5599
    %v5693 = vunpack.c.h.b16 %v5599
    %v5694 = vunpack.c.l.b16 %v5600
    %v5695 = vunpack.c.h.b16 %v5600
    %v5696 = vunpack.c.l.b16 %v5601
    %v5697 = vunpack.c.h.b16 %v5601
    %v5698 = vpack.c.b16 %v5638, %v5634
    %v5699 = vpack.c.b16 %v5639, %v5635
    %v5700 = vpack.c.b16 %v5640, %v5636
    %v5701 = vpack.c.b16 %v5641, %v5637
    %v5702 = vpack.c.b16 %v5646, %v5642
    %v5703 = vpack.c.b16 %v5647, %v5643
    %v5704 = vpack.c.b16 %v5648, %v5644
    %v5705 = vpack.c.b16 %v5649, %v5645
    %v5706 = vpack.c.b16 %v5654, %v5650
    %v5707 = vpack.c.b16 %v5655, %v5651
    %v5708 = vpack.c.b16 %v5656, %v5652
    %v5709 = vpack.c.b16 %v5657, %v5653
    %v5710 = vpack.c.b16 %v5662, %v5658
    %v5711 = vpack.c.b16 %v5663, %v5659
    %v5712 = vpack.c.b16 %v5664, %v5660
    %v5713 = vpack.c.b16 %v5665, %v5661
    %v5714 = vpack.c.b16 %v5670, %v5666
    %v5715 = vpack.c.b16 %v5671, %v5667
    %v5716 = vpack.c.b16 %v5672, %v5668
    %v5717 = vpack.c.b16 %v5673, %v5669
    %v5718 = vpack.c.b16 %v5678, %v5674
    %v5719 = vpack.c.b16 %v5679, %v5675
    %v5720 = vpack.c.b16 %v5680, %v5676
    %v5721 = vpack.c.b16 %v5681, %v5677
    %v5722 = vpack.c.b16 %v5686, %v5682
    %v5723 = vpack.c.b16 %v5687, %v5683
    %v5724 = vpack.c.b16 %v5688, %v5684
    %v5725 = vpack.c.b16 %v5689, %v5685
    %v5726 = vpack.c.b16 %v5694, %v5690
    %v5727 = vpack.c.b16 %v5695, %v5691
    %v5728 = vpack.c.b16 %v5696, %v5692
    %v5729 = vpack.c.b16 %v5697, %v5693
    %5762 = vmatprep.subr.bf16.mxu0 %v5699
    %5763 = vmatpush1.bf16.msra.mxu0 %v5698
    %5764 = vmatprep.subr.bf16.mxu0 %v5703
    %5765 = vmatpush1.bf16.msra.mxu0 %v5702
    %5766 = vmatprep.subr.bf16.mxu0 %v5707
    %5767 = vmatpush1.bf16.msra.mxu0 %v5706
    %5768 = vmatprep.subr.bf16.mxu0 %v5711
    %5769 = vmatpush1.bf16.msra.mxu0 %v5710
    %5770 = vmatprep.subr.bf16.mxu0 %v5715
    %5771 = vmatpush1.bf16.msra.mxu0 %v5714
    %5772 = vmatprep.subr.bf16.mxu0 %v5719
    %5773 = vmatpush1.bf16.msra.mxu0 %v5718
    %5774 = vmatprep.subr.bf16.mxu0 %v5723
    %5775 = vmatpush1.bf16.msra.mxu0 %v5722
    %5776 = vmatprep.subr.bf16.mxu0 %v5727
    %5777 = vmatpush1.bf16.msra.mxu0 %v5726
    %5778 = vmatprep.subr.bf16.mxu0 0
    %5779 = vmatpush1.bf16.msra.mxu0 0
    %5780 = vmatprep.subr.bf16.mxu0 0
    %5781 = vmatpush1.bf16.msra.mxu0 0
    %5782 = vmatprep.subr.bf16.mxu0 0
    %5783 = vmatpush1.bf16.msra.mxu0 0
    %5784 = vmatprep.subr.bf16.mxu0 0
    %5785 = vmatpush1.bf16.msra.mxu0 0
    %5786 = vmatprep.subr.bf16.mxu0 0
    %5787 = vmatpush1.bf16.msra.mxu0 0
    %5788 = vmatprep.subr.bf16.mxu0 0
    %5789 = vmatpush1.bf16.msra.mxu0 0
    %5790 = vmatprep.subr.bf16.mxu0 0
    %5791 = vmatpush1.bf16.msra.mxu0 0
    %5792 = vmatprep.subr.bf16.mxu0 0
    %5793 = vmatpush1.bf16.msra.mxu0 0
    %5794 = vmatprep.mubr.bf16.mxu0 0
    %5795 = vmatmul.mubr.bf16.gmra.mrb[0].mxu0 %v5569
    %v5796 = vpop.f32.mrb[0].mxu0
    %v5797 = vadd.f32 0.0, %v5796
    %v5798 = vpop.f32.mrb[0].mxu0
    %v5799 = vadd.f32 0.0, %v5798
    %v5800 = vpop.f32.mrb[0].mxu0
    %v5801 = vpop.f32.mrb[0].mxu0
    %5802 = vdwg.mxu0
    %5803 = vmatprep.subr.bf16.mxu0 %v5701
    %5804 = vmatpush1.bf16.msra.mxu0 %v5700
    %5805 = vmatprep.subr.bf16.mxu0 %v5705
    %5806 = vmatpush1.bf16.msra.mxu0 %v5704
    %5807 = vmatprep.subr.bf16.mxu0 %v5709
    %5808 = vmatpush1.bf16.msra.mxu0 %v5708
    %5809 = vmatprep.subr.bf16.mxu0 %v5713
    %5810 = vmatpush1.bf16.msra.mxu0 %v5712
    %5811 = vmatprep.subr.bf16.mxu0 %v5717
    %5812 = vmatpush1.bf16.msra.mxu0 %v5716
    %5813 = vmatprep.subr.bf16.mxu0 %v5721
    %5814 = vmatpush1.bf16.msra.mxu0 %v5720
    %5815 = vmatprep.subr.bf16.mxu0 %v5725
    %5816 = vmatpush1.bf16.msra.mxu0 %v5724
    %5817 = vmatprep.subr.bf16.mxu0 %v5729
    %5818 = vmatpush1.bf16.msra.mxu0 %v5728
    %5819 = vmatprep.subr.bf16.mxu0 0
    %5820 = vmatpush1.bf16.msra.mxu0 0
    %5821 = vmatprep.subr.bf16.mxu0 0
    %5822 = vmatpush1.bf16.msra.mxu0 0
    %5823 = vmatprep.subr.bf16.mxu0 0
    %5824 = vmatpush1.bf16.msra.mxu0 0
    %5825 = vmatprep.subr.bf16.mxu0 0
    %5826 = vmatpush1.bf16.msra.mxu0 0
    %5827 = vmatprep.subr.bf16.mxu0 0
    %5828 = vmatpush1.bf16.msra.mxu0 0
    %5829 = vmatprep.subr.bf16.mxu0 0
    %5830 = vmatpush1.bf16.msra.mxu0 0
    %5831 = vmatprep.subr.bf16.mxu0 0
    %5832 = vmatpush1.bf16.msra.mxu0 0
    %5833 = vmatprep.subr.bf16.mxu0 0
    %5834 = vmatpush1.bf16.msra.mxu0 0
    %5835 = vmatprep.mubr.bf16.mxu0 0
    %5836 = vmatmul.mubr.bf16.gmra.mrb[0].mxu0 %v5569
    %v5837 = vpop.f32.mrb[0].mxu0
    %v5838 = vadd.f32 0.0, %v5837
    %v5839 = vpop.f32.mrb[0].mxu0
    %v5840 = vadd.f32 0.0, %v5839
    %v5841 = vpop.f32.mrb[0].mxu0
    %v5842 = vpop.f32.mrb[0].mxu0
    %5843 = vdwg.mxu0
    %v5848 = vrot.slane %v5797, 1
    %v5849 = vrot.slane %v5799, 1
    %v5850 = vrot.slane %v5838, 1
    %v5851 = vrot.slane %v5840, 1
    %v5852 = vrot.slane %v5797, 2
    %v5853 = vrot.slane %v5799, 2
    %v5854 = vrot.slane %v5838, 2
    %v5855 = vrot.slane %v5840, 2
    %v5856 = vrot.slane %v5797, 3
    %v5857 = vrot.slane %v5799, 3
    %v5858 = vrot.slane %v5838, 3
    %v5859 = vrot.slane %v5840, 3
    %v5860 = vrot.slane %v5797, 4
    %v5861 = vrot.slane %v5799, 4
    %v5862 = vrot.slane %v5838, 4
    %v5863 = vrot.slane %v5840, 4
    %v5864 = vrot.slane %v5797, 5
    %v5865 = vrot.slane %v5799, 5
    %v5866 = vrot.slane %v5838, 5
    %v5867 = vrot.slane %v5840, 5
    %v5868 = vrot.slane %v5797, 6
    %v5869 = vrot.slane %v5799, 6
    %v5870 = vrot.slane %v5838, 6
    %v5871 = vrot.slane %v5840, 6
    %v5872 = vrot.slane %v5797, 7
    %v5873 = vrot.slane %v5799, 7
    %v5874 = vrot.slane %v5838, 7
    %v5875 = vrot.slane %v5840, 7
    %v5908 = vadd.f32 %v5537, %v5797
    %v5909 = vadd.f32 %v5538, %v5799
    %v5910 = vadd.f32 %v5539, %v5838
    %v5911 = vadd.f32 %v5540, %v5840
    %v5912 = vadd.f32 %v5541, %v5848
    %v5913 = vadd.f32 %v5542, %v5849
    %v5914 = vadd.f32 %v5543, %v5850
    %v5915 = vadd.f32 %v5544, %v5851
    %v5916 = vadd.f32 %v5545, %v5852
    %v5917 = vadd.f32 %v5546, %v5853
    %v5918 = vadd.f32 %v5547, %v5854
    %v5919 = vadd.f32 %v5548, %v5855
    %v5920 = vadd.f32 %v5549, %v5856
    %v5921 = vadd.f32 %v5550, %v5857
    %v5922 = vadd.f32 %v5551, %v5858
    %v5923 = vadd.f32 %v5552, %v5859
    %v5924 = vadd.f32 %v5553, %v5860
    %v5925 = vadd.f32 %v5554, %v5861
    %v5926 = vadd.f32 %v5555, %v5862
    %v5927 = vadd.f32 %v5556, %v5863
    %v5928 = vadd.f32 %v5557, %v5864
    %v5929 = vadd.f32 %v5558, %v5865
    %v5930 = vadd.f32 %v5559, %v5866
    %v5931 = vadd.f32 %v5560, %v5867
    %v5932 = vadd.f32 %v5561, %v5868
    %v5933 = vadd.f32 %v5562, %v5869
    %v5934 = vadd.f32 %v5563, %v5870
    %v5935 = vadd.f32 %v5564, %v5871
    %v5936 = vadd.f32 %v5565, %v5872
    %v5937 = vadd.f32 %v5566, %v5873
    %v5938 = vadd.f32 %v5567, %v5874
    %v5939 = vadd.f32 %v5568, %v5875
    %v5940 = vmul.f32 %v5908, 0.5
    %v5941 = vmul.f32 %v5912, 0.5
    %v5942 = vmul.f32 %v5916, 0.5
    %v5943 = vmul.f32 %v5920, 0.5
    %v5944 = vmul.f32 %v5924, 0.5
    %v5945 = vmul.f32 %v5928, 0.5
    %v5946 = vmul.f32 %v5932, 0.5
    %v5947 = vmul.f32 %v5936, 0.5
    %v5948 = vtanh.pop %v5940
    %v5949 = vtanh.pop %v5941
    %v5950 = vtanh.pop %v5942
    %v5951 = vtanh.pop %v5943
    %v5952 = vtanh.pop %v5944
    %v5953 = vtanh.pop %v5945
    %v5954 = vtanh.pop %v5946
    %v5955 = vtanh.pop %v5947
    %v5956 = vmul.f32 %v5948, 0.5
    %v5957 = vmul.f32 %v5949, 0.5
    %v5958 = vmul.f32 %v5950, 0.5
    %v5959 = vmul.f32 %v5951, 0.5
    %v5960 = vmul.f32 %v5952, 0.5
    %v5961 = vmul.f32 %v5953, 0.5
    %v5962 = vmul.f32 %v5954, 0.5
    %v5963 = vmul.f32 %v5955, 0.5
    %v5964 = vadd.f32 %v5956, 0.5
    %v5965 = vadd.f32 %v5957, 0.5
    %v5966 = vadd.f32 %v5958, 0.5
    %v5967 = vadd.f32 %v5959, 0.5
    %v5968 = vadd.f32 %v5960, 0.5
    %v5969 = vadd.f32 %v5961, 0.5
    %v5970 = vadd.f32 %v5962, 0.5
    %v5971 = vadd.f32 %v5963, 0.5
    %v5972 = vmul.f32 %v5909, 0.5
    %v5973 = vmul.f32 %v5913, 0.5
    %v5974 = vmul.f32 %v5917, 0.5
    %v5975 = vmul.f32 %v5921, 0.5
    %v5976 = vmul.f32 %v5925, 0.5
    %v5977 = vmul.f32 %v5929, 0.5
    %v5978 = vmul.f32 %v5933, 0.5
    %v5979 = vmul.f32 %v5937, 0.5
    %v5980 = vtanh.pop %v5972
    %v5981 = vtanh.pop %v5973
    %v5982 = vtanh.pop %v5974
    %v5983 = vtanh.pop %v5975
    %v5984 = vtanh.pop %v5976
    %v5985 = vtanh.pop %v5977
    %v5986 = vtanh.pop %v5978
    %v5987 = vtanh.pop %v5979
    %v5988 = vmul.f32 %v5980, 0.5
    %v5989 = vmul.f32 %v5981, 0.5
    %v5990 = vmul.f32 %v5982, 0.5
    %v5991 = vmul.f32 %v5983, 0.5
    %v5992 = vmul.f32 %v5984, 0.5
    %v5993 = vmul.f32 %v5985, 0.5
    %v5994 = vmul.f32 %v5986, 0.5
    %v5995 = vmul.f32 %v5987, 0.5
    %v5996 = vadd.f32 %v5988, 0.5
    %v5997 = vadd.f32 %v5989, 0.5
    %v5998 = vadd.f32 %v5990, 0.5
    %v5999 = vadd.f32 %v5991, 0.5
    %v6000 = vadd.f32 %v5992, 0.5
    %v6001 = vadd.f32 %v5993, 0.5
    %v6002 = vadd.f32 %v5994, 0.5
    %v6003 = vadd.f32 %v5995, 0.5
    %v6004 = vtanh.pop %v5910
    %v6005 = vtanh.pop %v5914
    %v6006 = vtanh.pop %v5918
    %v6007 = vtanh.pop %v5922
    %v6008 = vtanh.pop %v5926
    %v6009 = vtanh.pop %v5930
    %v6010 = vtanh.pop %v5934
    %v6011 = vtanh.pop %v5938
    %v6012 = vmul.f32 %v5911, 0.5
    %v6013 = vmul.f32 %v5915, 0.5
    %v6014 = vmul.f32 %v5919, 0.5
    %v6015 = vmul.f32 %v5923, 0.5
    %v6016 = vmul.f32 %v5927, 0.5
    %v6017 = vmul.f32 %v5931, 0.5
    %v6018 = vmul.f32 %v5935, 0.5
    %v6019 = vmul.f32 %v5939, 0.5
    %v6020 = vtanh.pop %v6012
    %v6021 = vtanh.pop %v6013
    %v6022 = vtanh.pop %v6014
    %v6023 = vtanh.pop %v6015
    %v6024 = vtanh.pop %v6016
    %v6025 = vtanh.pop %v6017
    %v6026 = vtanh.pop %v6018
    %v6027 = vtanh.pop %v6019
    %v6028 = vmul.f32 %v6020, 0.5
    %v6029 = vmul.f32 %v6021, 0.5
    %v6030 = vmul.f32 %v6022, 0.5
    %v6031 = vmul.f32 %v6023, 0.5
    %v6032 = vmul.f32 %v6024, 0.5
    %v6033 = vmul.f32 %v6025, 0.5
    %v6034 = vmul.f32 %v6026, 0.5
    %v6035 = vmul.f32 %v6027, 0.5
    %v6036 = vadd.f32 %v6028, 0.5
    %v6037 = vadd.f32 %v6029, 0.5
    %v6038 = vadd.f32 %v6030, 0.5
    %v6039 = vadd.f32 %v6031, 0.5
    %v6040 = vadd.f32 %v6032, 0.5
    %v6041 = vadd.f32 %v6033, 0.5
    %v6042 = vadd.f32 %v6034, 0.5
    %v6043 = vadd.f32 %v6035, 0.5
    %v6045 = vrot.slane %v5488, 1
    %v6046 = vrot.slane %v5488, 2
    %v6047 = vrot.slane %v5488, 3
    %v6048 = vrot.slane %v5488, 4
    %v6049 = vrot.slane %v5488, 5
    %v6050 = vrot.slane %v5488, 6
    %v6051 = vrot.slane %v5488, 7
    %v6060 = vmul.f32 %v5996, %v5488
    %v6061 = vmul.f32 %v5997, %v6045
    %v6062 = vmul.f32 %v5998, %v6046
    %v6063 = vmul.f32 %v5999, %v6047
    %v6064 = vmul.f32 %v6000, %v6048
    %v6065 = vmul.f32 %v6001, %v6049
    %v6066 = vmul.f32 %v6002, %v6050
    %v6067 = vmul.f32 %v6003, %v6051
    %v6068 = vmul.f32 %v5964, %v6004
    %v6069 = vmul.f32 %v5965, %v6005
    %v6070 = vmul.f32 %v5966, %v6006
    %v6071 = vmul.f32 %v5967, %v6007
    %v6072 = vmul.f32 %v5968, %v6008
    %v6073 = vmul.f32 %v5969, %v6009
    %v6074 = vmul.f32 %v5970, %v6010
    %v6075 = vmul.f32 %v5971, %v6011
    %v6076 = vadd.f32 %v6060, %v6068
    %v6077 = vadd.f32 %v6061, %v6069
    %v6078 = vadd.f32 %v6062, %v6070
    %v6079 = vadd.f32 %v6063, %v6071
    %v6080 = vadd.f32 %v6064, %v6072
    %v6081 = vadd.f32 %v6065, %v6073
    %v6082 = vadd.f32 %v6066, %v6074
    %v6083 = vadd.f32 %v6067, %v6075
    %v6084 = vtanh.pop %v6076
    %v6085 = vtanh.pop %v6077
    %v6086 = vtanh.pop %v6078
    %v6087 = vtanh.pop %v6079
    %v6088 = vtanh.pop %v6080
    %v6089 = vtanh.pop %v6081
    %v6090 = vtanh.pop %v6082
    %v6091 = vtanh.pop %v6083
    %v6092 = vmul.f32 %v6036, %v6084
    %v6093 = vmul.f32 %v6037, %v6085
    %v6094 = vmul.f32 %v6038, %v6086
    %v6095 = vmul.f32 %v6039, %v6087
    %v6096 = vmul.f32 %v6040, %v6088
    %v6097 = vmul.f32 %v6041, %v6089
    %v6098 = vmul.f32 %v6042, %v6090
    %v6099 = vmul.f32 %v6043, %v6091
    %v6108 = vrot.slane %v6093, 7
    %v6109 = vsel %vm729, %v6108, %v6092
    %v6110 = vrot.slane %v6094, 6
    %v6111 = vsel %vm732, %v6110, %v6109
    %v6112 = vrot.slane %v6095, 5
    %v6113 = vsel %vm735, %v6112, %v6111
    %v6114 = vrot.slane %v6096, 4
    %v6115 = vsel %vm738, %v6114, %v6113
    %v6116 = vrot.slane %v6097, 3
    %v6117 = vsel %vm741, %v6116, %v6115
    %v6118 = vrot.slane %v6098, 2
    %v6119 = vsel %vm744, %v6118, %v6117
    %v6120 = vrot.slane %v6099, 1
    %v6121 = vsel %vm747, %v6120, %v6119
    %6123 = vst [vmem:[#allocation2] sm:$0xff] %v6121
    %v6132 = vrot.slane %v6077, 7
    %v6133 = vsel %vm729, %v6132, %v6076
    %v6134 = vrot.slane %v6078, 6
    %v6135 = vsel %vm732, %v6134, %v6133
    %v6136 = vrot.slane %v6079, 5
    %v6137 = vsel %vm735, %v6136, %v6135
    %v6138 = vrot.slane %v6080, 4
    %v6139 = vsel %vm738, %v6138, %v6137
    %v6140 = vrot.slane %v6081, 3
    %v6141 = vsel %vm741, %v6140, %v6139
    %v6142 = vrot.slane %v6082, 2
    %v6143 = vsel %vm744, %v6142, %v6141
    %v6144 = vrot.slane %v6083, 1
    %v6145 = vsel %vm747, %v6144, %v6143
    %6147 = vst [vmem:[#allocation3] sm:$0xff] %v6145
    %6148 = vst [vmem:[#allocation12 + $0x8] sm:$0x1] %v6092
    %6149 = vst [vmem:[#allocation12 + $0x18] sm:$0x1] %v6093
    %6150 = vst [vmem:[#allocation12 + $0x28] sm:$0x1] %v6094
    %6151 = vst [vmem:[#allocation12 + $0x38] sm:$0x1] %v6095
    %6152 = vst [vmem:[#allocation12 + $0x48] sm:$0x1] %v6096
    %6153 = vst [vmem:[#allocation12 + $0x58] sm:$0x1] %v6097
    %6154 = vst [vmem:[#allocation12 + $0x68] sm:$0x1] %v6098
    %6155 = vst [vmem:[#allocation12 + $0x78] sm:$0x1] %v6099
    %v6156 = vld [vmem:[#allocation2] sm:$0xff]
    %v6157 = vld [vmem:[#allocation3] sm:$0xff]
    %v6158 = vld [vmem:[#allocation4 + $0x10] sm:$0x11]
    %v6159 = vld [vmem:[#allocation4 + $0x18] sm:$0x11]
    %v6160 = vld [vmem:[#allocation4 + $0x30] sm:$0x11]
    %v6161 = vld [vmem:[#allocation4 + $0x38] sm:$0x11]
    %v6162 = vld [vmem:[#allocation4 + $0x50] sm:$0x11]
    %v6163 = vld [vmem:[#allocation4 + $0x58] sm:$0x11]
    %v6164 = vld [vmem:[#allocation4 + $0x70] sm:$0x11]
    %v6165 = vld [vmem:[#allocation4 + $0x78] sm:$0x11]
    %v6166 = vld [vmem:[#allocation4 + $0x90] sm:$0x11]
    %v6167 = vld [vmem:[#allocation4 + $0x98] sm:$0x11]
    %v6168 = vld [vmem:[#allocation4 + $0xb0] sm:$0x11]
    %v6169 = vld [vmem:[#allocation4 + $0xb8] sm:$0x11]
    %v6170 = vld [vmem:[#allocation4 + $0xd0] sm:$0x11]
    %v6171 = vld [vmem:[#allocation4 + $0xd8] sm:$0x11]
    %v6172 = vld [vmem:[#allocation4 + $0xf0] sm:$0x11]
    %v6173 = vld [vmem:[#allocation4 + $0xf8] sm:$0x11]
    %v6174 = vunpack.c.l.bf16 %v6158
    %v6175 = vunpack.c.h.bf16 %v6158
    %v6176 = vunpack.c.l.bf16 %v6159
    %v6177 = vunpack.c.h.bf16 %v6159
    %v6178 = vunpack.c.l.bf16 %v6160
    %v6179 = vunpack.c.h.bf16 %v6160
    %v6180 = vunpack.c.l.bf16 %v6161
    %v6181 = vunpack.c.h.bf16 %v6161
    %v6182 = vunpack.c.l.bf16 %v6162
    %v6183 = vunpack.c.h.bf16 %v6162
    %v6184 = vunpack.c.l.bf16 %v6163
    %v6185 = vunpack.c.h.bf16 %v6163
    %v6186 = vunpack.c.l.bf16 %v6164
    %v6187 = vunpack.c.h.bf16 %v6164
    %v6188 = vunpack.c.l.bf16 %v6165
    %v6189 = vunpack.c.h.bf16 %v6165
    %v6190 = vunpack.c.l.bf16 %v6166
    %v6191 = vunpack.c.h.bf16 %v6166
    %v6192 = vunpack.c.l.bf16 %v6167
    %v6193 = vunpack.c.h.bf16 %v6167
    %v6194 = vunpack.c.l.bf16 %v6168
    %v6195 = vunpack.c.h.bf16 %v6168
    %v6196 = vunpack.c.l.bf16 %v6169
    %v6197 = vunpack.c.h.bf16 %v6169
    %v6198 = vunpack.c.l.bf16 %v6170
    %v6199 = vunpack.c.h.bf16 %v6170
    %v6200 = vunpack.c.l.bf16 %v6171
    %v6201 = vunpack.c.h.bf16 %v6171
    %v6202 = vunpack.c.l.bf16 %v6172
    %v6203 = vunpack.c.h.bf16 %v6172
    %v6204 = vunpack.c.l.bf16 %v6173
    %v6205 = vunpack.c.h.bf16 %v6173
    %v6206 = vadd.f32 %v6174, %v140
    %v6207 = vadd.f32 %v6175, %v144
    %v6208 = vadd.f32 %v6176, %v148
    %v6209 = vadd.f32 %v6177, %v152
    %v6210 = vadd.f32 %v6178, %v140
    %v6211 = vadd.f32 %v6179, %v144
    %v6212 = vadd.f32 %v6180, %v148
    %v6213 = vadd.f32 %v6181, %v152
    %v6214 = vadd.f32 %v6182, %v140
    %v6215 = vadd.f32 %v6183, %v144
    %v6216 = vadd.f32 %v6184, %v148
    %v6217 = vadd.f32 %v6185, %v152
    %v6218 = vadd.f32 %v6186, %v140
    %v6219 = vadd.f32 %v6187, %v144
    %v6220 = vadd.f32 %v6188, %v148
    %v6221 = vadd.f32 %v6189, %v152
    %v6222 = vadd.f32 %v6190, %v140
    %v6223 = vadd.f32 %v6191, %v144
    %v6224 = vadd.f32 %v6192, %v148
    %v6225 = vadd.f32 %v6193, %v152
    %v6226 = vadd.f32 %v6194, %v140
    %v6227 = vadd.f32 %v6195, %v144
    %v6228 = vadd.f32 %v6196, %v148
    %v6229 = vadd.f32 %v6197, %v152
    %v6230 = vadd.f32 %v6198, %v140
    %v6231 = vadd.f32 %v6199, %v144
    %v6232 = vadd.f32 %v6200, %v148
    %v6233 = vadd.f32 %v6201, %v152
    %v6234 = vadd.f32 %v6202, %v140
    %v6235 = vadd.f32 %v6203, %v144
    %v6236 = vadd.f32 %v6204, %v148
    %v6237 = vadd.f32 %v6205, %v152
    %v6238 = vpack.c.bf16 %v6156, %v6156
    %v6239 = vld [vmem:[#allocation7] sm:$0xff]
    %v6240 = vld [vmem:[#allocation7 + $0x8] sm:$0xff]
    %v6241 = vld [vmem:[#allocation7 + $0x10] sm:$0xff]
    %v6242 = vld [vmem:[#allocation7 + $0x18] sm:$0xff]
    %v6243 = vld [vmem:[#allocation7 + $0x20] sm:$0xff]
    %v6244 = vld [vmem:[#allocation7 + $0x28] sm:$0xff]
    %v6245 = vld [vmem:[#allocation7 + $0x30] sm:$0xff]
    %v6246 = vld [vmem:[#allocation7 + $0x38] sm:$0xff]
    %v6247 = vld [vmem:[#allocation7 + $0x40] sm:$0xff]
    %v6248 = vld [vmem:[#allocation7 + $0x48] sm:$0xff]
    %v6249 = vld [vmem:[#allocation7 + $0x50] sm:$0xff]
    %v6250 = vld [vmem:[#allocation7 + $0x58] sm:$0xff]
    %v6251 = vld [vmem:[#allocation7 + $0x60] sm:$0xff]
    %v6252 = vld [vmem:[#allocation7 + $0x68] sm:$0xff]
    %v6253 = vld [vmem:[#allocation7 + $0x70] sm:$0xff]
    %v6254 = vld [vmem:[#allocation7 + $0x78] sm:$0xff]
    %v6255 = vld [vmem:[#allocation7 + $0x80] sm:$0xff]
    %v6256 = vld [vmem:[#allocation7 + $0x88] sm:$0xff]
    %v6257 = vld [vmem:[#allocation7 + $0x90] sm:$0xff]
    %v6258 = vld [vmem:[#allocation7 + $0x98] sm:$0xff]
    %v6259 = vld [vmem:[#allocation7 + $0xa0] sm:$0xff]
    %v6260 = vld [vmem:[#allocation7 + $0xa8] sm:$0xff]
    %v6261 = vld [vmem:[#allocation7 + $0xb0] sm:$0xff]
    %v6262 = vld [vmem:[#allocation7 + $0xb8] sm:$0xff]
    %v6263 = vld [vmem:[#allocation7 + $0xc0] sm:$0xff]
    %v6264 = vld [vmem:[#allocation7 + $0xc8] sm:$0xff]
    %v6265 = vld [vmem:[#allocation7 + $0xd0] sm:$0xff]
    %v6266 = vld [vmem:[#allocation7 + $0xd8] sm:$0xff]
    %v6267 = vld [vmem:[#allocation7 + $0xe0] sm:$0xff]
    %v6268 = vld [vmem:[#allocation7 + $0xe8] sm:$0xff]
    %v6269 = vld [vmem:[#allocation7 + $0xf0] sm:$0xff]
    %v6270 = vld [vmem:[#allocation7 + $0xf8] sm:$0xff]
    %v6303 = vunpack.c.l.b16 %v6239
    %v6304 = vunpack.c.h.b16 %v6239
    %v6305 = vunpack.c.l.b16 %v6240
    %v6306 = vunpack.c.h.b16 %v6240
    %v6307 = vunpack.c.l.b16 %v6241
    %v6308 = vunpack.c.h.b16 %v6241
    %v6309 = vunpack.c.l.b16 %v6242
    %v6310 = vunpack.c.h.b16 %v6242
    %v6311 = vunpack.c.l.b16 %v6243
    %v6312 = vunpack.c.h.b16 %v6243
    %v6313 = vunpack.c.l.b16 %v6244
    %v6314 = vunpack.c.h.b16 %v6244
    %v6315 = vunpack.c.l.b16 %v6245
    %v6316 = vunpack.c.h.b16 %v6245
    %v6317 = vunpack.c.l.b16 %v6246
    %v6318 = vunpack.c.h.b16 %v6246
    %v6319 = vunpack.c.l.b16 %v6247
    %v6320 = vunpack.c.h.b16 %v6247
    %v6321 = vunpack.c.l.b16 %v6248
    %v6322 = vunpack.c.h.b16 %v6248
    %v6323 = vunpack.c.l.b16 %v6249
    %v6324 = vunpack.c.h.b16 %v6249
    %v6325 = vunpack.c.l.b16 %v6250
    %v6326 = vunpack.c.h.b16 %v6250
    %v6327 = vunpack.c.l.b16 %v6251
    %v6328 = vunpack.c.h.b16 %v6251
    %v6329 = vunpack.c.l.b16 %v6252
    %v6330 = vunpack.c.h.b16 %v6252
    %v6331 = vunpack.c.l.b16 %v6253
    %v6332 = vunpack.c.h.b16 %v6253
    %v6333 = vunpack.c.l.b16 %v6254
    %v6334 = vunpack.c.h.b16 %v6254
    %v6335 = vunpack.c.l.b16 %v6255
    %v6336 = vunpack.c.h.b16 %v6255
    %v6337 = vunpack.c.l.b16 %v6256
    %v6338 = vunpack.c.h.b16 %v6256
    %v6339 = vunpack.c.l.b16 %v6257
    %v6340 = vunpack.c.h.b16 %v6257
    %v6341 = vunpack.c.l.b16 %v6258
    %v6342 = vunpack.c.h.b16 %v6258
    %v6343 = vunpack.c.l.b16 %v6259
    %v6344 = vunpack.c.h.b16 %v6259
    %v6345 = vunpack.c.l.b16 %v6260
    %v6346 = vunpack.c.h.b16 %v6260
    %v6347 = vunpack.c.l.b16 %v6261
    %v6348 = vunpack.c.h.b16 %v6261
    %v6349 = vunpack.c.l.b16 %v6262
    %v6350 = vunpack.c.h.b16 %v6262
    %v6351 = vunpack.c.l.b16 %v6263
    %v6352 = vunpack.c.h.b16 %v6263
    %v6353 = vunpack.c.l.b16 %v6264
    %v6354 = vunpack.c.h.b16 %v6264
    %v6355 = vunpack.c.l.b16 %v6265
    %v6356 = vunpack.c.h.b16 %v6265
    %v6357 = vunpack.c.l.b16 %v6266
    %v6358 = vunpack.c.h.b16 %v6266
    %v6359 = vunpack.c.l.b16 %v6267
    %v6360 = vunpack.c.h.b16 %v6267
    %v6361 = vunpack.c.l.b16 %v6268
    %v6362 = vunpack.c.h.b16 %v6268
    %v6363 = vunpack.c.l.b16 %v6269
    %v6364 = vunpack.c.h.b16 %v6269
    %v6365 = vunpack.c.l.b16 %v6270
    %v6366 = vunpack.c.h.b16 %v6270
    %v6367 = vpack.c.b16 %v6307, %v6303
    %v6368 = vpack.c.b16 %v6308, %v6304
    %v6369 = vpack.c.b16 %v6309, %v6305
    %v6370 = vpack.c.b16 %v6310, %v6306
    %v6371 = vpack.c.b16 %v6315, %v6311
    %v6372 = vpack.c.b16 %v6316, %v6312
    %v6373 = vpack.c.b16 %v6317, %v6313
    %v6374 = vpack.c.b16 %v6318, %v6314
    %v6375 = vpack.c.b16 %v6323, %v6319
    %v6376 = vpack.c.b16 %v6324, %v6320
    %v6377 = vpack.c.b16 %v6325, %v6321
    %v6378 = vpack.c.b16 %v6326, %v6322
    %v6379 = vpack.c.b16 %v6331, %v6327
    %v6380 = vpack.c.b16 %v6332, %v6328
    %v6381 = vpack.c.b16 %v6333, %v6329
    %v6382 = vpack.c.b16 %v6334, %v6330
    %v6383 = vpack.c.b16 %v6339, %v6335
    %v6384 = vpack.c.b16 %v6340, %v6336
    %v6385 = vpack.c.b16 %v6341, %v6337
    %v6386 = vpack.c.b16 %v6342, %v6338
    %v6387 = vpack.c.b16 %v6347, %v6343
    %v6388 = vpack.c.b16 %v6348, %v6344
    %v6389 = vpack.c.b16 %v6349, %v6345
    %v6390 = vpack.c.b16 %v6350, %v6346
    %v6391 = vpack.c.b16 %v6355, %v6351
    %v6392 = vpack.c.b16 %v6356, %v6352
    %v6393 = vpack.c.b16 %v6357, %v6353
    %v6394 = vpack.c.b16 %v6358, %v6354
    %v6395 = vpack.c.b16 %v6363, %v6359
    %v6396 = vpack.c.b16 %v6364, %v6360
    %v6397 = vpack.c.b16 %v6365, %v6361
    %v6398 = vpack.c.b16 %v6366, %v6362
    %6431 = vmatprep.subr.bf16.mxu0 %v6368
    %6432 = vmatpush1.bf16.msra.mxu0 %v6367
    %6433 = vmatprep.subr.bf16.mxu0 %v6372
    %6434 = vmatpush1.bf16.msra.mxu0 %v6371
    %6435 = vmatprep.subr.bf16.mxu0 %v6376
    %6436 = vmatpush1.bf16.msra.mxu0 %v6375
    %6437 = vmatprep.subr.bf16.mxu0 %v6380
    %6438 = vmatpush1.bf16.msra.mxu0 %v6379
    %6439 = vmatprep.subr.bf16.mxu0 %v6384
    %6440 = vmatpush1.bf16.msra.mxu0 %v6383
    %6441 = vmatprep.subr.bf16.mxu0 %v6388
    %6442 = vmatpush1.bf16.msra.mxu0 %v6387
    %6443 = vmatprep.subr.bf16.mxu0 %v6392
    %6444 = vmatpush1.bf16.msra.mxu0 %v6391
    %6445 = vmatprep.subr.bf16.mxu0 %v6396
    %6446 = vmatpush1.bf16.msra.mxu0 %v6395
    %6447 = vmatprep.subr.bf16.mxu0 0
    %6448 = vmatpush1.bf16.msra.mxu0 0
    %6449 = vmatprep.subr.bf16.mxu0 0
    %6450 = vmatpush1.bf16.msra.mxu0 0
    %6451 = vmatprep.subr.bf16.mxu0 0
    %6452 = vmatpush1.bf16.msra.mxu0 0
    %6453 = vmatprep.subr.bf16.mxu0 0
    %6454 = vmatpush1.bf16.msra.mxu0 0
    %6455 = vmatprep.subr.bf16.mxu0 0
    %6456 = vmatpush1.bf16.msra.mxu0 0
    %6457 = vmatprep.subr.bf16.mxu0 0
    %6458 = vmatpush1.bf16.msra.mxu0 0
    %6459 = vmatprep.subr.bf16.mxu0 0
    %6460 = vmatpush1.bf16.msra.mxu0 0
    %6461 = vmatprep.subr.bf16.mxu0 0
    %6462 = vmatpush1.bf16.msra.mxu0 0
    %6463 = vmatprep.mubr.bf16.mxu0 0
    %6464 = vmatmul.mubr.bf16.gmra.mrb[0].mxu0 %v6238
    %v6465 = vpop.f32.mrb[0].mxu0
    %v6466 = vadd.f32 0.0, %v6465
    %v6467 = vpop.f32.mrb[0].mxu0
    %v6468 = vadd.f32 0.0, %v6467
    %v6469 = vpop.f32.mrb[0].mxu0
    %v6470 = vpop.f32.mrb[0].mxu0
    %6471 = vdwg.mxu0
    %6472 = vmatprep.subr.bf16.mxu0 %v6370
    %6473 = vmatpush1.bf16.msra.mxu0 %v6369
    %6474 = vmatprep.subr.bf16.mxu0 %v6374
    %6475 = vmatpush1.bf16.msra.mxu0 %v6373
    %6476 = vmatprep.subr.bf16.mxu0 %v6378
    %6477 = vmatpush1.bf16.msra.mxu0 %v6377
    %6478 = vmatprep.subr.bf16.mxu0 %v6382
    %6479 = vmatpush1.bf16.msra.mxu0 %v6381
    %6480 = vmatprep.subr.bf16.mxu0 %v6386
    %6481 = vmatpush1.bf16.msra.mxu0 %v6385
    %6482 = vmatprep.subr.bf16.mxu0 %v6390
    %6483 = vmatpush1.bf16.msra.mxu0 %v6389
    %6484 = vmatprep.subr.bf16.mxu0 %v6394
    %6485 = vmatpush1.bf16.msra.mxu0 %v6393
    %6486 = vmatprep.subr.bf16.mxu0 %v6398
    %6487 = vmatpush1.bf16.msra.mxu0 %v6397
    %6488 = vmatprep.subr.bf16.mxu0 0
    %6489 = vmatpush1.bf16.msra.mxu0 0
    %6490 = vmatprep.subr.bf16.mxu0 0
    %6491 = vmatpush1.bf16.msra.mxu0 0
    %6492 = vmatprep.subr.bf16.mxu0 0
    %6493 = vmatpush1.bf16.msra.mxu0 0
    %6494 = vmatprep.subr.bf16.mxu0 0
    %6495 = vmatpush1.bf16.msra.mxu0 0
    %6496 = vmatprep.subr.bf16.mxu0 0
    %6497 = vmatpush1.bf16.msra.mxu0 0
    %6498 = vmatprep.subr.bf16.mxu0 0
    %6499 = vmatpush1.bf16.msra.mxu0 0
    %6500 = vmatprep.subr.bf16.mxu0 0
    %6501 = vmatpush1.bf16.msra.mxu0 0
    %6502 = vmatprep.subr.bf16.mxu0 0
    %6503 = vmatpush1.bf16.msra.mxu0 0
    %6504 = vmatprep.mubr.bf16.mxu0 0
    %6505 = vmatmul.mubr.bf16.gmra.mrb[0].mxu0 %v6238
    %v6506 = vpop.f32.mrb[0].mxu0
    %v6507 = vadd.f32 0.0, %v6506
    %v6508 = vpop.f32.mrb[0].mxu0
    %v6509 = vadd.f32 0.0, %v6508
    %v6510 = vpop.f32.mrb[0].mxu0
    %v6511 = vpop.f32.mrb[0].mxu0
    %6512 = vdwg.mxu0
    %v6517 = vrot.slane %v6466, 7
    %v6518 = vrot.slane %v6468, 7
    %v6519 = vrot.slane %v6507, 7
    %v6520 = vrot.slane %v6509, 7
    %v6521 = vrot.slane %v6466, 1
    %v6522 = vrot.slane %v6468, 1
    %v6523 = vrot.slane %v6507, 1
    %v6524 = vrot.slane %v6509, 1
    %v6525 = vrot.slane %v6466, 2
    %v6526 = vrot.slane %v6468, 2
    %v6527 = vrot.slane %v6507, 2
    %v6528 = vrot.slane %v6509, 2
    %v6529 = vrot.slane %v6466, 3
    %v6530 = vrot.slane %v6468, 3
    %v6531 = vrot.slane %v6507, 3
    %v6532 = vrot.slane %v6509, 3
    %v6533 = vrot.slane %v6466, 4
    %v6534 = vrot.slane %v6468, 4
    %v6535 = vrot.slane %v6507, 4
    %v6536 = vrot.slane %v6509, 4
    %v6537 = vrot.slane %v6466, 5
    %v6538 = vrot.slane %v6468, 5
    %v6539 = vrot.slane %v6507, 5
    %v6540 = vrot.slane %v6509, 5
    %v6541 = vrot.slane %v6466, 6
    %v6542 = vrot.slane %v6468, 6
    %v6543 = vrot.slane %v6507, 6
    %v6544 = vrot.slane %v6509, 6
    %v6577 = vadd.f32 %v6206, %v6517
    %v6578 = vadd.f32 %v6207, %v6518
    %v6579 = vadd.f32 %v6208, %v6519
    %v6580 = vadd.f32 %v6209, %v6520
    %v6581 = vadd.f32 %v6210, %v6466
    %v6582 = vadd.f32 %v6211, %v6468
    %v6583 = vadd.f32 %v6212, %v6507
    %v6584 = vadd.f32 %v6213, %v6509
    %v6585 = vadd.f32 %v6214, %v6521
    %v6586 = vadd.f32 %v6215, %v6522
    %v6587 = vadd.f32 %v6216, %v6523
    %v6588 = vadd.f32 %v6217, %v6524
    %v6589 = vadd.f32 %v6218, %v6525
    %v6590 = vadd.f32 %v6219, %v6526
    %v6591 = vadd.f32 %v6220, %v6527
    %v6592 = vadd.f32 %v6221, %v6528
    %v6593 = vadd.f32 %v6222, %v6529
    %v6594 = vadd.f32 %v6223, %v6530
    %v6595 = vadd.f32 %v6224, %v6531
    %v6596 = vadd.f32 %v6225, %v6532
    %v6597 = vadd.f32 %v6226, %v6533
    %v6598 = vadd.f32 %v6227, %v6534
    %v6599 = vadd.f32 %v6228, %v6535
    %v6600 = vadd.f32 %v6229, %v6536
    %v6601 = vadd.f32 %v6230, %v6537
    %v6602 = vadd.f32 %v6231, %v6538
    %v6603 = vadd.f32 %v6232, %v6539
    %v6604 = vadd.f32 %v6233, %v6540
    %v6605 = vadd.f32 %v6234, %v6541
    %v6606 = vadd.f32 %v6235, %v6542
    %v6607 = vadd.f32 %v6236, %v6543
    %v6608 = vadd.f32 %v6237, %v6544
    %v6609 = vmul.f32 %v6577, 0.5
    %v6610 = vmul.f32 %v6581, 0.5
    %v6611 = vmul.f32 %v6585, 0.5
    %v6612 = vmul.f32 %v6589, 0.5
    %v6613 = vmul.f32 %v6593, 0.5
    %v6614 = vmul.f32 %v6597, 0.5
    %v6615 = vmul.f32 %v6601, 0.5
    %v6616 = vmul.f32 %v6605, 0.5
    %v6617 = vtanh.pop %v6609
    %v6618 = vtanh.pop %v6610
    %v6619 = vtanh.pop %v6611
    %v6620 = vtanh.pop %v6612
    %v6621 = vtanh.pop %v6613
    %v6622 = vtanh.pop %v6614
    %v6623 = vtanh.pop %v6615
    %v6624 = vtanh.pop %v6616
    %v6625 = vmul.f32 %v6617, 0.5
    %v6626 = vmul.f32 %v6618, 0.5
    %v6627 = vmul.f32 %v6619, 0.5
    %v6628 = vmul.f32 %v6620, 0.5
    %v6629 = vmul.f32 %v6621, 0.5
    %v6630 = vmul.f32 %v6622, 0.5
    %v6631 = vmul.f32 %v6623, 0.5
    %v6632 = vmul.f32 %v6624, 0.5
    %v6633 = vadd.f32 %v6625, 0.5
    %v6634 = vadd.f32 %v6626, 0.5
    %v6635 = vadd.f32 %v6627, 0.5
    %v6636 = vadd.f32 %v6628, 0.5
    %v6637 = vadd.f32 %v6629, 0.5
    %v6638 = vadd.f32 %v6630, 0.5
    %v6639 = vadd.f32 %v6631, 0.5
    %v6640 = vadd.f32 %v6632, 0.5
    %v6641 = vmul.f32 %v6578, 0.5
    %v6642 = vmul.f32 %v6582, 0.5
    %v6643 = vmul.f32 %v6586, 0.5
    %v6644 = vmul.f32 %v6590, 0.5
    %v6645 = vmul.f32 %v6594, 0.5
    %v6646 = vmul.f32 %v6598, 0.5
    %v6647 = vmul.f32 %v6602, 0.5
    %v6648 = vmul.f32 %v6606, 0.5
    %v6649 = vtanh.pop %v6641
    %v6650 = vtanh.pop %v6642
    %v6651 = vtanh.pop %v6643
    %v6652 = vtanh.pop %v6644
    %v6653 = vtanh.pop %v6645
    %v6654 = vtanh.pop %v6646
    %v6655 = vtanh.pop %v6647
    %v6656 = vtanh.pop %v6648
    %v6657 = vmul.f32 %v6649, 0.5
    %v6658 = vmul.f32 %v6650, 0.5
    %v6659 = vmul.f32 %v6651, 0.5
    %v6660 = vmul.f32 %v6652, 0.5
    %v6661 = vmul.f32 %v6653, 0.5
    %v6662 = vmul.f32 %v6654, 0.5
    %v6663 = vmul.f32 %v6655, 0.5
    %v6664 = vmul.f32 %v6656, 0.5
    %v6665 = vadd.f32 %v6657, 0.5
    %v6666 = vadd.f32 %v6658, 0.5
    %v6667 = vadd.f32 %v6659, 0.5
    %v6668 = vadd.f32 %v6660, 0.5
    %v6669 = vadd.f32 %v6661, 0.5
    %v6670 = vadd.f32 %v6662, 0.5
    %v6671 = vadd.f32 %v6663, 0.5
    %v6672 = vadd.f32 %v6664, 0.5
    %v6673 = vtanh.pop %v6579
    %v6674 = vtanh.pop %v6583
    %v6675 = vtanh.pop %v6587
    %v6676 = vtanh.pop %v6591
    %v6677 = vtanh.pop %v6595
    %v6678 = vtanh.pop %v6599
    %v6679 = vtanh.pop %v6603
    %v6680 = vtanh.pop %v6607
    %v6681 = vmul.f32 %v6580, 0.5
    %v6682 = vmul.f32 %v6584, 0.5
    %v6683 = vmul.f32 %v6588, 0.5
    %v6684 = vmul.f32 %v6592, 0.5
    %v6685 = vmul.f32 %v6596, 0.5
    %v6686 = vmul.f32 %v6600, 0.5
    %v6687 = vmul.f32 %v6604, 0.5
    %v6688 = vmul.f32 %v6608, 0.5
    %v6689 = vtanh.pop %v6681
    %v6690 = vtanh.pop %v6682
    %v6691 = vtanh.pop %v6683
    %v6692 = vtanh.pop %v6684
    %v6693 = vtanh.pop %v6685
    %v6694 = vtanh.pop %v6686
    %v6695 = vtanh.pop %v6687
    %v6696 = vtanh.pop %v6688
    %v6697 = vmul.f32 %v6689, 0.5
    %v6698 = vmul.f32 %v6690, 0.5
    %v6699 = vmul.f32 %v6691, 0.5
    %v6700 = vmul.f32 %v6692, 0.5
    %v6701 = vmul.f32 %v6693, 0.5
    %v6702 = vmul.f32 %v6694, 0.5
    %v6703 = vmul.f32 %v6695, 0.5
    %v6704 = vmul.f32 %v6696, 0.5
    %v6705 = vadd.f32 %v6697, 0.5
    %v6706 = vadd.f32 %v6698, 0.5
    %v6707 = vadd.f32 %v6699, 0.5
    %v6708 = vadd.f32 %v6700, 0.5
    %v6709 = vadd.f32 %v6701, 0.5
    %v6710 = vadd.f32 %v6702, 0.5
    %v6711 = vadd.f32 %v6703, 0.5
    %v6712 = vadd.f32 %v6704, 0.5
    %v6714 = vrot.slane %v6157, 7
    %v6715 = vrot.slane %v6157, 1
    %v6716 = vrot.slane %v6157, 2
    %v6717 = vrot.slane %v6157, 3
    %v6718 = vrot.slane %v6157, 4
    %v6719 = vrot.slane %v6157, 5
    %v6720 = vrot.slane %v6157, 6
    %v6729 = vmul.f32 %v6665, %v6714
    %v6730 = vmul.f32 %v6666, %v6157
    %v6731 = vmul.f32 %v6667, %v6715
    %v6732 = vmul.f32 %v6668, %v6716
    %v6733 = vmul.f32 %v6669, %v6717
    %v6734 = vmul.f32 %v6670, %v6718
    %v6735 = vmul.f32 %v6671, %v6719
    %v6736 = vmul.f32 %v6672, %v6720
    %v6737 = vmul.f32 %v6633, %v6673
    %v6738 = vmul.f32 %v6634, %v6674
    %v6739 = vmul.f32 %v6635, %v6675
    %v6740 = vmul.f32 %v6636, %v6676
    %v6741 = vmul.f32 %v6637, %v6677
    %v6742 = vmul.f32 %v6638, %v6678
    %v6743 = vmul.f32 %v6639, %v6679
    %v6744 = vmul.f32 %v6640, %v6680
    %v6745 = vadd.f32 %v6729, %v6737
    %v6746 = vadd.f32 %v6730, %v6738
    %v6747 = vadd.f32 %v6731, %v6739
    %v6748 = vadd.f32 %v6732, %v6740
    %v6749 = vadd.f32 %v6733, %v6741
    %v6750 = vadd.f32 %v6734, %v6742
    %v6751 = vadd.f32 %v6735, %v6743
    %v6752 = vadd.f32 %v6736, %v6744
    %v6753 = vtanh.pop %v6745
    %v6754 = vtanh.pop %v6746
    %v6755 = vtanh.pop %v6747
    %v6756 = vtanh.pop %v6748
    %v6757 = vtanh.pop %v6749
    %v6758 = vtanh.pop %v6750
    %v6759 = vtanh.pop %v6751
    %v6760 = vtanh.pop %v6752
    %v6761 = vmul.f32 %v6705, %v6753
    %v6762 = vmul.f32 %v6706, %v6754
    %v6763 = vmul.f32 %v6707, %v6755
    %v6764 = vmul.f32 %v6708, %v6756
    %v6765 = vmul.f32 %v6709, %v6757
    %v6766 = vmul.f32 %v6710, %v6758
    %v6767 = vmul.f32 %v6711, %v6759
    %v6768 = vmul.f32 %v6712, %v6760
    %v6777 = vrot.slane %v6762, 7
    %v6778 = vsel %vm732, %v6777, %v6761
    %v6779 = vrot.slane %v6763, 6
    %v6780 = vsel %vm735, %v6779, %v6778
    %v6781 = vrot.slane %v6764, 5
    %v6782 = vsel %vm738, %v6781, %v6780
    %v6783 = vrot.slane %v6765, 4
    %v6784 = vsel %vm741, %v6783, %v6782
    %v6785 = vrot.slane %v6766, 3
    %v6786 = vsel %vm744, %v6785, %v6784
    %v6787 = vrot.slane %v6767, 2
    %v6788 = vsel %vm747, %v6787, %v6786
    %v6789 = vrot.slane %v6768, 1
    %6792 = vst [vmem:[#allocation2 - $0x1] sm:$0xfe] %v6788
    %6793 = vst [vmem:[#allocation2 + $0x7] sm:$0x1] %v6789
    %v6802 = vrot.slane %v6746, 7
    %v6803 = vsel %vm732, %v6802, %v6745
    %v6804 = vrot.slane %v6747, 6
    %v6805 = vsel %vm735, %v6804, %v6803
    %v6806 = vrot.slane %v6748, 5
    %v6807 = vsel %vm738, %v6806, %v6805
    %v6808 = vrot.slane %v6749, 4
    %v6809 = vsel %vm741, %v6808, %v6807
    %v6810 = vrot.slane %v6750, 3
    %v6811 = vsel %vm744, %v6810, %v6809
    %v6812 = vrot.slane %v6751, 2
    %v6813 = vsel %vm747, %v6812, %v6811
    %v6814 = vrot.slane %v6752, 1
    %6817 = vst [vmem:[#allocation3 - $0x1] sm:$0xfe] %v6813
    %6818 = vst [vmem:[#allocation3 + $0x7] sm:$0x1] %v6814
    %6819 = vst [vmem:[#allocation12 + $0x8] sm:$0x2] %v6761
    %6820 = vst [vmem:[#allocation12 + $0x18] sm:$0x2] %v6762
    %6821 = vst [vmem:[#allocation12 + $0x28] sm:$0x2] %v6763
    %6822 = vst [vmem:[#allocation12 + $0x38] sm:$0x2] %v6764
    %6823 = vst [vmem:[#allocation12 + $0x48] sm:$0x2] %v6765
    %6824 = vst [vmem:[#allocation12 + $0x58] sm:$0x2] %v6766
    %6825 = vst [vmem:[#allocation12 + $0x68] sm:$0x2] %v6767
    %6826 = vst [vmem:[#allocation12 + $0x78] sm:$0x2] %v6768
    %v6827 = vld [vmem:[#allocation2] sm:$0xff]
    %v6828 = vld [vmem:[#allocation3] sm:$0xff]
    %v6829 = vld [vmem:[#allocation4 + $0x10] sm:$0x22]
    %v6830 = vld [vmem:[#allocation4 + $0x18] sm:$0x22]
    %v6831 = vld [vmem:[#allocation4 + $0x30] sm:$0x22]
    %v6832 = vld [vmem:[#allocation4 + $0x38] sm:$0x22]
    %v6833 = vld [vmem:[#allocation4 + $0x50] sm:$0x22]
    %v6834 = vld [vmem:[#allocation4 + $0x58] sm:$0x22]
    %v6835 = vld [vmem:[#allocation4 + $0x70] sm:$0x22]
    %v6836 = vld [vmem:[#allocation4 + $0x78] sm:$0x22]
    %v6837 = vld [vmem:[#allocation4 + $0x90] sm:$0x22]
    %v6838 = vld [vmem:[#allocation4 + $0x98] sm:$0x22]
    %v6839 = vld [vmem:[#allocation4 + $0xb0] sm:$0x22]
    %v6840 = vld [vmem:[#allocation4 + $0xb8] sm:$0x22]
    %v6841 = vld [vmem:[#allocation4 + $0xd0] sm:$0x22]
    %v6842 = vld [vmem:[#allocation4 + $0xd8] sm:$0x22]
    %v6843 = vld [vmem:[#allocation4 + $0xf0] sm:$0x22]
    %v6844 = vld [vmem:[#allocation4 + $0xf8] sm:$0x22]
    %v6845 = vunpack.c.l.bf16 %v6829
    %v6846 = vunpack.c.h.bf16 %v6829
    %v6847 = vunpack.c.l.bf16 %v6830
    %v6848 = vunpack.c.h.bf16 %v6830
    %v6849 = vunpack.c.l.bf16 %v6831
    %v6850 = vunpack.c.h.bf16 %v6831
    %v6851 = vunpack.c.l.bf16 %v6832
    %v6852 = vunpack.c.h.bf16 %v6832
    %v6853 = vunpack.c.l.bf16 %v6833
    %v6854 = vunpack.c.h.bf16 %v6833
    %v6855 = vunpack.c.l.bf16 %v6834
    %v6856 = vunpack.c.h.bf16 %v6834
    %v6857 = vunpack.c.l.bf16 %v6835
    %v6858 = vunpack.c.h.bf16 %v6835
    %v6859 = vunpack.c.l.bf16 %v6836
    %v6860 = vunpack.c.h.bf16 %v6836
    %v6861 = vunpack.c.l.bf16 %v6837
    %v6862 = vunpack.c.h.bf16 %v6837
    %v6863 = vunpack.c.l.bf16 %v6838
    %v6864 = vunpack.c.h.bf16 %v6838
    %v6865 = vunpack.c.l.bf16 %v6839
    %v6866 = vunpack.c.h.bf16 %v6839
    %v6867 = vunpack.c.l.bf16 %v6840
    %v6868 = vunpack.c.h.bf16 %v6840
    %v6869 = vunpack.c.l.bf16 %v6841
    %v6870 = vunpack.c.h.bf16 %v6841
    %v6871 = vunpack.c.l.bf16 %v6842
    %v6872 = vunpack.c.h.bf16 %v6842
    %v6873 = vunpack.c.l.bf16 %v6843
    %v6874 = vunpack.c.h.bf16 %v6843
    %v6875 = vunpack.c.l.bf16 %v6844
    %v6876 = vunpack.c.h.bf16 %v6844
    %v6877 = vadd.f32 %v6845, %v140
    %v6878 = vadd.f32 %v6846, %v144
    %v6879 = vadd.f32 %v6847, %v148
    %v6880 = vadd.f32 %v6848, %v152
    %v6881 = vadd.f32 %v6849, %v140
    %v6882 = vadd.f32 %v6850, %v144
    %v6883 = vadd.f32 %v6851, %v148
    %v6884 = vadd.f32 %v6852, %v152
    %v6885 = vadd.f32 %v6853, %v140
    %v6886 = vadd.f32 %v6854, %v144
    %v6887 = vadd.f32 %v6855, %v148
    %v6888 = vadd.f32 %v6856, %v152
    %v6889 = vadd.f32 %v6857, %v140
    %v6890 = vadd.f32 %v6858, %v144
    %v6891 = vadd.f32 %v6859, %v148
    %v6892 = vadd.f32 %v6860, %v152
    %v6893 = vadd.f32 %v6861, %v140
    %v6894 = vadd.f32 %v6862, %v144
    %v6895 = vadd.f32 %v6863, %v148
    %v6896 = vadd.f32 %v6864, %v152
    %v6897 = vadd.f32 %v6865, %v140
    %v6898 = vadd.f32 %v6866, %v144
    %v6899 = vadd.f32 %v6867, %v148
    %v6900 = vadd.f32 %v6868, %v152
    %v6901 = vadd.f32 %v6869, %v140
    %v6902 = vadd.f32 %v6870, %v144
    %v6903 = vadd.f32 %v6871, %v148
    %v6904 = vadd.f32 %v6872, %v152
    %v6905 = vadd.f32 %v6873, %v140
    %v6906 = vadd.f32 %v6874, %v144
    %v6907 = vadd.f32 %v6875, %v148
    %v6908 = vadd.f32 %v6876, %v152
    %v6909 = vpack.c.bf16 %v6827, %v6827
    %v6910 = vld [vmem:[#allocation7] sm:$0xff]
    %v6911 = vld [vmem:[#allocation7 + $0x8] sm:$0xff]
    %v6912 = vld [vmem:[#allocation7 + $0x10] sm:$0xff]
    %v6913 = vld [vmem:[#allocation7 + $0x18] sm:$0xff]
    %v6914 = vld [vmem:[#allocation7 + $0x20] sm:$0xff]
    %v6915 = vld [vmem:[#allocation7 + $0x28] sm:$0xff]
    %v6916 = vld [vmem:[#allocation7 + $0x30] sm:$0xff]
    %v6917 = vld [vmem:[#allocation7 + $0x38] sm:$0xff]
    %v6918 = vld [vmem:[#allocation7 + $0x40] sm:$0xff]
    %v6919 = vld [vmem:[#allocation7 + $0x48] sm:$0xff]
    %v6920 = vld [vmem:[#allocation7 + $0x50] sm:$0xff]
    %v6921 = vld [vmem:[#allocation7 + $0x58] sm:$0xff]
    %v6922 = vld [vmem:[#allocation7 + $0x60] sm:$0xff]
    %v6923 = vld [vmem:[#allocation7 + $0x68] sm:$0xff]
    %v6924 = vld [vmem:[#allocation7 + $0x70] sm:$0xff]
    %v6925 = vld [vmem:[#allocation7 + $0x78] sm:$0xff]
    %v6926 = vld [vmem:[#allocation7 + $0x80] sm:$0xff]
    %v6927 = vld [vmem:[#allocation7 + $0x88] sm:$0xff]
    %v6928 = vld [vmem:[#allocation7 + $0x90] sm:$0xff]
    %v6929 = vld [vmem:[#allocation7 + $0x98] sm:$0xff]
    %v6930 = vld [vmem:[#allocation7 + $0xa0] sm:$0xff]
    %v6931 = vld [vmem:[#allocation7 + $0xa8] sm:$0xff]
    %v6932 = vld [vmem:[#allocation7 + $0xb0] sm:$0xff]
    %v6933 = vld [vmem:[#allocation7 + $0xb8] sm:$0xff]
    %v6934 = vld [vmem:[#allocation7 + $0xc0] sm:$0xff]
    %v6935 = vld [vmem:[#allocation7 + $0xc8] sm:$0xff]
    %v6936 = vld [vmem:[#allocation7 + $0xd0] sm:$0xff]
    %v6937 = vld [vmem:[#allocation7 + $0xd8] sm:$0xff]
    %v6938 = vld [vmem:[#allocation7 + $0xe0] sm:$0xff]
    %v6939 = vld [vmem:[#allocation7 + $0xe8] sm:$0xff]
    %v6940 = vld [vmem:[#allocation7 + $0xf0] sm:$0xff]
    %v6941 = vld [vmem:[#allocation7 + $0xf8] sm:$0xff]
    %v6974 = vunpack.c.l.b16 %v6910
    %v6975 = vunpack.c.h.b16 %v6910
    %v6976 = vunpack.c.l.b16 %v6911
    %v6977 = vunpack.c.h.b16 %v6911
    %v6978 = vunpack.c.l.b16 %v6912
    %v6979 = vunpack.c.h.b16 %v6912
    %v6980 = vunpack.c.l.b16 %v6913
    %v6981 = vunpack.c.h.b16 %v6913
    %v6982 = vunpack.c.l.b16 %v6914
    %v6983 = vunpack.c.h.b16 %v6914
    %v6984 = vunpack.c.l.b16 %v6915
    %v6985 = vunpack.c.h.b16 %v6915
    %v6986 = vunpack.c.l.b16 %v6916
    %v6987 = vunpack.c.h.b16 %v6916
    %v6988 = vunpack.c.l.b16 %v6917
    %v6989 = vunpack.c.h.b16 %v6917
    %v6990 = vunpack.c.l.b16 %v6918
    %v6991 = vunpack.c.h.b16 %v6918
    %v6992 = vunpack.c.l.b16 %v6919
    %v6993 = vunpack.c.h.b16 %v6919
    %v6994 = vunpack.c.l.b16 %v6920
    %v6995 = vunpack.c.h.b16 %v6920
    %v6996 = vunpack.c.l.b16 %v6921
    %v6997 = vunpack.c.h.b16 %v6921
    %v6998 = vunpack.c.l.b16 %v6922
    %v6999 = vunpack.c.h.b16 %v6922
    %v7000 = vunpack.c.l.b16 %v6923
    %v7001 = vunpack.c.h.b16 %v6923
    %v7002 = vunpack.c.l.b16 %v6924
    %v7003 = vunpack.c.h.b16 %v6924
    %v7004 = vunpack.c.l.b16 %v6925
    %v7005 = vunpack.c.h.b16 %v6925
    %v7006 = vunpack.c.l.b16 %v6926
    %v7007 = vunpack.c.h.b16 %v6926
    %v7008 = vunpack.c.l.b16 %v6927
    %v7009 = vunpack.c.h.b16 %v6927
    %v7010 = vunpack.c.l.b16 %v6928
    %v7011 = vunpack.c.h.b16 %v6928
    %v7012 = vunpack.c.l.b16 %v6929
    %v7013 = vunpack.c.h.b16 %v6929
    %v7014 = vunpack.c.l.b16 %v6930
    %v7015 = vunpack.c.h.b16 %v6930
    %v7016 = vunpack.c.l.b16 %v6931
    %v7017 = vunpack.c.h.b16 %v6931
    %v7018 = vunpack.c.l.b16 %v6932
    %v7019 = vunpack.c.h.b16 %v6932
    %v7020 = vunpack.c.l.b16 %v6933
    %v7021 = vunpack.c.h.b16 %v6933
    %v7022 = vunpack.c.l.b16 %v6934
    %v7023 = vunpack.c.h.b16 %v6934
    %v7024 = vunpack.c.l.b16 %v6935
    %v7025 = vunpack.c.h.b16 %v6935
    %v7026 = vunpack.c.l.b16 %v6936
    %v7027 = vunpack.c.h.b16 %v6936
    %v7028 = vunpack.c.l.b16 %v6937
    %v7029 = vunpack.c.h.b16 %v6937
    %v7030 = vunpack.c.l.b16 %v6938
    %v7031 = vunpack.c.h.b16 %v6938
    %v7032 = vunpack.c.l.b16 %v6939
    %v7033 = vunpack.c.h.b16 %v6939
    %v7034 = vunpack.c.l.b16 %v6940
    %v7035 = vunpack.c.h.b16 %v6940
    %v7036 = vunpack.c.l.b16 %v6941
    %v7037 = vunpack.c.h.b16 %v6941
    %v7038 = vpack.c.b16 %v6978, %v6974
    %v7039 = vpack.c.b16 %v6979, %v6975
    %v7040 = vpack.c.b16 %v6980, %v6976
    %v7041 = vpack.c.b16 %v6981, %v6977
    %v7042 = vpack.c.b16 %v6986, %v6982
    %v7043 = vpack.c.b16 %v6987, %v6983
    %v7044 = vpack.c.b16 %v6988, %v6984
    %v7045 = vpack.c.b16 %v6989, %v6985
    %v7046 = vpack.c.b16 %v6994, %v6990
    %v7047 = vpack.c.b16 %v6995, %v6991
    %v7048 = vpack.c.b16 %v6996, %v6992
    %v7049 = vpack.c.b16 %v6997, %v6993
    %v7050 = vpack.c.b16 %v7002, %v6998
    %v7051 = vpack.c.b16 %v7003, %v6999
    %v7052 = vpack.c.b16 %v7004, %v7000
    %v7053 = vpack.c.b16 %v7005, %v7001
    %v7054 = vpack.c.b16 %v7010, %v7006
    %v7055 = vpack.c.b16 %v7011, %v7007
    %v7056 = vpack.c.b16 %v7012, %v7008
    %v7057 = vpack.c.b16 %v7013, %v7009
    %v7058 = vpack.c.b16 %v7018, %v7014
    %v7059 = vpack.c.b16 %v7019, %v7015
    %v7060 = vpack.c.b16 %v7020, %v7016
    %v7061 = vpack.c.b16 %v7021, %v7017
    %v7062 = vpack.c.b16 %v7026, %v7022
    %v7063 = vpack.c.b16 %v7027, %v7023
    %v7064 = vpack.c.b16 %v7028, %v7024
    %v7065 = vpack.c.b16 %v7029, %v7025
    %v7066 = vpack.c.b16 %v7034, %v7030
    %v7067 = vpack.c.b16 %v7035, %v7031
    %v7068 = vpack.c.b16 %v7036, %v7032
    %v7069 = vpack.c.b16 %v7037, %v7033
    %7102 = vmatprep.subr.bf16.mxu0 %v7039
    %7103 = vmatpush1.bf16.msra.mxu0 %v7038
    %7104 = vmatprep.subr.bf16.mxu0 %v7043
    %7105 = vmatpush1.bf16.msra.mxu0 %v7042
    %7106 = vmatprep.subr.bf16.mxu0 %v7047
    %7107 = vmatpush1.bf16.msra.mxu0 %v7046
    %7108 = vmatprep.subr.bf16.mxu0 %v7051
    %7109 = vmatpush1.bf16.msra.mxu0 %v7050
    %7110 = vmatprep.subr.bf16.mxu0 %v7055
    %7111 = vmatpush1.bf16.msra.mxu0 %v7054
    %7112 = vmatprep.subr.bf16.mxu0 %v7059
    %7113 = vmatpush1.bf16.msra.mxu0 %v7058
    %7114 = vmatprep.subr.bf16.mxu0 %v7063
    %7115 = vmatpush1.bf16.msra.mxu0 %v7062
    %7116 = vmatprep.subr.bf16.mxu0 %v7067
    %7117 = vmatpush1.bf16.msra.mxu0 %v7066
    %7118 = vmatprep.subr.bf16.mxu0 0
    %7119 = vmatpush1.bf16.msra.mxu0 0
    %7120 = vmatprep.subr.bf16.mxu0 0
    %7121 = vmatpush1.bf16.msra.mxu0 0
    %7122 = vmatprep.subr.bf16.mxu0 0
    %7123 = vmatpush1.bf16.msra.mxu0 0
    %7124 = vmatprep.subr.bf16.mxu0 0
    %7125 = vmatpush1.bf16.msra.mxu0 0
    %7126 = vmatprep.subr.bf16.mxu0 0
    %7127 = vmatpush1.bf16.msra.mxu0 0
    %7128 = vmatprep.subr.bf16.mxu0 0
    %7129 = vmatpush1.bf16.msra.mxu0 0
    %7130 = vmatprep.subr.bf16.mxu0 0
    %7131 = vmatpush1.bf16.msra.mxu0 0
    %7132 = vmatprep.subr.bf16.mxu0 0
    %7133 = vmatpush1.bf16.msra.mxu0 0
    %7134 = vmatprep.mubr.bf16.mxu0 0
    %7135 = vmatmul.mubr.bf16.gmra.mrb[0].mxu0 %v6909
    %v7136 = vpop.f32.mrb[0].mxu0
    %v7137 = vadd.f32 0.0, %v7136
    %v7138 = vpop.f32.mrb[0].mxu0
    %v7139 = vadd.f32 0.0, %v7138
    %v7140 = vpop.f32.mrb[0].mxu0
    %v7141 = vpop.f32.mrb[0].mxu0
    %7142 = vdwg.mxu0
    %7143 = vmatprep.subr.bf16.mxu0 %v7041
    %7144 = vmatpush1.bf16.msra.mxu0 %v7040
    %7145 = vmatprep.subr.bf16.mxu0 %v7045
    %7146 = vmatpush1.bf16.msra.mxu0 %v7044
    %7147 = vmatprep.subr.bf16.mxu0 %v7049
    %7148 = vmatpush1.bf16.msra.mxu0 %v7048
    %7149 = vmatprep.subr.bf16.mxu0 %v7053
    %7150 = vmatpush1.bf16.msra.mxu0 %v7052
    %7151 = vmatprep.subr.bf16.mxu0 %v7057
    %7152 = vmatpush1.bf16.msra.mxu0 %v7056
    %7153 = vmatprep.subr.bf16.mxu0 %v7061
    %7154 = vmatpush1.bf16.msra.mxu0 %v7060
    %7155 = vmatprep.subr.bf16.mxu0 %v7065
    %7156 = vmatpush1.bf16.msra.mxu0 %v7064
    %7157 = vmatprep.subr.bf16.mxu0 %v7069
    %7158 = vmatpush1.bf16.msra.mxu0 %v7068
    %7159 = vmatprep.subr.bf16.mxu0 0
    %7160 = vmatpush1.bf16.msra.mxu0 0
    %7161 = vmatprep.subr.bf16.mxu0 0
    %7162 = vmatpush1.bf16.msra.mxu0 0
    %7163 = vmatprep.subr.bf16.mxu0 0
    %7164 = vmatpush1.bf16.msra.mxu0 0
    %7165 = vmatprep.subr.bf16.mxu0 0
    %7166 = vmatpush1.bf16.msra.mxu0 0
    %7167 = vmatprep.subr.bf16.mxu0 0
    %7168 = vmatpush1.bf16.msra.mxu0 0
    %7169 = vmatprep.subr.bf16.mxu0 0
    %7170 = vmatpush1.bf16.msra.mxu0 0
    %7171 = vmatprep.subr.bf16.mxu0 0
    %7172 = vmatpush1.bf16.msra.mxu0 0
    %7173 = vmatprep.subr.bf16.mxu0 0
    %7174 = vmatpush1.bf16.msra.mxu0 0
    %7175 = vmatprep.mubr.bf16.mxu0 0
    %7176 = vmatmul.mubr.bf16.gmra.mrb[0].mxu0 %v6909
    %v7177 = vpop.f32.mrb[0].mxu0
    %v7178 = vadd.f32 0.0, %v7177
    %v7179 = vpop.f32.mrb[0].mxu0
    %v7180 = vadd.f32 0.0, %v7179
    %v7181 = vpop.f32.mrb[0].mxu0
    %v7182 = vpop.f32.mrb[0].mxu0
    %7183 = vdwg.mxu0
    %v7188 = vrot.slane %v7137, 6
    %v7189 = vrot.slane %v7139, 6
    %v7190 = vrot.slane %v7178, 6
    %v7191 = vrot.slane %v7180, 6
    %v7192 = vrot.slane %v7137, 7
    %v7193 = vrot.slane %v7139, 7
    %v7194 = vrot.slane %v7178, 7
    %v7195 = vrot.slane %v7180, 7
    %v7196 = vrot.slane %v7137, 1
    %v7197 = vrot.slane %v7139, 1
    %v7198 = vrot.slane %v7178, 1
    %v7199 = vrot.slane %v7180, 1
    %v7200 = vrot.slane %v7137, 2
    %v7201 = vrot.slane %v7139, 2
    %v7202 = vrot.slane %v7178, 2
    %v7203 = vrot.slane %v7180, 2
    %v7204 = vrot.slane %v7137, 3
    %v7205 = vrot.slane %v7139, 3
    %v7206 = vrot.slane %v7178, 3
    %v7207 = vrot.slane %v7180, 3
    %v7208 = vrot.slane %v7137, 4
    %v7209 = vrot.slane %v7139, 4
    %v7210 = vrot.slane %v7178, 4
    %v7211 = vrot.slane %v7180, 4
    %v7212 = vrot.slane %v7137, 5
    %v7213 = vrot.slane %v7139, 5
    %v7214 = vrot.slane %v7178, 5
    %v7215 = vrot.slane %v7180, 5
    %v7248 = vadd.f32 %v6877, %v7188
    %v7249 = vadd.f32 %v6878, %v7189
    %v7250 = vadd.f32 %v6879, %v7190
    %v7251 = vadd.f32 %v6880, %v7191
    %v7252 = vadd.f32 %v6881, %v7192
    %v7253 = vadd.f32 %v6882, %v7193
    %v7254 = vadd.f32 %v6883, %v7194
    %v7255 = vadd.f32 %v6884, %v7195
    %v7256 = vadd.f32 %v6885, %v7137
    %v7257 = vadd.f32 %v6886, %v7139
    %v7258 = vadd.f32 %v6887, %v7178
    %v7259 = vadd.f32 %v6888, %v7180
    %v7260 = vadd.f32 %v6889, %v7196
    %v7261 = vadd.f32 %v6890, %v7197
    %v7262 = vadd.f32 %v6891, %v7198
    %v7263 = vadd.f32 %v6892, %v7199
    %v7264 = vadd.f32 %v6893, %v7200
    %v7265 = vadd.f32 %v6894, %v7201
    %v7266 = vadd.f32 %v6895, %v7202
    %v7267 = vadd.f32 %v6896, %v7203
    %v7268 = vadd.f32 %v6897, %v7204
    %v7269 = vadd.f32 %v6898, %v7205
    %v7270 = vadd.f32 %v6899, %v7206
    %v7271 = vadd.f32 %v6900, %v7207
    %v7272 = vadd.f32 %v6901, %v7208
    %v7273 = vadd.f32 %v6902, %v7209
    %v7274 = vadd.f32 %v6903, %v7210
    %v7275 = vadd.f32 %v6904, %v7211
    %v7276 = vadd.f32 %v6905, %v7212
    %v7277 = vadd.f32 %v6906, %v7213
    %v7278 = vadd.f32 %v6907, %v7214
    %v7279 = vadd.f32 %v6908, %v7215
    %v7280 = vmul.f32 %v7248, 0.5
    %v7281 = vmul.f32 %v7252, 0.5
    %v7282 = vmul.f32 %v7256, 0.5
    %v7283 = vmul.f32 %v7260, 0.5
    %v7284 = vmul.f32 %v7264, 0.5
    %v7285 = vmul.f32 %v7268, 0.5
    %v7286 = vmul.f32 %v7272, 0.5
    %v7287 = vmul.f32 %v7276, 0.5
    %v7288 = vtanh.pop %v7280
    %v7289 = vtanh.pop %v7281
    %v7290 = vtanh.pop %v7282
    %v7291 = vtanh.pop %v7283
    %v7292 = vtanh.pop %v7284
    %v7293 = vtanh.pop %v7285
    %v7294 = vtanh.pop %v7286
    %v7295 = vtanh.pop %v7287
    %v7296 = vmul.f32 %v7288, 0.5
    %v7297 = vmul.f32 %v7289, 0.5
    %v7298 = vmul.f32 %v7290, 0.5
    %v7299 = vmul.f32 %v7291, 0.5
    %v7300 = vmul.f32 %v7292, 0.5
    %v7301 = vmul.f32 %v7293, 0.5
    %v7302 = vmul.f32 %v7294, 0.5
    %v7303 = vmul.f32 %v7295, 0.5
    %v7304 = vadd.f32 %v7296, 0.5
    %v7305 = vadd.f32 %v7297, 0.5
    %v7306 = vadd.f32 %v7298, 0.5
    %v7307 = vadd.f32 %v7299, 0.5
    %v7308 = vadd.f32 %v7300, 0.5
    %v7309 = vadd.f32 %v7301, 0.5
    %v7310 = vadd.f32 %v7302, 0.5
    %v7311 = vadd.f32 %v7303, 0.5
    %v7312 = vmul.f32 %v7249, 0.5
    %v7313 = vmul.f32 %v7253, 0.5
    %v7314 = vmul.f32 %v7257, 0.5
    %v7315 = vmul.f32 %v7261, 0.5
    %v7316 = vmul.f32 %v7265, 0.5
    %v7317 = vmul.f32 %v7269, 0.5
    %v7318 = vmul.f32 %v7273, 0.5
    %v7319 = vmul.f32 %v7277, 0.5
    %v7320 = vtanh.pop %v7312
    %v7321 = vtanh.pop %v7313
    %v7322 = vtanh.pop %v7314
    %v7323 = vtanh.pop %v7315
    %v7324 = vtanh.pop %v7316
    %v7325 = vtanh.pop %v7317
    %v7326 = vtanh.pop %v7318
    %v7327 = vtanh.pop %v7319
    %v7328 = vmul.f32 %v7320, 0.5
    %v7329 = vmul.f32 %v7321, 0.5
    %v7330 = vmul.f32 %v7322, 0.5
    %v7331 = vmul.f32 %v7323, 0.5
    %v7332 = vmul.f32 %v7324, 0.5
    %v7333 = vmul.f32 %v7325, 0.5
    %v7334 = vmul.f32 %v7326, 0.5
    %v7335 = vmul.f32 %v7327, 0.5
    %v7336 = vadd.f32 %v7328, 0.5
    %v7337 = vadd.f32 %v7329, 0.5
    %v7338 = vadd.f32 %v7330, 0.5
    %v7339 = vadd.f32 %v7331, 0.5
    %v7340 = vadd.f32 %v7332, 0.5
    %v7341 = vadd.f32 %v7333, 0.5
    %v7342 = vadd.f32 %v7334, 0.5
    %v7343 = vadd.f32 %v7335, 0.5
    %v7344 = vtanh.pop %v7250
    %v7345 = vtanh.pop %v7254
    %v7346 = vtanh.pop %v7258
    %v7347 = vtanh.pop %v7262
    %v7348 = vtanh.pop %v7266
    %v7349 = vtanh.pop %v7270
    %v7350 = vtanh.pop %v7274
    %v7351 = vtanh.pop %v7278
    %v7352 = vmul.f32 %v7251, 0.5
    %v7353 = vmul.f32 %v7255, 0.5
    %v7354 = vmul.f32 %v7259, 0.5
    %v7355 = vmul.f32 %v7263, 0.5
    %v7356 = vmul.f32 %v7267, 0.5
    %v7357 = vmul.f32 %v7271, 0.5
    %v7358 = vmul.f32 %v7275, 0.5
    %v7359 = vmul.f32 %v7279, 0.5
    %v7360 = vtanh.pop %v7352
    %v7361 = vtanh.pop %v7353
    %v7362 = vtanh.pop %v7354
    %v7363 = vtanh.pop %v7355
    %v7364 = vtanh.pop %v7356
    %v7365 = vtanh.pop %v7357
    %v7366 = vtanh.pop %v7358
    %v7367 = vtanh.pop %v7359
    %v7368 = vmul.f32 %v7360, 0.5
    %v7369 = vmul.f32 %v7361, 0.5
    %v7370 = vmul.f32 %v7362, 0.5
    %v7371 = vmul.f32 %v7363, 0.5
    %v7372 = vmul.f32 %v7364, 0.5
    %v7373 = vmul.f32 %v7365, 0.5
    %v7374 = vmul.f32 %v7366, 0.5
    %v7375 = vmul.f32 %v7367, 0.5
    %v7376 = vadd.f32 %v7368, 0.5
    %v7377 = vadd.f32 %v7369, 0.5
    %v7378 = vadd.f32 %v7370, 0.5
    %v7379 = vadd.f32 %v7371, 0.5
    %v7380 = vadd.f32 %v7372, 0.5
    %v7381 = vadd.f32 %v7373, 0.5
    %v7382 = vadd.f32 %v7374, 0.5
    %v7383 = vadd.f32 %v7375, 0.5
    %v7385 = vrot.slane %v6828, 6
    %v7386 = vrot.slane %v6828, 7
    %v7387 = vrot.slane %v6828, 1
    %v7388 = vrot.slane %v6828, 2
    %v7389 = vrot.slane %v6828, 3
    %v7390 = vrot.slane %v6828, 4
    %v7391 = vrot.slane %v6828, 5
    %v7400 = vmul.f32 %v7336, %v7385
    %v7401 = vmul.f32 %v7337, %v7386
    %v7402 = vmul.f32 %v7338, %v6828
    %v7403 = vmul.f32 %v7339, %v7387
    %v7404 = vmul.f32 %v7340, %v7388
    %v7405 = vmul.f32 %v7341, %v7389
    %v7406 = vmul.f32 %v7342, %v7390
    %v7407 = vmul.f32 %v7343, %v7391
    %v7408 = vmul.f32 %v7304, %v7344
    %v7409 = vmul.f32 %v7305, %v7345
    %v7410 = vmul.f32 %v7306, %v7346
    %v7411 = vmul.f32 %v7307, %v7347
    %v7412 = vmul.f32 %v7308, %v7348
    %v7413 = vmul.f32 %v7309, %v7349
    %v7414 = vmul.f32 %v7310, %v7350
    %v7415 = vmul.f32 %v7311, %v7351
    %v7416 = vadd.f32 %v7400, %v7408
    %v7417 = vadd.f32 %v7401, %v7409
    %v7418 = vadd.f32 %v7402, %v7410
    %v7419 = vadd.f32 %v7403, %v7411
    %v7420 = vadd.f32 %v7404, %v7412
    %v7421 = vadd.f32 %v7405, %v7413
    %v7422 = vadd.f32 %v7406, %v7414
    %v7423 = vadd.f32 %v7407, %v7415
    %v7424 = vtanh.pop %v7416
    %v7425 = vtanh.pop %v7417
    %v7426 = vtanh.pop %v7418
    %v7427 = vtanh.pop %v7419
    %v7428 = vtanh.pop %v7420
    %v7429 = vtanh.pop %v7421
    %v7430 = vtanh.pop %v7422
    %v7431 = vtanh.pop %v7423
    %v7432 = vmul.f32 %v7376, %v7424
    %v7433 = vmul.f32 %v7377, %v7425
    %v7434 = vmul.f32 %v7378, %v7426
    %v7435 = vmul.f32 %v7379, %v7427
    %v7436 = vmul.f32 %v7380, %v7428
    %v7437 = vmul.f32 %v7381, %v7429
    %v7438 = vmul.f32 %v7382, %v7430
    %v7439 = vmul.f32 %v7383, %v7431
    %v7448 = vrot.slane %v7433, 7
    %v7449 = vsel %vm735, %v7448, %v7432
    %v7450 = vrot.slane %v7434, 6
    %v7451 = vsel %vm738, %v7450, %v7449
    %v7452 = vrot.slane %v7435, 5
    %v7453 = vsel %vm741, %v7452, %v7451
    %v7454 = vrot.slane %v7436, 4
    %v7455 = vsel %vm744, %v7454, %v7453
    %v7456 = vrot.slane %v7437, 3
    %v7457 = vsel %vm747, %v7456, %v7455
    %v7458 = vrot.slane %v7438, 2
    %v7459 = vrot.slane %v7439, 1
    %v7460 = vsel %vm729, %v7459, %v7458
    %7463 = vst [vmem:[#allocation2 - $0x2] sm:$0xfc] %v7457
    %7464 = vst [vmem:[#allocation2 + $0x6] sm:$0x3] %v7460
    %v7473 = vrot.slane %v7417, 7
    %v7474 = vsel %vm735, %v7473, %v7416
    %v7475 = vrot.slane %v7418, 6
    %v7476 = vsel %vm738, %v7475, %v7474
    %v7477 = vrot.slane %v7419, 5
    %v7478 = vsel %vm741, %v7477, %v7476
    %v7479 = vrot.slane %v7420, 4
    %v7480 = vsel %vm744, %v7479, %v7478
    %v7481 = vrot.slane %v7421, 3
    %v7482 = vsel %vm747, %v7481, %v7480
    %v7483 = vrot.slane %v7422, 2
    %v7484 = vrot.slane %v7423, 1
    %v7485 = vsel %vm729, %v7484, %v7483
    %7488 = vst [vmem:[#allocation3 - $0x2] sm:$0xfc] %v7482
    %7489 = vst [vmem:[#allocation3 + $0x6] sm:$0x3] %v7485
    %7490 = vst [vmem:[#allocation12 + $0x8] sm:$0x4] %v7432
    %7491 = vst [vmem:[#allocation12 + $0x18] sm:$0x4] %v7433
    %7492 = vst [vmem:[#allocation12 + $0x28] sm:$0x4] %v7434
    %7493 = vst [vmem:[#allocation12 + $0x38] sm:$0x4] %v7435
    %7494 = vst [vmem:[#allocation12 + $0x48] sm:$0x4] %v7436
    %7495 = vst [vmem:[#allocation12 + $0x58] sm:$0x4] %v7437
    %7496 = vst [vmem:[#allocation12 + $0x68] sm:$0x4] %v7438
    %7497 = vst [vmem:[#allocation12 + $0x78] sm:$0x4] %v7439
    %v7498 = vld [vmem:[#allocation2] sm:$0xff]
    %v7499 = vld [vmem:[#allocation3] sm:$0xff]
    %v7500 = vld [vmem:[#allocation4 + $0x10] sm:$0x22]
    %v7501 = vld [vmem:[#allocation4 + $0x18] sm:$0x22]
    %v7502 = vld [vmem:[#allocation4 + $0x30] sm:$0x22]
    %v7503 = vld [vmem:[#allocation4 + $0x38] sm:$0x22]
    %v7504 = vld [vmem:[#allocation4 + $0x50] sm:$0x22]
    %v7505 = vld [vmem:[#allocation4 + $0x58] sm:$0x22]
    %v7506 = vld [vmem:[#allocation4 + $0x70] sm:$0x22]
    %v7507 = vld [vmem:[#allocation4 + $0x78] sm:$0x22]
    %v7508 = vld [vmem:[#allocation4 + $0x90] sm:$0x22]
    %v7509 = vld [vmem:[#allocation4 + $0x98] sm:$0x22]
    %v7510 = vld [vmem:[#allocation4 + $0xb0] sm:$0x22]
    %v7511 = vld [vmem:[#allocation4 + $0xb8] sm:$0x22]
    %v7512 = vld [vmem:[#allocation4 + $0xd0] sm:$0x22]
    %v7513 = vld [vmem:[#allocation4 + $0xd8] sm:$0x22]
    %v7514 = vld [vmem:[#allocation4 + $0xf0] sm:$0x22]
    %v7515 = vld [vmem:[#allocation4 + $0xf8] sm:$0x22]
    %v7516 = vunpack.c.l.bf16 %v7500
    %v7517 = vunpack.c.h.bf16 %v7500
    %v7518 = vunpack.c.l.bf16 %v7501
    %v7519 = vunpack.c.h.bf16 %v7501
    %v7520 = vunpack.c.l.bf16 %v7502
    %v7521 = vunpack.c.h.bf16 %v7502
    %v7522 = vunpack.c.l.bf16 %v7503
    %v7523 = vunpack.c.h.bf16 %v7503
    %v7524 = vunpack.c.l.bf16 %v7504
    %v7525 = vunpack.c.h.bf16 %v7504
    %v7526 = vunpack.c.l.bf16 %v7505
    %v7527 = vunpack.c.h.bf16 %v7505
    %v7528 = vunpack.c.l.bf16 %v7506
    %v7529 = vunpack.c.h.bf16 %v7506
    %v7530 = vunpack.c.l.bf16 %v7507
    %v7531 = vunpack.c.h.bf16 %v7507
    %v7532 = vunpack.c.l.bf16 %v7508
    %v7533 = vunpack.c.h.bf16 %v7508
    %v7534 = vunpack.c.l.bf16 %v7509
    %v7535 = vunpack.c.h.bf16 %v7509
    %v7536 = vunpack.c.l.bf16 %v7510
    %v7537 = vunpack.c.h.bf16 %v7510
    %v7538 = vunpack.c.l.bf16 %v7511
    %v7539 = vunpack.c.h.bf16 %v7511
    %v7540 = vunpack.c.l.bf16 %v7512
    %v7541 = vunpack.c.h.bf16 %v7512
    %v7542 = vunpack.c.l.bf16 %v7513
    %v7543 = vunpack.c.h.bf16 %v7513
    %v7544 = vunpack.c.l.bf16 %v7514
    %v7545 = vunpack.c.h.bf16 %v7514
    %v7546 = vunpack.c.l.bf16 %v7515
    %v7547 = vunpack.c.h.bf16 %v7515
    %v7548 = vadd.f32 %v7516, %v140
    %v7549 = vadd.f32 %v7517, %v144
    %v7550 = vadd.f32 %v7518, %v148
    %v7551 = vadd.f32 %v7519, %v152
    %v7552 = vadd.f32 %v7520, %v140
    %v7553 = vadd.f32 %v7521, %v144
    %v7554 = vadd.f32 %v7522, %v148
    %v7555 = vadd.f32 %v7523, %v152
    %v7556 = vadd.f32 %v7524, %v140
    %v7557 = vadd.f32 %v7525, %v144
    %v7558 = vadd.f32 %v7526, %v148
    %v7559 = vadd.f32 %v7527, %v152
    %v7560 = vadd.f32 %v7528, %v140
    %v7561 = vadd.f32 %v7529, %v144
    %v7562 = vadd.f32 %v7530, %v148
    %v7563 = vadd.f32 %v7531, %v152
    %v7564 = vadd.f32 %v7532, %v140
    %v7565 = vadd.f32 %v7533, %v144
    %v7566 = vadd.f32 %v7534, %v148
    %v7567 = vadd.f32 %v7535, %v152
    %v7568 = vadd.f32 %v7536, %v140
    %v7569 = vadd.f32 %v7537, %v144
    %v7570 = vadd.f32 %v7538, %v148
    %v7571 = vadd.f32 %v7539, %v152
    %v7572 = vadd.f32 %v7540, %v140
    %v7573 = vadd.f32 %v7541, %v144
    %v7574 = vadd.f32 %v7542, %v148
    %v7575 = vadd.f32 %v7543, %v152
    %v7576 = vadd.f32 %v7544, %v140
    %v7577 = vadd.f32 %v7545, %v144
    %v7578 = vadd.f32 %v7546, %v148
    %v7579 = vadd.f32 %v7547, %v152
    %v7580 = vpack.c.bf16 %v7498, %v7498
    %v7581 = vld [vmem:[#allocation7] sm:$0xff]
    %v7582 = vld [vmem:[#allocation7 + $0x8] sm:$0xff]
    %v7583 = vld [vmem:[#allocation7 + $0x10] sm:$0xff]
    %v7584 = vld [vmem:[#allocation7 + $0x18] sm:$0xff]
    %v7585 = vld [vmem:[#allocation7 + $0x20] sm:$0xff]
    %v7586 = vld [vmem:[#allocation7 + $0x28] sm:$0xff]
    %v7587 = vld [vmem:[#allocation7 + $0x30] sm:$0xff]
    %v7588 = vld [vmem:[#allocation7 + $0x38] sm:$0xff]
    %v7589 = vld [vmem:[#allocation7 + $0x40] sm:$0xff]
    %v7590 = vld [vmem:[#allocation7 + $0x48] sm:$0xff]
    %v7591 = vld [vmem:[#allocation7 + $0x50] sm:$0xff]
    %v7592 = vld [vmem:[#allocation7 + $0x58] sm:$0xff]
    %v7593 = vld [vmem:[#allocation7 + $0x60] sm:$0xff]
    %v7594 = vld [vmem:[#allocation7 + $0x68] sm:$0xff]
    %v7595 = vld [vmem:[#allocation7 + $0x70] sm:$0xff]
    %v7596 = vld [vmem:[#allocation7 + $0x78] sm:$0xff]
    %v7597 = vld [vmem:[#allocation7 + $0x80] sm:$0xff]
    %v7598 = vld [vmem:[#allocation7 + $0x88] sm:$0xff]
    %v7599 = vld [vmem:[#allocation7 + $0x90] sm:$0xff]
    %v7600 = vld [vmem:[#allocation7 + $0x98] sm:$0xff]
    %v7601 = vld [vmem:[#allocation7 + $0xa0] sm:$0xff]
    %v7602 = vld [vmem:[#allocation7 + $0xa8] sm:$0xff]
    %v7603 = vld [vmem:[#allocation7 + $0xb0] sm:$0xff]
    %v7604 = vld [vmem:[#allocation7 + $0xb8] sm:$0xff]
    %v7605 = vld [vmem:[#allocation7 + $0xc0] sm:$0xff]
    %v7606 = vld [vmem:[#allocation7 + $0xc8] sm:$0xff]
    %v7607 = vld [vmem:[#allocation7 + $0xd0] sm:$0xff]
    %v7608 = vld [vmem:[#allocation7 + $0xd8] sm:$0xff]
    %v7609 = vld [vmem:[#allocation7 + $0xe0] sm:$0xff]
    %v7610 = vld [vmem:[#allocation7 + $0xe8] sm:$0xff]
    %v7611 = vld [vmem:[#allocation7 + $0xf0] sm:$0xff]
    %v7612 = vld [vmem:[#allocation7 + $0xf8] sm:$0xff]
    %v7645 = vunpack.c.l.b16 %v7581
    %v7646 = vunpack.c.h.b16 %v7581
    %v7647 = vunpack.c.l.b16 %v7582
    %v7648 = vunpack.c.h.b16 %v7582
    %v7649 = vunpack.c.l.b16 %v7583
    %v7650 = vunpack.c.h.b16 %v7583
    %v7651 = vunpack.c.l.b16 %v7584
    %v7652 = vunpack.c.h.b16 %v7584
    %v7653 = vunpack.c.l.b16 %v7585
    %v7654 = vunpack.c.h.b16 %v7585
    %v7655 = vunpack.c.l.b16 %v7586
    %v7656 = vunpack.c.h.b16 %v7586
    %v7657 = vunpack.c.l.b16 %v7587
    %v7658 = vunpack.c.h.b16 %v7587
    %v7659 = vunpack.c.l.b16 %v7588
    %v7660 = vunpack.c.h.b16 %v7588
    %v7661 = vunpack.c.l.b16 %v7589
    %v7662 = vunpack.c.h.b16 %v7589
    %v7663 = vunpack.c.l.b16 %v7590
    %v7664 = vunpack.c.h.b16 %v7590
    %v7665 = vunpack.c.l.b16 %v7591
    %v7666 = vunpack.c.h.b16 %v7591
    %v7667 = vunpack.c.l.b16 %v7592
    %v7668 = vunpack.c.h.b16 %v7592
    %v7669 = vunpack.c.l.b16 %v7593
    %v7670 = vunpack.c.h.b16 %v7593
    %v7671 = vunpack.c.l.b16 %v7594
    %v7672 = vunpack.c.h.b16 %v7594
    %v7673 = vunpack.c.l.b16 %v7595
    %v7674 = vunpack.c.h.b16 %v7595
    %v7675 = vunpack.c.l.b16 %v7596
    %v7676 = vunpack.c.h.b16 %v7596
    %v7677 = vunpack.c.l.b16 %v7597
    %v7678 = vunpack.c.h.b16 %v7597
    %v7679 = vunpack.c.l.b16 %v7598
    %v7680 = vunpack.c.h.b16 %v7598
    %v7681 = vunpack.c.l.b16 %v7599
    %v7682 = vunpack.c.h.b16 %v7599
    %v7683 = vunpack.c.l.b16 %v7600
    %v7684 = vunpack.c.h.b16 %v7600
    %v7685 = vunpack.c.l.b16 %v7601
    %v7686 = vunpack.c.h.b16 %v7601
    %v7687 = vunpack.c.l.b16 %v7602
    %v7688 = vunpack.c.h.b16 %v7602
    %v7689 = vunpack.c.l.b16 %v7603
    %v7690 = vunpack.c.h.b16 %v7603
    %v7691 = vunpack.c.l.b16 %v7604
    %v7692 = vunpack.c.h.b16 %v7604
    %v7693 = vunpack.c.l.b16 %v7605
    %v7694 = vunpack.c.h.b16 %v7605
    %v7695 = vunpack.c.l.b16 %v7606
    %v7696 = vunpack.c.h.b16 %v7606
    %v7697 = vunpack.c.l.b16 %v7607
    %v7698 = vunpack.c.h.b16 %v7607
    %v7699 = vunpack.c.l.b16 %v7608
    %v7700 = vunpack.c.h.b16 %v7608
    %v7701 = vunpack.c.l.b16 %v7609
    %v7702 = vunpack.c.h.b16 %v7609
    %v7703 = vunpack.c.l.b16 %v7610
    %v7704 = vunpack.c.h.b16 %v7610
    %v7705 = vunpack.c.l.b16 %v7611
    %v7706 = vunpack.c.h.b16 %v7611
    %v7707 = vunpack.c.l.b16 %v7612
    %v7708 = vunpack.c.h.b16 %v7612
    %v7709 = vpack.c.b16 %v7649, %v7645
    %v7710 = vpack.c.b16 %v7650, %v7646
    %v7711 = vpack.c.b16 %v7651, %v7647
    %v7712 = vpack.c.b16 %v7652, %v7648
    %v7713 = vpack.c.b16 %v7657, %v7653
    %v7714 = vpack.c.b16 %v7658, %v7654
    %v7715 = vpack.c.b16 %v7659, %v7655
    %v7716 = vpack.c.b16 %v7660, %v7656
    %v7717 = vpack.c.b16 %v7665, %v7661
    %v7718 = vpack.c.b16 %v7666, %v7662
    %v7719 = vpack.c.b16 %v7667, %v7663
    %v7720 = vpack.c.b16 %v7668, %v7664
    %v7721 = vpack.c.b16 %v7673, %v7669
    %v7722 = vpack.c.b16 %v7674, %v7670
    %v7723 = vpack.c.b16 %v7675, %v7671
    %v7724 = vpack.c.b16 %v7676, %v7672
    %v7725 = vpack.c.b16 %v7681, %v7677
    %v7726 = vpack.c.b16 %v7682, %v7678
    %v7727 = vpack.c.b16 %v7683, %v7679
    %v7728 = vpack.c.b16 %v7684, %v7680
    %v7729 = vpack.c.b16 %v7689, %v7685
    %v7730 = vpack.c.b16 %v7690, %v7686
    %v7731 = vpack.c.b16 %v7691, %v7687
    %v7732 = vpack.c.b16 %v7692, %v7688
    %v7733 = vpack.c.b16 %v7697, %v7693
    %v7734 = vpack.c.b16 %v7698, %v7694
    %v7735 = vpack.c.b16 %v7699, %v7695
    %v7736 = vpack.c.b16 %v7700, %v7696
    %v7737 = vpack.c.b16 %v7705, %v7701
    %v7738 = vpack.c.b16 %v7706, %v7702
    %v7739 = vpack.c.b16 %v7707, %v7703
    %v7740 = vpack.c.b16 %v7708, %v7704
    %7773 = vmatprep.subr.bf16.mxu0 %v7710
    %7774 = vmatpush1.bf16.msra.mxu0 %v7709
    %7775 = vmatprep.subr.bf16.mxu0 %v7714
    %7776 = vmatpush1.bf16.msra.mxu0 %v7713
    %7777 = vmatprep.subr.bf16.mxu0 %v7718
    %7778 = vmatpush1.bf16.msra.mxu0 %v7717
    %7779 = vmatprep.subr.bf16.mxu0 %v7722
    %7780 = vmatpush1.bf16.msra.mxu0 %v7721
    %7781 = vmatprep.subr.bf16.mxu0 %v7726
    %7782 = vmatpush1.bf16.msra.mxu0 %v7725
    %7783 = vmatprep.subr.bf16.mxu0 %v7730
    %7784 = vmatpush1.bf16.msra.mxu0 %v7729
    %7785 = vmatprep.subr.bf16.mxu0 %v7734
    %7786 = vmatpush1.bf16.msra.mxu0 %v7733
    %7787 = vmatprep.subr.bf16.mxu0 %v7738
    %7788 = vmatpush1.bf16.msra.mxu0 %v7737
    %7789 = vmatprep.subr.bf16.mxu0 0
    %7790 = vmatpush1.bf16.msra.mxu0 0
    %7791 = vmatprep.subr.bf16.mxu0 0
    %7792 = vmatpush1.bf16.msra.mxu0 0
    %7793 = vmatprep.subr.bf16.mxu0 0
    %7794 = vmatpush1.bf16.msra.mxu0 0
    %7795 = vmatprep.subr.bf16.mxu0 0
    %7796 = vmatpush1.bf16.msra.mxu0 0
    %7797 = vmatprep.subr.bf16.mxu0 0
    %7798 = vmatpush1.bf16.msra.mxu0 0
    %7799 = vmatprep.subr.bf16.mxu0 0
    %7800 = vmatpush1.bf16.msra.mxu0 0
    %7801 = vmatprep.subr.bf16.mxu0 0
    %7802 = vmatpush1.bf16.msra.mxu0 0
    %7803 = vmatprep.subr.bf16.mxu0 0
    %7804 = vmatpush1.bf16.msra.mxu0 0
    %7805 = vmatprep.mubr.bf16.mxu0 0
    %7806 = vmatmul.mubr.bf16.gmra.mrb[0].mxu0 %v7580
    %v7807 = vpop.f32.mrb[0].mxu0
    %v7808 = vadd.f32 0.0, %v7807
    %v7809 = vpop.f32.mrb[0].mxu0
    %v7810 = vadd.f32 0.0, %v7809
    %v7811 = vpop.f32.mrb[0].mxu0
    %v7812 = vpop.f32.mrb[0].mxu0
    %7813 = vdwg.mxu0
    %7814 = vmatprep.subr.bf16.mxu0 %v7712
    %7815 = vmatpush1.bf16.msra.mxu0 %v7711
    %7816 = vmatprep.subr.bf16.mxu0 %v7716
    %7817 = vmatpush1.bf16.msra.mxu0 %v7715
    %7818 = vmatprep.subr.bf16.mxu0 %v7720
    %7819 = vmatpush1.bf16.msra.mxu0 %v7719
    %7820 = vmatprep.subr.bf16.mxu0 %v7724
    %7821 = vmatpush1.bf16.msra.mxu0 %v7723
    %7822 = vmatprep.subr.bf16.mxu0 %v7728
    %7823 = vmatpush1.bf16.msra.mxu0 %v7727
    %7824 = vmatprep.subr.bf16.mxu0 %v7732
    %7825 = vmatpush1.bf16.msra.mxu0 %v7731
    %7826 = vmatprep.subr.bf16.mxu0 %v7736
    %7827 = vmatpush1.bf16.msra.mxu0 %v7735
    %7828 = vmatprep.subr.bf16.mxu0 %v7740
    %7829 = vmatpush1.bf16.msra.mxu0 %v7739
    %7830 = vmatprep.subr.bf16.mxu0 0
    %7831 = vmatpush1.bf16.msra.mxu0 0
    %7832 = vmatprep.subr.bf16.mxu0 0
    %7833 = vmatpush1.bf16.msra.mxu0 0
    %7834 = vmatprep.subr.bf16.mxu0 0
    %7835 = vmatpush1.bf16.msra.mxu0 0
    %7836 = vmatprep.subr.bf16.mxu0 0
    %7837 = vmatpush1.bf16.msra.mxu0 0
    %7838 = vmatprep.subr.bf16.mxu0 0
    %7839 = vmatpush1.bf16.msra.mxu0 0
    %7840 = vmatprep.subr.bf16.mxu0 0
    %7841 = vmatpush1.bf16.msra.mxu0 0
    %7842 = vmatprep.subr.bf16.mxu0 0
    %7843 = vmatpush1.bf16.msra.mxu0 0
    %7844 = vmatprep.subr.bf16.mxu0 0
    %7845 = vmatpush1.bf16.msra.mxu0 0
    %7846 = vmatprep.mubr.bf16.mxu0 0
    %7847 = vmatmul.mubr.bf16.gmra.mrb[0].mxu0 %v7580
    %v7848 = vpop.f32.mrb[0].mxu0
    %v7849 = vadd.f32 0.0, %v7848
    %v7850 = vpop.f32.mrb[0].mxu0
    %v7851 = vadd.f32 0.0, %v7850
    %v7852 = vpop.f32.mrb[0].mxu0
    %v7853 = vpop.f32.mrb[0].mxu0
    %7854 = vdwg.mxu0
    %v7859 = vrot.slane %v7808, 5
    %v7860 = vrot.slane %v7810, 5
    %v7861 = vrot.slane %v7849, 5
    %v7862 = vrot.slane %v7851, 5
    %v7863 = vrot.slane %v7808, 6
    %v7864 = vrot.slane %v7810, 6
    %v7865 = vrot.slane %v7849, 6
    %v7866 = vrot.slane %v7851, 6
    %v7867 = vrot.slane %v7808, 7
    %v7868 = vrot.slane %v7810, 7
    %v7869 = vrot.slane %v7849, 7
    %v7870 = vrot.slane %v7851, 7
    %v7871 = vrot.slane %v7808, 1
    %v7872 = vrot.slane %v7810, 1
    %v7873 = vrot.slane %v7849, 1
    %v7874 = vrot.slane %v7851, 1
    %v7875 = vrot.slane %v7808, 2
    %v7876 = vrot.slane %v7810, 2
    %v7877 = vrot.slane %v7849, 2
    %v7878 = vrot.slane %v7851, 2
    %v7879 = vrot.slane %v7808, 3
    %v7880 = vrot.slane %v7810, 3
    %v7881 = vrot.slane %v7849, 3
    %v7882 = vrot.slane %v7851, 3
    %v7883 = vrot.slane %v7808, 4
    %v7884 = vrot.slane %v7810, 4
    %v7885 = vrot.slane %v7849, 4
    %v7886 = vrot.slane %v7851, 4
    %v7919 = vadd.f32 %v7548, %v7859
    %v7920 = vadd.f32 %v7549, %v7860
    %v7921 = vadd.f32 %v7550, %v7861
    %v7922 = vadd.f32 %v7551, %v7862
    %v7923 = vadd.f32 %v7552, %v7863
    %v7924 = vadd.f32 %v7553, %v7864
    %v7925 = vadd.f32 %v7554, %v7865
    %v7926 = vadd.f32 %v7555, %v7866
    %v7927 = vadd.f32 %v7556, %v7867
    %v7928 = vadd.f32 %v7557, %v7868
    %v7929 = vadd.f32 %v7558, %v7869
    %v7930 = vadd.f32 %v7559, %v7870
    %v7931 = vadd.f32 %v7560, %v7808
    %v7932 = vadd.f32 %v7561, %v7810
    %v7933 = vadd.f32 %v7562, %v7849
    %v7934 = vadd.f32 %v7563, %v7851
    %v7935 = vadd.f32 %v7564, %v7871
    %v7936 = vadd.f32 %v7565, %v7872
    %v7937 = vadd.f32 %v7566, %v7873
    %v7938 = vadd.f32 %v7567, %v7874
    %v7939 = vadd.f32 %v7568, %v7875
    %v7940 = vadd.f32 %v7569, %v7876
    %v7941 = vadd.f32 %v7570, %v7877
    %v7942 = vadd.f32 %v7571, %v7878
    %v7943 = vadd.f32 %v7572, %v7879
    %v7944 = vadd.f32 %v7573, %v7880
    %v7945 = vadd.f32 %v7574, %v7881
    %v7946 = vadd.f32 %v7575, %v7882
    %v7947 = vadd.f32 %v7576, %v7883
    %v7948 = vadd.f32 %v7577, %v7884
    %v7949 = vadd.f32 %v7578, %v7885
    %v7950 = vadd.f32 %v7579, %v7886
    %v7951 = vmul.f32 %v7919, 0.5
    %v7952 = vmul.f32 %v7923, 0.5
    %v7953 = vmul.f32 %v7927, 0.5
    %v7954 = vmul.f32 %v7931, 0.5
    %v7955 = vmul.f32 %v7935, 0.5
    %v7956 = vmul.f32 %v7939, 0.5
    %v7957 = vmul.f32 %v7943, 0.5
    %v7958 = vmul.f32 %v7947, 0.5
    %v7959 = vtanh.pop %v7951
    %v7960 = vtanh.pop %v7952
    %v7961 = vtanh.pop %v7953
    %v7962 = vtanh.pop %v7954
    %v7963 = vtanh.pop %v7955
    %v7964 = vtanh.pop %v7956
    %v7965 = vtanh.pop %v7957
    %v7966 = vtanh.pop %v7958
    %v7967 = vmul.f32 %v7959, 0.5
    %v7968 = vmul.f32 %v7960, 0.5
    %v7969 = vmul.f32 %v7961, 0.5
    %v7970 = vmul.f32 %v7962, 0.5
    %v7971 = vmul.f32 %v7963, 0.5
    %v7972 = vmul.f32 %v7964, 0.5
    %v7973 = vmul.f32 %v7965, 0.5
    %v7974 = vmul.f32 %v7966, 0.5
    %v7975 = vadd.f32 %v7967, 0.5
    %v7976 = vadd.f32 %v7968, 0.5
    %v7977 = vadd.f32 %v7969, 0.5
    %v7978 = vadd.f32 %v7970, 0.5
    %v7979 = vadd.f32 %v7971, 0.5
    %v7980 = vadd.f32 %v7972, 0.5
    %v7981 = vadd.f32 %v7973, 0.5
    %v7982 = vadd.f32 %v7974, 0.5
    %v7983 = vmul.f32 %v7920, 0.5
    %v7984 = vmul.f32 %v7924, 0.5
    %v7985 = vmul.f32 %v7928, 0.5
    %v7986 = vmul.f32 %v7932, 0.5
    %v7987 = vmul.f32 %v7936, 0.5
    %v7988 = vmul.f32 %v7940, 0.5
    %v7989 = vmul.f32 %v7944, 0.5
    %v7990 = vmul.f32 %v7948, 0.5
    %v7991 = vtanh.pop %v7983
    %v7992 = vtanh.pop %v7984
    %v7993 = vtanh.pop %v7985
    %v7994 = vtanh.pop %v7986
    %v7995 = vtanh.pop %v7987
    %v7996 = vtanh.pop %v7988
    %v7997 = vtanh.pop %v7989
    %v7998 = vtanh.pop %v7990
    %v7999 = vmul.f32 %v7991, 0.5
    %v8000 = vmul.f32 %v7992, 0.5
    %v8001 = vmul.f32 %v7993, 0.5
    %v8002 = vmul.f32 %v7994, 0.5
    %v8003 = vmul.f32 %v7995, 0.5
    %v8004 = vmul.f32 %v7996, 0.5
    %v8005 = vmul.f32 %v7997, 0.5
    %v8006 = vmul.f32 %v7998, 0.5
    %v8007 = vadd.f32 %v7999, 0.5
    %v8008 = vadd.f32 %v8000, 0.5
    %v8009 = vadd.f32 %v8001, 0.5
    %v8010 = vadd.f32 %v8002, 0.5
    %v8011 = vadd.f32 %v8003, 0.5
    %v8012 = vadd.f32 %v8004, 0.5
    %v8013 = vadd.f32 %v8005, 0.5
    %v8014 = vadd.f32 %v8006, 0.5
    %v8015 = vtanh.pop %v7921
    %v8016 = vtanh.pop %v7925
    %v8017 = vtanh.pop %v7929
    %v8018 = vtanh.pop %v7933
    %v8019 = vtanh.pop %v7937
    %v8020 = vtanh.pop %v7941
    %v8021 = vtanh.pop %v7945
    %v8022 = vtanh.pop %v7949
    %v8023 = vmul.f32 %v7922, 0.5
    %v8024 = vmul.f32 %v7926, 0.5
    %v8025 = vmul.f32 %v7930, 0.5
    %v8026 = vmul.f32 %v7934, 0.5
    %v8027 = vmul.f32 %v7938, 0.5
    %v8028 = vmul.f32 %v7942, 0.5
    %v8029 = vmul.f32 %v7946, 0.5
    %v8030 = vmul.f32 %v7950, 0.5
    %v8031 = vtanh.pop %v8023
    %v8032 = vtanh.pop %v8024
    %v8033 = vtanh.pop %v8025
    %v8034 = vtanh.pop %v8026
    %v8035 = vtanh.pop %v8027
    %v8036 = vtanh.pop %v8028
    %v8037 = vtanh.pop %v8029
    %v8038 = vtanh.pop %v8030
    %v8039 = vmul.f32 %v8031, 0.5
    %v8040 = vmul.f32 %v8032, 0.5
    %v8041 = vmul.f32 %v8033, 0.5
    %v8042 = vmul.f32 %v8034, 0.5
    %v8043 = vmul.f32 %v8035, 0.5
    %v8044 = vmul.f32 %v8036, 0.5
    %v8045 = vmul.f32 %v8037, 0.5
    %v8046 = vmul.f32 %v8038, 0.5
    %v8047 = vadd.f32 %v8039, 0.5
    %v8048 = vadd.f32 %v8040, 0.5
    %v8049 = vadd.f32 %v8041, 0.5
    %v8050 = vadd.f32 %v8042, 0.5
    %v8051 = vadd.f32 %v8043, 0.5
    %v8052 = vadd.f32 %v8044, 0.5
    %v8053 = vadd.f32 %v8045, 0.5
    %v8054 = vadd.f32 %v8046, 0.5
    %v8056 = vrot.slane %v7499, 5
    %v8057 = vrot.slane %v7499, 6
    %v8058 = vrot.slane %v7499, 7
    %v8059 = vrot.slane %v7499, 1
    %v8060 = vrot.slane %v7499, 2
    %v8061 = vrot.slane %v7499, 3
    %v8062 = vrot.slane %v7499, 4
    %v8071 = vmul.f32 %v8007, %v8056
    %v8072 = vmul.f32 %v8008, %v8057
    %v8073 = vmul.f32 %v8009, %v8058
    %v8074 = vmul.f32 %v8010, %v7499
    %v8075 = vmul.f32 %v8011, %v8059
    %v8076 = vmul.f32 %v8012, %v8060
    %v8077 = vmul.f32 %v8013, %v8061
    %v8078 = vmul.f32 %v8014, %v8062
    %v8079 = vmul.f32 %v7975, %v8015
    %v8080 = vmul.f32 %v7976, %v8016
    %v8081 = vmul.f32 %v7977, %v8017
    %v8082 = vmul.f32 %v7978, %v8018
    %v8083 = vmul.f32 %v7979, %v8019
    %v8084 = vmul.f32 %v7980, %v8020
    %v8085 = vmul.f32 %v7981, %v8021
    %v8086 = vmul.f32 %v7982, %v8022
    %v8087 = vadd.f32 %v8071, %v8079
    %v8088 = vadd.f32 %v8072, %v8080
    %v8089 = vadd.f32 %v8073, %v8081
    %v8090 = vadd.f32 %v8074, %v8082
    %v8091 = vadd.f32 %v8075, %v8083
    %v8092 = vadd.f32 %v8076, %v8084
    %v8093 = vadd.f32 %v8077, %v8085
    %v8094 = vadd.f32 %v8078, %v8086
    %v8095 = vtanh.pop %v8087
    %v8096 = vtanh.pop %v8088
    %v8097 = vtanh.pop %v8089
    %v8098 = vtanh.pop %v8090
    %v8099 = vtanh.pop %v8091
    %v8100 = vtanh.pop %v8092
    %v8101 = vtanh.pop %v8093
    %v8102 = vtanh.pop %v8094
    %v8103 = vmul.f32 %v8047, %v8095
    %v8104 = vmul.f32 %v8048, %v8096
    %v8105 = vmul.f32 %v8049, %v8097
    %v8106 = vmul.f32 %v8050, %v8098
    %v8107 = vmul.f32 %v8051, %v8099
    %v8108 = vmul.f32 %v8052, %v8100
    %v8109 = vmul.f32 %v8053, %v8101
    %v8110 = vmul.f32 %v8054, %v8102
    %v8119 = vrot.slane %v8104, 7
    %v8120 = vsel %vm738, %v8119, %v8103
    %v8121 = vrot.slane %v8105, 6
    %v8122 = vsel %vm741, %v8121, %v8120
    %v8123 = vrot.slane %v8106, 5
    %v8124 = vsel %vm744, %v8123, %v8122
    %v8125 = vrot.slane %v8107, 4
    %v8126 = vsel %vm747, %v8125, %v8124
    %v8127 = vrot.slane %v8108, 3
    %v8128 = vrot.slane %v8109, 2
    %v8129 = vsel %vm729, %v8128, %v8127
    %v8130 = vrot.slane %v8110, 1
    %v8131 = vsel %vm732, %v8130, %v8129
    %8134 = vst [vmem:[#allocation2 - $0x3] sm:$0xf8] %v8126
    %8135 = vst [vmem:[#allocation2 + $0x5] sm:$0x7] %v8131
    %v8144 = vrot.slane %v8088, 7
    %v8145 = vsel %vm738, %v8144, %v8087
    %v8146 = vrot.slane %v8089, 6
    %v8147 = vsel %vm741, %v8146, %v8145
    %v8148 = vrot.slane %v8090, 5
    %v8149 = vsel %vm744, %v8148, %v8147
    %v8150 = vrot.slane %v8091, 4
    %v8151 = vsel %vm747, %v8150, %v8149
    %v8152 = vrot.slane %v8092, 3
    %v8153 = vrot.slane %v8093, 2
    %v8154 = vsel %vm729, %v8153, %v8152
    %v8155 = vrot.slane %v8094, 1
    %v8156 = vsel %vm732, %v8155, %v8154
    %8159 = vst [vmem:[#allocation3 - $0x3] sm:$0xf8] %v8151
    %8160 = vst [vmem:[#allocation3 + $0x5] sm:$0x7] %v8156
    %8161 = vst [vmem:[#allocation12 + $0x8] sm:$0x8] %v8103
    %8162 = vst [vmem:[#allocation12 + $0x18] sm:$0x8] %v8104
    %8163 = vst [vmem:[#allocation12 + $0x28] sm:$0x8] %v8105
    %8164 = vst [vmem:[#allocation12 + $0x38] sm:$0x8] %v8106
    %8165 = vst [vmem:[#allocation12 + $0x48] sm:$0x8] %v8107
    %8166 = vst [vmem:[#allocation12 + $0x58] sm:$0x8] %v8108
    %8167 = vst [vmem:[#allocation12 + $0x68] sm:$0x8] %v8109
    %8168 = vst [vmem:[#allocation12 + $0x78] sm:$0x8] %v8110
    %v8169 = vld [vmem:[#allocation2] sm:$0xff]
    %v8170 = vld [vmem:[#allocation3] sm:$0xff]
    %v8171 = vld [vmem:[#allocation4 + $0x10] sm:$0x44]
    %v8172 = vld [vmem:[#allocation4 + $0x18] sm:$0x44]
    %v8173 = vld [vmem:[#allocation4 + $0x30] sm:$0x44]
    %v8174 = vld [vmem:[#allocation4 + $0x38] sm:$0x44]
    %v8175 = vld [vmem:[#allocation4 + $0x50] sm:$0x44]
    %v8176 = vld [vmem:[#allocation4 + $0x58] sm:$0x44]
    %v8177 = vld [vmem:[#allocation4 + $0x70] sm:$0x44]
    %v8178 = vld [vmem:[#allocation4 + $0x78] sm:$0x44]
    %v8179 = vld [vmem:[#allocation4 + $0x90] sm:$0x44]
    %v8180 = vld [vmem:[#allocation4 + $0x98] sm:$0x44]
    %v8181 = vld [vmem:[#allocation4 + $0xb0] sm:$0x44]
    %v8182 = vld [vmem:[#allocation4 + $0xb8] sm:$0x44]
    %v8183 = vld [vmem:[#allocation4 + $0xd0] sm:$0x44]
    %v8184 = vld [vmem:[#allocation4 + $0xd8] sm:$0x44]
    %v8185 = vld [vmem:[#allocation4 + $0xf0] sm:$0x44]
    %v8186 = vld [vmem:[#allocation4 + $0xf8] sm:$0x44]
    %v8187 = vunpack.c.l.bf16 %v8171
    %v8188 = vunpack.c.h.bf16 %v8171
    %v8189 = vunpack.c.l.bf16 %v8172
    %v8190 = vunpack.c.h.bf16 %v8172
    %v8191 = vunpack.c.l.bf16 %v8173
    %v8192 = vunpack.c.h.bf16 %v8173
    %v8193 = vunpack.c.l.bf16 %v8174
    %v8194 = vunpack.c.h.bf16 %v8174
    %v8195 = vunpack.c.l.bf16 %v8175
    %v8196 = vunpack.c.h.bf16 %v8175
    %v8197 = vunpack.c.l.bf16 %v8176
    %v8198 = vunpack.c.h.bf16 %v8176
    %v8199 = vunpack.c.l.bf16 %v8177
    %v8200 = vunpack.c.h.bf16 %v8177
    %v8201 = vunpack.c.l.bf16 %v8178
    %v8202 = vunpack.c.h.bf16 %v8178
    %v8203 = vunpack.c.l.bf16 %v8179
    %v8204 = vunpack.c.h.bf16 %v8179
    %v8205 = vunpack.c.l.bf16 %v8180
    %v8206 = vunpack.c.h.bf16 %v8180
    %v8207 = vunpack.c.l.bf16 %v8181
    %v8208 = vunpack.c.h.bf16 %v8181
    %v8209 = vunpack.c.l.bf16 %v8182
    %v8210 = vunpack.c.h.bf16 %v8182
    %v8211 = vunpack.c.l.bf16 %v8183
    %v8212 = vunpack.c.h.bf16 %v8183
    %v8213 = vunpack.c.l.bf16 %v8184
    %v8214 = vunpack.c.h.bf16 %v8184
    %v8215 = vunpack.c.l.bf16 %v8185
    %v8216 = vunpack.c.h.bf16 %v8185
    %v8217 = vunpack.c.l.bf16 %v8186
    %v8218 = vunpack.c.h.bf16 %v8186
    %v8219 = vadd.f32 %v8187, %v140
    %v8220 = vadd.f32 %v8188, %v144
    %v8221 = vadd.f32 %v8189, %v148
    %v8222 = vadd.f32 %v8190, %v152
    %v8223 = vadd.f32 %v8191, %v140
    %v8224 = vadd.f32 %v8192, %v144
    %v8225 = vadd.f32 %v8193, %v148
    %v8226 = vadd.f32 %v8194, %v152
    %v8227 = vadd.f32 %v8195, %v140
    %v8228 = vadd.f32 %v8196, %v144
    %v8229 = vadd.f32 %v8197, %v148
    %v8230 = vadd.f32 %v8198, %v152
    %v8231 = vadd.f32 %v8199, %v140
    %v8232 = vadd.f32 %v8200, %v144
    %v8233 = vadd.f32 %v8201, %v148
    %v8234 = vadd.f32 %v8202, %v152
    %v8235 = vadd.f32 %v8203, %v140
    %v8236 = vadd.f32 %v8204, %v144
    %v8237 = vadd.f32 %v8205, %v148
    %v8238 = vadd.f32 %v8206, %v152
    %v8239 = vadd.f32 %v8207, %v140
    %v8240 = vadd.f32 %v8208, %v144
    %v8241 = vadd.f32 %v8209, %v148
    %v8242 = vadd.f32 %v8210, %v152
    %v8243 = vadd.f32 %v8211, %v140
    %v8244 = vadd.f32 %v8212, %v144
    %v8245 = vadd.f32 %v8213, %v148
    %v8246 = vadd.f32 %v8214, %v152
    %v8247 = vadd.f32 %v8215, %v140
    %v8248 = vadd.f32 %v8216, %v144
    %v8249 = vadd.f32 %v8217, %v148
    %v8250 = vadd.f32 %v8218, %v152
    %v8251 = vpack.c.bf16 %v8169, %v8169
    %v8252 = vld [vmem:[#allocation7] sm:$0xff]
    %v8253 = vld [vmem:[#allocation7 + $0x8] sm:$0xff]
    %v8254 = vld [vmem:[#allocation7 + $0x10] sm:$0xff]
    %v8255 = vld [vmem:[#allocation7 + $0x18] sm:$0xff]
    %v8256 = vld [vmem:[#allocation7 + $0x20] sm:$0xff]
    %v8257 = vld [vmem:[#allocation7 + $0x28] sm:$0xff]
    %v8258 = vld [vmem:[#allocation7 + $0x30] sm:$0xff]
    %v8259 = vld [vmem:[#allocation7 + $0x38] sm:$0xff]
    %v8260 = vld [vmem:[#allocation7 + $0x40] sm:$0xff]
    %v8261 = vld [vmem:[#allocation7 + $0x48] sm:$0xff]
    %v8262 = vld [vmem:[#allocation7 + $0x50] sm:$0xff]
    %v8263 = vld [vmem:[#allocation7 + $0x58] sm:$0xff]
    %v8264 = vld [vmem:[#allocation7 + $0x60] sm:$0xff]
    %v8265 = vld [vmem:[#allocation7 + $0x68] sm:$0xff]
    %v8266 = vld [vmem:[#allocation7 + $0x70] sm:$0xff]
    %v8267 = vld [vmem:[#allocation7 + $0x78] sm:$0xff]
    %v8268 = vld [vmem:[#allocation7 + $0x80] sm:$0xff]
    %v8269 = vld [vmem:[#allocation7 + $0x88] sm:$0xff]
    %v8270 = vld [vmem:[#allocation7 + $0x90] sm:$0xff]
    %v8271 = vld [vmem:[#allocation7 + $0x98] sm:$0xff]
    %v8272 = vld [vmem:[#allocation7 + $0xa0] sm:$0xff]
    %v8273 = vld [vmem:[#allocation7 + $0xa8] sm:$0xff]
    %v8274 = vld [vmem:[#allocation7 + $0xb0] sm:$0xff]
    %v8275 = vld [vmem:[#allocation7 + $0xb8] sm:$0xff]
    %v8276 = vld [vmem:[#allocation7 + $0xc0] sm:$0xff]
    %v8277 = vld [vmem:[#allocation7 + $0xc8] sm:$0xff]
    %v8278 = vld [vmem:[#allocation7 + $0xd0] sm:$0xff]
    %v8279 = vld [vmem:[#allocation7 + $0xd8] sm:$0xff]
    %v8280 = vld [vmem:[#allocation7 + $0xe0] sm:$0xff]
    %v8281 = vld [vmem:[#allocation7 + $0xe8] sm:$0xff]
    %v8282 = vld [vmem:[#allocation7 + $0xf0] sm:$0xff]
    %v8283 = vld [vmem:[#allocation7 + $0xf8] sm:$0xff]
    %v8316 = vunpack.c.l.b16 %v8252
    %v8317 = vunpack.c.h.b16 %v8252
    %v8318 = vunpack.c.l.b16 %v8253
    %v8319 = vunpack.c.h.b16 %v8253
    %v8320 = vunpack.c.l.b16 %v8254
    %v8321 = vunpack.c.h.b16 %v8254
    %v8322 = vunpack.c.l.b16 %v8255
    %v8323 = vunpack.c.h.b16 %v8255
    %v8324 = vunpack.c.l.b16 %v8256
    %v8325 = vunpack.c.h.b16 %v8256
    %v8326 = vunpack.c.l.b16 %v8257
    %v8327 = vunpack.c.h.b16 %v8257
    %v8328 = vunpack.c.l.b16 %v8258
    %v8329 = vunpack.c.h.b16 %v8258
    %v8330 = vunpack.c.l.b16 %v8259
    %v8331 = vunpack.c.h.b16 %v8259
    %v8332 = vunpack.c.l.b16 %v8260
    %v8333 = vunpack.c.h.b16 %v8260
    %v8334 = vunpack.c.l.b16 %v8261
    %v8335 = vunpack.c.h.b16 %v8261
    %v8336 = vunpack.c.l.b16 %v8262
    %v8337 = vunpack.c.h.b16 %v8262
    %v8338 = vunpack.c.l.b16 %v8263
    %v8339 = vunpack.c.h.b16 %v8263
    %v8340 = vunpack.c.l.b16 %v8264
    %v8341 = vunpack.c.h.b16 %v8264
    %v8342 = vunpack.c.l.b16 %v8265
    %v8343 = vunpack.c.h.b16 %v8265
    %v8344 = vunpack.c.l.b16 %v8266
    %v8345 = vunpack.c.h.b16 %v8266
    %v8346 = vunpack.c.l.b16 %v8267
    %v8347 = vunpack.c.h.b16 %v8267
    %v8348 = vunpack.c.l.b16 %v8268
    %v8349 = vunpack.c.h.b16 %v8268
    %v8350 = vunpack.c.l.b16 %v8269
    %v8351 = vunpack.c.h.b16 %v8269
    %v8352 = vunpack.c.l.b16 %v8270
    %v8353 = vunpack.c.h.b16 %v8270
    %v8354 = vunpack.c.l.b16 %v8271
    %v8355 = vunpack.c.h.b16 %v8271
    %v8356 = vunpack.c.l.b16 %v8272
    %v8357 = vunpack.c.h.b16 %v8272
    %v8358 = vunpack.c.l.b16 %v8273
    %v8359 = vunpack.c.h.b16 %v8273
    %v8360 = vunpack.c.l.b16 %v8274
    %v8361 = vunpack.c.h.b16 %v8274
    %v8362 = vunpack.c.l.b16 %v8275
    %v8363 = vunpack.c.h.b16 %v8275
    %v8364 = vunpack.c.l.b16 %v8276
    %v8365 = vunpack.c.h.b16 %v8276
    %v8366 = vunpack.c.l.b16 %v8277
    %v8367 = vunpack.c.h.b16 %v8277
    %v8368 = vunpack.c.l.b16 %v8278
    %v8369 = vunpack.c.h.b16 %v8278
    %v8370 = vunpack.c.l.b16 %v8279
    %v8371 = vunpack.c.h.b16 %v8279
    %v8372 = vunpack.c.l.b16 %v8280
    %v8373 = vunpack.c.h.b16 %v8280
    %v8374 = vunpack.c.l.b16 %v8281
    %v8375 = vunpack.c.h.b16 %v8281
    %v8376 = vunpack.c.l.b16 %v8282
    %v8377 = vunpack.c.h.b16 %v8282
    %v8378 = vunpack.c.l.b16 %v8283
    %v8379 = vunpack.c.h.b16 %v8283
    %v8380 = vpack.c.b16 %v8320, %v8316
    %v8381 = vpack.c.b16 %v8321, %v8317
    %v8382 = vpack.c.b16 %v8322, %v8318
    %v8383 = vpack.c.b16 %v8323, %v8319
    %v8384 = vpack.c.b16 %v8328, %v8324
    %v8385 = vpack.c.b16 %v8329, %v8325
    %v8386 = vpack.c.b16 %v8330, %v8326
    %v8387 = vpack.c.b16 %v8331, %v8327
    %v8388 = vpack.c.b16 %v8336, %v8332
    %v8389 = vpack.c.b16 %v8337, %v8333
    %v8390 = vpack.c.b16 %v8338, %v8334
    %v8391 = vpack.c.b16 %v8339, %v8335
    %v8392 = vpack.c.b16 %v8344, %v8340
    %v8393 = vpack.c.b16 %v8345, %v8341
    %v8394 = vpack.c.b16 %v8346, %v8342
    %v8395 = vpack.c.b16 %v8347, %v8343
    %v8396 = vpack.c.b16 %v8352, %v8348
    %v8397 = vpack.c.b16 %v8353, %v8349
    %v8398 = vpack.c.b16 %v8354, %v8350
    %v8399 = vpack.c.b16 %v8355, %v8351
    %v8400 = vpack.c.b16 %v8360, %v8356
    %v8401 = vpack.c.b16 %v8361, %v8357
    %v8402 = vpack.c.b16 %v8362, %v8358
    %v8403 = vpack.c.b16 %v8363, %v8359
    %v8404 = vpack.c.b16 %v8368, %v8364
    %v8405 = vpack.c.b16 %v8369, %v8365
    %v8406 = vpack.c.b16 %v8370, %v8366
    %v8407 = vpack.c.b16 %v8371, %v8367
    %v8408 = vpack.c.b16 %v8376, %v8372
    %v8409 = vpack.c.b16 %v8377, %v8373
    %v8410 = vpack.c.b16 %v8378, %v8374
    %v8411 = vpack.c.b16 %v8379, %v8375
    %8444 = vmatprep.subr.bf16.mxu0 %v8381
    %8445 = vmatpush1.bf16.msra.mxu0 %v8380
    %8446 = vmatprep.subr.bf16.mxu0 %v8385
    %8447 = vmatpush1.bf16.msra.mxu0 %v8384
    %8448 = vmatprep.subr.bf16.mxu0 %v8389
    %8449 = vmatpush1.bf16.msra.mxu0 %v8388
    %8450 = vmatprep.subr.bf16.mxu0 %v8393
    %8451 = vmatpush1.bf16.msra.mxu0 %v8392
    %8452 = vmatprep.subr.bf16.mxu0 %v8397
    %8453 = vmatpush1.bf16.msra.mxu0 %v8396
    %8454 = vmatprep.subr.bf16.mxu0 %v8401
    %8455 = vmatpush1.bf16.msra.mxu0 %v8400
    %8456 = vmatprep.subr.bf16.mxu0 %v8405
    %8457 = vmatpush1.bf16.msra.mxu0 %v8404
    %8458 = vmatprep.subr.bf16.mxu0 %v8409
    %8459 = vmatpush1.bf16.msra.mxu0 %v8408
    %8460 = vmatprep.subr.bf16.mxu0 0
    %8461 = vmatpush1.bf16.msra.mxu0 0
    %8462 = vmatprep.subr.bf16.mxu0 0
    %8463 = vmatpush1.bf16.msra.mxu0 0
    %8464 = vmatprep.subr.bf16.mxu0 0
    %8465 = vmatpush1.bf16.msra.mxu0 0
    %8466 = vmatprep.subr.bf16.mxu0 0
    %8467 = vmatpush1.bf16.msra.mxu0 0
    %8468 = vmatprep.subr.bf16.mxu0 0
    %8469 = vmatpush1.bf16.msra.mxu0 0
    %8470 = vmatprep.subr.bf16.mxu0 0
    %8471 = vmatpush1.bf16.msra.mxu0 0
    %8472 = vmatprep.subr.bf16.mxu0 0
    %8473 = vmatpush1.bf16.msra.mxu0 0
    %8474 = vmatprep.subr.bf16.mxu0 0
    %8475 = vmatpush1.bf16.msra.mxu0 0
    %8476 = vmatprep.mubr.bf16.mxu0 0
    %8477 = vmatmul.mubr.bf16.gmra.mrb[0].mxu0 %v8251
    %v8478 = vpop.f32.mrb[0].mxu0
    %v8479 = vadd.f32 0.0, %v8478
    %v8480 = vpop.f32.mrb[0].mxu0
    %v8481 = vadd.f32 0.0, %v8480
    %v8482 = vpop.f32.mrb[0].mxu0
    %v8483 = vpop.f32.mrb[0].mxu0
    %8484 = vdwg.mxu0
    %8485 = vmatprep.subr.bf16.mxu0 %v8383
    %8486 = vmatpush1.bf16.msra.mxu0 %v8382
    %8487 = vmatprep.subr.bf16.mxu0 %v8387
    %8488 = vmatpush1.bf16.msra.mxu0 %v8386
    %8489 = vmatprep.subr.bf16.mxu0 %v8391
    %8490 = vmatpush1.bf16.msra.mxu0 %v8390
    %8491 = vmatprep.subr.bf16.mxu0 %v8395
    %8492 = vmatpush1.bf16.msra.mxu0 %v8394
    %8493 = vmatprep.subr.bf16.mxu0 %v8399
    %8494 = vmatpush1.bf16.msra.mxu0 %v8398
    %8495 = vmatprep.subr.bf16.mxu0 %v8403
    %8496 = vmatpush1.bf16.msra.mxu0 %v8402
    %8497 = vmatprep.subr.bf16.mxu0 %v8407
    %8498 = vmatpush1.bf16.msra.mxu0 %v8406
    %8499 = vmatprep.subr.bf16.mxu0 %v8411
    %8500 = vmatpush1.bf16.msra.mxu0 %v8410
    %8501 = vmatprep.subr.bf16.mxu0 0
    %8502 = vmatpush1.bf16.msra.mxu0 0
    %8503 = vmatprep.subr.bf16.mxu0 0
    %8504 = vmatpush1.bf16.msra.mxu0 0
    %8505 = vmatprep.subr.bf16.mxu0 0
    %8506 = vmatpush1.bf16.msra.mxu0 0
    %8507 = vmatprep.subr.bf16.mxu0 0
    %8508 = vmatpush1.bf16.msra.mxu0 0
    %8509 = vmatprep.subr.bf16.mxu0 0
    %8510 = vmatpush1.bf16.msra.mxu0 0
    %8511 = vmatprep.subr.bf16.mxu0 0
    %8512 = vmatpush1.bf16.msra.mxu0 0
    %8513 = vmatprep.subr.bf16.mxu0 0
    %8514 = vmatpush1.bf16.msra.mxu0 0
    %8515 = vmatprep.subr.bf16.mxu0 0
    %8516 = vmatpush1.bf16.msra.mxu0 0
    %8517 = vmatprep.mubr.bf16.mxu0 0
    %8518 = vmatmul.mubr.bf16.gmra.mrb[0].mxu0 %v8251
    %v8519 = vpop.f32.mrb[0].mxu0
    %v8520 = vadd.f32 0.0, %v8519
    %v8521 = vpop.f32.mrb[0].mxu0
    %v8522 = vadd.f32 0.0, %v8521
    %v8523 = vpop.f32.mrb[0].mxu0
    %v8524 = vpop.f32.mrb[0].mxu0
    %8525 = vdwg.mxu0
    %v8530 = vrot.slane %v8479, 4
    %v8531 = vrot.slane %v8481, 4
    %v8532 = vrot.slane %v8520, 4
    %v8533 = vrot.slane %v8522, 4
    %v8534 = vrot.slane %v8479, 5
    %v8535 = vrot.slane %v8481, 5
    %v8536 = vrot.slane %v8520, 5
    %v8537 = vrot.slane %v8522, 5
    %v8538 = vrot.slane %v8479, 6
    %v8539 = vrot.slane %v8481, 6
    %v8540 = vrot.slane %v8520, 6
    %v8541 = vrot.slane %v8522, 6
    %v8542 = vrot.slane %v8479, 7
    %v8543 = vrot.slane %v8481, 7
    %v8544 = vrot.slane %v8520, 7
    %v8545 = vrot.slane %v8522, 7
    %v8546 = vrot.slane %v8479, 1
    %v8547 = vrot.slane %v8481, 1
    %v8548 = vrot.slane %v8520, 1
    %v8549 = vrot.slane %v8522, 1
    %v8550 = vrot.slane %v8479, 2
    %v8551 = vrot.slane %v8481, 2
    %v8552 = vrot.slane %v8520, 2
    %v8553 = vrot.slane %v8522, 2
    %v8554 = vrot.slane %v8479, 3
    %v8555 = vrot.slane %v8481, 3
    %v8556 = vrot.slane %v8520, 3
    %v8557 = vrot.slane %v8522, 3
    %v8590 = vadd.f32 %v8219, %v8530
    %v8591 = vadd.f32 %v8220, %v8531
    %v8592 = vadd.f32 %v8221, %v8532
    %v8593 = vadd.f32 %v8222, %v8533
    %v8594 = vadd.f32 %v8223, %v8534
    %v8595 = vadd.f32 %v8224, %v8535
    %v8596 = vadd.f32 %v8225, %v8536
    %v8597 = vadd.f32 %v8226, %v8537
    %v8598 = vadd.f32 %v8227, %v8538
    %v8599 = vadd.f32 %v8228, %v8539
    %v8600 = vadd.f32 %v8229, %v8540
    %v8601 = vadd.f32 %v8230, %v8541
    %v8602 = vadd.f32 %v8231, %v8542
    %v8603 = vadd.f32 %v8232, %v8543
    %v8604 = vadd.f32 %v8233, %v8544
    %v8605 = vadd.f32 %v8234, %v8545
    %v8606 = vadd.f32 %v8235, %v8479
    %v8607 = vadd.f32 %v8236, %v8481
    %v8608 = vadd.f32 %v8237, %v8520
    %v8609 = vadd.f32 %v8238, %v8522
    %v8610 = vadd.f32 %v8239, %v8546
    %v8611 = vadd.f32 %v8240, %v8547
    %v8612 = vadd.f32 %v8241, %v8548
    %v8613 = vadd.f32 %v8242, %v8549
    %v8614 = vadd.f32 %v8243, %v8550
    %v8615 = vadd.f32 %v8244, %v8551
    %v8616 = vadd.f32 %v8245, %v8552
    %v8617 = vadd.f32 %v8246, %v8553
    %v8618 = vadd.f32 %v8247, %v8554
    %v8619 = vadd.f32 %v8248, %v8555
    %v8620 = vadd.f32 %v8249, %v8556
    %v8621 = vadd.f32 %v8250, %v8557
    %v8622 = vmul.f32 %v8590, 0.5
    %v8623 = vmul.f32 %v8594, 0.5
    %v8624 = vmul.f32 %v8598, 0.5
    %v8625 = vmul.f32 %v8602, 0.5
    %v8626 = vmul.f32 %v8606, 0.5
    %v8627 = vmul.f32 %v8610, 0.5
    %v8628 = vmul.f32 %v8614, 0.5
    %v8629 = vmul.f32 %v8618, 0.5
    %v8630 = vtanh.pop %v8622
    %v8631 = vtanh.pop %v8623
    %v8632 = vtanh.pop %v8624
    %v8633 = vtanh.pop %v8625
    %v8634 = vtanh.pop %v8626
    %v8635 = vtanh.pop %v8627
    %v8636 = vtanh.pop %v8628
    %v8637 = vtanh.pop %v8629
    %v8638 = vmul.f32 %v8630, 0.5
    %v8639 = vmul.f32 %v8631, 0.5
    %v8640 = vmul.f32 %v8632, 0.5
    %v8641 = vmul.f32 %v8633, 0.5
    %v8642 = vmul.f32 %v8634, 0.5
    %v8643 = vmul.f32 %v8635, 0.5
    %v8644 = vmul.f32 %v8636, 0.5
    %v8645 = vmul.f32 %v8637, 0.5
    %v8646 = vadd.f32 %v8638, 0.5
    %v8647 = vadd.f32 %v8639, 0.5
    %v8648 = vadd.f32 %v8640, 0.5
    %v8649 = vadd.f32 %v8641, 0.5
    %v8650 = vadd.f32 %v8642, 0.5
    %v8651 = vadd.f32 %v8643, 0.5
    %v8652 = vadd.f32 %v8644, 0.5
    %v8653 = vadd.f32 %v8645, 0.5
    %v8654 = vmul.f32 %v8591, 0.5
    %v8655 = vmul.f32 %v8595, 0.5
    %v8656 = vmul.f32 %v8599, 0.5
    %v8657 = vmul.f32 %v8603, 0.5
    %v8658 = vmul.f32 %v8607, 0.5
    %v8659 = vmul.f32 %v8611, 0.5
    %v8660 = vmul.f32 %v8615, 0.5
    %v8661 = vmul.f32 %v8619, 0.5
    %v8662 = vtanh.pop %v8654
    %v8663 = vtanh.pop %v8655
    %v8664 = vtanh.pop %v8656
    %v8665 = vtanh.pop %v8657
    %v8666 = vtanh.pop %v8658
    %v8667 = vtanh.pop %v8659
    %v8668 = vtanh.pop %v8660
    %v8669 = vtanh.pop %v8661
    %v8670 = vmul.f32 %v8662, 0.5
    %v8671 = vmul.f32 %v8663, 0.5
    %v8672 = vmul.f32 %v8664, 0.5
    %v8673 = vmul.f32 %v8665, 0.5
    %v8674 = vmul.f32 %v8666, 0.5
    %v8675 = vmul.f32 %v8667, 0.5
    %v8676 = vmul.f32 %v8668, 0.5
    %v8677 = vmul.f32 %v8669, 0.5
    %v8678 = vadd.f32 %v8670, 0.5
    %v8679 = vadd.f32 %v8671, 0.5
    %v8680 = vadd.f32 %v8672, 0.5
    %v8681 = vadd.f32 %v8673, 0.5
    %v8682 = vadd.f32 %v8674, 0.5
    %v8683 = vadd.f32 %v8675, 0.5
    %v8684 = vadd.f32 %v8676, 0.5
    %v8685 = vadd.f32 %v8677, 0.5
    %v8686 = vtanh.pop %v8592
    %v8687 = vtanh.pop %v8596
    %v8688 = vtanh.pop %v8600
    %v8689 = vtanh.pop %v8604
    %v8690 = vtanh.pop %v8608
    %v8691 = vtanh.pop %v8612
    %v8692 = vtanh.pop %v8616
    %v8693 = vtanh.pop %v8620
    %v8694 = vmul.f32 %v8593, 0.5
    %v8695 = vmul.f32 %v8597, 0.5
    %v8696 = vmul.f32 %v8601, 0.5
    %v8697 = vmul.f32 %v8605, 0.5
    %v8698 = vmul.f32 %v8609, 0.5
    %v8699 = vmul.f32 %v8613, 0.5
    %v8700 = vmul.f32 %v8617, 0.5
    %v8701 = vmul.f32 %v8621, 0.5
    %v8702 = vtanh.pop %v8694
    %v8703 = vtanh.pop %v8695
    %v8704 = vtanh.pop %v8696
    %v8705 = vtanh.pop %v8697
    %v8706 = vtanh.pop %v8698
    %v8707 = vtanh.pop %v8699
    %v8708 = vtanh.pop %v8700
    %v8709 = vtanh.pop %v8701
    %v8710 = vmul.f32 %v8702, 0.5
    %v8711 = vmul.f32 %v8703, 0.5
    %v8712 = vmul.f32 %v8704, 0.5
    %v8713 = vmul.f32 %v8705, 0.5
    %v8714 = vmul.f32 %v8706, 0.5
    %v8715 = vmul.f32 %v8707, 0.5
    %v8716 = vmul.f32 %v8708, 0.5
    %v8717 = vmul.f32 %v8709, 0.5
    %v8718 = vadd.f32 %v8710, 0.5
    %v8719 = vadd.f32 %v8711, 0.5
    %v8720 = vadd.f32 %v8712, 0.5
    %v8721 = vadd.f32 %v8713, 0.5
    %v8722 = vadd.f32 %v8714, 0.5
    %v8723 = vadd.f32 %v8715, 0.5
    %v8724 = vadd.f32 %v8716, 0.5
    %v8725 = vadd.f32 %v8717, 0.5
    %v8727 = vrot.slane %v8170, 4
    %v8728 = vrot.slane %v8170, 5
    %v8729 = vrot.slane %v8170, 6
    %v8730 = vrot.slane %v8170, 7
    %v8731 = vrot.slane %v8170, 1
    %v8732 = vrot.slane %v8170, 2
    %v8733 = vrot.slane %v8170, 3
    %v8742 = vmul.f32 %v8678, %v8727
    %v8743 = vmul.f32 %v8679, %v8728
    %v8744 = vmul.f32 %v8680, %v8729
    %v8745 = vmul.f32 %v8681, %v8730
    %v8746 = vmul.f32 %v8682, %v8170
    %v8747 = vmul.f32 %v8683, %v8731
    %v8748 = vmul.f32 %v8684, %v8732
    %v8749 = vmul.f32 %v8685, %v8733
    %v8750 = vmul.f32 %v8646, %v8686
    %v8751 = vmul.f32 %v8647, %v8687
    %v8752 = vmul.f32 %v8648, %v8688
    %v8753 = vmul.f32 %v8649, %v8689
    %v8754 = vmul.f32 %v8650, %v8690
    %v8755 = vmul.f32 %v8651, %v8691
    %v8756 = vmul.f32 %v8652, %v8692
    %v8757 = vmul.f32 %v8653, %v8693
    %v8758 = vadd.f32 %v8742, %v8750
    %v8759 = vadd.f32 %v8743, %v8751
    %v8760 = vadd.f32 %v8744, %v8752
    %v8761 = vadd.f32 %v8745, %v8753
    %v8762 = vadd.f32 %v8746, %v8754
    %v8763 = vadd.f32 %v8747, %v8755
    %v8764 = vadd.f32 %v8748, %v8756
    %v8765 = vadd.f32 %v8749, %v8757
    %v8766 = vtanh.pop %v8758
    %v8767 = vtanh.pop %v8759
    %v8768 = vtanh.pop %v8760
    %v8769 = vtanh.pop %v8761
    %v8770 = vtanh.pop %v8762
    %v8771 = vtanh.pop %v8763
    %v8772 = vtanh.pop %v8764
    %v8773 = vtanh.pop %v8765
    %v8774 = vmul.f32 %v8718, %v8766
    %v8775 = vmul.f32 %v8719, %v8767
    %v8776 = vmul.f32 %v8720, %v8768
    %v8777 = vmul.f32 %v8721, %v8769
    %v8778 = vmul.f32 %v8722, %v8770
    %v8779 = vmul.f32 %v8723, %v8771
    %v8780 = vmul.f32 %v8724, %v8772
    %v8781 = vmul.f32 %v8725, %v8773
    %v8790 = vrot.slane %v8775, 7
    %v8791 = vsel %vm741, %v8790, %v8774
    %v8792 = vrot.slane %v8776, 6
    %v8793 = vsel %vm744, %v8792, %v8791
    %v8794 = vrot.slane %v8777, 5
    %v8795 = vsel %vm747, %v8794, %v8793
    %v8796 = vrot.slane %v8778, 4
    %v8797 = vrot.slane %v8779, 3
    %v8798 = vsel %vm729, %v8797, %v8796
    %v8799 = vrot.slane %v8780, 2
    %v8800 = vsel %vm732, %v8799, %v8798
    %v8801 = vrot.slane %v8781, 1
    %v8802 = vsel %vm735, %v8801, %v8800
    %8805 = vst [vmem:[#allocation2 - $0x4] sm:$0xf0] %v8795
    %8806 = vst [vmem:[#allocation2 + $0x4] sm:$0xf] %v8802
    %v8815 = vrot.slane %v8759, 7
    %v8816 = vsel %vm741, %v8815, %v8758
    %v8817 = vrot.slane %v8760, 6
    %v8818 = vsel %vm744, %v8817, %v8816
    %v8819 = vrot.slane %v8761, 5
    %v8820 = vsel %vm747, %v8819, %v8818
    %v8821 = vrot.slane %v8762, 4
    %v8822 = vrot.slane %v8763, 3
    %v8823 = vsel %vm729, %v8822, %v8821
    %v8824 = vrot.slane %v8764, 2
    %v8825 = vsel %vm732, %v8824, %v8823
    %v8826 = vrot.slane %v8765, 1
    %v8827 = vsel %vm735, %v8826, %v8825
    %8830 = vst [vmem:[#allocation3 - $0x4] sm:$0xf0] %v8820
    %8831 = vst [vmem:[#allocation3 + $0x4] sm:$0xf] %v8827
    %8832 = vst [vmem:[#allocation12 + $0x8] sm:$0x10] %v8774
    %8833 = vst [vmem:[#allocation12 + $0x18] sm:$0x10] %v8775
    %8834 = vst [vmem:[#allocation12 + $0x28] sm:$0x10] %v8776
    %8835 = vst [vmem:[#allocation12 + $0x38] sm:$0x10] %v8777
    %8836 = vst [vmem:[#allocation12 + $0x48] sm:$0x10] %v8778
    %8837 = vst [vmem:[#allocation12 + $0x58] sm:$0x10] %v8779
    %8838 = vst [vmem:[#allocation12 + $0x68] sm:$0x10] %v8780
    %8839 = vst [vmem:[#allocation12 + $0x78] sm:$0x10] %v8781
    %v8840 = vld [vmem:[#allocation2] sm:$0xff]
    %v8841 = vld [vmem:[#allocation3] sm:$0xff]
    %v8842 = vld [vmem:[#allocation4 + $0x10] sm:$0x44]
    %v8843 = vld [vmem:[#allocation4 + $0x18] sm:$0x44]
    %v8844 = vld [vmem:[#allocation4 + $0x30] sm:$0x44]
    %v8845 = vld [vmem:[#allocation4 + $0x38] sm:$0x44]
    %v8846 = vld [vmem:[#allocation4 + $0x50] sm:$0x44]
    %v8847 = vld [vmem:[#allocation4 + $0x58] sm:$0x44]
    %v8848 = vld [vmem:[#allocation4 + $0x70] sm:$0x44]
    %v8849 = vld [vmem:[#allocation4 + $0x78] sm:$0x44]
    %v8850 = vld [vmem:[#allocation4 + $0x90] sm:$0x44]
    %v8851 = vld [vmem:[#allocation4 + $0x98] sm:$0x44]
    %v8852 = vld [vmem:[#allocation4 + $0xb0] sm:$0x44]
    %v8853 = vld [vmem:[#allocation4 + $0xb8] sm:$0x44]
    %v8854 = vld [vmem:[#allocation4 + $0xd0] sm:$0x44]
    %v8855 = vld [vmem:[#allocation4 + $0xd8] sm:$0x44]
    %v8856 = vld [vmem:[#allocation4 + $0xf0] sm:$0x44]
    %v8857 = vld [vmem:[#allocation4 + $0xf8] sm:$0x44]
    %v8858 = vunpack.c.l.bf16 %v8842
    %v8859 = vunpack.c.h.bf16 %v8842
    %v8860 = vunpack.c.l.bf16 %v8843
    %v8861 = vunpack.c.h.bf16 %v8843
    %v8862 = vunpack.c.l.bf16 %v8844
    %v8863 = vunpack.c.h.bf16 %v8844
    %v8864 = vunpack.c.l.bf16 %v8845
    %v8865 = vunpack.c.h.bf16 %v8845
    %v8866 = vunpack.c.l.bf16 %v8846
    %v8867 = vunpack.c.h.bf16 %v8846
    %v8868 = vunpack.c.l.bf16 %v8847
    %v8869 = vunpack.c.h.bf16 %v8847
    %v8870 = vunpack.c.l.bf16 %v8848
    %v8871 = vunpack.c.h.bf16 %v8848
    %v8872 = vunpack.c.l.bf16 %v8849
    %v8873 = vunpack.c.h.bf16 %v8849
    %v8874 = vunpack.c.l.bf16 %v8850
    %v8875 = vunpack.c.h.bf16 %v8850
    %v8876 = vunpack.c.l.bf16 %v8851
    %v8877 = vunpack.c.h.bf16 %v8851
    %v8878 = vunpack.c.l.bf16 %v8852
    %v8879 = vunpack.c.h.bf16 %v8852
    %v8880 = vunpack.c.l.bf16 %v8853
    %v8881 = vunpack.c.h.bf16 %v8853
    %v8882 = vunpack.c.l.bf16 %v8854
    %v8883 = vunpack.c.h.bf16 %v8854
    %v8884 = vunpack.c.l.bf16 %v8855
    %v8885 = vunpack.c.h.bf16 %v8855
    %v8886 = vunpack.c.l.bf16 %v8856
    %v8887 = vunpack.c.h.bf16 %v8856
    %v8888 = vunpack.c.l.bf16 %v8857
    %v8889 = vunpack.c.h.bf16 %v8857
    %v8890 = vadd.f32 %v8858, %v140
    %v8891 = vadd.f32 %v8859, %v144
    %v8892 = vadd.f32 %v8860, %v148
    %v8893 = vadd.f32 %v8861, %v152
    %v8894 = vadd.f32 %v8862, %v140
    %v8895 = vadd.f32 %v8863, %v144
    %v8896 = vadd.f32 %v8864, %v148
    %v8897 = vadd.f32 %v8865, %v152
    %v8898 = vadd.f32 %v8866, %v140
    %v8899 = vadd.f32 %v8867, %v144
    %v8900 = vadd.f32 %v8868, %v148
    %v8901 = vadd.f32 %v8869, %v152
    %v8902 = vadd.f32 %v8870, %v140
    %v8903 = vadd.f32 %v8871, %v144
    %v8904 = vadd.f32 %v8872, %v148
    %v8905 = vadd.f32 %v8873, %v152
    %v8906 = vadd.f32 %v8874, %v140
    %v8907 = vadd.f32 %v8875, %v144
    %v8908 = vadd.f32 %v8876, %v148
    %v8909 = vadd.f32 %v8877, %v152
    %v8910 = vadd.f32 %v8878, %v140
    %v8911 = vadd.f32 %v8879, %v144
    %v8912 = vadd.f32 %v8880, %v148
    %v8913 = vadd.f32 %v8881, %v152
    %v8914 = vadd.f32 %v8882, %v140
    %v8915 = vadd.f32 %v8883, %v144
    %v8916 = vadd.f32 %v8884, %v148
    %v8917 = vadd.f32 %v8885, %v152
    %v8918 = vadd.f32 %v8886, %v140
    %v8919 = vadd.f32 %v8887, %v144
    %v8920 = vadd.f32 %v8888, %v148
    %v8921 = vadd.f32 %v8889, %v152
    %v8922 = vpack.c.bf16 %v8840, %v8840
    %v8923 = vld [vmem:[#allocation7] sm:$0xff]
    %v8924 = vld [vmem:[#allocation7 + $0x8] sm:$0xff]
    %v8925 = vld [vmem:[#allocation7 + $0x10] sm:$0xff]
    %v8926 = vld [vmem:[#allocation7 + $0x18] sm:$0xff]
    %v8927 = vld [vmem:[#allocation7 + $0x20] sm:$0xff]
    %v8928 = vld [vmem:[#allocation7 + $0x28] sm:$0xff]
    %v8929 = vld [vmem:[#allocation7 + $0x30] sm:$0xff]
    %v8930 = vld [vmem:[#allocation7 + $0x38] sm:$0xff]
    %v8931 = vld [vmem:[#allocation7 + $0x40] sm:$0xff]
    %v8932 = vld [vmem:[#allocation7 + $0x48] sm:$0xff]
    %v8933 = vld [vmem:[#allocation7 + $0x50] sm:$0xff]
    %v8934 = vld [vmem:[#allocation7 + $0x58] sm:$0xff]
    %v8935 = vld [vmem:[#allocation7 + $0x60] sm:$0xff]
    %v8936 = vld [vmem:[#allocation7 + $0x68] sm:$0xff]
    %v8937 = vld [vmem:[#allocation7 + $0x70] sm:$0xff]
    %v8938 = vld [vmem:[#allocation7 + $0x78] sm:$0xff]
    %v8939 = vld [vmem:[#allocation7 + $0x80] sm:$0xff]
    %v8940 = vld [vmem:[#allocation7 + $0x88] sm:$0xff]
    %v8941 = vld [vmem:[#allocation7 + $0x90] sm:$0xff]
    %v8942 = vld [vmem:[#allocation7 + $0x98] sm:$0xff]
    %v8943 = vld [vmem:[#allocation7 + $0xa0] sm:$0xff]
    %v8944 = vld [vmem:[#allocation7 + $0xa8] sm:$0xff]
    %v8945 = vld [vmem:[#allocation7 + $0xb0] sm:$0xff]
    %v8946 = vld [vmem:[#allocation7 + $0xb8] sm:$0xff]
    %v8947 = vld [vmem:[#allocation7 + $0xc0] sm:$0xff]
    %v8948 = vld [vmem:[#allocation7 + $0xc8] sm:$0xff]
    %v8949 = vld [vmem:[#allocation7 + $0xd0] sm:$0xff]
    %v8950 = vld [vmem:[#allocation7 + $0xd8] sm:$0xff]
    %v8951 = vld [vmem:[#allocation7 + $0xe0] sm:$0xff]
    %v8952 = vld [vmem:[#allocation7 + $0xe8] sm:$0xff]
    %v8953 = vld [vmem:[#allocation7 + $0xf0] sm:$0xff]
    %v8954 = vld [vmem:[#allocation7 + $0xf8] sm:$0xff]
    %v8987 = vunpack.c.l.b16 %v8923
    %v8988 = vunpack.c.h.b16 %v8923
    %v8989 = vunpack.c.l.b16 %v8924
    %v8990 = vunpack.c.h.b16 %v8924
    %v8991 = vunpack.c.l.b16 %v8925
    %v8992 = vunpack.c.h.b16 %v8925
    %v8993 = vunpack.c.l.b16 %v8926
    %v8994 = vunpack.c.h.b16 %v8926
    %v8995 = vunpack.c.l.b16 %v8927
    %v8996 = vunpack.c.h.b16 %v8927
    %v8997 = vunpack.c.l.b16 %v8928
    %v8998 = vunpack.c.h.b16 %v8928
    %v8999 = vunpack.c.l.b16 %v8929
    %v9000 = vunpack.c.h.b16 %v8929
    %v9001 = vunpack.c.l.b16 %v8930
    %v9002 = vunpack.c.h.b16 %v8930
    %v9003 = vunpack.c.l.b16 %v8931
    %v9004 = vunpack.c.h.b16 %v8931
    %v9005 = vunpack.c.l.b16 %v8932
    %v9006 = vunpack.c.h.b16 %v8932
    %v9007 = vunpack.c.l.b16 %v8933
    %v9008 = vunpack.c.h.b16 %v8933
    %v9009 = vunpack.c.l.b16 %v8934
    %v9010 = vunpack.c.h.b16 %v8934
    %v9011 = vunpack.c.l.b16 %v8935
    %v9012 = vunpack.c.h.b16 %v8935
    %v9013 = vunpack.c.l.b16 %v8936
    %v9014 = vunpack.c.h.b16 %v8936
    %v9015 = vunpack.c.l.b16 %v8937
    %v9016 = vunpack.c.h.b16 %v8937
    %v9017 = vunpack.c.l.b16 %v8938
    %v9018 = vunpack.c.h.b16 %v8938
    %v9019 = vunpack.c.l.b16 %v8939
    %v9020 = vunpack.c.h.b16 %v8939
    %v9021 = vunpack.c.l.b16 %v8940
    %v9022 = vunpack.c.h.b16 %v8940
    %v9023 = vunpack.c.l.b16 %v8941
    %v9024 = vunpack.c.h.b16 %v8941
    %v9025 = vunpack.c.l.b16 %v8942
    %v9026 = vunpack.c.h.b16 %v8942
    %v9027 = vunpack.c.l.b16 %v8943
    %v9028 = vunpack.c.h.b16 %v8943
    %v9029 = vunpack.c.l.b16 %v8944
    %v9030 = vunpack.c.h.b16 %v8944
    %v9031 = vunpack.c.l.b16 %v8945
    %v9032 = vunpack.c.h.b16 %v8945
    %v9033 = vunpack.c.l.b16 %v8946
    %v9034 = vunpack.c.h.b16 %v8946
    %v9035 = vunpack.c.l.b16 %v8947
    %v9036 = vunpack.c.h.b16 %v8947
    %v9037 = vunpack.c.l.b16 %v8948
    %v9038 = vunpack.c.h.b16 %v8948
    %v9039 = vunpack.c.l.b16 %v8949
    %v9040 = vunpack.c.h.b16 %v8949
    %v9041 = vunpack.c.l.b16 %v8950
    %v9042 = vunpack.c.h.b16 %v8950
    %v9043 = vunpack.c.l.b16 %v8951
    %v9044 = vunpack.c.h.b16 %v8951
    %v9045 = vunpack.c.l.b16 %v8952
    %v9046 = vunpack.c.h.b16 %v8952
    %v9047 = vunpack.c.l.b16 %v8953
    %v9048 = vunpack.c.h.b16 %v8953
    %v9049 = vunpack.c.l.b16 %v8954
    %v9050 = vunpack.c.h.b16 %v8954
    %v9051 = vpack.c.b16 %v8991, %v8987
    %v9052 = vpack.c.b16 %v8992, %v8988
    %v9053 = vpack.c.b16 %v8993, %v8989
    %v9054 = vpack.c.b16 %v8994, %v8990
    %v9055 = vpack.c.b16 %v8999, %v8995
    %v9056 = vpack.c.b16 %v9000, %v8996
    %v9057 = vpack.c.b16 %v9001, %v8997
    %v9058 = vpack.c.b16 %v9002, %v8998
    %v9059 = vpack.c.b16 %v9007, %v9003
    %v9060 = vpack.c.b16 %v9008, %v9004
    %v9061 = vpack.c.b16 %v9009, %v9005
    %v9062 = vpack.c.b16 %v9010, %v9006
    %v9063 = vpack.c.b16 %v9015, %v9011
    %v9064 = vpack.c.b16 %v9016, %v9012
    %v9065 = vpack.c.b16 %v9017, %v9013
    %v9066 = vpack.c.b16 %v9018, %v9014
    %v9067 = vpack.c.b16 %v9023, %v9019
    %v9068 = vpack.c.b16 %v9024, %v9020
    %v9069 = vpack.c.b16 %v9025, %v9021
    %v9070 = vpack.c.b16 %v9026, %v9022
    %v9071 = vpack.c.b16 %v9031, %v9027
    %v9072 = vpack.c.b16 %v9032, %v9028
    %v9073 = vpack.c.b16 %v9033, %v9029
    %v9074 = vpack.c.b16 %v9034, %v9030
    %v9075 = vpack.c.b16 %v9039, %v9035
    %v9076 = vpack.c.b16 %v9040, %v9036
    %v9077 = vpack.c.b16 %v9041, %v9037
    %v9078 = vpack.c.b16 %v9042, %v9038
    %v9079 = vpack.c.b16 %v9047, %v9043
    %v9080 = vpack.c.b16 %v9048, %v9044
    %v9081 = vpack.c.b16 %v9049, %v9045
    %v9082 = vpack.c.b16 %v9050, %v9046
    %9115 = vmatprep.subr.bf16.mxu0 %v9052
    %9116 = vmatpush1.bf16.msra.mxu0 %v9051
    %9117 = vmatprep.subr.bf16.mxu0 %v9056
    %9118 = vmatpush1.bf16.msra.mxu0 %v9055
    %9119 = vmatprep.subr.bf16.mxu0 %v9060
    %9120 = vmatpush1.bf16.msra.mxu0 %v9059
    %9121 = vmatprep.subr.bf16.mxu0 %v9064
    %9122 = vmatpush1.bf16.msra.mxu0 %v9063
    %9123 = vmatprep.subr.bf16.mxu0 %v9068
    %9124 = vmatpush1.bf16.msra.mxu0 %v9067
    %9125 = vmatprep.subr.bf16.mxu0 %v9072
    %9126 = vmatpush1.bf16.msra.mxu0 %v9071
    %9127 = vmatprep.subr.bf16.mxu0 %v9076
    %9128 = vmatpush1.bf16.msra.mxu0 %v9075
    %9129 = vmatprep.subr.bf16.mxu0 %v9080
    %9130 = vmatpush1.bf16.msra.mxu0 %v9079
    %9131 = vmatprep.subr.bf16.mxu0 0
    %9132 = vmatpush1.bf16.msra.mxu0 0
    %9133 = vmatprep.subr.bf16.mxu0 0
    %9134 = vmatpush1.bf16.msra.mxu0 0
    %9135 = vmatprep.subr.bf16.mxu0 0
    %9136 = vmatpush1.bf16.msra.mxu0 0
    %9137 = vmatprep.subr.bf16.mxu0 0
    %9138 = vmatpush1.bf16.msra.mxu0 0
    %9139 = vmatprep.subr.bf16.mxu0 0
    %9140 = vmatpush1.bf16.msra.mxu0 0
    %9141 = vmatprep.subr.bf16.mxu0 0
    %9142 = vmatpush1.bf16.msra.mxu0 0
    %9143 = vmatprep.subr.bf16.mxu0 0
    %9144 = vmatpush1.bf16.msra.mxu0 0
    %9145 = vmatprep.subr.bf16.mxu0 0
    %9146 = vmatpush1.bf16.msra.mxu0 0
    %9147 = vmatprep.mubr.bf16.mxu0 0
    %9148 = vmatmul.mubr.bf16.gmra.mrb[0].mxu0 %v8922
    %v9149 = vpop.f32.mrb[0].mxu0
    %v9150 = vadd.f32 0.0, %v9149
    %v9151 = vpop.f32.mrb[0].mxu0
    %v9152 = vadd.f32 0.0, %v9151
    %v9153 = vpop.f32.mrb[0].mxu0
    %v9154 = vpop.f32.mrb[0].mxu0
    %9155 = vdwg.mxu0
    %9156 = vmatprep.subr.bf16.mxu0 %v9054
    %9157 = vmatpush1.bf16.msra.mxu0 %v9053
    %9158 = vmatprep.subr.bf16.mxu0 %v9058
    %9159 = vmatpush1.bf16.msra.mxu0 %v9057
    %9160 = vmatprep.subr.bf16.mxu0 %v9062
    %9161 = vmatpush1.bf16.msra.mxu0 %v9061
    %9162 = vmatprep.subr.bf16.mxu0 %v9066
    %9163 = vmatpush1.bf16.msra.mxu0 %v9065
    %9164 = vmatprep.subr.bf16.mxu0 %v9070
    %9165 = vmatpush1.bf16.msra.mxu0 %v9069
    %9166 = vmatprep.subr.bf16.mxu0 %v9074
    %9167 = vmatpush1.bf16.msra.mxu0 %v9073
    %9168 = vmatprep.subr.bf16.mxu0 %v9078
    %9169 = vmatpush1.bf16.msra.mxu0 %v9077
    %9170 = vmatprep.subr.bf16.mxu0 %v9082
    %9171 = vmatpush1.bf16.msra.mxu0 %v9081
    %9172 = vmatprep.subr.bf16.mxu0 0
    %9173 = vmatpush1.bf16.msra.mxu0 0
    %9174 = vmatprep.subr.bf16.mxu0 0
    %9175 = vmatpush1.bf16.msra.mxu0 0
    %9176 = vmatprep.subr.bf16.mxu0 0
    %9177 = vmatpush1.bf16.msra.mxu0 0
    %9178 = vmatprep.subr.bf16.mxu0 0
    %9179 = vmatpush1.bf16.msra.mxu0 0
    %9180 = vmatprep.subr.bf16.mxu0 0
    %9181 = vmatpush1.bf16.msra.mxu0 0
    %9182 = vmatprep.subr.bf16.mxu0 0
    %9183 = vmatpush1.bf16.msra.mxu0 0
    %9184 = vmatprep.subr.bf16.mxu0 0
    %9185 = vmatpush1.bf16.msra.mxu0 0
    %9186 = vmatprep.subr.bf16.mxu0 0
    %9187 = vmatpush1.bf16.msra.mxu0 0
    %9188 = vmatprep.mubr.bf16.mxu0 0
    %9189 = vmatmul.mubr.bf16.gmra.mrb[0].mxu0 %v8922
    %v9190 = vpop.f32.mrb[0].mxu0
    %v9191 = vadd.f32 0.0, %v9190
    %v9192 = vpop.f32.mrb[0].mxu0
    %v9193 = vadd.f32 0.0, %v9192
    %v9194 = vpop.f32.mrb[0].mxu0
    %v9195 = vpop.f32.mrb[0].mxu0
    %9196 = vdwg.mxu0
    %v9201 = vrot.slane %v9150, 3
    %v9202 = vrot.slane %v9152, 3
    %v9203 = vrot.slane %v9191, 3
    %v9204 = vrot.slane %v9193, 3
    %v9205 = vrot.slane %v9150, 4
    %v9206 = vrot.slane %v9152, 4
    %v9207 = vrot.slane %v9191, 4
    %v9208 = vrot.slane %v9193, 4
    %v9209 = vrot.slane %v9150, 5
    %v9210 = vrot.slane %v9152, 5
    %v9211 = vrot.slane %v9191, 5
    %v9212 = vrot.slane %v9193, 5
    %v9213 = vrot.slane %v9150, 6
    %v9214 = vrot.slane %v9152, 6
    %v9215 = vrot.slane %v9191, 6
    %v9216 = vrot.slane %v9193, 6
    %v9217 = vrot.slane %v9150, 7
    %v9218 = vrot.slane %v9152, 7
    %v9219 = vrot.slane %v9191, 7
    %v9220 = vrot.slane %v9193, 7
    %v9221 = vrot.slane %v9150, 1
    %v9222 = vrot.slane %v9152, 1
    %v9223 = vrot.slane %v9191, 1
    %v9224 = vrot.slane %v9193, 1
    %v9225 = vrot.slane %v9150, 2
    %v9226 = vrot.slane %v9152, 2
    %v9227 = vrot.slane %v9191, 2
    %v9228 = vrot.slane %v9193, 2
    %v9261 = vadd.f32 %v8890, %v9201
    %v9262 = vadd.f32 %v8891, %v9202
    %v9263 = vadd.f32 %v8892, %v9203
    %v9264 = vadd.f32 %v8893, %v9204
    %v9265 = vadd.f32 %v8894, %v9205
    %v9266 = vadd.f32 %v8895, %v9206
    %v9267 = vadd.f32 %v8896, %v9207
    %v9268 = vadd.f32 %v8897, %v9208
    %v9269 = vadd.f32 %v8898, %v9209
    %v9270 = vadd.f32 %v8899, %v9210
    %v9271 = vadd.f32 %v8900, %v9211
    %v9272 = vadd.f32 %v8901, %v9212
    %v9273 = vadd.f32 %v8902, %v9213
    %v9274 = vadd.f32 %v8903, %v9214
    %v9275 = vadd.f32 %v8904, %v9215
    %v9276 = vadd.f32 %v8905, %v9216
    %v9277 = vadd.f32 %v8906, %v9217
    %v9278 = vadd.f32 %v8907, %v9218
    %v9279 = vadd.f32 %v8908, %v9219
    %v9280 = vadd.f32 %v8909, %v9220
    %v9281 = vadd.f32 %v8910, %v9150
    %v9282 = vadd.f32 %v8911, %v9152
    %v9283 = vadd.f32 %v8912, %v9191
    %v9284 = vadd.f32 %v8913, %v9193
    %v9285 = vadd.f32 %v8914, %v9221
    %v9286 = vadd.f32 %v8915, %v9222
    %v9287 = vadd.f32 %v8916, %v9223
    %v9288 = vadd.f32 %v8917, %v9224
    %v9289 = vadd.f32 %v8918, %v9225
    %v9290 = vadd.f32 %v8919, %v9226
    %v9291 = vadd.f32 %v8920, %v9227
    %v9292 = vadd.f32 %v8921, %v9228
    %v9293 = vmul.f32 %v9261, 0.5
    %v9294 = vmul.f32 %v9265, 0.5
    %v9295 = vmul.f32 %v9269, 0.5
    %v9296 = vmul.f32 %v9273, 0.5
    %v9297 = vmul.f32 %v9277, 0.5
    %v9298 = vmul.f32 %v9281, 0.5
    %v9299 = vmul.f32 %v9285, 0.5
    %v9300 = vmul.f32 %v9289, 0.5
    %v9301 = vtanh.pop %v9293
    %v9302 = vtanh.pop %v9294
    %v9303 = vtanh.pop %v9295
    %v9304 = vtanh.pop %v9296
    %v9305 = vtanh.pop %v9297
    %v9306 = vtanh.pop %v9298
    %v9307 = vtanh.pop %v9299
    %v9308 = vtanh.pop %v9300
    %v9309 = vmul.f32 %v9301, 0.5
    %v9310 = vmul.f32 %v9302, 0.5
    %v9311 = vmul.f32 %v9303, 0.5
    %v9312 = vmul.f32 %v9304, 0.5
    %v9313 = vmul.f32 %v9305, 0.5
    %v9314 = vmul.f32 %v9306, 0.5
    %v9315 = vmul.f32 %v9307, 0.5
    %v9316 = vmul.f32 %v9308, 0.5
    %v9317 = vadd.f32 %v9309, 0.5
    %v9318 = vadd.f32 %v9310, 0.5
    %v9319 = vadd.f32 %v9311, 0.5
    %v9320 = vadd.f32 %v9312, 0.5
    %v9321 = vadd.f32 %v9313, 0.5
    %v9322 = vadd.f32 %v9314, 0.5
    %v9323 = vadd.f32 %v9315, 0.5
    %v9324 = vadd.f32 %v9316, 0.5
    %v9325 = vmul.f32 %v9262, 0.5
    %v9326 = vmul.f32 %v9266, 0.5
    %v9327 = vmul.f32 %v9270, 0.5
    %v9328 = vmul.f32 %v9274, 0.5
    %v9329 = vmul.f32 %v9278, 0.5
    %v9330 = vmul.f32 %v9282, 0.5
    %v9331 = vmul.f32 %v9286, 0.5
    %v9332 = vmul.f32 %v9290, 0.5
    %v9333 = vtanh.pop %v9325
    %v9334 = vtanh.pop %v9326
    %v9335 = vtanh.pop %v9327
    %v9336 = vtanh.pop %v9328
    %v9337 = vtanh.pop %v9329
    %v9338 = vtanh.pop %v9330
    %v9339 = vtanh.pop %v9331
    %v9340 = vtanh.pop %v9332
    %v9341 = vmul.f32 %v9333, 0.5
    %v9342 = vmul.f32 %v9334, 0.5
    %v9343 = vmul.f32 %v9335, 0.5
    %v9344 = vmul.f32 %v9336, 0.5
    %v9345 = vmul.f32 %v9337, 0.5
    %v9346 = vmul.f32 %v9338, 0.5
    %v9347 = vmul.f32 %v9339, 0.5
    %v9348 = vmul.f32 %v9340, 0.5
    %v9349 = vadd.f32 %v9341, 0.5
    %v9350 = vadd.f32 %v9342, 0.5
    %v9351 = vadd.f32 %v9343, 0.5
    %v9352 = vadd.f32 %v9344, 0.5
    %v9353 = vadd.f32 %v9345, 0.5
    %v9354 = vadd.f32 %v9346, 0.5
    %v9355 = vadd.f32 %v9347, 0.5
    %v9356 = vadd.f32 %v9348, 0.5
    %v9357 = vtanh.pop %v9263
    %v9358 = vtanh.pop %v9267
    %v9359 = vtanh.pop %v9271
    %v9360 = vtanh.pop %v9275
    %v9361 = vtanh.pop %v9279
    %v9362 = vtanh.pop %v9283
    %v9363 = vtanh.pop %v9287
    %v9364 = vtanh.pop %v9291
    %v9365 = vmul.f32 %v9264, 0.5
    %v9366 = vmul.f32 %v9268, 0.5
    %v9367 = vmul.f32 %v9272, 0.5
    %v9368 = vmul.f32 %v9276, 0.5
    %v9369 = vmul.f32 %v9280, 0.5
    %v9370 = vmul.f32 %v9284, 0.5
    %v9371 = vmul.f32 %v9288, 0.5
    %v9372 = vmul.f32 %v9292, 0.5
    %v9373 = vtanh.pop %v9365
    %v9374 = vtanh.pop %v9366
    %v9375 = vtanh.pop %v9367
    %v9376 = vtanh.pop %v9368
    %v9377 = vtanh.pop %v9369
    %v9378 = vtanh.pop %v9370
    %v9379 = vtanh.pop %v9371
    %v9380 = vtanh.pop %v9372
    %v9381 = vmul.f32 %v9373, 0.5
    %v9382 = vmul.f32 %v9374, 0.5
    %v9383 = vmul.f32 %v9375, 0.5
    %v9384 = vmul.f32 %v9376, 0.5
    %v9385 = vmul.f32 %v9377, 0.5
    %v9386 = vmul.f32 %v9378, 0.5
    %v9387 = vmul.f32 %v9379, 0.5
    %v9388 = vmul.f32 %v9380, 0.5
    %v9389 = vadd.f32 %v9381, 0.5
    %v9390 = vadd.f32 %v9382, 0.5
    %v9391 = vadd.f32 %v9383, 0.5
    %v9392 = vadd.f32 %v9384, 0.5
    %v9393 = vadd.f32 %v9385, 0.5
    %v9394 = vadd.f32 %v9386, 0.5
    %v9395 = vadd.f32 %v9387, 0.5
    %v9396 = vadd.f32 %v9388, 0.5
    %v9398 = vrot.slane %v8841, 3
    %v9399 = vrot.slane %v8841, 4
    %v9400 = vrot.slane %v8841, 5
    %v9401 = vrot.slane %v8841, 6
    %v9402 = vrot.slane %v8841, 7
    %v9403 = vrot.slane %v8841, 1
    %v9404 = vrot.slane %v8841, 2
    %v9413 = vmul.f32 %v9349, %v9398
    %v9414 = vmul.f32 %v9350, %v9399
    %v9415 = vmul.f32 %v9351, %v9400
    %v9416 = vmul.f32 %v9352, %v9401
    %v9417 = vmul.f32 %v9353, %v9402
    %v9418 = vmul.f32 %v9354, %v8841
    %v9419 = vmul.f32 %v9355, %v9403
    %v9420 = vmul.f32 %v9356, %v9404
    %v9421 = vmul.f32 %v9317, %v9357
    %v9422 = vmul.f32 %v9318, %v9358
    %v9423 = vmul.f32 %v9319, %v9359
    %v9424 = vmul.f32 %v9320, %v9360
    %v9425 = vmul.f32 %v9321, %v9361
    %v9426 = vmul.f32 %v9322, %v9362
    %v9427 = vmul.f32 %v9323, %v9363
    %v9428 = vmul.f32 %v9324, %v9364
    %v9429 = vadd.f32 %v9413, %v9421
    %v9430 = vadd.f32 %v9414, %v9422
    %v9431 = vadd.f32 %v9415, %v9423
    %v9432 = vadd.f32 %v9416, %v9424
    %v9433 = vadd.f32 %v9417, %v9425
    %v9434 = vadd.f32 %v9418, %v9426
    %v9435 = vadd.f32 %v9419, %v9427
    %v9436 = vadd.f32 %v9420, %v9428
    %v9437 = vtanh.pop %v9429
    %v9438 = vtanh.pop %v9430
    %v9439 = vtanh.pop %v9431
    %v9440 = vtanh.pop %v9432
    %v9441 = vtanh.pop %v9433
    %v9442 = vtanh.pop %v9434
    %v9443 = vtanh.pop %v9435
    %v9444 = vtanh.pop %v9436
    %v9445 = vmul.f32 %v9389, %v9437
    %v9446 = vmul.f32 %v9390, %v9438
    %v9447 = vmul.f32 %v9391, %v9439
    %v9448 = vmul.f32 %v9392, %v9440
    %v9449 = vmul.f32 %v9393, %v9441
    %v9450 = vmul.f32 %v9394, %v9442
    %v9451 = vmul.f32 %v9395, %v9443
    %v9452 = vmul.f32 %v9396, %v9444
    %v9461 = vrot.slane %v9446, 7
    %v9462 = vsel %vm744, %v9461, %v9445
    %v9463 = vrot.slane %v9447, 6
    %v9464 = vsel %vm747, %v9463, %v9462
    %v9465 = vrot.slane %v9448, 5
    %v9466 = vrot.slane %v9449, 4
    %v9467 = vsel %vm729, %v9466, %v9465
    %v9468 = vrot.slane %v9450, 3
    %v9469 = vsel %vm732, %v9468, %v9467
    %v9470 = vrot.slane %v9451, 2
    %v9471 = vsel %vm735, %v9470, %v9469
    %v9472 = vrot.slane %v9452, 1
    %v9473 = vsel %vm738, %v9472, %v9471
    %9476 = vst [vmem:[#allocation2 - $0x5] sm:$0xe0] %v9464
    %9477 = vst [vmem:[#allocation2 + $0x3] sm:$0x1f] %v9473
    %v9486 = vrot.slane %v9430, 7
    %v9487 = vsel %vm744, %v9486, %v9429
    %v9488 = vrot.slane %v9431, 6
    %v9489 = vsel %vm747, %v9488, %v9487
    %v9490 = vrot.slane %v9432, 5
    %v9491 = vrot.slane %v9433, 4
    %v9492 = vsel %vm729, %v9491, %v9490
    %v9493 = vrot.slane %v9434, 3
    %v9494 = vsel %vm732, %v9493, %v9492
    %v9495 = vrot.slane %v9435, 2
    %v9496 = vsel %vm735, %v9495, %v9494
    %v9497 = vrot.slane %v9436, 1
    %v9498 = vsel %vm738, %v9497, %v9496
    %9501 = vst [vmem:[#allocation3 - $0x5] sm:$0xe0] %v9489
    %9502 = vst [vmem:[#allocation3 + $0x3] sm:$0x1f] %v9498
    %9503 = vst [vmem:[#allocation12 + $0x8] sm:$0x20] %v9445
    %9504 = vst [vmem:[#allocation12 + $0x18] sm:$0x20] %v9446
    %9505 = vst [vmem:[#allocation12 + $0x28] sm:$0x20] %v9447
    %9506 = vst [vmem:[#allocation12 + $0x38] sm:$0x20] %v9448
    %9507 = vst [vmem:[#allocation12 + $0x48] sm:$0x20] %v9449
    %9508 = vst [vmem:[#allocation12 + $0x58] sm:$0x20] %v9450
    %9509 = vst [vmem:[#allocation12 + $0x68] sm:$0x20] %v9451
    %9510 = vst [vmem:[#allocation12 + $0x78] sm:$0x20] %v9452
    %v9511 = vld [vmem:[#allocation2] sm:$0xff]
    %v9512 = vld [vmem:[#allocation3] sm:$0xff]
    %v9513 = vld [vmem:[#allocation4 + $0x10] sm:$0x88]
    %v9514 = vld [vmem:[#allocation4 + $0x18] sm:$0x88]
    %v9515 = vld [vmem:[#allocation4 + $0x30] sm:$0x88]
    %v9516 = vld [vmem:[#allocation4 + $0x38] sm:$0x88]
    %v9517 = vld [vmem:[#allocation4 + $0x50] sm:$0x88]
    %v9518 = vld [vmem:[#allocation4 + $0x58] sm:$0x88]
    %v9519 = vld [vmem:[#allocation4 + $0x70] sm:$0x88]
    %v9520 = vld [vmem:[#allocation4 + $0x78] sm:$0x88]
    %v9521 = vld [vmem:[#allocation4 + $0x90] sm:$0x88]
    %v9522 = vld [vmem:[#allocation4 + $0x98] sm:$0x88]
    %v9523 = vld [vmem:[#allocation4 + $0xb0] sm:$0x88]
    %v9524 = vld [vmem:[#allocation4 + $0xb8] sm:$0x88]
    %v9525 = vld [vmem:[#allocation4 + $0xd0] sm:$0x88]
    %v9526 = vld [vmem:[#allocation4 + $0xd8] sm:$0x88]
    %v9527 = vld [vmem:[#allocation4 + $0xf0] sm:$0x88]
    %v9528 = vld [vmem:[#allocation4 + $0xf8] sm:$0x88]
    %v9529 = vunpack.c.l.bf16 %v9513
    %v9530 = vunpack.c.h.bf16 %v9513
    %v9531 = vunpack.c.l.bf16 %v9514
    %v9532 = vunpack.c.h.bf16 %v9514
    %v9533 = vunpack.c.l.bf16 %v9515
    %v9534 = vunpack.c.h.bf16 %v9515
    %v9535 = vunpack.c.l.bf16 %v9516
    %v9536 = vunpack.c.h.bf16 %v9516
    %v9537 = vunpack.c.l.bf16 %v9517
    %v9538 = vunpack.c.h.bf16 %v9517
    %v9539 = vunpack.c.l.bf16 %v9518
    %v9540 = vunpack.c.h.bf16 %v9518
    %v9541 = vunpack.c.l.bf16 %v9519
    %v9542 = vunpack.c.h.bf16 %v9519
    %v9543 = vunpack.c.l.bf16 %v9520
    %v9544 = vunpack.c.h.bf16 %v9520
    %v9545 = vunpack.c.l.bf16 %v9521
    %v9546 = vunpack.c.h.bf16 %v9521
    %v9547 = vunpack.c.l.bf16 %v9522
    %v9548 = vunpack.c.h.bf16 %v9522
    %v9549 = vunpack.c.l.bf16 %v9523
    %v9550 = vunpack.c.h.bf16 %v9523
    %v9551 = vunpack.c.l.bf16 %v9524
    %v9552 = vunpack.c.h.bf16 %v9524
    %v9553 = vunpack.c.l.bf16 %v9525
    %v9554 = vunpack.c.h.bf16 %v9525
    %v9555 = vunpack.c.l.bf16 %v9526
    %v9556 = vunpack.c.h.bf16 %v9526
    %v9557 = vunpack.c.l.bf16 %v9527
    %v9558 = vunpack.c.h.bf16 %v9527
    %v9559 = vunpack.c.l.bf16 %v9528
    %v9560 = vunpack.c.h.bf16 %v9528
    %v9561 = vadd.f32 %v9529, %v140
    %v9562 = vadd.f32 %v9530, %v144
    %v9563 = vadd.f32 %v9531, %v148
    %v9564 = vadd.f32 %v9532, %v152
    %v9565 = vadd.f32 %v9533, %v140
    %v9566 = vadd.f32 %v9534, %v144
    %v9567 = vadd.f32 %v9535, %v148
    %v9568 = vadd.f32 %v9536, %v152
    %v9569 = vadd.f32 %v9537, %v140
    %v9570 = vadd.f32 %v9538, %v144
    %v9571 = vadd.f32 %v9539, %v148
    %v9572 = vadd.f32 %v9540, %v152
    %v9573 = vadd.f32 %v9541, %v140
    %v9574 = vadd.f32 %v9542, %v144
    %v9575 = vadd.f32 %v9543, %v148
    %v9576 = vadd.f32 %v9544, %v152
    %v9577 = vadd.f32 %v9545, %v140
    %v9578 = vadd.f32 %v9546, %v144
    %v9579 = vadd.f32 %v9547, %v148
    %v9580 = vadd.f32 %v9548, %v152
    %v9581 = vadd.f32 %v9549, %v140
    %v9582 = vadd.f32 %v9550, %v144
    %v9583 = vadd.f32 %v9551, %v148
    %v9584 = vadd.f32 %v9552, %v152
    %v9585 = vadd.f32 %v9553, %v140
    %v9586 = vadd.f32 %v9554, %v144
    %v9587 = vadd.f32 %v9555, %v148
    %v9588 = vadd.f32 %v9556, %v152
    %v9589 = vadd.f32 %v9557, %v140
    %v9590 = vadd.f32 %v9558, %v144
    %v9591 = vadd.f32 %v9559, %v148
    %v9592 = vadd.f32 %v9560, %v152
    %v9593 = vpack.c.bf16 %v9511, %v9511
    %v9594 = vld [vmem:[#allocation7] sm:$0xff]
    %v9595 = vld [vmem:[#allocation7 + $0x8] sm:$0xff]
    %v9596 = vld [vmem:[#allocation7 + $0x10] sm:$0xff]
    %v9597 = vld [vmem:[#allocation7 + $0x18] sm:$0xff]
    %v9598 = vld [vmem:[#allocation7 + $0x20] sm:$0xff]
    %v9599 = vld [vmem:[#allocation7 + $0x28] sm:$0xff]
    %v9600 = vld [vmem:[#allocation7 + $0x30] sm:$0xff]
    %v9601 = vld [vmem:[#allocation7 + $0x38] sm:$0xff]
    %v9602 = vld [vmem:[#allocation7 + $0x40] sm:$0xff]
    %v9603 = vld [vmem:[#allocation7 + $0x48] sm:$0xff]
    %v9604 = vld [vmem:[#allocation7 + $0x50] sm:$0xff]
    %v9605 = vld [vmem:[#allocation7 + $0x58] sm:$0xff]
    %v9606 = vld [vmem:[#allocation7 + $0x60] sm:$0xff]
    %v9607 = vld [vmem:[#allocation7 + $0x68] sm:$0xff]
    %v9608 = vld [vmem:[#allocation7 + $0x70] sm:$0xff]
    %v9609 = vld [vmem:[#allocation7 + $0x78] sm:$0xff]
    %v9610 = vld [vmem:[#allocation7 + $0x80] sm:$0xff]
    %v9611 = vld [vmem:[#allocation7 + $0x88] sm:$0xff]
    %v9612 = vld [vmem:[#allocation7 + $0x90] sm:$0xff]
    %v9613 = vld [vmem:[#allocation7 + $0x98] sm:$0xff]
    %v9614 = vld [vmem:[#allocation7 + $0xa0] sm:$0xff]
    %v9615 = vld [vmem:[#allocation7 + $0xa8] sm:$0xff]
    %v9616 = vld [vmem:[#allocation7 + $0xb0] sm:$0xff]
    %v9617 = vld [vmem:[#allocation7 + $0xb8] sm:$0xff]
    %v9618 = vld [vmem:[#allocation7 + $0xc0] sm:$0xff]
    %v9619 = vld [vmem:[#allocation7 + $0xc8] sm:$0xff]
    %v9620 = vld [vmem:[#allocation7 + $0xd0] sm:$0xff]
    %v9621 = vld [vmem:[#allocation7 + $0xd8] sm:$0xff]
    %v9622 = vld [vmem:[#allocation7 + $0xe0] sm:$0xff]
    %v9623 = vld [vmem:[#allocation7 + $0xe8] sm:$0xff]
    %v9624 = vld [vmem:[#allocation7 + $0xf0] sm:$0xff]
    %v9625 = vld [vmem:[#allocation7 + $0xf8] sm:$0xff]
    %v9658 = vunpack.c.l.b16 %v9594
    %v9659 = vunpack.c.h.b16 %v9594
    %v9660 = vunpack.c.l.b16 %v9595
    %v9661 = vunpack.c.h.b16 %v9595
    %v9662 = vunpack.c.l.b16 %v9596
    %v9663 = vunpack.c.h.b16 %v9596
    %v9664 = vunpack.c.l.b16 %v9597
    %v9665 = vunpack.c.h.b16 %v9597
    %v9666 = vunpack.c.l.b16 %v9598
    %v9667 = vunpack.c.h.b16 %v9598
    %v9668 = vunpack.c.l.b16 %v9599
    %v9669 = vunpack.c.h.b16 %v9599
    %v9670 = vunpack.c.l.b16 %v9600
    %v9671 = vunpack.c.h.b16 %v9600
    %v9672 = vunpack.c.l.b16 %v9601
    %v9673 = vunpack.c.h.b16 %v9601
    %v9674 = vunpack.c.l.b16 %v9602
    %v9675 = vunpack.c.h.b16 %v9602
    %v9676 = vunpack.c.l.b16 %v9603
    %v9677 = vunpack.c.h.b16 %v9603
    %v9678 = vunpack.c.l.b16 %v9604
    %v9679 = vunpack.c.h.b16 %v9604
    %v9680 = vunpack.c.l.b16 %v9605
    %v9681 = vunpack.c.h.b16 %v9605
    %v9682 = vunpack.c.l.b16 %v9606
    %v9683 = vunpack.c.h.b16 %v9606
    %v9684 = vunpack.c.l.b16 %v9607
    %v9685 = vunpack.c.h.b16 %v9607
    %v9686 = vunpack.c.l.b16 %v9608
    %v9687 = vunpack.c.h.b16 %v9608
    %v9688 = vunpack.c.l.b16 %v9609
    %v9689 = vunpack.c.h.b16 %v9609
    %v9690 = vunpack.c.l.b16 %v9610
    %v9691 = vunpack.c.h.b16 %v9610
    %v9692 = vunpack.c.l.b16 %v9611
    %v9693 = vunpack.c.h.b16 %v9611
    %v9694 = vunpack.c.l.b16 %v9612
    %v9695 = vunpack.c.h.b16 %v9612
    %v9696 = vunpack.c.l.b16 %v9613
    %v9697 = vunpack.c.h.b16 %v9613
    %v9698 = vunpack.c.l.b16 %v9614
    %v9699 = vunpack.c.h.b16 %v9614
    %v9700 = vunpack.c.l.b16 %v9615
    %v9701 = vunpack.c.h.b16 %v9615
    %v9702 = vunpack.c.l.b16 %v9616
    %v9703 = vunpack.c.h.b16 %v9616
    %v9704 = vunpack.c.l.b16 %v9617
    %v9705 = vunpack.c.h.b16 %v9617
    %v9706 = vunpack.c.l.b16 %v9618
    %v9707 = vunpack.c.h.b16 %v9618
    %v9708 = vunpack.c.l.b16 %v9619
    %v9709 = vunpack.c.h.b16 %v9619
    %v9710 = vunpack.c.l.b16 %v9620
    %v9711 = vunpack.c.h.b16 %v9620
    %v9712 = vunpack.c.l.b16 %v9621
    %v9713 = vunpack.c.h.b16 %v9621
    %v9714 = vunpack.c.l.b16 %v9622
    %v9715 = vunpack.c.h.b16 %v9622
    %v9716 = vunpack.c.l.b16 %v9623
    %v9717 = vunpack.c.h.b16 %v9623
    %v9718 = vunpack.c.l.b16 %v9624
    %v9719 = vunpack.c.h.b16 %v9624
    %v9720 = vunpack.c.l.b16 %v9625
    %v9721 = vunpack.c.h.b16 %v9625
    %v9722 = vpack.c.b16 %v9662, %v9658
    %v9723 = vpack.c.b16 %v9663, %v9659
    %v9724 = vpack.c.b16 %v9664, %v9660
    %v9725 = vpack.c.b16 %v9665, %v9661
    %v9726 = vpack.c.b16 %v9670, %v9666
    %v9727 = vpack.c.b16 %v9671, %v9667
    %v9728 = vpack.c.b16 %v9672, %v9668
    %v9729 = vpack.c.b16 %v9673, %v9669
    %v9730 = vpack.c.b16 %v9678, %v9674
    %v9731 = vpack.c.b16 %v9679, %v9675
    %v9732 = vpack.c.b16 %v9680, %v9676
    %v9733 = vpack.c.b16 %v9681, %v9677
    %v9734 = vpack.c.b16 %v9686, %v9682
    %v9735 = vpack.c.b16 %v9687, %v9683
    %v9736 = vpack.c.b16 %v9688, %v9684
    %v9737 = vpack.c.b16 %v9689, %v9685
    %v9738 = vpack.c.b16 %v9694, %v9690
    %v9739 = vpack.c.b16 %v9695, %v9691
    %v9740 = vpack.c.b16 %v9696, %v9692
    %v9741 = vpack.c.b16 %v9697, %v9693
    %v9742 = vpack.c.b16 %v9702, %v9698
    %v9743 = vpack.c.b16 %v9703, %v9699
    %v9744 = vpack.c.b16 %v9704, %v9700
    %v9745 = vpack.c.b16 %v9705, %v9701
    %v9746 = vpack.c.b16 %v9710, %v9706
    %v9747 = vpack.c.b16 %v9711, %v9707
    %v9748 = vpack.c.b16 %v9712, %v9708
    %v9749 = vpack.c.b16 %v9713, %v9709
    %v9750 = vpack.c.b16 %v9718, %v9714
    %v9751 = vpack.c.b16 %v9719, %v9715
    %v9752 = vpack.c.b16 %v9720, %v9716
    %v9753 = vpack.c.b16 %v9721, %v9717
    %9786 = vmatprep.subr.bf16.mxu0 %v9723
    %9787 = vmatpush1.bf16.msra.mxu0 %v9722
    %9788 = vmatprep.subr.bf16.mxu0 %v9727
    %9789 = vmatpush1.bf16.msra.mxu0 %v9726
    %9790 = vmatprep.subr.bf16.mxu0 %v9731
    %9791 = vmatpush1.bf16.msra.mxu0 %v9730
    %9792 = vmatprep.subr.bf16.mxu0 %v9735
    %9793 = vmatpush1.bf16.msra.mxu0 %v9734
    %9794 = vmatprep.subr.bf16.mxu0 %v9739
    %9795 = vmatpush1.bf16.msra.mxu0 %v9738
    %9796 = vmatprep.subr.bf16.mxu0 %v9743
    %9797 = vmatpush1.bf16.msra.mxu0 %v9742
    %9798 = vmatprep.subr.bf16.mxu0 %v9747
    %9799 = vmatpush1.bf16.msra.mxu0 %v9746
    %9800 = vmatprep.subr.bf16.mxu0 %v9751
    %9801 = vmatpush1.bf16.msra.mxu0 %v9750
    %9802 = vmatprep.subr.bf16.mxu0 0
    %9803 = vmatpush1.bf16.msra.mxu0 0
    %9804 = vmatprep.subr.bf16.mxu0 0
    %9805 = vmatpush1.bf16.msra.mxu0 0
    %9806 = vmatprep.subr.bf16.mxu0 0
    %9807 = vmatpush1.bf16.msra.mxu0 0
    %9808 = vmatprep.subr.bf16.mxu0 0
    %9809 = vmatpush1.bf16.msra.mxu0 0
    %9810 = vmatprep.subr.bf16.mxu0 0
    %9811 = vmatpush1.bf16.msra.mxu0 0
    %9812 = vmatprep.subr.bf16.mxu0 0
    %9813 = vmatpush1.bf16.msra.mxu0 0
    %9814 = vmatprep.subr.bf16.mxu0 0
    %9815 = vmatpush1.bf16.msra.mxu0 0
    %9816 = vmatprep.subr.bf16.mxu0 0
    %9817 = vmatpush1.bf16.msra.mxu0 0
    %9818 = vmatprep.mubr.bf16.mxu0 0
    %9819 = vmatmul.mubr.bf16.gmra.mrb[0].mxu0 %v9593
    %v9820 = vpop.f32.mrb[0].mxu0
    %v9821 = vadd.f32 0.0, %v9820
    %v9822 = vpop.f32.mrb[0].mxu0
    %v9823 = vadd.f32 0.0, %v9822
    %v9824 = vpop.f32.mrb[0].mxu0
    %v9825 = vpop.f32.mrb[0].mxu0
    %9826 = vdwg.mxu0
    %9827 = vmatprep.subr.bf16.mxu0 %v9725
    %9828 = vmatpush1.bf16.msra.mxu0 %v9724
    %9829 = vmatprep.subr.bf16.mxu0 %v9729
    %9830 = vmatpush1.bf16.msra.mxu0 %v9728
    %9831 = vmatprep.subr.bf16.mxu0 %v9733
    %9832 = vmatpush1.bf16.msra.mxu0 %v9732
    %9833 = vmatprep.subr.bf16.mxu0 %v9737
    %9834 = vmatpush1.bf16.msra.mxu0 %v9736
    %9835 = vmatprep.subr.bf16.mxu0 %v9741
    %9836 = vmatpush1.bf16.msra.mxu0 %v9740
    %9837 = vmatprep.subr.bf16.mxu0 %v9745
    %9838 = vmatpush1.bf16.msra.mxu0 %v9744
    %9839 = vmatprep.subr.bf16.mxu0 %v9749
    %9840 = vmatpush1.bf16.msra.mxu0 %v9748
    %9841 = vmatprep.subr.bf16.mxu0 %v9753
    %9842 = vmatpush1.bf16.msra.mxu0 %v9752
    %9843 = vmatprep.subr.bf16.mxu0 0
    %9844 = vmatpush1.bf16.msra.mxu0 0
    %9845 = vmatprep.subr.bf16.mxu0 0
    %9846 = vmatpush1.bf16.msra.mxu0 0
    %9847 = vmatprep.subr.bf16.mxu0 0
    %9848 = vmatpush1.bf16.msra.mxu0 0
    %9849 = vmatprep.subr.bf16.mxu0 0
    %9850 = vmatpush1.bf16.msra.mxu0 0
    %9851 = vmatprep.subr.bf16.mxu0 0
    %9852 = vmatpush1.bf16.msra.mxu0 0
    %9853 = vmatprep.subr.bf16.mxu0 0
    %9854 = vmatpush1.bf16.msra.mxu0 0
    %9855 = vmatprep.subr.bf16.mxu0 0
    %9856 = vmatpush1.bf16.msra.mxu0 0
    %9857 = vmatprep.subr.bf16.mxu0 0
    %9858 = vmatpush1.bf16.msra.mxu0 0
    %9859 = vmatprep.mubr.bf16.mxu0 0
    %9860 = vmatmul.mubr.bf16.gmra.mrb[0].mxu0 %v9593
    %v9861 = vpop.f32.mrb[0].mxu0
    %v9862 = vadd.f32 0.0, %v9861
    %v9863 = vpop.f32.mrb[0].mxu0
    %v9864 = vadd.f32 0.0, %v9863
    %v9865 = vpop.f32.mrb[0].mxu0
    %v9866 = vpop.f32.mrb[0].mxu0
    %9867 = vdwg.mxu0
    %v9872 = vrot.slane %v9821, 2
    %v9873 = vrot.slane %v9823, 2
    %v9874 = vrot.slane %v9862, 2
    %v9875 = vrot.slane %v9864, 2
    %v9876 = vrot.slane %v9821, 3
    %v9877 = vrot.slane %v9823, 3
    %v9878 = vrot.slane %v9862, 3
    %v9879 = vrot.slane %v9864, 3
    %v9880 = vrot.slane %v9821, 4
    %v9881 = vrot.slane %v9823, 4
    %v9882 = vrot.slane %v9862, 4
    %v9883 = vrot.slane %v9864, 4
    %v9884 = vrot.slane %v9821, 5
    %v9885 = vrot.slane %v9823, 5
    %v9886 = vrot.slane %v9862, 5
    %v9887 = vrot.slane %v9864, 5
    %v9888 = vrot.slane %v9821, 6
    %v9889 = vrot.slane %v9823, 6
    %v9890 = vrot.slane %v9862, 6
    %v9891 = vrot.slane %v9864, 6
    %v9892 = vrot.slane %v9821, 7
    %v9893 = vrot.slane %v9823, 7
    %v9894 = vrot.slane %v9862, 7
    %v9895 = vrot.slane %v9864, 7
    %v9896 = vrot.slane %v9821, 1
    %v9897 = vrot.slane %v9823, 1
    %v9898 = vrot.slane %v9862, 1
    %v9899 = vrot.slane %v9864, 1
    %v9932 = vadd.f32 %v9561, %v9872
    %v9933 = vadd.f32 %v9562, %v9873
    %v9934 = vadd.f32 %v9563, %v9874
    %v9935 = vadd.f32 %v9564, %v9875
    %v9936 = vadd.f32 %v9565, %v9876
    %v9937 = vadd.f32 %v9566, %v9877
    %v9938 = vadd.f32 %v9567, %v9878
    %v9939 = vadd.f32 %v9568, %v9879
    %v9940 = vadd.f32 %v9569, %v9880
    %v9941 = vadd.f32 %v9570, %v9881
    %v9942 = vadd.f32 %v9571, %v9882
    %v9943 = vadd.f32 %v9572, %v9883
    %v9944 = vadd.f32 %v9573, %v9884
    %v9945 = vadd.f32 %v9574, %v9885
    %v9946 = vadd.f32 %v9575, %v9886
    %v9947 = vadd.f32 %v9576, %v9887
    %v9948 = vadd.f32 %v9577, %v9888
    %v9949 = vadd.f32 %v9578, %v9889
    %v9950 = vadd.f32 %v9579, %v9890
    %v9951 = vadd.f32 %v9580, %v9891
    %v9952 = vadd.f32 %v9581, %v9892
    %v9953 = vadd.f32 %v9582, %v9893
    %v9954 = vadd.f32 %v9583, %v9894
    %v9955 = vadd.f32 %v9584, %v9895
    %v9956 = vadd.f32 %v9585, %v9821
    %v9957 = vadd.f32 %v9586, %v9823
    %v9958 = vadd.f32 %v9587, %v9862
    %v9959 = vadd.f32 %v9588, %v9864
    %v9960 = vadd.f32 %v9589, %v9896
    %v9961 = vadd.f32 %v9590, %v9897
    %v9962 = vadd.f32 %v9591, %v9898
    %v9963 = vadd.f32 %v9592, %v9899
    %v9964 = vmul.f32 %v9932, 0.5
    %v9965 = vmul.f32 %v9936, 0.5
    %v9966 = vmul.f32 %v9940, 0.5
    %v9967 = vmul.f32 %v9944, 0.5
    %v9968 = vmul.f32 %v9948, 0.5
    %v9969 = vmul.f32 %v9952, 0.5
    %v9970 = vmul.f32 %v9956, 0.5
    %v9971 = vmul.f32 %v9960, 0.5
    %v9972 = vtanh.pop %v9964
    %v9973 = vtanh.pop %v9965
    %v9974 = vtanh.pop %v9966
    %v9975 = vtanh.pop %v9967
    %v9976 = vtanh.pop %v9968
    %v9977 = vtanh.pop %v9969
    %v9978 = vtanh.pop %v9970
    %v9979 = vtanh.pop %v9971
    %v9980 = vmul.f32 %v9972, 0.5
    %v9981 = vmul.f32 %v9973, 0.5
    %v9982 = vmul.f32 %v9974, 0.5
    %v9983 = vmul.f32 %v9975, 0.5
    %v9984 = vmul.f32 %v9976, 0.5
    %v9985 = vmul.f32 %v9977, 0.5
    %v9986 = vmul.f32 %v9978, 0.5
    %v9987 = vmul.f32 %v9979, 0.5
    %v9988 = vadd.f32 %v9980, 0.5
    %v9989 = vadd.f32 %v9981, 0.5
    %v9990 = vadd.f32 %v9982, 0.5
    %v9991 = vadd.f32 %v9983, 0.5
    %v9992 = vadd.f32 %v9984, 0.5
    %v9993 = vadd.f32 %v9985, 0.5
    %v9994 = vadd.f32 %v9986, 0.5
    %v9995 = vadd.f32 %v9987, 0.5
    %v9996 = vmul.f32 %v9933, 0.5
    %v9997 = vmul.f32 %v9937, 0.5
    %v9998 = vmul.f32 %v9941, 0.5
    %v9999 = vmul.f32 %v9945, 0.5
    %v10000 = vmul.f32 %v9949, 0.5
    %v10001 = vmul.f32 %v9953, 0.5
    %v10002 = vmul.f32 %v9957, 0.5
    %v10003 = vmul.f32 %v9961, 0.5
    %v10004 = vtanh.pop %v9996
    %v10005 = vtanh.pop %v9997
    %v10006 = vtanh.pop %v9998
    %v10007 = vtanh.pop %v9999
    %v10008 = vtanh.pop %v10000
    %v10009 = vtanh.pop %v10001
    %v10010 = vtanh.pop %v10002
    %v10011 = vtanh.pop %v10003
    %v10012 = vmul.f32 %v10004, 0.5
    %v10013 = vmul.f32 %v10005, 0.5
    %v10014 = vmul.f32 %v10006, 0.5
    %v10015 = vmul.f32 %v10007, 0.5
    %v10016 = vmul.f32 %v10008, 0.5
    %v10017 = vmul.f32 %v10009, 0.5
    %v10018 = vmul.f32 %v10010, 0.5
    %v10019 = vmul.f32 %v10011, 0.5
    %v10020 = vadd.f32 %v10012, 0.5
    %v10021 = vadd.f32 %v10013, 0.5
    %v10022 = vadd.f32 %v10014, 0.5
    %v10023 = vadd.f32 %v10015, 0.5
    %v10024 = vadd.f32 %v10016, 0.5
    %v10025 = vadd.f32 %v10017, 0.5
    %v10026 = vadd.f32 %v10018, 0.5
    %v10027 = vadd.f32 %v10019, 0.5
    %v10028 = vtanh.pop %v9934
    %v10029 = vtanh.pop %v9938
    %v10030 = vtanh.pop %v9942
    %v10031 = vtanh.pop %v9946
    %v10032 = vtanh.pop %v9950
    %v10033 = vtanh.pop %v9954
    %v10034 = vtanh.pop %v9958
    %v10035 = vtanh.pop %v9962
    %v10036 = vmul.f32 %v9935, 0.5
    %v10037 = vmul.f32 %v9939, 0.5
    %v10038 = vmul.f32 %v9943, 0.5
    %v10039 = vmul.f32 %v9947, 0.5
    %v10040 = vmul.f32 %v9951, 0.5
    %v10041 = vmul.f32 %v9955, 0.5
    %v10042 = vmul.f32 %v9959, 0.5
    %v10043 = vmul.f32 %v9963, 0.5
    %v10044 = vtanh.pop %v10036
    %v10045 = vtanh.pop %v10037
    %v10046 = vtanh.pop %v10038
    %v10047 = vtanh.pop %v10039
    %v10048 = vtanh.pop %v10040
    %v10049 = vtanh.pop %v10041
    %v10050 = vtanh.pop %v10042
    %v10051 = vtanh.pop %v10043
    %v10052 = vmul.f32 %v10044, 0.5
    %v10053 = vmul.f32 %v10045, 0.5
    %v10054 = vmul.f32 %v10046, 0.5
    %v10055 = vmul.f32 %v10047, 0.5
    %v10056 = vmul.f32 %v10048, 0.5
    %v10057 = vmul.f32 %v10049, 0.5
    %v10058 = vmul.f32 %v10050, 0.5
    %v10059 = vmul.f32 %v10051, 0.5
    %v10060 = vadd.f32 %v10052, 0.5
    %v10061 = vadd.f32 %v10053, 0.5
    %v10062 = vadd.f32 %v10054, 0.5
    %v10063 = vadd.f32 %v10055, 0.5
    %v10064 = vadd.f32 %v10056, 0.5
    %v10065 = vadd.f32 %v10057, 0.5
    %v10066 = vadd.f32 %v10058, 0.5
    %v10067 = vadd.f32 %v10059, 0.5
    %v10069 = vrot.slane %v9512, 2
    %v10070 = vrot.slane %v9512, 3
    %v10071 = vrot.slane %v9512, 4
    %v10072 = vrot.slane %v9512, 5
    %v10073 = vrot.slane %v9512, 6
    %v10074 = vrot.slane %v9512, 7
    %v10075 = vrot.slane %v9512, 1
    %v10084 = vmul.f32 %v10020, %v10069
    %v10085 = vmul.f32 %v10021, %v10070
    %v10086 = vmul.f32 %v10022, %v10071
    %v10087 = vmul.f32 %v10023, %v10072
    %v10088 = vmul.f32 %v10024, %v10073
    %v10089 = vmul.f32 %v10025, %v10074
    %v10090 = vmul.f32 %v10026, %v9512
    %v10091 = vmul.f32 %v10027, %v10075
    %v10092 = vmul.f32 %v9988, %v10028
    %v10093 = vmul.f32 %v9989, %v10029
    %v10094 = vmul.f32 %v9990, %v10030
    %v10095 = vmul.f32 %v9991, %v10031
    %v10096 = vmul.f32 %v9992, %v10032
    %v10097 = vmul.f32 %v9993, %v10033
    %v10098 = vmul.f32 %v9994, %v10034
    %v10099 = vmul.f32 %v9995, %v10035
    %v10100 = vadd.f32 %v10084, %v10092
    %v10101 = vadd.f32 %v10085, %v10093
    %v10102 = vadd.f32 %v10086, %v10094
    %v10103 = vadd.f32 %v10087, %v10095
    %v10104 = vadd.f32 %v10088, %v10096
    %v10105 = vadd.f32 %v10089, %v10097
    %v10106 = vadd.f32 %v10090, %v10098
    %v10107 = vadd.f32 %v10091, %v10099
    %v10108 = vtanh.pop %v10100
    %v10109 = vtanh.pop %v10101
    %v10110 = vtanh.pop %v10102
    %v10111 = vtanh.pop %v10103
    %v10112 = vtanh.pop %v10104
    %v10113 = vtanh.pop %v10105
    %v10114 = vtanh.pop %v10106
    %v10115 = vtanh.pop %v10107
    %v10116 = vmul.f32 %v10060, %v10108
    %v10117 = vmul.f32 %v10061, %v10109
    %v10118 = vmul.f32 %v10062, %v10110
    %v10119 = vmul.f32 %v10063, %v10111
    %v10120 = vmul.f32 %v10064, %v10112
    %v10121 = vmul.f32 %v10065, %v10113
    %v10122 = vmul.f32 %v10066, %v10114
    %v10123 = vmul.f32 %v10067, %v10115
    %v10132 = vrot.slane %v10117, 7
    %v10133 = vsel %vm747, %v10132, %v10116
    %v10134 = vrot.slane %v10118, 6
    %v10135 = vrot.slane %v10119, 5
    %v10136 = vsel %vm729, %v10135, %v10134
    %v10137 = vrot.slane %v10120, 4
    %v10138 = vsel %vm732, %v10137, %v10136
    %v10139 = vrot.slane %v10121, 3
    %v10140 = vsel %vm735, %v10139, %v10138
    %v10141 = vrot.slane %v10122, 2
    %v10142 = vsel %vm738, %v10141, %v10140
    %v10143 = vrot.slane %v10123, 1
    %v10144 = vsel %vm741, %v10143, %v10142
    %10147 = vst [vmem:[#allocation2 - $0x6] sm:$0xc0] %v10133
    %10148 = vst [vmem:[#allocation2 + $0x2] sm:$0x3f] %v10144
    %v10157 = vrot.slane %v10101, 7
    %v10158 = vsel %vm747, %v10157, %v10100
    %v10159 = vrot.slane %v10102, 6
    %v10160 = vrot.slane %v10103, 5
    %v10161 = vsel %vm729, %v10160, %v10159
    %v10162 = vrot.slane %v10104, 4
    %v10163 = vsel %vm732, %v10162, %v10161
    %v10164 = vrot.slane %v10105, 3
    %v10165 = vsel %vm735, %v10164, %v10163
    %v10166 = vrot.slane %v10106, 2
    %v10167 = vsel %vm738, %v10166, %v10165
    %v10168 = vrot.slane %v10107, 1
    %v10169 = vsel %vm741, %v10168, %v10167
    %10172 = vst [vmem:[#allocation3 - $0x6] sm:$0xc0] %v10158
    %10173 = vst [vmem:[#allocation3 + $0x2] sm:$0x3f] %v10169
    %10174 = vst [vmem:[#allocation12 + $0x8] sm:$0x40] %v10116
    %10175 = vst [vmem:[#allocation12 + $0x18] sm:$0x40] %v10117
    %10176 = vst [vmem:[#allocation12 + $0x28] sm:$0x40] %v10118
    %10177 = vst [vmem:[#allocation12 + $0x38] sm:$0x40] %v10119
    %10178 = vst [vmem:[#allocation12 + $0x48] sm:$0x40] %v10120
    %10179 = vst [vmem:[#allocation12 + $0x58] sm:$0x40] %v10121
    %10180 = vst [vmem:[#allocation12 + $0x68] sm:$0x40] %v10122
    %10181 = vst [vmem:[#allocation12 + $0x78] sm:$0x40] %v10123
    %v10182 = vld [vmem:[#allocation2] sm:$0xff]
    %v10183 = vld [vmem:[#allocation3] sm:$0xff]
    %v10184 = vld [vmem:[#allocation4 + $0x10] sm:$0x88]
    %v10185 = vld [vmem:[#allocation4 + $0x18] sm:$0x88]
    %v10186 = vld [vmem:[#allocation4 + $0x30] sm:$0x88]
    %v10187 = vld [vmem:[#allocation4 + $0x38] sm:$0x88]
    %v10188 = vld [vmem:[#allocation4 + $0x50] sm:$0x88]
    %v10189 = vld [vmem:[#allocation4 + $0x58] sm:$0x88]
    %v10190 = vld [vmem:[#allocation4 + $0x70] sm:$0x88]
    %v10191 = vld [vmem:[#allocation4 + $0x78] sm:$0x88]
    %v10192 = vld [vmem:[#allocation4 + $0x90] sm:$0x88]
    %v10193 = vld [vmem:[#allocation4 + $0x98] sm:$0x88]
    %v10194 = vld [vmem:[#allocation4 + $0xb0] sm:$0x88]
    %v10195 = vld [vmem:[#allocation4 + $0xb8] sm:$0x88]
    %v10196 = vld [vmem:[#allocation4 + $0xd0] sm:$0x88]
    %v10197 = vld [vmem:[#allocation4 + $0xd8] sm:$0x88]
    %v10198 = vld [vmem:[#allocation4 + $0xf0] sm:$0x88]
    %v10199 = vld [vmem:[#allocation4 + $0xf8] sm:$0x88]
    %v10200 = vunpack.c.l.bf16 %v10184
    %v10201 = vunpack.c.h.bf16 %v10184
    %v10202 = vunpack.c.l.bf16 %v10185
    %v10203 = vunpack.c.h.bf16 %v10185
    %v10204 = vunpack.c.l.bf16 %v10186
    %v10205 = vunpack.c.h.bf16 %v10186
    %v10206 = vunpack.c.l.bf16 %v10187
    %v10207 = vunpack.c.h.bf16 %v10187
    %v10208 = vunpack.c.l.bf16 %v10188
    %v10209 = vunpack.c.h.bf16 %v10188
    %v10210 = vunpack.c.l.bf16 %v10189
    %v10211 = vunpack.c.h.bf16 %v10189
    %v10212 = vunpack.c.l.bf16 %v10190
    %v10213 = vunpack.c.h.bf16 %v10190
    %v10214 = vunpack.c.l.bf16 %v10191
    %v10215 = vunpack.c.h.bf16 %v10191
    %v10216 = vunpack.c.l.bf16 %v10192
    %v10217 = vunpack.c.h.bf16 %v10192
    %v10218 = vunpack.c.l.bf16 %v10193
    %v10219 = vunpack.c.h.bf16 %v10193
    %v10220 = vunpack.c.l.bf16 %v10194
    %v10221 = vunpack.c.h.bf16 %v10194
    %v10222 = vunpack.c.l.bf16 %v10195
    %v10223 = vunpack.c.h.bf16 %v10195
    %v10224 = vunpack.c.l.bf16 %v10196
    %v10225 = vunpack.c.h.bf16 %v10196
    %v10226 = vunpack.c.l.bf16 %v10197
    %v10227 = vunpack.c.h.bf16 %v10197
    %v10228 = vunpack.c.l.bf16 %v10198
    %v10229 = vunpack.c.h.bf16 %v10198
    %v10230 = vunpack.c.l.bf16 %v10199
    %v10231 = vunpack.c.h.bf16 %v10199
    %v10232 = vadd.f32 %v10200, %v140
    %v10233 = vadd.f32 %v10201, %v144
    %v10234 = vadd.f32 %v10202, %v148
    %v10235 = vadd.f32 %v10203, %v152
    %v10236 = vadd.f32 %v10204, %v140
    %v10237 = vadd.f32 %v10205, %v144
    %v10238 = vadd.f32 %v10206, %v148
    %v10239 = vadd.f32 %v10207, %v152
    %v10240 = vadd.f32 %v10208, %v140
    %v10241 = vadd.f32 %v10209, %v144
    %v10242 = vadd.f32 %v10210, %v148
    %v10243 = vadd.f32 %v10211, %v152
    %v10244 = vadd.f32 %v10212, %v140
    %v10245 = vadd.f32 %v10213, %v144
    %v10246 = vadd.f32 %v10214, %v148
    %v10247 = vadd.f32 %v10215, %v152
    %v10248 = vadd.f32 %v10216, %v140
    %v10249 = vadd.f32 %v10217, %v144
    %v10250 = vadd.f32 %v10218, %v148
    %v10251 = vadd.f32 %v10219, %v152
    %v10252 = vadd.f32 %v10220, %v140
    %v10253 = vadd.f32 %v10221, %v144
    %v10254 = vadd.f32 %v10222, %v148
    %v10255 = vadd.f32 %v10223, %v152
    %v10256 = vadd.f32 %v10224, %v140
    %v10257 = vadd.f32 %v10225, %v144
    %v10258 = vadd.f32 %v10226, %v148
    %v10259 = vadd.f32 %v10227, %v152
    %v10260 = vadd.f32 %v10228, %v140
    %v10261 = vadd.f32 %v10229, %v144
    %v10262 = vadd.f32 %v10230, %v148
    %v10263 = vadd.f32 %v10231, %v152
    %v10264 = vpack.c.bf16 %v10182, %v10182
    %v10265 = vld [vmem:[#allocation7] sm:$0xff]
    %v10266 = vld [vmem:[#allocation7 + $0x8] sm:$0xff]
    %v10267 = vld [vmem:[#allocation7 + $0x10] sm:$0xff]
    %v10268 = vld [vmem:[#allocation7 + $0x18] sm:$0xff]
    %v10269 = vld [vmem:[#allocation7 + $0x20] sm:$0xff]
    %v10270 = vld [vmem:[#allocation7 + $0x28] sm:$0xff]
    %v10271 = vld [vmem:[#allocation7 + $0x30] sm:$0xff]
    %v10272 = vld [vmem:[#allocation7 + $0x38] sm:$0xff]
    %v10273 = vld [vmem:[#allocation7 + $0x40] sm:$0xff]
    %v10274 = vld [vmem:[#allocation7 + $0x48] sm:$0xff]
    %v10275 = vld [vmem:[#allocation7 + $0x50] sm:$0xff]
    %v10276 = vld [vmem:[#allocation7 + $0x58] sm:$0xff]
    %v10277 = vld [vmem:[#allocation7 + $0x60] sm:$0xff]
    %v10278 = vld [vmem:[#allocation7 + $0x68] sm:$0xff]
    %v10279 = vld [vmem:[#allocation7 + $0x70] sm:$0xff]
    %v10280 = vld [vmem:[#allocation7 + $0x78] sm:$0xff]
    %v10281 = vld [vmem:[#allocation7 + $0x80] sm:$0xff]
    %v10282 = vld [vmem:[#allocation7 + $0x88] sm:$0xff]
    %v10283 = vld [vmem:[#allocation7 + $0x90] sm:$0xff]
    %v10284 = vld [vmem:[#allocation7 + $0x98] sm:$0xff]
    %v10285 = vld [vmem:[#allocation7 + $0xa0] sm:$0xff]
    %v10286 = vld [vmem:[#allocation7 + $0xa8] sm:$0xff]
    %v10287 = vld [vmem:[#allocation7 + $0xb0] sm:$0xff]
    %v10288 = vld [vmem:[#allocation7 + $0xb8] sm:$0xff]
    %v10289 = vld [vmem:[#allocation7 + $0xc0] sm:$0xff]
    %v10290 = vld [vmem:[#allocation7 + $0xc8] sm:$0xff]
    %v10291 = vld [vmem:[#allocation7 + $0xd0] sm:$0xff]
    %v10292 = vld [vmem:[#allocation7 + $0xd8] sm:$0xff]
    %v10293 = vld [vmem:[#allocation7 + $0xe0] sm:$0xff]
    %v10294 = vld [vmem:[#allocation7 + $0xe8] sm:$0xff]
    %v10295 = vld [vmem:[#allocation7 + $0xf0] sm:$0xff]
    %v10296 = vld [vmem:[#allocation7 + $0xf8] sm:$0xff]
    %v10329 = vunpack.c.l.b16 %v10265
    %v10330 = vunpack.c.h.b16 %v10265
    %v10331 = vunpack.c.l.b16 %v10266
    %v10332 = vunpack.c.h.b16 %v10266
    %v10333 = vunpack.c.l.b16 %v10267
    %v10334 = vunpack.c.h.b16 %v10267
    %v10335 = vunpack.c.l.b16 %v10268
    %v10336 = vunpack.c.h.b16 %v10268
    %v10337 = vunpack.c.l.b16 %v10269
    %v10338 = vunpack.c.h.b16 %v10269
    %v10339 = vunpack.c.l.b16 %v10270
    %v10340 = vunpack.c.h.b16 %v10270
    %v10341 = vunpack.c.l.b16 %v10271
    %v10342 = vunpack.c.h.b16 %v10271
    %v10343 = vunpack.c.l.b16 %v10272
    %v10344 = vunpack.c.h.b16 %v10272
    %v10345 = vunpack.c.l.b16 %v10273
    %v10346 = vunpack.c.h.b16 %v10273
    %v10347 = vunpack.c.l.b16 %v10274
    %v10348 = vunpack.c.h.b16 %v10274
    %v10349 = vunpack.c.l.b16 %v10275
    %v10350 = vunpack.c.h.b16 %v10275
    %v10351 = vunpack.c.l.b16 %v10276
    %v10352 = vunpack.c.h.b16 %v10276
    %v10353 = vunpack.c.l.b16 %v10277
    %v10354 = vunpack.c.h.b16 %v10277
    %v10355 = vunpack.c.l.b16 %v10278
    %v10356 = vunpack.c.h.b16 %v10278
    %v10357 = vunpack.c.l.b16 %v10279
    %v10358 = vunpack.c.h.b16 %v10279
    %v10359 = vunpack.c.l.b16 %v10280
    %v10360 = vunpack.c.h.b16 %v10280
    %v10361 = vunpack.c.l.b16 %v10281
    %v10362 = vunpack.c.h.b16 %v10281
    %v10363 = vunpack.c.l.b16 %v10282
    %v10364 = vunpack.c.h.b16 %v10282
    %v10365 = vunpack.c.l.b16 %v10283
    %v10366 = vunpack.c.h.b16 %v10283
    %v10367 = vunpack.c.l.b16 %v10284
    %v10368 = vunpack.c.h.b16 %v10284
    %v10369 = vunpack.c.l.b16 %v10285
    %v10370 = vunpack.c.h.b16 %v10285
    %v10371 = vunpack.c.l.b16 %v10286
    %v10372 = vunpack.c.h.b16 %v10286
    %v10373 = vunpack.c.l.b16 %v10287
    %v10374 = vunpack.c.h.b16 %v10287
    %v10375 = vunpack.c.l.b16 %v10288
    %v10376 = vunpack.c.h.b16 %v10288
    %v10377 = vunpack.c.l.b16 %v10289
    %v10378 = vunpack.c.h.b16 %v10289
    %v10379 = vunpack.c.l.b16 %v10290
    %v10380 = vunpack.c.h.b16 %v10290
    %v10381 = vunpack.c.l.b16 %v10291
    %v10382 = vunpack.c.h.b16 %v10291
    %v10383 = vunpack.c.l.b16 %v10292
    %v10384 = vunpack.c.h.b16 %v10292
    %v10385 = vunpack.c.l.b16 %v10293
    %v10386 = vunpack.c.h.b16 %v10293
    %v10387 = vunpack.c.l.b16 %v10294
    %v10388 = vunpack.c.h.b16 %v10294
    %v10389 = vunpack.c.l.b16 %v10295
    %v10390 = vunpack.c.h.b16 %v10295
    %v10391 = vunpack.c.l.b16 %v10296
    %v10392 = vunpack.c.h.b16 %v10296
    %v10393 = vpack.c.b16 %v10333, %v10329
    %v10394 = vpack.c.b16 %v10334, %v10330
    %v10395 = vpack.c.b16 %v10335, %v10331
    %v10396 = vpack.c.b16 %v10336, %v10332
    %v10397 = vpack.c.b16 %v10341, %v10337
    %v10398 = vpack.c.b16 %v10342, %v10338
    %v10399 = vpack.c.b16 %v10343, %v10339
    %v10400 = vpack.c.b16 %v10344, %v10340
    %v10401 = vpack.c.b16 %v10349, %v10345
    %v10402 = vpack.c.b16 %v10350, %v10346
    %v10403 = vpack.c.b16 %v10351, %v10347
    %v10404 = vpack.c.b16 %v10352, %v10348
    %v10405 = vpack.c.b16 %v10357, %v10353
    %v10406 = vpack.c.b16 %v10358, %v10354
    %v10407 = vpack.c.b16 %v10359, %v10355
    %v10408 = vpack.c.b16 %v10360, %v10356
    %v10409 = vpack.c.b16 %v10365, %v10361
    %v10410 = vpack.c.b16 %v10366, %v10362
    %v10411 = vpack.c.b16 %v10367, %v10363
    %v10412 = vpack.c.b16 %v10368, %v10364
    %v10413 = vpack.c.b16 %v10373, %v10369
    %v10414 = vpack.c.b16 %v10374, %v10370
    %v10415 = vpack.c.b16 %v10375, %v10371
    %v10416 = vpack.c.b16 %v10376, %v10372
    %v10417 = vpack.c.b16 %v10381, %v10377
    %v10418 = vpack.c.b16 %v10382, %v10378
    %v10419 = vpack.c.b16 %v10383, %v10379
    %v10420 = vpack.c.b16 %v10384, %v10380
    %v10421 = vpack.c.b16 %v10389, %v10385
    %v10422 = vpack.c.b16 %v10390, %v10386
    %v10423 = vpack.c.b16 %v10391, %v10387
    %v10424 = vpack.c.b16 %v10392, %v10388
    %10457 = vmatprep.subr.bf16.mxu0 %v10394
    %10458 = vmatpush1.bf16.msra.mxu0 %v10393
    %10459 = vmatprep.subr.bf16.mxu0 %v10398
    %10460 = vmatpush1.bf16.msra.mxu0 %v10397
    %10461 = vmatprep.subr.bf16.mxu0 %v10402
    %10462 = vmatpush1.bf16.msra.mxu0 %v10401
    %10463 = vmatprep.subr.bf16.mxu0 %v10406
    %10464 = vmatpush1.bf16.msra.mxu0 %v10405
    %10465 = vmatprep.subr.bf16.mxu0 %v10410
    %10466 = vmatpush1.bf16.msra.mxu0 %v10409
    %10467 = vmatprep.subr.bf16.mxu0 %v10414
    %10468 = vmatpush1.bf16.msra.mxu0 %v10413
    %10469 = vmatprep.subr.bf16.mxu0 %v10418
    %10470 = vmatpush1.bf16.msra.mxu0 %v10417
    %10471 = vmatprep.subr.bf16.mxu0 %v10422
    %10472 = vmatpush1.bf16.msra.mxu0 %v10421
    %10473 = vmatprep.subr.bf16.mxu0 0
    %10474 = vmatpush1.bf16.msra.mxu0 0
    %10475 = vmatprep.subr.bf16.mxu0 0
    %10476 = vmatpush1.bf16.msra.mxu0 0
    %10477 = vmatprep.subr.bf16.mxu0 0
    %10478 = vmatpush1.bf16.msra.mxu0 0
    %10479 = vmatprep.subr.bf16.mxu0 0
    %10480 = vmatpush1.bf16.msra.mxu0 0
    %10481 = vmatprep.subr.bf16.mxu0 0
    %10482 = vmatpush1.bf16.msra.mxu0 0
    %10483 = vmatprep.subr.bf16.mxu0 0
    %10484 = vmatpush1.bf16.msra.mxu0 0
    %10485 = vmatprep.subr.bf16.mxu0 0
    %10486 = vmatpush1.bf16.msra.mxu0 0
    %10487 = vmatprep.subr.bf16.mxu0 0
    %10488 = vmatpush1.bf16.msra.mxu0 0
    %10489 = vmatprep.mubr.bf16.mxu0 0
    %10490 = vmatmul.mubr.bf16.gmra.mrb[0].mxu0 %v10264
    %v10491 = vpop.f32.mrb[0].mxu0
    %v10492 = vadd.f32 0.0, %v10491
    %v10493 = vpop.f32.mrb[0].mxu0
    %v10494 = vadd.f32 0.0, %v10493
    %v10495 = vpop.f32.mrb[0].mxu0
    %v10496 = vpop.f32.mrb[0].mxu0
    %10497 = vdwg.mxu0
    %10498 = vmatprep.subr.bf16.mxu0 %v10396
    %10499 = vmatpush1.bf16.msra.mxu0 %v10395
    %10500 = vmatprep.subr.bf16.mxu0 %v10400
    %10501 = vmatpush1.bf16.msra.mxu0 %v10399
    %10502 = vmatprep.subr.bf16.mxu0 %v10404
    %10503 = vmatpush1.bf16.msra.mxu0 %v10403
    %10504 = vmatprep.subr.bf16.mxu0 %v10408
    %10505 = vmatpush1.bf16.msra.mxu0 %v10407
    %10506 = vmatprep.subr.bf16.mxu0 %v10412
    %10507 = vmatpush1.bf16.msra.mxu0 %v10411
    %10508 = vmatprep.subr.bf16.mxu0 %v10416
    %10509 = vmatpush1.bf16.msra.mxu0 %v10415
    %10510 = vmatprep.subr.bf16.mxu0 %v10420
    %10511 = vmatpush1.bf16.msra.mxu0 %v10419
    %10512 = vmatprep.subr.bf16.mxu0 %v10424
    %10513 = vmatpush1.bf16.msra.mxu0 %v10423
    %10514 = vmatprep.subr.bf16.mxu0 0
    %10515 = vmatpush1.bf16.msra.mxu0 0
    %10516 = vmatprep.subr.bf16.mxu0 0
    %10517 = vmatpush1.bf16.msra.mxu0 0
    %10518 = vmatprep.subr.bf16.mxu0 0
    %10519 = vmatpush1.bf16.msra.mxu0 0
    %10520 = vmatprep.subr.bf16.mxu0 0
    %10521 = vmatpush1.bf16.msra.mxu0 0
    %10522 = vmatprep.subr.bf16.mxu0 0
    %10523 = vmatpush1.bf16.msra.mxu0 0
    %10524 = vmatprep.subr.bf16.mxu0 0
    %10525 = vmatpush1.bf16.msra.mxu0 0
    %10526 = vmatprep.subr.bf16.mxu0 0
    %10527 = vmatpush1.bf16.msra.mxu0 0
    %10528 = vmatprep.subr.bf16.mxu0 0
    %10529 = vmatpush1.bf16.msra.mxu0 0
    %10530 = vmatprep.mubr.bf16.mxu0 0
    %10531 = vmatmul.mubr.bf16.gmra.mrb[0].mxu0 %v10264
    %v10532 = vpop.f32.mrb[0].mxu0
    %v10533 = vadd.f32 0.0, %v10532
    %v10534 = vpop.f32.mrb[0].mxu0
    %v10535 = vadd.f32 0.0, %v10534
    %v10536 = vpop.f32.mrb[0].mxu0
    %v10537 = vpop.f32.mrb[0].mxu0
    %10538 = vdwg.mxu0
    %v10543 = vrot.slane %v10492, 1
    %v10544 = vrot.slane %v10494, 1
    %v10545 = vrot.slane %v10533, 1
    %v10546 = vrot.slane %v10535, 1
    %v10547 = vrot.slane %v10492, 2
    %v10548 = vrot.slane %v10494, 2
    %v10549 = vrot.slane %v10533, 2
    %v10550 = vrot.slane %v10535, 2
    %v10551 = vrot.slane %v10492, 3
    %v10552 = vrot.slane %v10494, 3
    %v10553 = vrot.slane %v10533, 3
    %v10554 = vrot.slane %v10535, 3
    %v10555 = vrot.slane %v10492, 4
    %v10556 = vrot.slane %v10494, 4
    %v10557 = vrot.slane %v10533, 4
    %v10558 = vrot.slane %v10535, 4
    %v10559 = vrot.slane %v10492, 5
    %v10560 = vrot.slane %v10494, 5
    %v10561 = vrot.slane %v10533, 5
    %v10562 = vrot.slane %v10535, 5
    %v10563 = vrot.slane %v10492, 6
    %v10564 = vrot.slane %v10494, 6
    %v10565 = vrot.slane %v10533, 6
    %v10566 = vrot.slane %v10535, 6
    %v10567 = vrot.slane %v10492, 7
    %v10568 = vrot.slane %v10494, 7
    %v10569 = vrot.slane %v10533, 7
    %v10570 = vrot.slane %v10535, 7
    %v10603 = vadd.f32 %v10232, %v10543
    %v10604 = vadd.f32 %v10233, %v10544
    %v10605 = vadd.f32 %v10234, %v10545
    %v10606 = vadd.f32 %v10235, %v10546
    %v10607 = vadd.f32 %v10236, %v10547
    %v10608 = vadd.f32 %v10237, %v10548
    %v10609 = vadd.f32 %v10238, %v10549
    %v10610 = vadd.f32 %v10239, %v10550
    %v10611 = vadd.f32 %v10240, %v10551
    %v10612 = vadd.f32 %v10241, %v10552
    %v10613 = vadd.f32 %v10242, %v10553
    %v10614 = vadd.f32 %v10243, %v10554
    %v10615 = vadd.f32 %v10244, %v10555
    %v10616 = vadd.f32 %v10245, %v10556
    %v10617 = vadd.f32 %v10246, %v10557
    %v10618 = vadd.f32 %v10247, %v10558
    %v10619 = vadd.f32 %v10248, %v10559
    %v10620 = vadd.f32 %v10249, %v10560
    %v10621 = vadd.f32 %v10250, %v10561
    %v10622 = vadd.f32 %v10251, %v10562
    %v10623 = vadd.f32 %v10252, %v10563
    %v10624 = vadd.f32 %v10253, %v10564
    %v10625 = vadd.f32 %v10254, %v10565
    %v10626 = vadd.f32 %v10255, %v10566
    %v10627 = vadd.f32 %v10256, %v10567
    %v10628 = vadd.f32 %v10257, %v10568
    %v10629 = vadd.f32 %v10258, %v10569
    %v10630 = vadd.f32 %v10259, %v10570
    %v10631 = vadd.f32 %v10260, %v10492
    %v10632 = vadd.f32 %v10261, %v10494
    %v10633 = vadd.f32 %v10262, %v10533
    %v10634 = vadd.f32 %v10263, %v10535
    %v10635 = vmul.f32 %v10603, 0.5
    %v10636 = vmul.f32 %v10607, 0.5
    %v10637 = vmul.f32 %v10611, 0.5
    %v10638 = vmul.f32 %v10615, 0.5
    %v10639 = vmul.f32 %v10619, 0.5
    %v10640 = vmul.f32 %v10623, 0.5
    %v10641 = vmul.f32 %v10627, 0.5
    %v10642 = vmul.f32 %v10631, 0.5
    %v10643 = vtanh.pop %v10635
    %v10644 = vtanh.pop %v10636
    %v10645 = vtanh.pop %v10637
    %v10646 = vtanh.pop %v10638
    %v10647 = vtanh.pop %v10639
    %v10648 = vtanh.pop %v10640
    %v10649 = vtanh.pop %v10641
    %v10650 = vtanh.pop %v10642
    %v10651 = vmul.f32 %v10643, 0.5
    %v10652 = vmul.f32 %v10644, 0.5
    %v10653 = vmul.f32 %v10645, 0.5
    %v10654 = vmul.f32 %v10646, 0.5
    %v10655 = vmul.f32 %v10647, 0.5
    %v10656 = vmul.f32 %v10648, 0.5
    %v10657 = vmul.f32 %v10649, 0.5
    %v10658 = vmul.f32 %v10650, 0.5
    %v10659 = vadd.f32 %v10651, 0.5
    %v10660 = vadd.f32 %v10652, 0.5
    %v10661 = vadd.f32 %v10653, 0.5
    %v10662 = vadd.f32 %v10654, 0.5
    %v10663 = vadd.f32 %v10655, 0.5
    %v10664 = vadd.f32 %v10656, 0.5
    %v10665 = vadd.f32 %v10657, 0.5
    %v10666 = vadd.f32 %v10658, 0.5
    %v10667 = vmul.f32 %v10604, 0.5
    %v10668 = vmul.f32 %v10608, 0.5
    %v10669 = vmul.f32 %v10612, 0.5
    %v10670 = vmul.f32 %v10616, 0.5
    %v10671 = vmul.f32 %v10620, 0.5
    %v10672 = vmul.f32 %v10624, 0.5
    %v10673 = vmul.f32 %v10628, 0.5
    %v10674 = vmul.f32 %v10632, 0.5
    %v10675 = vtanh.pop %v10667
    %v10676 = vtanh.pop %v10668
    %v10677 = vtanh.pop %v10669
    %v10678 = vtanh.pop %v10670
    %v10679 = vtanh.pop %v10671
    %v10680 = vtanh.pop %v10672
    %v10681 = vtanh.pop %v10673
    %v10682 = vtanh.pop %v10674
    %v10683 = vmul.f32 %v10675, 0.5
    %v10684 = vmul.f32 %v10676, 0.5
    %v10685 = vmul.f32 %v10677, 0.5
    %v10686 = vmul.f32 %v10678, 0.5
    %v10687 = vmul.f32 %v10679, 0.5
    %v10688 = vmul.f32 %v10680, 0.5
    %v10689 = vmul.f32 %v10681, 0.5
    %v10690 = vmul.f32 %v10682, 0.5
    %v10691 = vadd.f32 %v10683, 0.5
    %v10692 = vadd.f32 %v10684, 0.5
    %v10693 = vadd.f32 %v10685, 0.5
    %v10694 = vadd.f32 %v10686, 0.5
    %v10695 = vadd.f32 %v10687, 0.5
    %v10696 = vadd.f32 %v10688, 0.5
    %v10697 = vadd.f32 %v10689, 0.5
    %v10698 = vadd.f32 %v10690, 0.5
    %v10699 = vtanh.pop %v10605
    %v10700 = vtanh.pop %v10609
    %v10701 = vtanh.pop %v10613
    %v10702 = vtanh.pop %v10617
    %v10703 = vtanh.pop %v10621
    %v10704 = vtanh.pop %v10625
    %v10705 = vtanh.pop %v10629
    %v10706 = vtanh.pop %v10633
    %v10707 = vmul.f32 %v10606, 0.5
    %v10708 = vmul.f32 %v10610, 0.5
    %v10709 = vmul.f32 %v10614, 0.5
    %v10710 = vmul.f32 %v10618, 0.5
    %v10711 = vmul.f32 %v10622, 0.5
    %v10712 = vmul.f32 %v10626, 0.5
    %v10713 = vmul.f32 %v10630, 0.5
    %v10714 = vmul.f32 %v10634, 0.5
    %v10715 = vtanh.pop %v10707
    %v10716 = vtanh.pop %v10708
    %v10717 = vtanh.pop %v10709
    %v10718 = vtanh.pop %v10710
    %v10719 = vtanh.pop %v10711
    %v10720 = vtanh.pop %v10712
    %v10721 = vtanh.pop %v10713
    %v10722 = vtanh.pop %v10714
    %v10723 = vmul.f32 %v10715, 0.5
    %v10724 = vmul.f32 %v10716, 0.5
    %v10725 = vmul.f32 %v10717, 0.5
    %v10726 = vmul.f32 %v10718, 0.5
    %v10727 = vmul.f32 %v10719, 0.5
    %v10728 = vmul.f32 %v10720, 0.5
    %v10729 = vmul.f32 %v10721, 0.5
    %v10730 = vmul.f32 %v10722, 0.5
    %v10731 = vadd.f32 %v10723, 0.5
    %v10732 = vadd.f32 %v10724, 0.5
    %v10733 = vadd.f32 %v10725, 0.5
    %v10734 = vadd.f32 %v10726, 0.5
    %v10735 = vadd.f32 %v10727, 0.5
    %v10736 = vadd.f32 %v10728, 0.5
    %v10737 = vadd.f32 %v10729, 0.5
    %v10738 = vadd.f32 %v10730, 0.5
    %v10740 = vrot.slane %v10183, 1
    %v10741 = vrot.slane %v10183, 2
    %v10742 = vrot.slane %v10183, 3
    %v10743 = vrot.slane %v10183, 4
    %v10744 = vrot.slane %v10183, 5
    %v10745 = vrot.slane %v10183, 6
    %v10746 = vrot.slane %v10183, 7
    %v10755 = vmul.f32 %v10691, %v10740
    %v10756 = vmul.f32 %v10692, %v10741
    %v10757 = vmul.f32 %v10693, %v10742
    %v10758 = vmul.f32 %v10694, %v10743
    %v10759 = vmul.f32 %v10695, %v10744
    %v10760 = vmul.f32 %v10696, %v10745
    %v10761 = vmul.f32 %v10697, %v10746
    %v10762 = vmul.f32 %v10698, %v10183
    %v10763 = vmul.f32 %v10659, %v10699
    %v10764 = vmul.f32 %v10660, %v10700
    %v10765 = vmul.f32 %v10661, %v10701
    %v10766 = vmul.f32 %v10662, %v10702
    %v10767 = vmul.f32 %v10663, %v10703
    %v10768 = vmul.f32 %v10664, %v10704
    %v10769 = vmul.f32 %v10665, %v10705
    %v10770 = vmul.f32 %v10666, %v10706
    %v10771 = vadd.f32 %v10755, %v10763
    %v10772 = vadd.f32 %v10756, %v10764
    %v10773 = vadd.f32 %v10757, %v10765
    %v10774 = vadd.f32 %v10758, %v10766
    %v10775 = vadd.f32 %v10759, %v10767
    %v10776 = vadd.f32 %v10760, %v10768
    %v10777 = vadd.f32 %v10761, %v10769
    %v10778 = vadd.f32 %v10762, %v10770
    %v10779 = vtanh.pop %v10771
    %v10780 = vtanh.pop %v10772
    %v10781 = vtanh.pop %v10773
    %v10782 = vtanh.pop %v10774
    %v10783 = vtanh.pop %v10775
    %v10784 = vtanh.pop %v10776
    %v10785 = vtanh.pop %v10777
    %v10786 = vtanh.pop %v10778
    %v10787 = vmul.f32 %v10731, %v10779
    %v10788 = vmul.f32 %v10732, %v10780
    %v10789 = vmul.f32 %v10733, %v10781
    %v10790 = vmul.f32 %v10734, %v10782
    %v10791 = vmul.f32 %v10735, %v10783
    %v10792 = vmul.f32 %v10736, %v10784
    %v10793 = vmul.f32 %v10737, %v10785
    %v10794 = vmul.f32 %v10738, %v10786
    %v10803 = vrot.slane %v10788, 7
    %v10804 = vrot.slane %v10789, 6
    %v10805 = vsel %vm729, %v10804, %v10803
    %v10806 = vrot.slane %v10790, 5
    %v10807 = vsel %vm732, %v10806, %v10805
    %v10808 = vrot.slane %v10791, 4
    %v10809 = vsel %vm735, %v10808, %v10807
    %v10810 = vrot.slane %v10792, 3
    %v10811 = vsel %vm738, %v10810, %v10809
    %v10812 = vrot.slane %v10793, 2
    %v10813 = vsel %vm741, %v10812, %v10811
    %v10814 = vrot.slane %v10794, 1
    %v10815 = vsel %vm744, %v10814, %v10813
    %10818 = vst [vmem:[#allocation2 - $0x7] sm:$0x80] %v10787
    %10819 = vst [vmem:[#allocation2 + $0x1] sm:$0x7f] %v10815
    %v10828 = vrot.slane %v10772, 7
    %v10829 = vrot.slane %v10773, 6
    %v10830 = vsel %vm729, %v10829, %v10828
    %v10831 = vrot.slane %v10774, 5
    %v10832 = vsel %vm732, %v10831, %v10830
    %v10833 = vrot.slane %v10775, 4
    %v10834 = vsel %vm735, %v10833, %v10832
    %v10835 = vrot.slane %v10776, 3
    %v10836 = vsel %vm738, %v10835, %v10834
    %v10837 = vrot.slane %v10777, 2
    %v10838 = vsel %vm741, %v10837, %v10836
    %v10839 = vrot.slane %v10778, 1
    %v10840 = vsel %vm744, %v10839, %v10838
    %10843 = vst [vmem:[#allocation3 - $0x7] sm:$0x80] %v10771
    %10844 = vst [vmem:[#allocation3 + $0x1] sm:$0x7f] %v10840
    %10845 = vst [vmem:[#allocation12 + $0x8] sm:$0x80] %v10787
    %10846 = vst [vmem:[#allocation12 + $0x18] sm:$0x80] %v10788
    %10847 = vst [vmem:[#allocation12 + $0x28] sm:$0x80] %v10789
    %10848 = vst [vmem:[#allocation12 + $0x38] sm:$0x80] %v10790
    %10849 = vst [vmem:[#allocation12 + $0x48] sm:$0x80] %v10791
    %10850 = vst [vmem:[#allocation12 + $0x58] sm:$0x80] %v10792
    %10851 = vst [vmem:[#allocation12 + $0x68] sm:$0x80] %v10793
    %10852 = vst [vmem:[#allocation12 + $0x78] sm:$0x80] %v10794
    // Predicated region
    $region46: #{tpu_custom_call.1} parent=1 // pred_check
      _
    $region47: #{tpu_custom_call.1} parent=1 // pred_check_branch
      %10854 = sbr.rel (0) target = $region49
    $region48: #{tpu_custom_call.1} parent=1 // pred_region
      %s10856 = ssub.s32 2048, 2048
      %10857 = vsyncadd [#allocation6], %s10856
      %s10858 = sshll.u32 [#allocation12], 4
      %s10859 = int_to_ptr.vmem [resolvable:$true] %s10858
      %10864 = dma.vmem_to_hbm [thread:$0]  %s10859, 2048, %s5, [#allocation6], 128, 128, 8
    $region49: #{tpu_custom_call.1} parent=1 // pred_fallthru
      _
    // Predicated region
    $region50: #{tpu_custom_call.1} parent=1 // pred_check
      _
    $region51: #{tpu_custom_call.1} parent=1 // pred_check_branch
      %10866 = sbr.rel (0) target = $region53
    $region52: #{tpu_custom_call.1} parent=1 // pred_region
      %s10868 = ssub.s32 128, 128
      %10869 = vsyncadd [#allocation14], %s10868
      %s10871 = sshll.u32 [#allocation13], 4
      %s10872 = int_to_ptr.vmem [resolvable:$true] %s10871
      %10874 = dma.vmem_to_hbm [thread:$0]  %s10872, 128, %s6, [#allocation14]
    $region53: #{tpu_custom_call.1} parent=1 // pred_fallthru
      _
    // Predicated region
    $region54: #{tpu_custom_call.1} parent=1 // pred_check
      _
    $region55: #{tpu_custom_call.1} parent=1 // pred_check_branch
      %10876 = sbr.rel (0) target = $region57
    $region56: #{tpu_custom_call.1} parent=1 // pred_region
      %s10878 = ssub.s32 128, 128
      %10879 = vsyncadd [#allocation14], %s10878
      %s10881 = sshll.u32 [#allocation15], 4
      %s10882 = int_to_ptr.vmem [resolvable:$true] %s10881
      %10884 = dma.vmem_to_hbm [thread:$0]  %s10882, 128, %s7, [#allocation14]
    $region57: #{tpu_custom_call.1} parent=1 // pred_fallthru
      _
    // Predicated region
    $region58: #{tpu_custom_call.1} parent=1 // pred_check
      _
    $region59: #{tpu_custom_call.1} parent=1 // pred_check_branch
      %10886 = sbr.rel (0) target = $region61
    $region60: #{tpu_custom_call.1} parent=1 // pred_region
      %10887 = dma.done [#allocation6], 2048
    $region61: #{tpu_custom_call.1} parent=1 // pred_fallthru
      _
    // Predicated region
    $region62: #{tpu_custom_call.1} parent=1 // pred_check
      _
    $region63: #{tpu_custom_call.1} parent=1 // pred_check_branch
      %10889 = sbr.rel (0) target = $region65
    $region64: #{tpu_custom_call.1} parent=1 // pred_region
      %10890 = dma.done [#allocation14], 128
    $region65: #{tpu_custom_call.1} parent=1 // pred_fallthru
      _
    // Predicated region
    $region66: #{tpu_custom_call.1} parent=1 // pred_check
      _
    $region67: #{tpu_custom_call.1} parent=1 // pred_check_branch
      %10892 = sbr.rel (0) target = $region69
    $region68: #{tpu_custom_call.1} parent=1 // pred_region
      %10893 = dma.done [#allocation14], 128
    $region69: #{tpu_custom_call.1} parent=1 // pred_fallthru
      _
    %10894 = vsyncpa [#allocation5], 1
    %10895 = vsyncpa [#allocation8], 1
    %10896 = vsyncpa [#allocation11], 1
    %10897 = vsyncpa [#allocation6], 1
    %10898 = vsyncpa [#allocation14], 1

</llo_original>
